<compile_context>
chip_gen: v7x
topology: tpu7x:2x2x1
jax: 0.10.0
libtpu: 0.0.40
codegen_flags: <defaults>
</compile_context>

<pallas_src>
import functools

import jax
import jax.numpy as jnp
from jax.experimental import pallas as pl
from jax.experimental.pallas import tpu as pltpu

LANE = 128
_VMEM_BUDGET = 12 * 1024 * 1024  # per-step budget: fits v5e 16MiB scoped / v7x 32MiB


def _round_up(x, m):
    return ((x + m - 1) // m) * m


def _pick_tm(n, n_col_pad, h_pad, c_pad, tm):
    """Largest multiple-of-128 row tile <= tm whose per-step VMEM fits the budget."""
    tm = max(LANE, (tm // LANE) * LANE)
    tm = min(tm, _round_up(n, LANE))
    while tm > LANE:
        per_step = (2 * tm * n_col_pad * 2        # A row tile, double-buffered bf16
                    + 2 * n_col_pad * h_pad * 2   # xw1 (layer 1, grid-invariant)
                    + 2 * n_col_pad * c_pad * 2   # hw2 (layer 2, grid-invariant)
                    + 2 * tm * c_pad * 4          # output tile (f32 worst case)
                    + 2 * tm * h_pad * 4)         # f32 temporaries headroom
        if per_step <= _VMEM_BUDGET:
            break
        tm //= 2
    return tm


# ---------------- layer 1: hw2 = (relu(A @ xw1 + b1)) @ W2 ----------------
def gcn_layer1_kernel(a_ref, xw_ref, w2_ref, b1_ref, hw2_ref):
    # a_ref:  (TM, Ncol)    bf16   (row tile of A_hat)
    # xw_ref: (Ncol, Hpad)  bf16   (x @ W1, precomputed, grid-invariant)
    # w2_ref: (Hpad, Cpad)  bf16
    # b1_ref: (1, Hpad)     f32
    ax = jnp.dot(a_ref[...], xw_ref[...], preferred_element_type=jnp.float32)
    h1 = jnp.maximum(ax + b1_ref[...], 0.0)                        # (TM, Hpad) f32
    hw2 = jnp.dot(h1.astype(jnp.bfloat16), w2_ref[...],
                  preferred_element_type=jnp.float32)               # (TM, Cpad) f32
    hw2_ref[...] = hw2.astype(hw2_ref.dtype)


# ------------- layer 2: out = log_softmax(A @ hw2 + b2, axis=1) -----------
def gcn_layer2_kernel(a_ref, hw2_ref, b2_ref, out_ref):
    # a_ref:   (TM, Ncol)    bf16
    # hw2_ref: (Ncol, Cpad)  bf16
    # b2_ref:  (1, Cpad)     f32  (padded class columns hold -1e30)
    logits = jnp.dot(a_ref[...], hw2_ref[...],
                     preferred_element_type=jnp.float32) + b2_ref[...]
    m = jnp.max(logits, axis=1, keepdims=True)
    z = logits - m
    lse = jnp.log(jnp.sum(jnp.exp(z), axis=1, keepdims=True))
    out_ref[...] = (z - lse).astype(out_ref.dtype)


def gcn_prepare(a_hat, x, w1, b1, w2, b2, *, tm=512):
    """One-time padding / bf16 casting / x@W1 projection (hoisted out of the hot path)."""
    n = a_hat.shape[0]
    f_in = x.shape[1]
    h = w1.shape[1]
    c = w2.shape[1]

    h_pad = _round_up(h, LANE)
    c_pad = _round_up(c, LANE)
    n_col_pad = _round_up(n, LANE)            # columns only padded to a lane multiple
    tm = _pick_tm(n, n_col_pad, h_pad, c_pad, tm)
    n_row_pad = _round_up(n, tm)              # rows padded to the row-tile size

    # Zero padding is semantics-preserving: A's padded columns are zero, so the
    # (possibly nonzero, relu(b1)@W2) padded rows of hw2 never contribute.
    a_bf = (jnp.zeros((n_row_pad, n_col_pad), jnp.bfloat16)
            .at[:n, :n].set(a_hat.astype(jnp.bfloat16)))

    b1_p = jnp.zeros((1, h_pad), jnp.float32).at[:, :h].set(b1)
    # padded class columns get a huge negative bias -> exp() == 0 in log_softmax
    b2_p = jnp.full((1, c_pad), -1e30, jnp.float32).at[:, :c].set(b2)

    w1_bf = jnp.zeros((f_in, h_pad), jnp.bfloat16).at[:, :h].set(w1.astype(jnp.bfloat16))
    w2_bf = jnp.zeros((h_pad, c_pad), jnp.bfloat16).at[:h, :c].set(w2.astype(jnp.bfloat16))

    # Projection-first: x @ W1 is a plain dense GEMM left to XLA (bf16 in, f32
    # accumulate), so the kernels only ever multiply A against 128-wide bf16 operands.
    x_bf = jnp.zeros((n_col_pad, f_in), jnp.bfloat16).at[:n, :].set(x.astype(jnp.bfloat16))
    xw1 = jnp.dot(x_bf, w1_bf, preferred_element_type=jnp.float32).astype(jnp.bfloat16)

    return (a_bf, xw1, w2_bf, b1_p, b2_p), dict(n=n, c=c, tm=tm)


@functools.partial(jax.jit, static_argnames=("n", "c", "tm"))
def gcn_forward_prepared(a_bf, xw1, w2_bf, b1_p, b2_p, *, n, c, tm):
    n_row_pad, n_col_pad = a_bf.shape
    h_pad = xw1.shape[1]
    c_pad = w2_bf.shape[1]

    grid = (n_row_pad // tm,)
    row_spec = lambda shape: pl.BlockSpec(shape, lambda i: (i, 0))
    full_spec = lambda shape: pl.BlockSpec(shape, lambda i: (0, 0))
    cparams = pltpu.CompilerParams(dimension_semantics=("parallel",))

    ce1 = pl.CostEstimate(
        flops=2 * n_row_pad * n_col_pad * h_pad + 2 * n_row_pad * h_pad * c_pad,
        transcendentals=0,
        bytes_accessed=(n_row_pad * n_col_pad * 2 + n_col_pad * h_pad * 2
                        + h_pad * c_pad * 2 + h_pad * 4 + n_row_pad * c_pad * 2))
    ce2 = pl.CostEstimate(
        flops=2 * n_row_pad * n_col_pad * c_pad + 6 * n_row_pad * c_pad,
        transcendentals=n_row_pad * c_pad + n_row_pad,
        bytes_accessed=(n_row_pad * n_col_pad * 2 + n_col_pad * c_pad * 2
                        + c_pad * 4 + n_row_pad * c_pad * 4))

    # -------- layer 1 (A pass #1) --------
    hw2 = pl.pallas_call(
        gcn_layer1_kernel,
        out_shape=jax.ShapeDtypeStruct((n_row_pad, c_pad), jnp.bfloat16),
        grid_spec=pltpu.PrefetchScalarGridSpec(
            num_scalar_prefetch=0,
            grid=grid,
            in_specs=[
                row_spec((tm, n_col_pad)),       # A row tile
                full_spec((n_col_pad, h_pad)),   # x @ W1 (grid-invariant)
                full_spec((h_pad, c_pad)),       # W2
                full_spec((1, h_pad)),           # b1
            ],
            out_specs=row_spec((tm, c_pad)),
        ),
        compiler_params=cparams,
        cost_estimate=ce1,
    )(a_bf, xw1, w2_bf, b1_p)

    # -------- layer 2 (A pass #2) --------
    out_p = pl.pallas_call(
        gcn_layer2_kernel,
        out_shape=jax.ShapeDtypeStruct((n_row_pad, c_pad), jnp.float32),
        grid_spec=pltpu.PrefetchScalarGridSpec(
            num_scalar_prefetch=0,
            grid=grid,
            in_specs=[
                row_spec((tm, n_col_pad)),       # A row tile
                # only the first n_col_pad rows of hw2 participate (A's extra
                # padded columns are zero), so present a lane/sublane-aligned
                # (n_col_pad, c_pad) grid-invariant block:
                full_spec((n_col_pad, c_pad)),
                full_spec((1, c_pad)),           # b2 (padded cols = -1e30)
            ],
            out_specs=row_spec((tm, c_pad)),
        ),
        compiler_params=cparams,
        cost_estimate=ce2,
    )(a_bf, hw2, b2_p)

    return out_p[:n, :c]


def gcn_forward(a_hat, x, w1, b1, w2, b2, *, tm=512):
    """Convenience wrapper (re-pads every call; prefer gcn_prepare + gcn_forward_prepared)."""
    operands, meta = gcn_prepare(a_hat, x, w1, b1, w2, b2, tm=tm)
    return gcn_forward_prepared(*operands, **meta)


def normalized_adjacency(edge_index, num_nodes):
    """Dense D^-1/2 (A + I) D^-1/2 from an edge_index of shape (2, E)."""
    src, dst = edge_index[0], edge_index[1]
    a = jnp.zeros((num_nodes, num_nodes), jnp.float32)
    a = a.at[dst, src].set(1.0)
    a = a.at[src, dst].set(1.0)                      # make symmetric
    a = a + jnp.eye(num_nodes, dtype=jnp.float32)    # add self-loops
    a = jnp.clip(a, 0.0, 1.0)
    deg = jnp.sum(a, axis=1)                         # >= 1 thanks to self-loops
    d_inv_sqrt = 1.0 / jnp.sqrt(deg)
    return d_inv_sqrt[:, None] * a * d_inv_sqrt[None, :]


if __name__ == "__main__":
    # Small synthetic stand-in for Cora (1433 feats / 7 classes) sized so the
    # row pipeline still runs multiple tiles at TM=512 (grid = 1024/512 = 2).
    N_NODES = 1024
    F_IN = 64
    HIDDEN = 16
    N_CLASSES = 7
    N_EDGES = 4096

    key = jax.random.PRNGKey(0)
    k_x, k_src, k_dst, k_w1, k_w2 = jax.random.split(key, 5)

    x = jax.random.normal(k_x, (N_NODES, F_IN), dtype=jnp.float32)
    edge_index = jnp.stack([
        jax.random.randint(k_src, (N_EDGES,), 0, N_NODES),
        jax.random.randint(k_dst, (N_EDGES,), 0, N_NODES),
    ]).astype(jnp.int32)

    # Deterministic Glorot-style parameter init (GCNConv weights + bias).
    lim1 = (6.0 / (F_IN + HIDDEN)) ** 0.5
    w1 = jax.random.uniform(k_w1, (F_IN, HIDDEN), jnp.float32, -lim1, lim1)
    b1 = jnp.zeros((1, HIDDEN), jnp.float32)
    lim2 = (6.0 / (HIDDEN + N_CLASSES)) ** 0.5
    w2 = jax.random.uniform(k_w2, (HIDDEN, N_CLASSES), jnp.float32, -lim2, lim2)
    b2 = jnp.zeros((1, N_CLASSES), jnp.float32)

    a_hat = normalized_adjacency(edge_index, N_NODES)

    # One-time prep (padding + bf16 cast + x @ W1) hoisted out of the forward path.
    operands, meta = gcn_prepare(a_hat, x, w1, b1, w2, b2, tm=512)
    operands = jax.block_until_ready(operands)

    out = gcn_forward_prepared(*operands, **meta)
    jax.block_until_ready(out)

    # Pure-f32 reference of the same forward pass.
    h1_ref = jnp.maximum(a_hat @ (x @ w1) + b1, 0.0)
    logits_ref = a_hat @ (h1_ref @ w2) + b2
    ref = jax.nn.log_softmax(logits_ref, axis=1)

    row_sums = jnp.exp(out).sum(axis=1)
    assert out.shape == (N_NODES, N_CLASSES)
    assert bool(jnp.all(jnp.isfinite(out)))
    assert jnp.allclose(row_sums, 1.0, atol=1e-4)
    max_err = float(jnp.max(jnp.abs(out - ref)))
    assert max_err < 5e-2, f"max abs err vs f32 reference: {max_err}"

    print("KERNEL_OK")
</pallas_src>

<mosaic_0001>
module attributes {stable_mosaic.version = 11 : i64} {
  func.func @gcn_layer2_kernel(%arg0: i32, %arg1: memref<512x1024xbf16, #tpu.memory_space<vmem>>, %arg2: memref<1024x128xbf16, #tpu.memory_space<vmem>>, %arg3: memref<1x128xf32, #tpu.memory_space<vmem>>, %arg4: memref<512x128xf32, #tpu.memory_space<vmem>>) attributes {dimension_semantics = [#tpu.dimension_semantics<parallel>], iteration_bounds = array<i64: 2>, scalar_prefetch = 0 : i64, scratch_operands = 0 : i64, tpu.core_type = #tpu.core_type<tc>, window_params = [{transform_indices = @transform_0, window_bounds = array<i64: 512, 1024>}, {pipeline_mode = #tpu.pipeline_mode<synchronous>, transform_indices = @transform_1, window_bounds = array<i64: 1024, 128>}, {pipeline_mode = #tpu.pipeline_mode<synchronous>, transform_indices = @transform_2, window_bounds = array<i64: 1, 128>}, {transform_indices = @transform_3, window_bounds = array<i64: 512, 128>}]} {
    %c0 = arith.constant 0 : index
    %c0_0 = arith.constant 0 : index
    %0 = vector.load %arg1[%c0, %c0_0] : memref<512x1024xbf16, #tpu.memory_space<vmem>>, vector<512x1024xbf16>
    %c0_1 = arith.constant 0 : index
    %c0_2 = arith.constant 0 : index
    %1 = vector.load %arg2[%c0_1, %c0_2] : memref<1024x128xbf16, #tpu.memory_space<vmem>>, vector<1024x128xbf16>
    %cst = arith.constant dense<0.000000e+00> : vector<512x128xf32>
    %2 = tpu.matmul %0, %1, %cst {dimension_numbers = #tpu.dot_dimension_numbers<[1], [0], [0], [1], [0, 0, 1, 1], [], []>} : vector<512x1024xbf16>, vector<1024x128xbf16>, vector<512x128xf32> -> vector<512x128xf32>
    %c0_3 = arith.constant 0 : index
    %c0_4 = arith.constant 0 : index
    %3 = vector.load %arg3[%c0_3, %c0_4] : memref<1x128xf32, #tpu.memory_space<vmem>>, vector<1x128xf32>
    %4 = vector.broadcast %3 : vector<1x128xf32> to vector<512x128xf32>
    %5 = arith.addf %2, %4 : vector<512x128xf32>
    %cst_5 = arith.constant dense<0xFF800000> : vector<512xf32>
    %6 = vector.multi_reduction <maximumf>, %5, %cst_5 [1] : vector<512x128xf32> to vector<512xf32>
    %7 = vector.shape_cast %6 : vector<512xf32> to vector<512x1xf32>
    %8 = vector.broadcast %7 : vector<512x1xf32> to vector<512x128xf32>
    %9 = arith.subf %5, %8 : vector<512x128xf32>
    %10 = math.exp %9 : vector<512x128xf32>
    %cst_6 = arith.constant dense<0.000000e+00> : vector<512xf32>
    %11 = vector.multi_reduction <add>, %10, %cst_6 [1] : vector<512x128xf32> to vector<512xf32>
    %12 = vector.shape_cast %11 : vector<512xf32> to vector<512x1xf32>
    %13 = math.log %12 : vector<512x1xf32>
    %14 = vector.broadcast %13 : vector<512x1xf32> to vector<512x128xf32>
    %15 = arith.subf %9, %14 : vector<512x128xf32>
    %c0_7 = arith.constant 0 : index
    %c0_8 = arith.constant 0 : index
    %16 = vector.load %arg4[%c0_7, %c0_8] : memref<512x128xf32, #tpu.memory_space<vmem>>, vector<512x128xf32>
    tpu.vector_store %arg4[%c0_7, %c0_8], %15 {strides = array<i32>} : memref<512x128xf32, #tpu.memory_space<vmem>>, vector<512x128xf32>,
    return
  }
  func.func @transform_0(%arg0: i32) -> (i32, i32) {
    %c0_i32 = arith.constant 0 : i32
    %c0_i32_0 = arith.constant 0 : i32
    return %arg0, %c0_i32 : i32, i32
  }
  func.func @transform_1(%arg0: i32) -> (i32, i32) {
    %c0_i32 = arith.constant 0 : i32
    %c0_i32_0 = arith.constant 0 : i32
    %c0_i32_1 = arith.constant 0 : i32
    return %c0_i32, %c0_i32_0 : i32, i32
  }
  func.func @transform_2(%arg0: i32) -> (i32, i32) {
    %c0_i32 = arith.constant 0 : i32
    %c0_i32_0 = arith.constant 0 : i32
    %c0_i32_1 = arith.constant 0 : i32
    return %c0_i32, %c0_i32_0 : i32, i32
  }
  func.func @transform_3(%arg0: i32) -> (i32, i32) {
    %c0_i32 = arith.constant 0 : i32
    %c0_i32_0 = arith.constant 0 : i32
    return %arg0, %c0_i32 : i32, i32
  }
}

module attributes {stable_mosaic.version = 11 : i64} {
  func.func @gcn_layer1_kernel(%arg0: i32, %arg1: memref<512x1024xbf16, #tpu.memory_space<vmem>>, %arg2: memref<1024x128xbf16, #tpu.memory_space<vmem>>, %arg3: memref<128x128xbf16, #tpu.memory_space<vmem>>, %arg4: memref<1x128xf32, #tpu.memory_space<vmem>>, %arg5: memref<512x128xbf16, #tpu.memory_space<vmem>>) attributes {dimension_semantics = [#tpu.dimension_semantics<parallel>], iteration_bounds = array<i64: 2>, scalar_prefetch = 0 : i64, scratch_operands = 0 : i64, tpu.core_type = #tpu.core_type<tc>, window_params = [{transform_indices = @transform_0, window_bounds = array<i64: 512, 1024>}, {pipeline_mode = #tpu.pipeline_mode<synchronous>, transform_indices = @transform_1, window_bounds = array<i64: 1024, 128>}, {pipeline_mode = #tpu.pipeline_mode<synchronous>, transform_indices = @transform_2, window_bounds = array<i64: 128, 128>}, {pipeline_mode = #tpu.pipeline_mode<synchronous>, transform_indices = @transform_3, window_bounds = array<i64: 1, 128>}, {transform_indices = @transform_4, window_bounds = array<i64: 512, 128>}]} {
    %c0 = arith.constant 0 : index
    %c0_0 = arith.constant 0 : index
    %0 = vector.load %arg1[%c0, %c0_0] : memref<512x1024xbf16, #tpu.memory_space<vmem>>, vector<512x1024xbf16>
    %c0_1 = arith.constant 0 : index
    %c0_2 = arith.constant 0 : index
    %1 = vector.load %arg2[%c0_1, %c0_2] : memref<1024x128xbf16, #tpu.memory_space<vmem>>, vector<1024x128xbf16>
    %cst = arith.constant dense<0.000000e+00> : vector<512x128xf32>
    %2 = tpu.matmul %0, %1, %cst {dimension_numbers = #tpu.dot_dimension_numbers<[1], [0], [0], [1], [0, 0, 1, 1], [], []>} : vector<512x1024xbf16>, vector<1024x128xbf16>, vector<512x128xf32> -> vector<512x128xf32>
    %c0_3 = arith.constant 0 : index
    %c0_4 = arith.constant 0 : index
    %3 = vector.load %arg4[%c0_3, %c0_4] : memref<1x128xf32, #tpu.memory_space<vmem>>, vector<1x128xf32>
    %4 = vector.broadcast %3 : vector<1x128xf32> to vector<512x128xf32>
    %5 = arith.addf %2, %4 : vector<512x128xf32>
    %cst_5 = arith.constant 0.000000e+00 : f32
    %6 = vector.broadcast %cst_5 : f32 to vector<512x128xf32>
    %7 = arith.maximumf %5, %6 : vector<512x128xf32>
    %8 = arith.truncf %7 : vector<512x128xf32> to vector<512x128xbf16>
    %c0_6 = arith.constant 0 : index
    %c0_7 = arith.constant 0 : index
    %9 = vector.load %arg3[%c0_6, %c0_7] : memref<128x128xbf16, #tpu.memory_space<vmem>>, vector<128x128xbf16>
    %cst_8 = arith.constant dense<0.000000e+00> : vector<512x128xf32>
    %10 = tpu.matmul %8, %9, %cst_8 {dimension_numbers = #tpu.dot_dimension_numbers<[1], [0], [0], [1], [0, 0, 1, 1], [], []>} : vector<512x128xbf16>, vector<128x128xbf16>, vector<512x128xf32> -> vector<512x128xf32>
    %11 = arith.truncf %10 : vector<512x128xf32> to vector<512x128xbf16>
    %c0_9 = arith.constant 0 : index
    %c0_10 = arith.constant 0 : index
    %12 = vector.load %arg5[%c0_9, %c0_10] : memref<512x128xbf16, #tpu.memory_space<vmem>>, vector<512x128xbf16>
    tpu.vector_store %arg5[%c0_9, %c0_10], %11 {strides = array<i32>} : memref<512x128xbf16, #tpu.memory_space<vmem>>, vector<512x128xbf16>,
    return
  }
  func.func @transform_0(%arg0: i32) -> (i32, i32) {
    %c0_i32 = arith.constant 0 : i32
    %c0_i32_0 = arith.constant 0 : i32
    return %arg0, %c0_i32 : i32, i32
  }
  func.func @transform_1(%arg0: i32) -> (i32, i32) {
    %c0_i32 = arith.constant 0 : i32
    %c0_i32_0 = arith.constant 0 : i32
    %c0_i32_1 = arith.constant 0 : i32
    return %c0_i32, %c0_i32_0 : i32, i32
  }
  func.func @transform_2(%arg0: i32) -> (i32, i32) {
    %c0_i32 = arith.constant 0 : i32
    %c0_i32_0 = arith.constant 0 : i32
    %c0_i32_1 = arith.constant 0 : i32
    return %c0_i32, %c0_i32_0 : i32, i32
  }
  func.func @transform_3(%arg0: i32) -> (i32, i32) {
    %c0_i32 = arith.constant 0 : i32
    %c0_i32_0 = arith.constant 0 : i32
    %c0_i32_1 = arith.constant 0 : i32
    return %c0_i32, %c0_i32_0 : i32, i32
  }
  func.func @transform_4(%arg0: i32) -> (i32, i32) {
    %c0_i32 = arith.constant 0 : i32
    %c0_i32_0 = arith.constant 0 : i32
    return %arg0, %c0_i32 : i32, i32
  }
}

</mosaic_0001>

<llo_original>
// kernel: gcn_forward_prepared.3
$region0: #{gcn_forward_prepared.3}
  #allocation0 [shape = 'u32[]', space=smem, size = 0x4, offset = 0x4, fixed_abs, tag = 'smem constant byte address 0x4 - core index']
  #allocation1 [shape = 'u32[144,128]{1,0:T(1,128)}', space=vmem, size = 0x12000, scoped, tag = 'internal scratch']
  %s0 = inlined_call_operand.vmem [shape: bf16[1024,1024], index: 0, kind: input, shape index: {}]
  %s1 = inlined_call_operand.vmem [shape: bf16[1024,128], index: 1, kind: input, shape index: {}]
  %s2 = inlined_call_operand.vmem [shape: f32[1,128], index: 2, kind: input, shape index: {}]
  %s3 = inlined_call_operand.vmem [shape: f32[1024,128], index: 3, kind: output, shape index: {}]
  %s4 = sld [smem:[#allocation0]]
  $region45: #{gcn_forward_prepared.3} parent=0
    _
  %s6 = ssub.s32 1, %s4
  %s7 = scalar_select 0, %s6, %s4
  loop: start=0, step=1, limit=4
  $region2: #{gcn_forward_prepared.3} parent=0 // loop_pre_header
    _
  $region3: #{gcn_forward_prepared.3} parent=0 // loop_header
    %s9 = sphi 0, %s13
    %p10 = scmp.ge.s32.totalorder %s9, 4
    %s19 = sphi 0, %s21
    %s22 = sphi 0, %s19
    %s23 = sphi 0, %s22
    %s39 = sphi 0, %s23
    %s43 = sphi 0, %s43
    %s45 = sphi 0, %s43
    %s46 = sphi 0, %s45
    %s60 = sphi 0, %s46
    %s64 = sphi 0, %s64
    %s66 = sphi 0, %s64
    %s67 = sphi 0, %s66
    %s81 = sphi 0, %s67
    %s87 = sphi 0, %s89
    %s90 = sphi 0, %s87
    %s91 = sphi 0, %s90
    %s107 = sphi 0, %s91
  $region4: #{gcn_forward_prepared.3} parent=0 // loop_header_branch
    %12 = sbr.rel (%p10) target = $region8
  $region5: #{gcn_forward_prepared.3} parent=0 // loop_body
    %s14 = ssub.s32 %s9, 1
    %s15 = ssub.s32 %s9, 2
    %s16 = sadd.s32 %s9, 1
    %s17 = ssub.s32 %s9, %s16
    %p18 = scmp.eq.s32.totalorder %s17, 0
    %s20 = sadd.s32 %s19, 1
    %s21 = scalar_select %p18, %s19, %s20
    %p24 = pneg %p18
    %p25 = scmp.eq.s32.totalorder %s9, 1
    %p26 = por %p24, %p25
    %p27 = scmp.ne.s32.totalorder %s19, %s22
    %p28 = scmp.eq.s32.totalorder %s9, 0
    %p29 = por %p27, %p28
    %p30 = scmp.ne.s32.totalorder %s19, %s22
    %p31 = scmp.eq.s32.totalorder %s14, 1
    %p32 = por %p30, %p31
    %p33 = scmp.ne.s32.totalorder %s22, %s23
    %p34 = scmp.eq.s32.totalorder %s14, 0
    %p35 = por %p33, %p34
    %p36 = scmp.ne.s32.totalorder %s22, %s23
    %p37 = scmp.eq.s32.totalorder %s15, 1
    %p38 = por %p36, %p37
    %p40 = scmp.ne.s32.totalorder %s23, %s39
    %p41 = scmp.eq.s32.totalorder %s15, 0
    %p42 = por %p40, %p41
    %s44 = sadd.s32 %s43, 1
    %p47 = scmp.eq.s32.totalorder %s9, 1
    %p48 = scmp.ne.s32.totalorder %s43, %s45
    %p49 = scmp.eq.s32.totalorder %s9, 0
    %p50 = por %p48, %p49
    %p51 = scmp.ne.s32.totalorder %s43, %s45
    %p52 = scmp.eq.s32.totalorder %s14, 1
    %p53 = por %p51, %p52
    %p54 = scmp.ne.s32.totalorder %s45, %s46
    %p55 = scmp.eq.s32.totalorder %s14, 0
    %p56 = por %p54, %p55
    %p57 = scmp.ne.s32.totalorder %s45, %s46
    %p58 = scmp.eq.s32.totalorder %s15, 1
    %p59 = por %p57, %p58
    %p61 = scmp.ne.s32.totalorder %s46, %s60
    %p62 = scmp.eq.s32.totalorder %s15, 0
    %p63 = por %p61, %p62
    %s65 = sadd.s32 %s64, 1
    %p68 = scmp.eq.s32.totalorder %s9, 1
    %p69 = scmp.ne.s32.totalorder %s64, %s66
    %p70 = scmp.eq.s32.totalorder %s9, 0
    %p71 = por %p69, %p70
    %p72 = scmp.ne.s32.totalorder %s64, %s66
    %p73 = scmp.eq.s32.totalorder %s14, 1
    %p74 = por %p72, %p73
    %p75 = scmp.ne.s32.totalorder %s66, %s67
    %p76 = scmp.eq.s32.totalorder %s14, 0
    %p77 = por %p75, %p76
    %p78 = scmp.ne.s32.totalorder %s66, %s67
    %p79 = scmp.eq.s32.totalorder %s15, 1
    %p80 = por %p78, %p79
    %p82 = scmp.ne.s32.totalorder %s67, %s81
    %p83 = scmp.eq.s32.totalorder %s15, 0
    %p84 = por %p82, %p83
    %s85 = ssub.s32 %s9, %s16
    %p86 = scmp.eq.s32.totalorder %s85, 0
    %s88 = sadd.s32 %s87, 1
    %s89 = scalar_select %p86, %s87, %s88
    %p92 = pneg %p86
    %p93 = scmp.eq.s32.totalorder %s9, 1
    %p94 = por %p92, %p93
    %p95 = scmp.ne.s32.totalorder %s87, %s90
    %p96 = scmp.eq.s32.totalorder %s9, 0
    %p97 = por %p95, %p96
    %p98 = scmp.ne.s32.totalorder %s87, %s90
    %p99 = scmp.eq.s32.totalorder %s14, 1
    %p100 = por %p98, %p99
    %p101 = scmp.ne.s32.totalorder %s90, %s91
    %p102 = scmp.eq.s32.totalorder %s14, 0
    %p103 = por %p101, %p102
    %p104 = scmp.ne.s32.totalorder %s90, %s91
    %p105 = scmp.eq.s32.totalorder %s15, 1
    %p106 = por %p104, %p105
    %p108 = scmp.ne.s32.totalorder %s91, %s107
    %p109 = scmp.eq.s32.totalorder %s15, 0
    %p110 = por %p108, %p109
    %p111 = scmp.le.s32.totalorder 1, %s9
    %p112 = scmp.lt.s32.totalorder %s9, 3
    %p113 = pnand %p111, %p112
    %p114 = pneg %p113
    // Predicated region
    $region9: #{gcn_forward_prepared.3} parent=5 // pred_check
      _
    $region10: #{gcn_forward_prepared.3} parent=5 // pred_check_branch
      %116 = sbr.rel (%p113) target = $region12
    $region11: #{gcn_forward_prepared.3} parent=5 // pred_region
      %s117 = ssub.s32 %s9, 1
      // Predicated region
      $region13: #{gcn_forward_prepared.3} parent=11 // pred_check
        %p118 = pneg %p56
      $region14: #{gcn_forward_prepared.3} parent=11 // pred_check_branch
        %120 = sbr.rel (%p118) target = $region16
      $region15: #{gcn_forward_prepared.3} parent=11 // pred_region
        _
      $region16: #{gcn_forward_prepared.3} parent=11 // pred_fallthru
        _
      // Predicated region
      $region17: #{gcn_forward_prepared.3} parent=11 // pred_check
        %p121 = pneg %p77
      $region18: #{gcn_forward_prepared.3} parent=11 // pred_check_branch
        %123 = sbr.rel (%p121) target = $region20
      $region19: #{gcn_forward_prepared.3} parent=11 // pred_region
        _
      $region20: #{gcn_forward_prepared.3} parent=11 // pred_fallthru
        _
    $region12: #{gcn_forward_prepared.3} parent=5 // pred_fallthru
      _
    %p124 = scmp.lt.s32.totalorder %s9, 2
    // Predicated region
    $region21: #{gcn_forward_prepared.3} parent=5 // pred_check
      %p125 = pneg %p124
    $region22: #{gcn_forward_prepared.3} parent=5 // pred_check_branch
      %127 = sbr.rel (%p125) target = $region24
    $region23: #{gcn_forward_prepared.3} parent=5 // pred_region
      // Predicated region
      $region25: #{gcn_forward_prepared.3} parent=23 // pred_check
        %p128 = pneg %p29
      $region26: #{gcn_forward_prepared.3} parent=23 // pred_check_branch
        %130 = sbr.rel (%p128) target = $region28
      $region27: #{gcn_forward_prepared.3} parent=23 // pred_region
        %s131 = smul.u32 64, %s9
        %p132 = scmp.lt.s32.totalorder %s131, 127
        %s133 = scalar_select %p132, %s131, 127
        %s134 = smul.addr %s133, 8
        %s135 = smul.addr %s134, 4
        %s136 = scalar_lea.vmem %s0, %s135
        %s137 = smul.u32 64, %s9
      $region28: #{gcn_forward_prepared.3} parent=23 // pred_fallthru
        _
    $region24: #{gcn_forward_prepared.3} parent=5 // pred_fallthru
      _
    %p138 = scmp.le.s32.totalorder 1, %s9
    %p139 = scmp.lt.s32.totalorder %s9, 3
    %p140 = pnand %p138, %p139
    %p141 = pneg %p140
    // Predicated region
    $region29: #{gcn_forward_prepared.3} parent=5 // pred_check
      _
    $region30: #{gcn_forward_prepared.3} parent=5 // pred_check_branch
      %143 = sbr.rel (%p140) target = $region32
    $region31: #{gcn_forward_prepared.3} parent=5 // pred_region
      %s144 = ssub.s32 %s9, 1
      %s145 = smul.u32 64, %s14
      %p146 = scmp.lt.s32.totalorder %s145, 127
      %s147 = scalar_select %p146, %s145, 127
      %s148 = smul.addr %s147, 8
      %s149 = smul.addr %s148, 4
      %s150 = scalar_lea.vmem %s0, %s149
      %p151 = pneg %p35
      %p152 = pneg %p32
      %p153 = pneg %p56
      %p154 = pneg %p53
      %p155 = pneg %p77
      %p156 = pneg %p74
      %p157 = pneg %p103
      %p158 = pneg %p100
      %s159 = smul.u32 64, %s14
      %p160 = scmp.lt.s32.totalorder %s159, 127
      %s161 = scalar_select %p160, %s159, 127
      %s162 = smul.addr %s161, 8
      %s163 = scalar_lea.vmem %s3, %s162
      %s164 = smul.u32 64, %s14
      %p165 = scmp.lt.s32.totalorder %s164, 127
      %s166 = scalar_select %p165, %s164, 127
      %s167 = smul.addr %s166, 8
      %s168 = smul.addr %s167, 4
      %s169 = scalar_lea.vmem %s0, %s168
      %s170 = smul.u32 64, %s14
      %s171 = smul.u32 64, %s14
      %p172 = scmp.lt.s32.totalorder %s171, 127
      %s173 = scalar_select %p172, %s171, 127
      %s174 = smul.addr %s173, 8
      %s175 = scalar_lea.vmem %s3, %s174
      %s176 = smul.u32 64, %s14
      %v178 = vld [vmem:[%s169] sm:$0xff]
      %v179 = vld [vmem:[%s169 + $0x8] sm:$0xff]
      %v180 = vld [vmem:[%s169 + $0x10] sm:$0xff]
      %v181 = vld [vmem:[%s169 + $0x18] sm:$0xff]
      %v182 = vld [vmem:[%s169 + $0x20] sm:$0xff]
      %v183 = vld [vmem:[%s169 + $0x28] sm:$0xff]
      %v184 = vld [vmem:[%s169 + $0x30] sm:$0xff]
      %v185 = vld [vmem:[%s169 + $0x38] sm:$0xff]
      %v186 = vld [vmem:[%s169 + $0x40] sm:$0xff]
      %v187 = vld [vmem:[%s169 + $0x48] sm:$0xff]
      %v188 = vld [vmem:[%s169 + $0x50] sm:$0xff]
      %v189 = vld [vmem:[%s169 + $0x58] sm:$0xff]
      %v190 = vld [vmem:[%s169 + $0x60] sm:$0xff]
      %v191 = vld [vmem:[%s169 + $0x68] sm:$0xff]
      %v192 = vld [vmem:[%s169 + $0x70] sm:$0xff]
      %v193 = vld [vmem:[%s169 + $0x78] sm:$0xff]
      %v194 = vld [vmem:[%s169 + $0x80] sm:$0xff]
      %v195 = vld [vmem:[%s169 + $0x88] sm:$0xff]
      %v196 = vld [vmem:[%s169 + $0x90] sm:$0xff]
      %v197 = vld [vmem:[%s169 + $0x98] sm:$0xff]
      %v198 = vld [vmem:[%s169 + $0xa0] sm:$0xff]
      %v199 = vld [vmem:[%s169 + $0xa8] sm:$0xff]
      %v200 = vld [vmem:[%s169 + $0xb0] sm:$0xff]
      %v201 = vld [vmem:[%s169 + $0xb8] sm:$0xff]
      %v202 = vld [vmem:[%s169 + $0xc0] sm:$0xff]
      %v203 = vld [vmem:[%s169 + $0xc8] sm:$0xff]
      %v204 = vld [vmem:[%s169 + $0xd0] sm:$0xff]
      %v205 = vld [vmem:[%s169 + $0xd8] sm:$0xff]
      %v206 = vld [vmem:[%s169 + $0xe0] sm:$0xff]
      %v207 = vld [vmem:[%s169 + $0xe8] sm:$0xff]
      %v208 = vld [vmem:[%s169 + $0xf0] sm:$0xff]
      %v209 = vld [vmem:[%s169 + $0xf8] sm:$0xff]
      %v210 = vld [vmem:[%s169 + $0x100] sm:$0xff]
      %v211 = vld [vmem:[%s169 + $0x108] sm:$0xff]
      %v212 = vld [vmem:[%s169 + $0x110] sm:$0xff]
      %v213 = vld [vmem:[%s169 + $0x118] sm:$0xff]
      %v214 = vld [vmem:[%s169 + $0x120] sm:$0xff]
      %v215 = vld [vmem:[%s169 + $0x128] sm:$0xff]
      %v216 = vld [vmem:[%s169 + $0x130] sm:$0xff]
      %v217 = vld [vmem:[%s169 + $0x138] sm:$0xff]
      %v218 = vld [vmem:[%s169 + $0x140] sm:$0xff]
      %v219 = vld [vmem:[%s169 + $0x148] sm:$0xff]
      %v220 = vld [vmem:[%s169 + $0x150] sm:$0xff]
      %v221 = vld [vmem:[%s169 + $0x158] sm:$0xff]
      %v222 = vld [vmem:[%s169 + $0x160] sm:$0xff]
      %v223 = vld [vmem:[%s169 + $0x168] sm:$0xff]
      %v224 = vld [vmem:[%s169 + $0x170] sm:$0xff]
      %v225 = vld [vmem:[%s169 + $0x178] sm:$0xff]
      %v226 = vld [vmem:[%s169 + $0x180] sm:$0xff]
      %v227 = vld [vmem:[%s169 + $0x188] sm:$0xff]
      %v228 = vld [vmem:[%s169 + $0x190] sm:$0xff]
      %v229 = vld [vmem:[%s169 + $0x198] sm:$0xff]
      %v230 = vld [vmem:[%s169 + $0x1a0] sm:$0xff]
      %v231 = vld [vmem:[%s169 + $0x1a8] sm:$0xff]
      %v232 = vld [vmem:[%s169 + $0x1b0] sm:$0xff]
      %v233 = vld [vmem:[%s169 + $0x1b8] sm:$0xff]
      %v234 = vld [vmem:[%s169 + $0x1c0] sm:$0xff]
      %v235 = vld [vmem:[%s169 + $0x1c8] sm:$0xff]
      %v236 = vld [vmem:[%s169 + $0x1d0] sm:$0xff]
      %v237 = vld [vmem:[%s169 + $0x1d8] sm:$0xff]
      %v238 = vld [vmem:[%s169 + $0x1e0] sm:$0xff]
      %v239 = vld [vmem:[%s169 + $0x1e8] sm:$0xff]
      %v240 = vld [vmem:[%s169 + $0x1f0] sm:$0xff]
      %v241 = vld [vmem:[%s169 + $0x1f8] sm:$0xff]
      %v242 = vld [vmem:[%s169 + $0x200] sm:$0xff]
      %v243 = vld [vmem:[%s169 + $0x208] sm:$0xff]
      %v244 = vld [vmem:[%s169 + $0x210] sm:$0xff]
      %v245 = vld [vmem:[%s169 + $0x218] sm:$0xff]
      %v246 = vld [vmem:[%s169 + $0x220] sm:$0xff]
      %v247 = vld [vmem:[%s169 + $0x228] sm:$0xff]
      %v248 = vld [vmem:[%s169 + $0x230] sm:$0xff]
      %v249 = vld [vmem:[%s169 + $0x238] sm:$0xff]
      %v250 = vld [vmem:[%s169 + $0x240] sm:$0xff]
      %v251 = vld [vmem:[%s169 + $0x248] sm:$0xff]
      %v252 = vld [vmem:[%s169 + $0x250] sm:$0xff]
      %v253 = vld [vmem:[%s169 + $0x258] sm:$0xff]
      %v254 = vld [vmem:[%s169 + $0x260] sm:$0xff]
      %v255 = vld [vmem:[%s169 + $0x268] sm:$0xff]
      %v256 = vld [vmem:[%s169 + $0x270] sm:$0xff]
      %v257 = vld [vmem:[%s169 + $0x278] sm:$0xff]
      %v258 = vld [vmem:[%s169 + $0x280] sm:$0xff]
      %v259 = vld [vmem:[%s169 + $0x288] sm:$0xff]
      %v260 = vld [vmem:[%s169 + $0x290] sm:$0xff]
      %v261 = vld [vmem:[%s169 + $0x298] sm:$0xff]
      %v262 = vld [vmem:[%s169 + $0x2a0] sm:$0xff]
      %v263 = vld [vmem:[%s169 + $0x2a8] sm:$0xff]
      %v264 = vld [vmem:[%s169 + $0x2b0] sm:$0xff]
      %v265 = vld [vmem:[%s169 + $0x2b8] sm:$0xff]
      %v266 = vld [vmem:[%s169 + $0x2c0] sm:$0xff]
      %v267 = vld [vmem:[%s169 + $0x2c8] sm:$0xff]
      %v268 = vld [vmem:[%s169 + $0x2d0] sm:$0xff]
      %v269 = vld [vmem:[%s169 + $0x2d8] sm:$0xff]
      %v270 = vld [vmem:[%s169 + $0x2e0] sm:$0xff]
      %v271 = vld [vmem:[%s169 + $0x2e8] sm:$0xff]
      %v272 = vld [vmem:[%s169 + $0x2f0] sm:$0xff]
      %v273 = vld [vmem:[%s169 + $0x2f8] sm:$0xff]
      %v274 = vld [vmem:[%s169 + $0x300] sm:$0xff]
      %v275 = vld [vmem:[%s169 + $0x308] sm:$0xff]
      %v276 = vld [vmem:[%s169 + $0x310] sm:$0xff]
      %v277 = vld [vmem:[%s169 + $0x318] sm:$0xff]
      %v278 = vld [vmem:[%s169 + $0x320] sm:$0xff]
      %v279 = vld [vmem:[%s169 + $0x328] sm:$0xff]
      %v280 = vld [vmem:[%s169 + $0x330] sm:$0xff]
      %v281 = vld [vmem:[%s169 + $0x338] sm:$0xff]
      %v282 = vld [vmem:[%s169 + $0x340] sm:$0xff]
      %v283 = vld [vmem:[%s169 + $0x348] sm:$0xff]
      %v284 = vld [vmem:[%s169 + $0x350] sm:$0xff]
      %v285 = vld [vmem:[%s169 + $0x358] sm:$0xff]
      %v286 = vld [vmem:[%s169 + $0x360] sm:$0xff]
      %v287 = vld [vmem:[%s169 + $0x368] sm:$0xff]
      %v288 = vld [vmem:[%s169 + $0x370] sm:$0xff]
      %v289 = vld [vmem:[%s169 + $0x378] sm:$0xff]
      %v290 = vld [vmem:[%s169 + $0x380] sm:$0xff]
      %v291 = vld [vmem:[%s169 + $0x388] sm:$0xff]
      %v292 = vld [vmem:[%s169 + $0x390] sm:$0xff]
      %v293 = vld [vmem:[%s169 + $0x398] sm:$0xff]
      %v294 = vld [vmem:[%s169 + $0x3a0] sm:$0xff]
      %v295 = vld [vmem:[%s169 + $0x3a8] sm:$0xff]
      %v296 = vld [vmem:[%s169 + $0x3b0] sm:$0xff]
      %v297 = vld [vmem:[%s169 + $0x3b8] sm:$0xff]
      %v298 = vld [vmem:[%s169 + $0x3c0] sm:$0xff]
      %v299 = vld [vmem:[%s169 + $0x3c8] sm:$0xff]
      %v300 = vld [vmem:[%s169 + $0x3d0] sm:$0xff]
      %v301 = vld [vmem:[%s169 + $0x3d8] sm:$0xff]
      %v302 = vld [vmem:[%s169 + $0x3e0] sm:$0xff]
      %v303 = vld [vmem:[%s169 + $0x3e8] sm:$0xff]
      %v304 = vld [vmem:[%s169 + $0x3f0] sm:$0xff]
      %v305 = vld [vmem:[%s169 + $0x3f8] sm:$0xff]
      %v306 = vld [vmem:[%s169 + $0x400] sm:$0xff]
      %v307 = vld [vmem:[%s169 + $0x408] sm:$0xff]
      %v308 = vld [vmem:[%s169 + $0x410] sm:$0xff]
      %v309 = vld [vmem:[%s169 + $0x418] sm:$0xff]
      %v310 = vld [vmem:[%s169 + $0x420] sm:$0xff]
      %v311 = vld [vmem:[%s169 + $0x428] sm:$0xff]
      %v312 = vld [vmem:[%s169 + $0x430] sm:$0xff]
      %v313 = vld [vmem:[%s169 + $0x438] sm:$0xff]
      %v314 = vld [vmem:[%s169 + $0x440] sm:$0xff]
      %v315 = vld [vmem:[%s169 + $0x448] sm:$0xff]
      %v316 = vld [vmem:[%s169 + $0x450] sm:$0xff]
      %v317 = vld [vmem:[%s169 + $0x458] sm:$0xff]
      %v318 = vld [vmem:[%s169 + $0x460] sm:$0xff]
      %v319 = vld [vmem:[%s169 + $0x468] sm:$0xff]
      %v320 = vld [vmem:[%s169 + $0x470] sm:$0xff]
      %v321 = vld [vmem:[%s169 + $0x478] sm:$0xff]
      %v322 = vld [vmem:[%s169 + $0x480] sm:$0xff]
      %v323 = vld [vmem:[%s169 + $0x488] sm:$0xff]
      %v324 = vld [vmem:[%s169 + $0x490] sm:$0xff]
      %v325 = vld [vmem:[%s169 + $0x498] sm:$0xff]
      %v326 = vld [vmem:[%s169 + $0x4a0] sm:$0xff]
      %v327 = vld [vmem:[%s169 + $0x4a8] sm:$0xff]
      %v328 = vld [vmem:[%s169 + $0x4b0] sm:$0xff]
      %v329 = vld [vmem:[%s169 + $0x4b8] sm:$0xff]
      %v330 = vld [vmem:[%s169 + $0x4c0] sm:$0xff]
      %v331 = vld [vmem:[%s169 + $0x4c8] sm:$0xff]
      %v332 = vld [vmem:[%s169 + $0x4d0] sm:$0xff]
      %v333 = vld [vmem:[%s169 + $0x4d8] sm:$0xff]
      %v334 = vld [vmem:[%s169 + $0x4e0] sm:$0xff]
      %v335 = vld [vmem:[%s169 + $0x4e8] sm:$0xff]
      %v336 = vld [vmem:[%s169 + $0x4f0] sm:$0xff]
      %v337 = vld [vmem:[%s169 + $0x4f8] sm:$0xff]
      %v338 = vld [vmem:[%s169 + $0x500] sm:$0xff]
      %v339 = vld [vmem:[%s169 + $0x508] sm:$0xff]
      %v340 = vld [vmem:[%s169 + $0x510] sm:$0xff]
      %v341 = vld [vmem:[%s169 + $0x518] sm:$0xff]
      %v342 = vld [vmem:[%s169 + $0x520] sm:$0xff]
      %v343 = vld [vmem:[%s169 + $0x528] sm:$0xff]
      %v344 = vld [vmem:[%s169 + $0x530] sm:$0xff]
      %v345 = vld [vmem:[%s169 + $0x538] sm:$0xff]
      %v346 = vld [vmem:[%s169 + $0x540] sm:$0xff]
      %v347 = vld [vmem:[%s169 + $0x548] sm:$0xff]
      %v348 = vld [vmem:[%s169 + $0x550] sm:$0xff]
      %v349 = vld [vmem:[%s169 + $0x558] sm:$0xff]
      %v350 = vld [vmem:[%s169 + $0x560] sm:$0xff]
      %v351 = vld [vmem:[%s169 + $0x568] sm:$0xff]
      %v352 = vld [vmem:[%s169 + $0x570] sm:$0xff]
      %v353 = vld [vmem:[%s169 + $0x578] sm:$0xff]
      %v354 = vld [vmem:[%s169 + $0x580] sm:$0xff]
      %v355 = vld [vmem:[%s169 + $0x588] sm:$0xff]
      %v356 = vld [vmem:[%s169 + $0x590] sm:$0xff]
      %v357 = vld [vmem:[%s169 + $0x598] sm:$0xff]
      %v358 = vld [vmem:[%s169 + $0x5a0] sm:$0xff]
      %v359 = vld [vmem:[%s169 + $0x5a8] sm:$0xff]
      %v360 = vld [vmem:[%s169 + $0x5b0] sm:$0xff]
      %v361 = vld [vmem:[%s169 + $0x5b8] sm:$0xff]
      %v362 = vld [vmem:[%s169 + $0x5c0] sm:$0xff]
      %v363 = vld [vmem:[%s169 + $0x5c8] sm:$0xff]
      %v364 = vld [vmem:[%s169 + $0x5d0] sm:$0xff]
      %v365 = vld [vmem:[%s169 + $0x5d8] sm:$0xff]
      %v366 = vld [vmem:[%s169 + $0x5e0] sm:$0xff]
      %v367 = vld [vmem:[%s169 + $0x5e8] sm:$0xff]
      %v368 = vld [vmem:[%s169 + $0x5f0] sm:$0xff]
      %v369 = vld [vmem:[%s169 + $0x5f8] sm:$0xff]
      %v370 = vld [vmem:[%s169 + $0x600] sm:$0xff]
      %v371 = vld [vmem:[%s169 + $0x608] sm:$0xff]
      %v372 = vld [vmem:[%s169 + $0x610] sm:$0xff]
      %v373 = vld [vmem:[%s169 + $0x618] sm:$0xff]
      %v374 = vld [vmem:[%s169 + $0x620] sm:$0xff]
      %v375 = vld [vmem:[%s169 + $0x628] sm:$0xff]
      %v376 = vld [vmem:[%s169 + $0x630] sm:$0xff]
      %v377 = vld [vmem:[%s169 + $0x638] sm:$0xff]
      %v378 = vld [vmem:[%s169 + $0x640] sm:$0xff]
      %v379 = vld [vmem:[%s169 + $0x648] sm:$0xff]
      %v380 = vld [vmem:[%s169 + $0x650] sm:$0xff]
      %v381 = vld [vmem:[%s169 + $0x658] sm:$0xff]
      %v382 = vld [vmem:[%s169 + $0x660] sm:$0xff]
      %v383 = vld [vmem:[%s169 + $0x668] sm:$0xff]
      %v384 = vld [vmem:[%s169 + $0x670] sm:$0xff]
      %v385 = vld [vmem:[%s169 + $0x678] sm:$0xff]
      %v386 = vld [vmem:[%s169 + $0x680] sm:$0xff]
      %v387 = vld [vmem:[%s169 + $0x688] sm:$0xff]
      %v388 = vld [vmem:[%s169 + $0x690] sm:$0xff]
      %v389 = vld [vmem:[%s169 + $0x698] sm:$0xff]
      %v390 = vld [vmem:[%s169 + $0x6a0] sm:$0xff]
      %v391 = vld [vmem:[%s169 + $0x6a8] sm:$0xff]
      %v392 = vld [vmem:[%s169 + $0x6b0] sm:$0xff]
      %v393 = vld [vmem:[%s169 + $0x6b8] sm:$0xff]
      %v394 = vld [vmem:[%s169 + $0x6c0] sm:$0xff]
      %v395 = vld [vmem:[%s169 + $0x6c8] sm:$0xff]
      %v396 = vld [vmem:[%s169 + $0x6d0] sm:$0xff]
      %v397 = vld [vmem:[%s169 + $0x6d8] sm:$0xff]
      %v398 = vld [vmem:[%s169 + $0x6e0] sm:$0xff]
      %v399 = vld [vmem:[%s169 + $0x6e8] sm:$0xff]
      %v400 = vld [vmem:[%s169 + $0x6f0] sm:$0xff]
      %v401 = vld [vmem:[%s169 + $0x6f8] sm:$0xff]
      %v402 = vld [vmem:[%s169 + $0x700] sm:$0xff]
      %v403 = vld [vmem:[%s169 + $0x708] sm:$0xff]
      %v404 = vld [vmem:[%s169 + $0x710] sm:$0xff]
      %v405 = vld [vmem:[%s169 + $0x718] sm:$0xff]
      %v406 = vld [vmem:[%s169 + $0x720] sm:$0xff]
      %v407 = vld [vmem:[%s169 + $0x728] sm:$0xff]
      %v408 = vld [vmem:[%s169 + $0x730] sm:$0xff]
      %v409 = vld [vmem:[%s169 + $0x738] sm:$0xff]
      %v410 = vld [vmem:[%s169 + $0x740] sm:$0xff]
      %v411 = vld [vmem:[%s169 + $0x748] sm:$0xff]
      %v412 = vld [vmem:[%s169 + $0x750] sm:$0xff]
      %v413 = vld [vmem:[%s169 + $0x758] sm:$0xff]
      %v414 = vld [vmem:[%s169 + $0x760] sm:$0xff]
      %v415 = vld [vmem:[%s169 + $0x768] sm:$0xff]
      %v416 = vld [vmem:[%s169 + $0x770] sm:$0xff]
      %v417 = vld [vmem:[%s169 + $0x778] sm:$0xff]
      %v418 = vld [vmem:[%s169 + $0x780] sm:$0xff]
      %v419 = vld [vmem:[%s169 + $0x788] sm:$0xff]
      %v420 = vld [vmem:[%s169 + $0x790] sm:$0xff]
      %v421 = vld [vmem:[%s169 + $0x798] sm:$0xff]
      %v422 = vld [vmem:[%s169 + $0x7a0] sm:$0xff]
      %v423 = vld [vmem:[%s169 + $0x7a8] sm:$0xff]
      %v424 = vld [vmem:[%s169 + $0x7b0] sm:$0xff]
      %v425 = vld [vmem:[%s169 + $0x7b8] sm:$0xff]
      %v426 = vld [vmem:[%s169 + $0x7c0] sm:$0xff]
      %v427 = vld [vmem:[%s169 + $0x7c8] sm:$0xff]
      %v428 = vld [vmem:[%s169 + $0x7d0] sm:$0xff]
      %v429 = vld [vmem:[%s169 + $0x7d8] sm:$0xff]
      %v430 = vld [vmem:[%s169 + $0x7e0] sm:$0xff]
      %v431 = vld [vmem:[%s169 + $0x7e8] sm:$0xff]
      %v432 = vld [vmem:[%s169 + $0x7f0] sm:$0xff]
      %v433 = vld [vmem:[%s169 + $0x7f8] sm:$0xff]
      %v434 = vld [vmem:[%s1] sm:$0xf]
      %v435 = vld [vmem:[%s1 + $0x4] sm:$0xf]
      %v436 = vld [vmem:[%s1 + $0x8] sm:$0xf]
      %v437 = vld [vmem:[%s1 + $0xc] sm:$0xf]
      %v438 = vld [vmem:[%s1 + $0x10] sm:$0xf]
      %v439 = vld [vmem:[%s1 + $0x14] sm:$0xf]
      %v440 = vld [vmem:[%s1 + $0x18] sm:$0xf]
      %v441 = vld [vmem:[%s1 + $0x1c] sm:$0xf]
      %v442 = vld [vmem:[%s1 + $0x20] sm:$0xf]
      %v443 = vld [vmem:[%s1 + $0x24] sm:$0xf]
      %v444 = vld [vmem:[%s1 + $0x28] sm:$0xf]
      %v445 = vld [vmem:[%s1 + $0x2c] sm:$0xf]
      %v446 = vld [vmem:[%s1 + $0x30] sm:$0xf]
      %v447 = vld [vmem:[%s1 + $0x34] sm:$0xf]
      %v448 = vld [vmem:[%s1 + $0x38] sm:$0xf]
      %v449 = vld [vmem:[%s1 + $0x3c] sm:$0xf]
      %v450 = vld [vmem:[%s1 + $0x40] sm:$0xf]
      %v451 = vld [vmem:[%s1 + $0x44] sm:$0xf]
      %v452 = vld [vmem:[%s1 + $0x48] sm:$0xf]
      %v453 = vld [vmem:[%s1 + $0x4c] sm:$0xf]
      %v454 = vld [vmem:[%s1 + $0x50] sm:$0xf]
      %v455 = vld [vmem:[%s1 + $0x54] sm:$0xf]
      %v456 = vld [vmem:[%s1 + $0x58] sm:$0xf]
      %v457 = vld [vmem:[%s1 + $0x5c] sm:$0xf]
      %v458 = vld [vmem:[%s1 + $0x60] sm:$0xf]
      %v459 = vld [vmem:[%s1 + $0x64] sm:$0xf]
      %v460 = vld [vmem:[%s1 + $0x68] sm:$0xf]
      %v461 = vld [vmem:[%s1 + $0x6c] sm:$0xf]
      %v462 = vld [vmem:[%s1 + $0x70] sm:$0xf]
      %v463 = vld [vmem:[%s1 + $0x74] sm:$0xf]
      %v464 = vld [vmem:[%s1 + $0x78] sm:$0xf]
      %v465 = vld [vmem:[%s1 + $0x7c] sm:$0xf]
      %v466 = vld [vmem:[%s1 + $0x80] sm:$0xf]
      %v467 = vld [vmem:[%s1 + $0x84] sm:$0xf]
      %v468 = vld [vmem:[%s1 + $0x88] sm:$0xf]
      %v469 = vld [vmem:[%s1 + $0x8c] sm:$0xf]
      %v470 = vld [vmem:[%s1 + $0x90] sm:$0xf]
      %v471 = vld [vmem:[%s1 + $0x94] sm:$0xf]
      %v472 = vld [vmem:[%s1 + $0x98] sm:$0xf]
      %v473 = vld [vmem:[%s1 + $0x9c] sm:$0xf]
      %v474 = vld [vmem:[%s1 + $0xa0] sm:$0xf]
      %v475 = vld [vmem:[%s1 + $0xa4] sm:$0xf]
      %v476 = vld [vmem:[%s1 + $0xa8] sm:$0xf]
      %v477 = vld [vmem:[%s1 + $0xac] sm:$0xf]
      %v478 = vld [vmem:[%s1 + $0xb0] sm:$0xf]
      %v479 = vld [vmem:[%s1 + $0xb4] sm:$0xf]
      %v480 = vld [vmem:[%s1 + $0xb8] sm:$0xf]
      %v481 = vld [vmem:[%s1 + $0xbc] sm:$0xf]
      %v482 = vld [vmem:[%s1 + $0xc0] sm:$0xf]
      %v483 = vld [vmem:[%s1 + $0xc4] sm:$0xf]
      %v484 = vld [vmem:[%s1 + $0xc8] sm:$0xf]
      %v485 = vld [vmem:[%s1 + $0xcc] sm:$0xf]
      %v486 = vld [vmem:[%s1 + $0xd0] sm:$0xf]
      %v487 = vld [vmem:[%s1 + $0xd4] sm:$0xf]
      %v488 = vld [vmem:[%s1 + $0xd8] sm:$0xf]
      %v489 = vld [vmem:[%s1 + $0xdc] sm:$0xf]
      %v490 = vld [vmem:[%s1 + $0xe0] sm:$0xf]
      %v491 = vld [vmem:[%s1 + $0xe4] sm:$0xf]
      %v492 = vld [vmem:[%s1 + $0xe8] sm:$0xf]
      %v493 = vld [vmem:[%s1 + $0xec] sm:$0xf]
      %v494 = vld [vmem:[%s1 + $0xf0] sm:$0xf]
      %v495 = vld [vmem:[%s1 + $0xf4] sm:$0xf]
      %v496 = vld [vmem:[%s1 + $0xf8] sm:$0xf]
      %v497 = vld [vmem:[%s1 + $0xfc] sm:$0xf]
      %v498 = vld [vmem:[%s1 + $0x100] sm:$0xf]
      %v499 = vld [vmem:[%s1 + $0x104] sm:$0xf]
      %v500 = vld [vmem:[%s1 + $0x108] sm:$0xf]
      %v501 = vld [vmem:[%s1 + $0x10c] sm:$0xf]
      %v502 = vld [vmem:[%s1 + $0x110] sm:$0xf]
      %v503 = vld [vmem:[%s1 + $0x114] sm:$0xf]
      %v504 = vld [vmem:[%s1 + $0x118] sm:$0xf]
      %v505 = vld [vmem:[%s1 + $0x11c] sm:$0xf]
      %v506 = vld [vmem:[%s1 + $0x120] sm:$0xf]
      %v507 = vld [vmem:[%s1 + $0x124] sm:$0xf]
      %v508 = vld [vmem:[%s1 + $0x128] sm:$0xf]
      %v509 = vld [vmem:[%s1 + $0x12c] sm:$0xf]
      %v510 = vld [vmem:[%s1 + $0x130] sm:$0xf]
      %v511 = vld [vmem:[%s1 + $0x134] sm:$0xf]
      %v512 = vld [vmem:[%s1 + $0x138] sm:$0xf]
      %v513 = vld [vmem:[%s1 + $0x13c] sm:$0xf]
      %v514 = vld [vmem:[%s1 + $0x140] sm:$0xf]
      %v515 = vld [vmem:[%s1 + $0x144] sm:$0xf]
      %v516 = vld [vmem:[%s1 + $0x148] sm:$0xf]
      %v517 = vld [vmem:[%s1 + $0x14c] sm:$0xf]
      %v518 = vld [vmem:[%s1 + $0x150] sm:$0xf]
      %v519 = vld [vmem:[%s1 + $0x154] sm:$0xf]
      %v520 = vld [vmem:[%s1 + $0x158] sm:$0xf]
      %v521 = vld [vmem:[%s1 + $0x15c] sm:$0xf]
      %v522 = vld [vmem:[%s1 + $0x160] sm:$0xf]
      %v523 = vld [vmem:[%s1 + $0x164] sm:$0xf]
      %v524 = vld [vmem:[%s1 + $0x168] sm:$0xf]
      %v525 = vld [vmem:[%s1 + $0x16c] sm:$0xf]
      %v526 = vld [vmem:[%s1 + $0x170] sm:$0xf]
      %v527 = vld [vmem:[%s1 + $0x174] sm:$0xf]
      %v528 = vld [vmem:[%s1 + $0x178] sm:$0xf]
      %v529 = vld [vmem:[%s1 + $0x17c] sm:$0xf]
      %v530 = vld [vmem:[%s1 + $0x180] sm:$0xf]
      %v531 = vld [vmem:[%s1 + $0x184] sm:$0xf]
      %v532 = vld [vmem:[%s1 + $0x188] sm:$0xf]
      %v533 = vld [vmem:[%s1 + $0x18c] sm:$0xf]
      %v534 = vld [vmem:[%s1 + $0x190] sm:$0xf]
      %v535 = vld [vmem:[%s1 + $0x194] sm:$0xf]
      %v536 = vld [vmem:[%s1 + $0x198] sm:$0xf]
      %v537 = vld [vmem:[%s1 + $0x19c] sm:$0xf]
      %v538 = vld [vmem:[%s1 + $0x1a0] sm:$0xf]
      %v539 = vld [vmem:[%s1 + $0x1a4] sm:$0xf]
      %v540 = vld [vmem:[%s1 + $0x1a8] sm:$0xf]
      %v541 = vld [vmem:[%s1 + $0x1ac] sm:$0xf]
      %v542 = vld [vmem:[%s1 + $0x1b0] sm:$0xf]
      %v543 = vld [vmem:[%s1 + $0x1b4] sm:$0xf]
      %v544 = vld [vmem:[%s1 + $0x1b8] sm:$0xf]
      %v545 = vld [vmem:[%s1 + $0x1bc] sm:$0xf]
      %v546 = vld [vmem:[%s1 + $0x1c0] sm:$0xf]
      %v547 = vld [vmem:[%s1 + $0x1c4] sm:$0xf]
      %v548 = vld [vmem:[%s1 + $0x1c8] sm:$0xf]
      %v549 = vld [vmem:[%s1 + $0x1cc] sm:$0xf]
      %v550 = vld [vmem:[%s1 + $0x1d0] sm:$0xf]
      %v551 = vld [vmem:[%s1 + $0x1d4] sm:$0xf]
      %v552 = vld [vmem:[%s1 + $0x1d8] sm:$0xf]
      %v553 = vld [vmem:[%s1 + $0x1dc] sm:$0xf]
      %v554 = vld [vmem:[%s1 + $0x1e0] sm:$0xf]
      %v555 = vld [vmem:[%s1 + $0x1e4] sm:$0xf]
      %v556 = vld [vmem:[%s1 + $0x1e8] sm:$0xf]
      %v557 = vld [vmem:[%s1 + $0x1ec] sm:$0xf]
      %v558 = vld [vmem:[%s1 + $0x1f0] sm:$0xf]
      %v559 = vld [vmem:[%s1 + $0x1f4] sm:$0xf]
      %v560 = vld [vmem:[%s1 + $0x1f8] sm:$0xf]
      %v561 = vld [vmem:[%s1 + $0x1fc] sm:$0xf]
      %v562 = vld [vmem:[%s2] sm:$0x1]
      %v564 = vlaneseq
      %v565 = vshrl.u32 %v564, 7
      %v566 = vsub.s32 0, %v565
      %v567 = vrot.slane %v562, %v566
      %v825 = vunpack.c.l.b16 %v178
      %v826 = vunpack.c.h.b16 %v178
      %v827 = vunpack.c.l.b16 %v179
      %v828 = vunpack.c.h.b16 %v179
      %v829 = vunpack.c.l.b16 %v180
      %v830 = vunpack.c.h.b16 %v180
      %v831 = vunpack.c.l.b16 %v181
      %v832 = vunpack.c.h.b16 %v181
      %v833 = vunpack.c.l.b16 %v182
      %v834 = vunpack.c.h.b16 %v182
      %v835 = vunpack.c.l.b16 %v183
      %v836 = vunpack.c.h.b16 %v183
      %v837 = vunpack.c.l.b16 %v184
      %v838 = vunpack.c.h.b16 %v184
      %v839 = vunpack.c.l.b16 %v185
      %v840 = vunpack.c.h.b16 %v185
      %v841 = vunpack.c.l.b16 %v186
      %v842 = vunpack.c.h.b16 %v186
      %v843 = vunpack.c.l.b16 %v187
      %v844 = vunpack.c.h.b16 %v187
      %v845 = vunpack.c.l.b16 %v188
      %v846 = vunpack.c.h.b16 %v188
      %v847 = vunpack.c.l.b16 %v189
      %v848 = vunpack.c.h.b16 %v189
      %v849 = vunpack.c.l.b16 %v190
      %v850 = vunpack.c.h.b16 %v190
      %v851 = vunpack.c.l.b16 %v191
      %v852 = vunpack.c.h.b16 %v191
      %v853 = vunpack.c.l.b16 %v192
      %v854 = vunpack.c.h.b16 %v192
      %v855 = vunpack.c.l.b16 %v193
      %v856 = vunpack.c.h.b16 %v193
      %v857 = vunpack.c.l.b16 %v194
      %v858 = vunpack.c.h.b16 %v194
      %v859 = vunpack.c.l.b16 %v195
      %v860 = vunpack.c.h.b16 %v195
      %v861 = vunpack.c.l.b16 %v196
      %v862 = vunpack.c.h.b16 %v196
      %v863 = vunpack.c.l.b16 %v197
      %v864 = vunpack.c.h.b16 %v197
      %v865 = vunpack.c.l.b16 %v198
      %v866 = vunpack.c.h.b16 %v198
      %v867 = vunpack.c.l.b16 %v199
      %v868 = vunpack.c.h.b16 %v199
      %v869 = vunpack.c.l.b16 %v200
      %v870 = vunpack.c.h.b16 %v200
      %v871 = vunpack.c.l.b16 %v201
      %v872 = vunpack.c.h.b16 %v201
      %v873 = vunpack.c.l.b16 %v202
      %v874 = vunpack.c.h.b16 %v202
      %v875 = vunpack.c.l.b16 %v203
      %v876 = vunpack.c.h.b16 %v203
      %v877 = vunpack.c.l.b16 %v204
      %v878 = vunpack.c.h.b16 %v204
      %v879 = vunpack.c.l.b16 %v205
      %v880 = vunpack.c.h.b16 %v205
      %v881 = vunpack.c.l.b16 %v206
      %v882 = vunpack.c.h.b16 %v206
      %v883 = vunpack.c.l.b16 %v207
      %v884 = vunpack.c.h.b16 %v207
      %v885 = vunpack.c.l.b16 %v208
      %v886 = vunpack.c.h.b16 %v208
      %v887 = vunpack.c.l.b16 %v209
      %v888 = vunpack.c.h.b16 %v209
      %v889 = vunpack.c.l.b16 %v210
      %v890 = vunpack.c.h.b16 %v210
      %v891 = vunpack.c.l.b16 %v211
      %v892 = vunpack.c.h.b16 %v211
      %v893 = vunpack.c.l.b16 %v212
      %v894 = vunpack.c.h.b16 %v212
      %v895 = vunpack.c.l.b16 %v213
      %v896 = vunpack.c.h.b16 %v213
      %v897 = vunpack.c.l.b16 %v214
      %v898 = vunpack.c.h.b16 %v214
      %v899 = vunpack.c.l.b16 %v215
      %v900 = vunpack.c.h.b16 %v215
      %v901 = vunpack.c.l.b16 %v216
      %v902 = vunpack.c.h.b16 %v216
      %v903 = vunpack.c.l.b16 %v217
      %v904 = vunpack.c.h.b16 %v217
      %v905 = vunpack.c.l.b16 %v218
      %v906 = vunpack.c.h.b16 %v218
      %v907 = vunpack.c.l.b16 %v219
      %v908 = vunpack.c.h.b16 %v219
      %v909 = vunpack.c.l.b16 %v220
      %v910 = vunpack.c.h.b16 %v220
      %v911 = vunpack.c.l.b16 %v221
      %v912 = vunpack.c.h.b16 %v221
      %v913 = vunpack.c.l.b16 %v222
      %v914 = vunpack.c.h.b16 %v222
      %v915 = vunpack.c.l.b16 %v223
      %v916 = vunpack.c.h.b16 %v223
      %v917 = vunpack.c.l.b16 %v224
      %v918 = vunpack.c.h.b16 %v224
      %v919 = vunpack.c.l.b16 %v225
      %v920 = vunpack.c.h.b16 %v225
      %v921 = vunpack.c.l.b16 %v226
      %v922 = vunpack.c.h.b16 %v226
      %v923 = vunpack.c.l.b16 %v227
      %v924 = vunpack.c.h.b16 %v227
      %v925 = vunpack.c.l.b16 %v228
      %v926 = vunpack.c.h.b16 %v228
      %v927 = vunpack.c.l.b16 %v229
      %v928 = vunpack.c.h.b16 %v229
      %v929 = vunpack.c.l.b16 %v230
      %v930 = vunpack.c.h.b16 %v230
      %v931 = vunpack.c.l.b16 %v231
      %v932 = vunpack.c.h.b16 %v231
      %v933 = vunpack.c.l.b16 %v232
      %v934 = vunpack.c.h.b16 %v232
      %v935 = vunpack.c.l.b16 %v233
      %v936 = vunpack.c.h.b16 %v233
      %v937 = vunpack.c.l.b16 %v234
      %v938 = vunpack.c.h.b16 %v234
      %v939 = vunpack.c.l.b16 %v235
      %v940 = vunpack.c.h.b16 %v235
      %v941 = vunpack.c.l.b16 %v236
      %v942 = vunpack.c.h.b16 %v236
      %v943 = vunpack.c.l.b16 %v237
      %v944 = vunpack.c.h.b16 %v237
      %v945 = vunpack.c.l.b16 %v238
      %v946 = vunpack.c.h.b16 %v238
      %v947 = vunpack.c.l.b16 %v239
      %v948 = vunpack.c.h.b16 %v239
      %v949 = vunpack.c.l.b16 %v240
      %v950 = vunpack.c.h.b16 %v240
      %v951 = vunpack.c.l.b16 %v241
      %v952 = vunpack.c.h.b16 %v241
      %v953 = vunpack.c.l.b16 %v242
      %v954 = vunpack.c.h.b16 %v242
      %v955 = vunpack.c.l.b16 %v243
      %v956 = vunpack.c.h.b16 %v243
      %v957 = vunpack.c.l.b16 %v244
      %v958 = vunpack.c.h.b16 %v244
      %v959 = vunpack.c.l.b16 %v245
      %v960 = vunpack.c.h.b16 %v245
      %v961 = vunpack.c.l.b16 %v246
      %v962 = vunpack.c.h.b16 %v246
      %v963 = vunpack.c.l.b16 %v247
      %v964 = vunpack.c.h.b16 %v247
      %v965 = vunpack.c.l.b16 %v248
      %v966 = vunpack.c.h.b16 %v248
      %v967 = vunpack.c.l.b16 %v249
      %v968 = vunpack.c.h.b16 %v249
      %v969 = vunpack.c.l.b16 %v250
      %v970 = vunpack.c.h.b16 %v250
      %v971 = vunpack.c.l.b16 %v251
      %v972 = vunpack.c.h.b16 %v251
      %v973 = vunpack.c.l.b16 %v252
      %v974 = vunpack.c.h.b16 %v252
      %v975 = vunpack.c.l.b16 %v253
      %v976 = vunpack.c.h.b16 %v253
      %v977 = vunpack.c.l.b16 %v254
      %v978 = vunpack.c.h.b16 %v254
      %v979 = vunpack.c.l.b16 %v255
      %v980 = vunpack.c.h.b16 %v255
      %v981 = vunpack.c.l.b16 %v256
      %v982 = vunpack.c.h.b16 %v256
      %v983 = vunpack.c.l.b16 %v257
      %v984 = vunpack.c.h.b16 %v257
      %v985 = vunpack.c.l.b16 %v258
      %v986 = vunpack.c.h.b16 %v258
      %v987 = vunpack.c.l.b16 %v259
      %v988 = vunpack.c.h.b16 %v259
      %v989 = vunpack.c.l.b16 %v260
      %v990 = vunpack.c.h.b16 %v260
      %v991 = vunpack.c.l.b16 %v261
      %v992 = vunpack.c.h.b16 %v261
      %v993 = vunpack.c.l.b16 %v262
      %v994 = vunpack.c.h.b16 %v262
      %v995 = vunpack.c.l.b16 %v263
      %v996 = vunpack.c.h.b16 %v263
      %v997 = vunpack.c.l.b16 %v264
      %v998 = vunpack.c.h.b16 %v264
      %v999 = vunpack.c.l.b16 %v265
      %v1000 = vunpack.c.h.b16 %v265
      %v1001 = vunpack.c.l.b16 %v266
      %v1002 = vunpack.c.h.b16 %v266
      %v1003 = vunpack.c.l.b16 %v267
      %v1004 = vunpack.c.h.b16 %v267
      %v1005 = vunpack.c.l.b16 %v268
      %v1006 = vunpack.c.h.b16 %v268
      %v1007 = vunpack.c.l.b16 %v269
      %v1008 = vunpack.c.h.b16 %v269
      %v1009 = vunpack.c.l.b16 %v270
      %v1010 = vunpack.c.h.b16 %v270
      %v1011 = vunpack.c.l.b16 %v271
      %v1012 = vunpack.c.h.b16 %v271
      %v1013 = vunpack.c.l.b16 %v272
      %v1014 = vunpack.c.h.b16 %v272
      %v1015 = vunpack.c.l.b16 %v273
      %v1016 = vunpack.c.h.b16 %v273
      %v1017 = vunpack.c.l.b16 %v274
      %v1018 = vunpack.c.h.b16 %v274
      %v1019 = vunpack.c.l.b16 %v275
      %v1020 = vunpack.c.h.b16 %v275
      %v1021 = vunpack.c.l.b16 %v276
      %v1022 = vunpack.c.h.b16 %v276
      %v1023 = vunpack.c.l.b16 %v277
      %v1024 = vunpack.c.h.b16 %v277
      %v1025 = vunpack.c.l.b16 %v278
      %v1026 = vunpack.c.h.b16 %v278
      %v1027 = vunpack.c.l.b16 %v279
      %v1028 = vunpack.c.h.b16 %v279
      %v1029 = vunpack.c.l.b16 %v280
      %v1030 = vunpack.c.h.b16 %v280
      %v1031 = vunpack.c.l.b16 %v281
      %v1032 = vunpack.c.h.b16 %v281
      %v1033 = vunpack.c.l.b16 %v282
      %v1034 = vunpack.c.h.b16 %v282
      %v1035 = vunpack.c.l.b16 %v283
      %v1036 = vunpack.c.h.b16 %v283
      %v1037 = vunpack.c.l.b16 %v284
      %v1038 = vunpack.c.h.b16 %v284
      %v1039 = vunpack.c.l.b16 %v285
      %v1040 = vunpack.c.h.b16 %v285
      %v1041 = vunpack.c.l.b16 %v286
      %v1042 = vunpack.c.h.b16 %v286
      %v1043 = vunpack.c.l.b16 %v287
      %v1044 = vunpack.c.h.b16 %v287
      %v1045 = vunpack.c.l.b16 %v288
      %v1046 = vunpack.c.h.b16 %v288
      %v1047 = vunpack.c.l.b16 %v289
      %v1048 = vunpack.c.h.b16 %v289
      %v1049 = vunpack.c.l.b16 %v290
      %v1050 = vunpack.c.h.b16 %v290
      %v1051 = vunpack.c.l.b16 %v291
      %v1052 = vunpack.c.h.b16 %v291
      %v1053 = vunpack.c.l.b16 %v292
      %v1054 = vunpack.c.h.b16 %v292
      %v1055 = vunpack.c.l.b16 %v293
      %v1056 = vunpack.c.h.b16 %v293
      %v1057 = vunpack.c.l.b16 %v294
      %v1058 = vunpack.c.h.b16 %v294
      %v1059 = vunpack.c.l.b16 %v295
      %v1060 = vunpack.c.h.b16 %v295
      %v1061 = vunpack.c.l.b16 %v296
      %v1062 = vunpack.c.h.b16 %v296
      %v1063 = vunpack.c.l.b16 %v297
      %v1064 = vunpack.c.h.b16 %v297
      %v1065 = vunpack.c.l.b16 %v298
      %v1066 = vunpack.c.h.b16 %v298
      %v1067 = vunpack.c.l.b16 %v299
      %v1068 = vunpack.c.h.b16 %v299
      %v1069 = vunpack.c.l.b16 %v300
      %v1070 = vunpack.c.h.b16 %v300
      %v1071 = vunpack.c.l.b16 %v301
      %v1072 = vunpack.c.h.b16 %v301
      %v1073 = vunpack.c.l.b16 %v302
      %v1074 = vunpack.c.h.b16 %v302
      %v1075 = vunpack.c.l.b16 %v303
      %v1076 = vunpack.c.h.b16 %v303
      %v1077 = vunpack.c.l.b16 %v304
      %v1078 = vunpack.c.h.b16 %v304
      %v1079 = vunpack.c.l.b16 %v305
      %v1080 = vunpack.c.h.b16 %v305
      %v1081 = vunpack.c.l.b16 %v306
      %v1082 = vunpack.c.h.b16 %v306
      %v1083 = vunpack.c.l.b16 %v307
      %v1084 = vunpack.c.h.b16 %v307
      %v1085 = vunpack.c.l.b16 %v308
      %v1086 = vunpack.c.h.b16 %v308
      %v1087 = vunpack.c.l.b16 %v309
      %v1088 = vunpack.c.h.b16 %v309
      %v1089 = vunpack.c.l.b16 %v310
      %v1090 = vunpack.c.h.b16 %v310
      %v1091 = vunpack.c.l.b16 %v311
      %v1092 = vunpack.c.h.b16 %v311
      %v1093 = vunpack.c.l.b16 %v312
      %v1094 = vunpack.c.h.b16 %v312
      %v1095 = vunpack.c.l.b16 %v313
      %v1096 = vunpack.c.h.b16 %v313
      %v1097 = vunpack.c.l.b16 %v314
      %v1098 = vunpack.c.h.b16 %v314
      %v1099 = vunpack.c.l.b16 %v315
      %v1100 = vunpack.c.h.b16 %v315
      %v1101 = vunpack.c.l.b16 %v316
      %v1102 = vunpack.c.h.b16 %v316
      %v1103 = vunpack.c.l.b16 %v317
      %v1104 = vunpack.c.h.b16 %v317
      %v1105 = vunpack.c.l.b16 %v318
      %v1106 = vunpack.c.h.b16 %v318
      %v1107 = vunpack.c.l.b16 %v319
      %v1108 = vunpack.c.h.b16 %v319
      %v1109 = vunpack.c.l.b16 %v320
      %v1110 = vunpack.c.h.b16 %v320
      %v1111 = vunpack.c.l.b16 %v321
      %v1112 = vunpack.c.h.b16 %v321
      %v1113 = vunpack.c.l.b16 %v322
      %v1114 = vunpack.c.h.b16 %v322
      %v1115 = vunpack.c.l.b16 %v323
      %v1116 = vunpack.c.h.b16 %v323
      %v1117 = vunpack.c.l.b16 %v324
      %v1118 = vunpack.c.h.b16 %v324
      %v1119 = vunpack.c.l.b16 %v325
      %v1120 = vunpack.c.h.b16 %v325
      %v1121 = vunpack.c.l.b16 %v326
      %v1122 = vunpack.c.h.b16 %v326
      %v1123 = vunpack.c.l.b16 %v327
      %v1124 = vunpack.c.h.b16 %v327
      %v1125 = vunpack.c.l.b16 %v328
      %v1126 = vunpack.c.h.b16 %v328
      %v1127 = vunpack.c.l.b16 %v329
      %v1128 = vunpack.c.h.b16 %v329
      %v1129 = vunpack.c.l.b16 %v330
      %v1130 = vunpack.c.h.b16 %v330
      %v1131 = vunpack.c.l.b16 %v331
      %v1132 = vunpack.c.h.b16 %v331
      %v1133 = vunpack.c.l.b16 %v332
      %v1134 = vunpack.c.h.b16 %v332
      %v1135 = vunpack.c.l.b16 %v333
      %v1136 = vunpack.c.h.b16 %v333
      %v1137 = vunpack.c.l.b16 %v334
      %v1138 = vunpack.c.h.b16 %v334
      %v1139 = vunpack.c.l.b16 %v335
      %v1140 = vunpack.c.h.b16 %v335
      %v1141 = vunpack.c.l.b16 %v336
      %v1142 = vunpack.c.h.b16 %v336
      %v1143 = vunpack.c.l.b16 %v337
      %v1144 = vunpack.c.h.b16 %v337
      %v1145 = vunpack.c.l.b16 %v338
      %v1146 = vunpack.c.h.b16 %v338
      %v1147 = vunpack.c.l.b16 %v339
      %v1148 = vunpack.c.h.b16 %v339
      %v1149 = vunpack.c.l.b16 %v340
      %v1150 = vunpack.c.h.b16 %v340
      %v1151 = vunpack.c.l.b16 %v341
      %v1152 = vunpack.c.h.b16 %v341
      %v1153 = vunpack.c.l.b16 %v342
      %v1154 = vunpack.c.h.b16 %v342
      %v1155 = vunpack.c.l.b16 %v343
      %v1156 = vunpack.c.h.b16 %v343
      %v1157 = vunpack.c.l.b16 %v344
      %v1158 = vunpack.c.h.b16 %v344
      %v1159 = vunpack.c.l.b16 %v345
      %v1160 = vunpack.c.h.b16 %v345
      %v1161 = vunpack.c.l.b16 %v346
      %v1162 = vunpack.c.h.b16 %v346
      %v1163 = vunpack.c.l.b16 %v347
      %v1164 = vunpack.c.h.b16 %v347
      %v1165 = vunpack.c.l.b16 %v348
      %v1166 = vunpack.c.h.b16 %v348
      %v1167 = vunpack.c.l.b16 %v349
      %v1168 = vunpack.c.h.b16 %v349
      %v1169 = vunpack.c.l.b16 %v350
      %v1170 = vunpack.c.h.b16 %v350
      %v1171 = vunpack.c.l.b16 %v351
      %v1172 = vunpack.c.h.b16 %v351
      %v1173 = vunpack.c.l.b16 %v352
      %v1174 = vunpack.c.h.b16 %v352
      %v1175 = vunpack.c.l.b16 %v353
      %v1176 = vunpack.c.h.b16 %v353
      %v1177 = vunpack.c.l.b16 %v354
      %v1178 = vunpack.c.h.b16 %v354
      %v1179 = vunpack.c.l.b16 %v355
      %v1180 = vunpack.c.h.b16 %v355
      %v1181 = vunpack.c.l.b16 %v356
      %v1182 = vunpack.c.h.b16 %v356
      %v1183 = vunpack.c.l.b16 %v357
      %v1184 = vunpack.c.h.b16 %v357
      %v1185 = vunpack.c.l.b16 %v358
      %v1186 = vunpack.c.h.b16 %v358
      %v1187 = vunpack.c.l.b16 %v359
      %v1188 = vunpack.c.h.b16 %v359
      %v1189 = vunpack.c.l.b16 %v360
      %v1190 = vunpack.c.h.b16 %v360
      %v1191 = vunpack.c.l.b16 %v361
      %v1192 = vunpack.c.h.b16 %v361
      %v1193 = vunpack.c.l.b16 %v362
      %v1194 = vunpack.c.h.b16 %v362
      %v1195 = vunpack.c.l.b16 %v363
      %v1196 = vunpack.c.h.b16 %v363
      %v1197 = vunpack.c.l.b16 %v364
      %v1198 = vunpack.c.h.b16 %v364
      %v1199 = vunpack.c.l.b16 %v365
      %v1200 = vunpack.c.h.b16 %v365
      %v1201 = vunpack.c.l.b16 %v366
      %v1202 = vunpack.c.h.b16 %v366
      %v1203 = vunpack.c.l.b16 %v367
      %v1204 = vunpack.c.h.b16 %v367
      %v1205 = vunpack.c.l.b16 %v368
      %v1206 = vunpack.c.h.b16 %v368
      %v1207 = vunpack.c.l.b16 %v369
      %v1208 = vunpack.c.h.b16 %v369
      %v1209 = vunpack.c.l.b16 %v370
      %v1210 = vunpack.c.h.b16 %v370
      %v1211 = vunpack.c.l.b16 %v371
      %v1212 = vunpack.c.h.b16 %v371
      %v1213 = vunpack.c.l.b16 %v372
      %v1214 = vunpack.c.h.b16 %v372
      %v1215 = vunpack.c.l.b16 %v373
      %v1216 = vunpack.c.h.b16 %v373
      %v1217 = vunpack.c.l.b16 %v374
      %v1218 = vunpack.c.h.b16 %v374
      %v1219 = vunpack.c.l.b16 %v375
      %v1220 = vunpack.c.h.b16 %v375
      %v1221 = vunpack.c.l.b16 %v376
      %v1222 = vunpack.c.h.b16 %v376
      %v1223 = vunpack.c.l.b16 %v377
      %v1224 = vunpack.c.h.b16 %v377
      %v1225 = vunpack.c.l.b16 %v378
      %v1226 = vunpack.c.h.b16 %v378
      %v1227 = vunpack.c.l.b16 %v379
      %v1228 = vunpack.c.h.b16 %v379
      %v1229 = vunpack.c.l.b16 %v380
      %v1230 = vunpack.c.h.b16 %v380
      %v1231 = vunpack.c.l.b16 %v381
      %v1232 = vunpack.c.h.b16 %v381
      %v1233 = vunpack.c.l.b16 %v382
      %v1234 = vunpack.c.h.b16 %v382
      %v1235 = vunpack.c.l.b16 %v383
      %v1236 = vunpack.c.h.b16 %v383
      %v1237 = vunpack.c.l.b16 %v384
      %v1238 = vunpack.c.h.b16 %v384
      %v1239 = vunpack.c.l.b16 %v385
      %v1240 = vunpack.c.h.b16 %v385
      %v1241 = vunpack.c.l.b16 %v386
      %v1242 = vunpack.c.h.b16 %v386
      %v1243 = vunpack.c.l.b16 %v387
      %v1244 = vunpack.c.h.b16 %v387
      %v1245 = vunpack.c.l.b16 %v388
      %v1246 = vunpack.c.h.b16 %v388
      %v1247 = vunpack.c.l.b16 %v389
      %v1248 = vunpack.c.h.b16 %v389
      %v1249 = vunpack.c.l.b16 %v390
      %v1250 = vunpack.c.h.b16 %v390
      %v1251 = vunpack.c.l.b16 %v391
      %v1252 = vunpack.c.h.b16 %v391
      %v1253 = vunpack.c.l.b16 %v392
      %v1254 = vunpack.c.h.b16 %v392
      %v1255 = vunpack.c.l.b16 %v393
      %v1256 = vunpack.c.h.b16 %v393
      %v1257 = vunpack.c.l.b16 %v394
      %v1258 = vunpack.c.h.b16 %v394
      %v1259 = vunpack.c.l.b16 %v395
      %v1260 = vunpack.c.h.b16 %v395
      %v1261 = vunpack.c.l.b16 %v396
      %v1262 = vunpack.c.h.b16 %v396
      %v1263 = vunpack.c.l.b16 %v397
      %v1264 = vunpack.c.h.b16 %v397
      %v1265 = vunpack.c.l.b16 %v398
      %v1266 = vunpack.c.h.b16 %v398
      %v1267 = vunpack.c.l.b16 %v399
      %v1268 = vunpack.c.h.b16 %v399
      %v1269 = vunpack.c.l.b16 %v400
      %v1270 = vunpack.c.h.b16 %v400
      %v1271 = vunpack.c.l.b16 %v401
      %v1272 = vunpack.c.h.b16 %v401
      %v1273 = vunpack.c.l.b16 %v402
      %v1274 = vunpack.c.h.b16 %v402
      %v1275 = vunpack.c.l.b16 %v403
      %v1276 = vunpack.c.h.b16 %v403
      %v1277 = vunpack.c.l.b16 %v404
      %v1278 = vunpack.c.h.b16 %v404
      %v1279 = vunpack.c.l.b16 %v405
      %v1280 = vunpack.c.h.b16 %v405
      %v1281 = vunpack.c.l.b16 %v406
      %v1282 = vunpack.c.h.b16 %v406
      %v1283 = vunpack.c.l.b16 %v407
      %v1284 = vunpack.c.h.b16 %v407
      %v1285 = vunpack.c.l.b16 %v408
      %v1286 = vunpack.c.h.b16 %v408
      %v1287 = vunpack.c.l.b16 %v409
      %v1288 = vunpack.c.h.b16 %v409
      %v1289 = vunpack.c.l.b16 %v410
      %v1290 = vunpack.c.h.b16 %v410
      %v1291 = vunpack.c.l.b16 %v411
      %v1292 = vunpack.c.h.b16 %v411
      %v1293 = vunpack.c.l.b16 %v412
      %v1294 = vunpack.c.h.b16 %v412
      %v1295 = vunpack.c.l.b16 %v413
      %v1296 = vunpack.c.h.b16 %v413
      %v1297 = vunpack.c.l.b16 %v414
      %v1298 = vunpack.c.h.b16 %v414
      %v1299 = vunpack.c.l.b16 %v415
      %v1300 = vunpack.c.h.b16 %v415
      %v1301 = vunpack.c.l.b16 %v416
      %v1302 = vunpack.c.h.b16 %v416
      %v1303 = vunpack.c.l.b16 %v417
      %v1304 = vunpack.c.h.b16 %v417
      %v1305 = vunpack.c.l.b16 %v418
      %v1306 = vunpack.c.h.b16 %v418
      %v1307 = vunpack.c.l.b16 %v419
      %v1308 = vunpack.c.h.b16 %v419
      %v1309 = vunpack.c.l.b16 %v420
      %v1310 = vunpack.c.h.b16 %v420
      %v1311 = vunpack.c.l.b16 %v421
      %v1312 = vunpack.c.h.b16 %v421
      %v1313 = vunpack.c.l.b16 %v422
      %v1314 = vunpack.c.h.b16 %v422
      %v1315 = vunpack.c.l.b16 %v423
      %v1316 = vunpack.c.h.b16 %v423
      %v1317 = vunpack.c.l.b16 %v424
      %v1318 = vunpack.c.h.b16 %v424
      %v1319 = vunpack.c.l.b16 %v425
      %v1320 = vunpack.c.h.b16 %v425
      %v1321 = vunpack.c.l.b16 %v426
      %v1322 = vunpack.c.h.b16 %v426
      %v1323 = vunpack.c.l.b16 %v427
      %v1324 = vunpack.c.h.b16 %v427
      %v1325 = vunpack.c.l.b16 %v428
      %v1326 = vunpack.c.h.b16 %v428
      %v1327 = vunpack.c.l.b16 %v429
      %v1328 = vunpack.c.h.b16 %v429
      %v1329 = vunpack.c.l.b16 %v430
      %v1330 = vunpack.c.h.b16 %v430
      %v1331 = vunpack.c.l.b16 %v431
      %v1332 = vunpack.c.h.b16 %v431
      %v1333 = vunpack.c.l.b16 %v432
      %v1334 = vunpack.c.h.b16 %v432
      %v1335 = vunpack.c.l.b16 %v433
      %v1336 = vunpack.c.h.b16 %v433
      %v1337 = vpack.c.b16 %v833, %v825
      %v1338 = vpack.c.b16 %v834, %v826
      %v1339 = vpack.c.b16 %v835, %v827
      %v1340 = vpack.c.b16 %v836, %v828
      %v1341 = vpack.c.b16 %v837, %v829
      %v1342 = vpack.c.b16 %v838, %v830
      %v1343 = vpack.c.b16 %v839, %v831
      %v1344 = vpack.c.b16 %v840, %v832
      %v1345 = vpack.c.b16 %v849, %v841
      %v1346 = vpack.c.b16 %v850, %v842
      %v1347 = vpack.c.b16 %v851, %v843
      %v1348 = vpack.c.b16 %v852, %v844
      %v1349 = vpack.c.b16 %v853, %v845
      %v1350 = vpack.c.b16 %v854, %v846
      %v1351 = vpack.c.b16 %v855, %v847
      %v1352 = vpack.c.b16 %v856, %v848
      %v1353 = vpack.c.b16 %v865, %v857
      %v1354 = vpack.c.b16 %v866, %v858
      %v1355 = vpack.c.b16 %v867, %v859
      %v1356 = vpack.c.b16 %v868, %v860
      %v1357 = vpack.c.b16 %v869, %v861
      %v1358 = vpack.c.b16 %v870, %v862
      %v1359 = vpack.c.b16 %v871, %v863
      %v1360 = vpack.c.b16 %v872, %v864
      %v1361 = vpack.c.b16 %v881, %v873
      %v1362 = vpack.c.b16 %v882, %v874
      %v1363 = vpack.c.b16 %v883, %v875
      %v1364 = vpack.c.b16 %v884, %v876
      %v1365 = vpack.c.b16 %v885, %v877
      %v1366 = vpack.c.b16 %v886, %v878
      %v1367 = vpack.c.b16 %v887, %v879
      %v1368 = vpack.c.b16 %v888, %v880
      %v1369 = vpack.c.b16 %v897, %v889
      %v1370 = vpack.c.b16 %v898, %v890
      %v1371 = vpack.c.b16 %v899, %v891
      %v1372 = vpack.c.b16 %v900, %v892
      %v1373 = vpack.c.b16 %v901, %v893
      %v1374 = vpack.c.b16 %v902, %v894
      %v1375 = vpack.c.b16 %v903, %v895
      %v1376 = vpack.c.b16 %v904, %v896
      %v1377 = vpack.c.b16 %v913, %v905
      %v1378 = vpack.c.b16 %v914, %v906
      %v1379 = vpack.c.b16 %v915, %v907
      %v1380 = vpack.c.b16 %v916, %v908
      %v1381 = vpack.c.b16 %v917, %v909
      %v1382 = vpack.c.b16 %v918, %v910
      %v1383 = vpack.c.b16 %v919, %v911
      %v1384 = vpack.c.b16 %v920, %v912
      %v1385 = vpack.c.b16 %v929, %v921
      %v1386 = vpack.c.b16 %v930, %v922
      %v1387 = vpack.c.b16 %v931, %v923
      %v1388 = vpack.c.b16 %v932, %v924
      %v1389 = vpack.c.b16 %v933, %v925
      %v1390 = vpack.c.b16 %v934, %v926
      %v1391 = vpack.c.b16 %v935, %v927
      %v1392 = vpack.c.b16 %v936, %v928
      %v1393 = vpack.c.b16 %v945, %v937
      %v1394 = vpack.c.b16 %v946, %v938
      %v1395 = vpack.c.b16 %v947, %v939
      %v1396 = vpack.c.b16 %v948, %v940
      %v1397 = vpack.c.b16 %v949, %v941
      %v1398 = vpack.c.b16 %v950, %v942
      %v1399 = vpack.c.b16 %v951, %v943
      %v1400 = vpack.c.b16 %v952, %v944
      %v1401 = vpack.c.b16 %v961, %v953
      %v1402 = vpack.c.b16 %v962, %v954
      %v1403 = vpack.c.b16 %v963, %v955
      %v1404 = vpack.c.b16 %v964, %v956
      %v1405 = vpack.c.b16 %v965, %v957
      %v1406 = vpack.c.b16 %v966, %v958
      %v1407 = vpack.c.b16 %v967, %v959
      %v1408 = vpack.c.b16 %v968, %v960
      %v1409 = vpack.c.b16 %v977, %v969
      %v1410 = vpack.c.b16 %v978, %v970
      %v1411 = vpack.c.b16 %v979, %v971
      %v1412 = vpack.c.b16 %v980, %v972
      %v1413 = vpack.c.b16 %v981, %v973
      %v1414 = vpack.c.b16 %v982, %v974
      %v1415 = vpack.c.b16 %v983, %v975
      %v1416 = vpack.c.b16 %v984, %v976
      %v1417 = vpack.c.b16 %v993, %v985
      %v1418 = vpack.c.b16 %v994, %v986
      %v1419 = vpack.c.b16 %v995, %v987
      %v1420 = vpack.c.b16 %v996, %v988
      %v1421 = vpack.c.b16 %v997, %v989
      %v1422 = vpack.c.b16 %v998, %v990
      %v1423 = vpack.c.b16 %v999, %v991
      %v1424 = vpack.c.b16 %v1000, %v992
      %v1425 = vpack.c.b16 %v1009, %v1001
      %v1426 = vpack.c.b16 %v1010, %v1002
      %v1427 = vpack.c.b16 %v1011, %v1003
      %v1428 = vpack.c.b16 %v1012, %v1004
      %v1429 = vpack.c.b16 %v1013, %v1005
      %v1430 = vpack.c.b16 %v1014, %v1006
      %v1431 = vpack.c.b16 %v1015, %v1007
      %v1432 = vpack.c.b16 %v1016, %v1008
      %v1433 = vpack.c.b16 %v1025, %v1017
      %v1434 = vpack.c.b16 %v1026, %v1018
      %v1435 = vpack.c.b16 %v1027, %v1019
      %v1436 = vpack.c.b16 %v1028, %v1020
      %v1437 = vpack.c.b16 %v1029, %v1021
      %v1438 = vpack.c.b16 %v1030, %v1022
      %v1439 = vpack.c.b16 %v1031, %v1023
      %v1440 = vpack.c.b16 %v1032, %v1024
      %v1441 = vpack.c.b16 %v1041, %v1033
      %v1442 = vpack.c.b16 %v1042, %v1034
      %v1443 = vpack.c.b16 %v1043, %v1035
      %v1444 = vpack.c.b16 %v1044, %v1036
      %v1445 = vpack.c.b16 %v1045, %v1037
      %v1446 = vpack.c.b16 %v1046, %v1038
      %v1447 = vpack.c.b16 %v1047, %v1039
      %v1448 = vpack.c.b16 %v1048, %v1040
      %v1449 = vpack.c.b16 %v1057, %v1049
      %v1450 = vpack.c.b16 %v1058, %v1050
      %v1451 = vpack.c.b16 %v1059, %v1051
      %v1452 = vpack.c.b16 %v1060, %v1052
      %v1453 = vpack.c.b16 %v1061, %v1053
      %v1454 = vpack.c.b16 %v1062, %v1054
      %v1455 = vpack.c.b16 %v1063, %v1055
      %v1456 = vpack.c.b16 %v1064, %v1056
      %v1457 = vpack.c.b16 %v1073, %v1065
      %v1458 = vpack.c.b16 %v1074, %v1066
      %v1459 = vpack.c.b16 %v1075, %v1067
      %v1460 = vpack.c.b16 %v1076, %v1068
      %v1461 = vpack.c.b16 %v1077, %v1069
      %v1462 = vpack.c.b16 %v1078, %v1070
      %v1463 = vpack.c.b16 %v1079, %v1071
      %v1464 = vpack.c.b16 %v1080, %v1072
      %v1465 = vpack.c.b16 %v1089, %v1081
      %v1466 = vpack.c.b16 %v1090, %v1082
      %v1467 = vpack.c.b16 %v1091, %v1083
      %v1468 = vpack.c.b16 %v1092, %v1084
      %v1469 = vpack.c.b16 %v1093, %v1085
      %v1470 = vpack.c.b16 %v1094, %v1086
      %v1471 = vpack.c.b16 %v1095, %v1087
      %v1472 = vpack.c.b16 %v1096, %v1088
      %v1473 = vpack.c.b16 %v1105, %v1097
      %v1474 = vpack.c.b16 %v1106, %v1098
      %v1475 = vpack.c.b16 %v1107, %v1099
      %v1476 = vpack.c.b16 %v1108, %v1100
      %v1477 = vpack.c.b16 %v1109, %v1101
      %v1478 = vpack.c.b16 %v1110, %v1102
      %v1479 = vpack.c.b16 %v1111, %v1103
      %v1480 = vpack.c.b16 %v1112, %v1104
      %v1481 = vpack.c.b16 %v1121, %v1113
      %v1482 = vpack.c.b16 %v1122, %v1114
      %v1483 = vpack.c.b16 %v1123, %v1115
      %v1484 = vpack.c.b16 %v1124, %v1116
      %v1485 = vpack.c.b16 %v1125, %v1117
      %v1486 = vpack.c.b16 %v1126, %v1118
      %v1487 = vpack.c.b16 %v1127, %v1119
      %v1488 = vpack.c.b16 %v1128, %v1120
      %v1489 = vpack.c.b16 %v1137, %v1129
      %v1490 = vpack.c.b16 %v1138, %v1130
      %v1491 = vpack.c.b16 %v1139, %v1131
      %v1492 = vpack.c.b16 %v1140, %v1132
      %v1493 = vpack.c.b16 %v1141, %v1133
      %v1494 = vpack.c.b16 %v1142, %v1134
      %v1495 = vpack.c.b16 %v1143, %v1135
      %v1496 = vpack.c.b16 %v1144, %v1136
      %v1497 = vpack.c.b16 %v1153, %v1145
      %v1498 = vpack.c.b16 %v1154, %v1146
      %v1499 = vpack.c.b16 %v1155, %v1147
      %v1500 = vpack.c.b16 %v1156, %v1148
      %v1501 = vpack.c.b16 %v1157, %v1149
      %v1502 = vpack.c.b16 %v1158, %v1150
      %v1503 = vpack.c.b16 %v1159, %v1151
      %v1504 = vpack.c.b16 %v1160, %v1152
      %v1505 = vpack.c.b16 %v1169, %v1161
      %v1506 = vpack.c.b16 %v1170, %v1162
      %v1507 = vpack.c.b16 %v1171, %v1163
      %v1508 = vpack.c.b16 %v1172, %v1164
      %v1509 = vpack.c.b16 %v1173, %v1165
      %v1510 = vpack.c.b16 %v1174, %v1166
      %v1511 = vpack.c.b16 %v1175, %v1167
      %v1512 = vpack.c.b16 %v1176, %v1168
      %v1513 = vpack.c.b16 %v1185, %v1177
      %v1514 = vpack.c.b16 %v1186, %v1178
      %v1515 = vpack.c.b16 %v1187, %v1179
      %v1516 = vpack.c.b16 %v1188, %v1180
      %v1517 = vpack.c.b16 %v1189, %v1181
      %v1518 = vpack.c.b16 %v1190, %v1182
      %v1519 = vpack.c.b16 %v1191, %v1183
      %v1520 = vpack.c.b16 %v1192, %v1184
      %v1521 = vpack.c.b16 %v1201, %v1193
      %v1522 = vpack.c.b16 %v1202, %v1194
      %v1523 = vpack.c.b16 %v1203, %v1195
      %v1524 = vpack.c.b16 %v1204, %v1196
      %v1525 = vpack.c.b16 %v1205, %v1197
      %v1526 = vpack.c.b16 %v1206, %v1198
      %v1527 = vpack.c.b16 %v1207, %v1199
      %v1528 = vpack.c.b16 %v1208, %v1200
      %v1529 = vpack.c.b16 %v1217, %v1209
      %v1530 = vpack.c.b16 %v1218, %v1210
      %v1531 = vpack.c.b16 %v1219, %v1211
      %v1532 = vpack.c.b16 %v1220, %v1212
      %v1533 = vpack.c.b16 %v1221, %v1213
      %v1534 = vpack.c.b16 %v1222, %v1214
      %v1535 = vpack.c.b16 %v1223, %v1215
      %v1536 = vpack.c.b16 %v1224, %v1216
      %v1537 = vpack.c.b16 %v1233, %v1225
      %v1538 = vpack.c.b16 %v1234, %v1226
      %v1539 = vpack.c.b16 %v1235, %v1227
      %v1540 = vpack.c.b16 %v1236, %v1228
      %v1541 = vpack.c.b16 %v1237, %v1229
      %v1542 = vpack.c.b16 %v1238, %v1230
      %v1543 = vpack.c.b16 %v1239, %v1231
      %v1544 = vpack.c.b16 %v1240, %v1232
      %v1545 = vpack.c.b16 %v1249, %v1241
      %v1546 = vpack.c.b16 %v1250, %v1242
      %v1547 = vpack.c.b16 %v1251, %v1243
      %v1548 = vpack.c.b16 %v1252, %v1244
      %v1549 = vpack.c.b16 %v1253, %v1245
      %v1550 = vpack.c.b16 %v1254, %v1246
      %v1551 = vpack.c.b16 %v1255, %v1247
      %v1552 = vpack.c.b16 %v1256, %v1248
      %v1553 = vpack.c.b16 %v1265, %v1257
      %v1554 = vpack.c.b16 %v1266, %v1258
      %v1555 = vpack.c.b16 %v1267, %v1259
      %v1556 = vpack.c.b16 %v1268, %v1260
      %v1557 = vpack.c.b16 %v1269, %v1261
      %v1558 = vpack.c.b16 %v1270, %v1262
      %v1559 = vpack.c.b16 %v1271, %v1263
      %v1560 = vpack.c.b16 %v1272, %v1264
      %v1561 = vpack.c.b16 %v1281, %v1273
      %v1562 = vpack.c.b16 %v1282, %v1274
      %v1563 = vpack.c.b16 %v1283, %v1275
      %v1564 = vpack.c.b16 %v1284, %v1276
      %v1565 = vpack.c.b16 %v1285, %v1277
      %v1566 = vpack.c.b16 %v1286, %v1278
      %v1567 = vpack.c.b16 %v1287, %v1279
      %v1568 = vpack.c.b16 %v1288, %v1280
      %v1569 = vpack.c.b16 %v1297, %v1289
      %v1570 = vpack.c.b16 %v1298, %v1290
      %v1571 = vpack.c.b16 %v1299, %v1291
      %v1572 = vpack.c.b16 %v1300, %v1292
      %v1573 = vpack.c.b16 %v1301, %v1293
      %v1574 = vpack.c.b16 %v1302, %v1294
      %v1575 = vpack.c.b16 %v1303, %v1295
      %v1576 = vpack.c.b16 %v1304, %v1296
      %v1577 = vpack.c.b16 %v1313, %v1305
      %v1578 = vpack.c.b16 %v1314, %v1306
      %v1579 = vpack.c.b16 %v1315, %v1307
      %v1580 = vpack.c.b16 %v1316, %v1308
      %v1581 = vpack.c.b16 %v1317, %v1309
      %v1582 = vpack.c.b16 %v1318, %v1310
      %v1583 = vpack.c.b16 %v1319, %v1311
      %v1584 = vpack.c.b16 %v1320, %v1312
      %v1585 = vpack.c.b16 %v1329, %v1321
      %v1586 = vpack.c.b16 %v1330, %v1322
      %v1587 = vpack.c.b16 %v1331, %v1323
      %v1588 = vpack.c.b16 %v1332, %v1324
      %v1589 = vpack.c.b16 %v1333, %v1325
      %v1590 = vpack.c.b16 %v1334, %v1326
      %v1591 = vpack.c.b16 %v1335, %v1327
      %v1592 = vpack.c.b16 %v1336, %v1328
      %v1977 = vunpack.c.l.b16 %v434
      %v1978 = vunpack.c.l.b16 %v435
      %v1979 = vunpack.c.l.b16 %v436
      %v1980 = vunpack.c.l.b16 %v437
      %v1981 = vunpack.c.l.b16 %v438
      %v1982 = vunpack.c.l.b16 %v439
      %v1983 = vunpack.c.l.b16 %v440
      %v1984 = vunpack.c.l.b16 %v441
      %v1985 = vunpack.c.l.b16 %v442
      %v1986 = vunpack.c.l.b16 %v443
      %v1987 = vunpack.c.l.b16 %v444
      %v1988 = vunpack.c.l.b16 %v445
      %v1989 = vunpack.c.l.b16 %v446
      %v1990 = vunpack.c.l.b16 %v447
      %v1991 = vunpack.c.l.b16 %v448
      %v1992 = vunpack.c.l.b16 %v449
      %v1993 = vunpack.c.l.b16 %v450
      %v1994 = vunpack.c.l.b16 %v451
      %v1995 = vunpack.c.l.b16 %v452
      %v1996 = vunpack.c.l.b16 %v453
      %v1997 = vunpack.c.l.b16 %v454
      %v1998 = vunpack.c.l.b16 %v455
      %v1999 = vunpack.c.l.b16 %v456
      %v2000 = vunpack.c.l.b16 %v457
      %v2001 = vunpack.c.l.b16 %v458
      %v2002 = vunpack.c.l.b16 %v459
      %v2003 = vunpack.c.l.b16 %v460
      %v2004 = vunpack.c.l.b16 %v461
      %v2005 = vunpack.c.l.b16 %v462
      %v2006 = vunpack.c.l.b16 %v463
      %v2007 = vunpack.c.l.b16 %v464
      %v2008 = vunpack.c.l.b16 %v465
      %v2009 = vunpack.c.l.b16 %v466
      %v2010 = vunpack.c.l.b16 %v467
      %v2011 = vunpack.c.l.b16 %v468
      %v2012 = vunpack.c.l.b16 %v469
      %v2013 = vunpack.c.l.b16 %v470
      %v2014 = vunpack.c.l.b16 %v471
      %v2015 = vunpack.c.l.b16 %v472
      %v2016 = vunpack.c.l.b16 %v473
      %v2017 = vunpack.c.l.b16 %v474
      %v2018 = vunpack.c.l.b16 %v475
      %v2019 = vunpack.c.l.b16 %v476
      %v2020 = vunpack.c.l.b16 %v477
      %v2021 = vunpack.c.l.b16 %v478
      %v2022 = vunpack.c.l.b16 %v479
      %v2023 = vunpack.c.l.b16 %v480
      %v2024 = vunpack.c.l.b16 %v481
      %v2025 = vunpack.c.l.b16 %v482
      %v2026 = vunpack.c.l.b16 %v483
      %v2027 = vunpack.c.l.b16 %v484
      %v2028 = vunpack.c.l.b16 %v485
      %v2029 = vunpack.c.l.b16 %v486
      %v2030 = vunpack.c.l.b16 %v487
      %v2031 = vunpack.c.l.b16 %v488
      %v2032 = vunpack.c.l.b16 %v489
      %v2033 = vunpack.c.l.b16 %v490
      %v2034 = vunpack.c.l.b16 %v491
      %v2035 = vunpack.c.l.b16 %v492
      %v2036 = vunpack.c.l.b16 %v493
      %v2037 = vunpack.c.l.b16 %v494
      %v2038 = vunpack.c.l.b16 %v495
      %v2039 = vunpack.c.l.b16 %v496
      %v2040 = vunpack.c.l.b16 %v497
      %v2041 = vunpack.c.l.b16 %v498
      %v2042 = vunpack.c.l.b16 %v499
      %v2043 = vunpack.c.l.b16 %v500
      %v2044 = vunpack.c.l.b16 %v501
      %v2045 = vunpack.c.l.b16 %v502
      %v2046 = vunpack.c.l.b16 %v503
      %v2047 = vunpack.c.l.b16 %v504
      %v2048 = vunpack.c.l.b16 %v505
      %v2049 = vunpack.c.l.b16 %v506
      %v2050 = vunpack.c.l.b16 %v507
      %v2051 = vunpack.c.l.b16 %v508
      %v2052 = vunpack.c.l.b16 %v509
      %v2053 = vunpack.c.l.b16 %v510
      %v2054 = vunpack.c.l.b16 %v511
      %v2055 = vunpack.c.l.b16 %v512
      %v2056 = vunpack.c.l.b16 %v513
      %v2057 = vunpack.c.l.b16 %v514
      %v2058 = vunpack.c.l.b16 %v515
      %v2059 = vunpack.c.l.b16 %v516
      %v2060 = vunpack.c.l.b16 %v517
      %v2061 = vunpack.c.l.b16 %v518
      %v2062 = vunpack.c.l.b16 %v519
      %v2063 = vunpack.c.l.b16 %v520
      %v2064 = vunpack.c.l.b16 %v521
      %v2065 = vunpack.c.l.b16 %v522
      %v2066 = vunpack.c.l.b16 %v523
      %v2067 = vunpack.c.l.b16 %v524
      %v2068 = vunpack.c.l.b16 %v525
      %v2069 = vunpack.c.l.b16 %v526
      %v2070 = vunpack.c.l.b16 %v527
      %v2071 = vunpack.c.l.b16 %v528
      %v2072 = vunpack.c.l.b16 %v529
      %v2073 = vunpack.c.l.b16 %v530
      %v2074 = vunpack.c.l.b16 %v531
      %v2075 = vunpack.c.l.b16 %v532
      %v2076 = vunpack.c.l.b16 %v533
      %v2077 = vunpack.c.l.b16 %v534
      %v2078 = vunpack.c.l.b16 %v535
      %v2079 = vunpack.c.l.b16 %v536
      %v2080 = vunpack.c.l.b16 %v537
      %v2081 = vunpack.c.l.b16 %v538
      %v2082 = vunpack.c.l.b16 %v539
      %v2083 = vunpack.c.l.b16 %v540
      %v2084 = vunpack.c.l.b16 %v541
      %v2085 = vunpack.c.l.b16 %v542
      %v2086 = vunpack.c.l.b16 %v543
      %v2087 = vunpack.c.l.b16 %v544
      %v2088 = vunpack.c.l.b16 %v545
      %v2089 = vunpack.c.l.b16 %v546
      %v2090 = vunpack.c.l.b16 %v547
      %v2091 = vunpack.c.l.b16 %v548
      %v2092 = vunpack.c.l.b16 %v549
      %v2093 = vunpack.c.l.b16 %v550
      %v2094 = vunpack.c.l.b16 %v551
      %v2095 = vunpack.c.l.b16 %v552
      %v2096 = vunpack.c.l.b16 %v553
      %v2097 = vunpack.c.l.b16 %v554
      %v2098 = vunpack.c.l.b16 %v555
      %v2099 = vunpack.c.l.b16 %v556
      %v2100 = vunpack.c.l.b16 %v557
      %v2101 = vunpack.c.l.b16 %v558
      %v2102 = vunpack.c.l.b16 %v559
      %v2103 = vunpack.c.l.b16 %v560
      %v2104 = vunpack.c.l.b16 %v561
      %v2105 = vpack.c.b16 %v1978, %v1977
      %v2106 = vpack.c.b16 %v1980, %v1979
      %v2107 = vpack.c.b16 %v1982, %v1981
      %v2108 = vpack.c.b16 %v1984, %v1983
      %v2109 = vpack.c.b16 %v1986, %v1985
      %v2110 = vpack.c.b16 %v1988, %v1987
      %v2111 = vpack.c.b16 %v1990, %v1989
      %v2112 = vpack.c.b16 %v1992, %v1991
      %v2113 = vpack.c.b16 %v1994, %v1993
      %v2114 = vpack.c.b16 %v1996, %v1995
      %v2115 = vpack.c.b16 %v1998, %v1997
      %v2116 = vpack.c.b16 %v2000, %v1999
      %v2117 = vpack.c.b16 %v2002, %v2001
      %v2118 = vpack.c.b16 %v2004, %v2003
      %v2119 = vpack.c.b16 %v2006, %v2005
      %v2120 = vpack.c.b16 %v2008, %v2007
      %v2121 = vpack.c.b16 %v2010, %v2009
      %v2122 = vpack.c.b16 %v2012, %v2011
      %v2123 = vpack.c.b16 %v2014, %v2013
      %v2124 = vpack.c.b16 %v2016, %v2015
      %v2125 = vpack.c.b16 %v2018, %v2017
      %v2126 = vpack.c.b16 %v2020, %v2019
      %v2127 = vpack.c.b16 %v2022, %v2021
      %v2128 = vpack.c.b16 %v2024, %v2023
      %v2129 = vpack.c.b16 %v2026, %v2025
      %v2130 = vpack.c.b16 %v2028, %v2027
      %v2131 = vpack.c.b16 %v2030, %v2029
      %v2132 = vpack.c.b16 %v2032, %v2031
      %v2133 = vpack.c.b16 %v2034, %v2033
      %v2134 = vpack.c.b16 %v2036, %v2035
      %v2135 = vpack.c.b16 %v2038, %v2037
      %v2136 = vpack.c.b16 %v2040, %v2039
      %v2137 = vpack.c.b16 %v2042, %v2041
      %v2138 = vpack.c.b16 %v2044, %v2043
      %v2139 = vpack.c.b16 %v2046, %v2045
      %v2140 = vpack.c.b16 %v2048, %v2047
      %v2141 = vpack.c.b16 %v2050, %v2049
      %v2142 = vpack.c.b16 %v2052, %v2051
      %v2143 = vpack.c.b16 %v2054, %v2053
      %v2144 = vpack.c.b16 %v2056, %v2055
      %v2145 = vpack.c.b16 %v2058, %v2057
      %v2146 = vpack.c.b16 %v2060, %v2059
      %v2147 = vpack.c.b16 %v2062, %v2061
      %v2148 = vpack.c.b16 %v2064, %v2063
      %v2149 = vpack.c.b16 %v2066, %v2065
      %v2150 = vpack.c.b16 %v2068, %v2067
      %v2151 = vpack.c.b16 %v2070, %v2069
      %v2152 = vpack.c.b16 %v2072, %v2071
      %v2153 = vpack.c.b16 %v2074, %v2073
      %v2154 = vpack.c.b16 %v2076, %v2075
      %v2155 = vpack.c.b16 %v2078, %v2077
      %v2156 = vpack.c.b16 %v2080, %v2079
      %v2157 = vpack.c.b16 %v2082, %v2081
      %v2158 = vpack.c.b16 %v2084, %v2083
      %v2159 = vpack.c.b16 %v2086, %v2085
      %v2160 = vpack.c.b16 %v2088, %v2087
      %v2161 = vpack.c.b16 %v2090, %v2089
      %v2162 = vpack.c.b16 %v2092, %v2091
      %v2163 = vpack.c.b16 %v2094, %v2093
      %v2164 = vpack.c.b16 %v2096, %v2095
      %v2165 = vpack.c.b16 %v2098, %v2097
      %v2166 = vpack.c.b16 %v2100, %v2099
      %v2167 = vpack.c.b16 %v2102, %v2101
      %v2168 = vpack.c.b16 %v2104, %v2103
      %2233 = vmatprep.subr.bf16.mxu0 0
      %2234 = vmatpush1.bf16.msra.mxu0 %v2105
      %2235 = vmatprep.subr.bf16.mxu0 0
      %2236 = vmatpush1.bf16.msra.mxu0 %v2106
      %2237 = vmatprep.subr.bf16.mxu0 0
      %2238 = vmatpush1.bf16.msra.mxu0 %v2107
      %2239 = vmatprep.subr.bf16.mxu0 0
      %2240 = vmatpush1.bf16.msra.mxu0 %v2108
      %2241 = vmatprep.subr.bf16.mxu0 0
      %2242 = vmatpush1.bf16.msra.mxu0 %v2109
      %2243 = vmatprep.subr.bf16.mxu0 0
      %2244 = vmatpush1.bf16.msra.mxu0 %v2110
      %2245 = vmatprep.subr.bf16.mxu0 0
      %2246 = vmatpush1.bf16.msra.mxu0 %v2111
      %2247 = vmatprep.subr.bf16.mxu0 0
      %2248 = vmatpush1.bf16.msra.mxu0 %v2112
      %2249 = vmatprep.subr.bf16.mxu0 0
      %2250 = vmatpush1.bf16.msra.mxu0 %v2113
      %2251 = vmatprep.subr.bf16.mxu0 0
      %2252 = vmatpush1.bf16.msra.mxu0 %v2114
      %2253 = vmatprep.subr.bf16.mxu0 0
      %2254 = vmatpush1.bf16.msra.mxu0 %v2115
      %2255 = vmatprep.subr.bf16.mxu0 0
      %2256 = vmatpush1.bf16.msra.mxu0 %v2116
      %2257 = vmatprep.subr.bf16.mxu0 0
      %2258 = vmatpush1.bf16.msra.mxu0 %v2117
      %2259 = vmatprep.subr.bf16.mxu0 0
      %2260 = vmatpush1.bf16.msra.mxu0 %v2118
      %2261 = vmatprep.subr.bf16.mxu0 0
      %2262 = vmatpush1.bf16.msra.mxu0 %v2119
      %2263 = vmatprep.subr.bf16.mxu0 0
      %2264 = vmatpush1.bf16.msra.mxu0 %v2120
      %2265 = vmatprep.mubr.bf16.mxu0 %v1338
      %2266 = vmatmul.mubr.bf16.gmra.mrb[0].mxu0 %v1337
      %v2267 = vpop.f32.mrb[0].mxu0
      %v2268 = vadd.f32 %v567, %v2267
      %v2269 = vpop.f32.mrb[0].mxu0
      %v2270 = vpop.f32.mrb[0].mxu0
      %v2271 = vadd.f32 %v567, %v2270
      %v2272 = vpop.f32.mrb[0].mxu0
      %2273 = vmatprep.mubr.bf16.mxu0 %v1346
      %2274 = vmatmul.mubr.bf16.gmra.mrb[0].mxu0 %v1345
      %v2275 = vpop.f32.mrb[0].mxu0
      %v2276 = vadd.f32 %v567, %v2275
      %v2277 = vpop.f32.mrb[0].mxu0
      %v2278 = vpop.f32.mrb[0].mxu0
      %v2279 = vadd.f32 %v567, %v2278
      %v2280 = vpop.f32.mrb[0].mxu0
      %2281 = vmatprep.mubr.bf16.mxu0 %v1354
      %2282 = vmatmul.mubr.bf16.gmra.mrb[0].mxu0 %v1353
      %v2283 = vpop.f32.mrb[0].mxu0
      %v2284 = vadd.f32 %v567, %v2283
      %v2285 = vpop.f32.mrb[0].mxu0
      %v2286 = vpop.f32.mrb[0].mxu0
      %v2287 = vadd.f32 %v567, %v2286
      %v2288 = vpop.f32.mrb[0].mxu0
      %2289 = vmatprep.mubr.bf16.mxu0 %v1362
      %2290 = vmatmul.mubr.bf16.gmra.mrb[0].mxu0 %v1361
      %v2291 = vpop.f32.mrb[0].mxu0
      %v2292 = vadd.f32 %v567, %v2291
      %v2293 = vpop.f32.mrb[0].mxu0
      %v2294 = vpop.f32.mrb[0].mxu0
      %v2295 = vadd.f32 %v567, %v2294
      %v2296 = vpop.f32.mrb[0].mxu0
      %2297 = vmatprep.mubr.bf16.mxu0 %v1370
      %2298 = vmatmul.mubr.bf16.gmra.mrb[0].mxu0 %v1369
      %v2299 = vpop.f32.mrb[0].mxu0
      %v2300 = vadd.f32 %v567, %v2299
      %v2301 = vpop.f32.mrb[0].mxu0
      %v2302 = vpop.f32.mrb[0].mxu0
      %v2303 = vadd.f32 %v567, %v2302
      %v2304 = vpop.f32.mrb[0].mxu0
      %2305 = vmatprep.mubr.bf16.mxu0 %v1378
      %2306 = vmatmul.mubr.bf16.gmra.mrb[0].mxu0 %v1377
      %v2307 = vpop.f32.mrb[0].mxu0
      %v2308 = vadd.f32 %v567, %v2307
      %v2309 = vpop.f32.mrb[0].mxu0
      %v2310 = vpop.f32.mrb[0].mxu0
      %v2311 = vadd.f32 %v567, %v2310
      %v2312 = vpop.f32.mrb[0].mxu0
      %2313 = vmatprep.mubr.bf16.mxu0 %v1386
      %2314 = vmatmul.mubr.bf16.gmra.mrb[0].mxu0 %v1385
      %v2315 = vpop.f32.mrb[0].mxu0
      %v2316 = vadd.f32 %v567, %v2315
      %v2317 = vpop.f32.mrb[0].mxu0
      %v2318 = vpop.f32.mrb[0].mxu0
      %v2319 = vadd.f32 %v567, %v2318
      %v2320 = vpop.f32.mrb[0].mxu0
      %2321 = vmatprep.mubr.bf16.mxu0 %v1394
      %2322 = vmatmul.mubr.bf16.gmra.mrb[0].mxu0 %v1393
      %v2323 = vpop.f32.mrb[0].mxu0
      %v2324 = vadd.f32 %v567, %v2323
      %v2325 = vpop.f32.mrb[0].mxu0
      %v2326 = vpop.f32.mrb[0].mxu0
      %v2327 = vadd.f32 %v567, %v2326
      %v2328 = vpop.f32.mrb[0].mxu0
      %2329 = vmatprep.mubr.bf16.mxu0 %v1402
      %2330 = vmatmul.mubr.bf16.gmra.mrb[0].mxu0 %v1401
      %v2331 = vpop.f32.mrb[0].mxu0
      %v2332 = vadd.f32 %v567, %v2331
      %v2333 = vpop.f32.mrb[0].mxu0
      %v2334 = vpop.f32.mrb[0].mxu0
      %v2335 = vadd.f32 %v567, %v2334
      %v2336 = vpop.f32.mrb[0].mxu0
      %2337 = vmatprep.mubr.bf16.mxu0 %v1410
      %2338 = vmatmul.mubr.bf16.gmra.mrb[0].mxu0 %v1409
      %v2339 = vpop.f32.mrb[0].mxu0
      %v2340 = vadd.f32 %v567, %v2339
      %v2341 = vpop.f32.mrb[0].mxu0
      %v2342 = vpop.f32.mrb[0].mxu0
      %v2343 = vadd.f32 %v567, %v2342
      %v2344 = vpop.f32.mrb[0].mxu0
      %2345 = vmatprep.mubr.bf16.mxu0 %v1418
      %2346 = vmatmul.mubr.bf16.gmra.mrb[0].mxu0 %v1417
      %v2347 = vpop.f32.mrb[0].mxu0
      %v2348 = vadd.f32 %v567, %v2347
      %v2349 = vpop.f32.mrb[0].mxu0
      %v2350 = vpop.f32.mrb[0].mxu0
      %v2351 = vadd.f32 %v567, %v2350
      %v2352 = vpop.f32.mrb[0].mxu0
      %2353 = vmatprep.mubr.bf16.mxu0 %v1426
      %2354 = vmatmul.mubr.bf16.gmra.mrb[0].mxu0 %v1425
      %v2355 = vpop.f32.mrb[0].mxu0
      %v2356 = vadd.f32 %v567, %v2355
      %v2357 = vpop.f32.mrb[0].mxu0
      %v2358 = vpop.f32.mrb[0].mxu0
      %v2359 = vadd.f32 %v567, %v2358
      %v2360 = vpop.f32.mrb[0].mxu0
      %2361 = vmatprep.mubr.bf16.mxu0 %v1434
      %2362 = vmatmul.mubr.bf16.gmra.mrb[0].mxu0 %v1433
      %v2363 = vpop.f32.mrb[0].mxu0
      %v2364 = vadd.f32 %v567, %v2363
      %v2365 = vpop.f32.mrb[0].mxu0
      %v2366 = vpop.f32.mrb[0].mxu0
      %v2367 = vadd.f32 %v567, %v2366
      %v2368 = vpop.f32.mrb[0].mxu0
      %2369 = vmatprep.mubr.bf16.mxu0 %v1442
      %2370 = vmatmul.mubr.bf16.gmra.mrb[0].mxu0 %v1441
      %v2371 = vpop.f32.mrb[0].mxu0
      %v2372 = vadd.f32 %v567, %v2371
      %v2373 = vpop.f32.mrb[0].mxu0
      %v2374 = vpop.f32.mrb[0].mxu0
      %v2375 = vadd.f32 %v567, %v2374
      %v2376 = vpop.f32.mrb[0].mxu0
      %2377 = vmatprep.mubr.bf16.mxu0 %v1450
      %2378 = vmatmul.mubr.bf16.gmra.mrb[0].mxu0 %v1449
      %v2379 = vpop.f32.mrb[0].mxu0
      %v2380 = vadd.f32 %v567, %v2379
      %v2381 = vpop.f32.mrb[0].mxu0
      %v2382 = vpop.f32.mrb[0].mxu0
      %v2383 = vadd.f32 %v567, %v2382
      %v2384 = vpop.f32.mrb[0].mxu0
      %2385 = vmatprep.mubr.bf16.mxu0 %v1458
      %2386 = vmatmul.mubr.bf16.gmra.mrb[0].mxu0 %v1457
      %v2387 = vpop.f32.mrb[0].mxu0
      %v2388 = vadd.f32 %v567, %v2387
      %v2389 = vpop.f32.mrb[0].mxu0
      %v2390 = vpop.f32.mrb[0].mxu0
      %v2391 = vadd.f32 %v567, %v2390
      %v2392 = vpop.f32.mrb[0].mxu0
      %2393 = vmatprep.mubr.bf16.mxu0 %v1466
      %2394 = vmatmul.mubr.bf16.gmra.mrb[0].mxu0 %v1465
      %v2395 = vpop.f32.mrb[0].mxu0
      %v2396 = vadd.f32 %v567, %v2395
      %v2397 = vpop.f32.mrb[0].mxu0
      %v2398 = vpop.f32.mrb[0].mxu0
      %v2399 = vadd.f32 %v567, %v2398
      %v2400 = vpop.f32.mrb[0].mxu0
      %2401 = vmatprep.mubr.bf16.mxu0 %v1474
      %2402 = vmatmul.mubr.bf16.gmra.mrb[0].mxu0 %v1473
      %v2403 = vpop.f32.mrb[0].mxu0
      %v2404 = vadd.f32 %v567, %v2403
      %v2405 = vpop.f32.mrb[0].mxu0
      %v2406 = vpop.f32.mrb[0].mxu0
      %v2407 = vadd.f32 %v567, %v2406
      %v2408 = vpop.f32.mrb[0].mxu0
      %2409 = vmatprep.mubr.bf16.mxu0 %v1482
      %2410 = vmatmul.mubr.bf16.gmra.mrb[0].mxu0 %v1481
      %v2411 = vpop.f32.mrb[0].mxu0
      %v2412 = vadd.f32 %v567, %v2411
      %v2413 = vpop.f32.mrb[0].mxu0
      %v2414 = vpop.f32.mrb[0].mxu0
      %v2415 = vadd.f32 %v567, %v2414
      %v2416 = vpop.f32.mrb[0].mxu0
      %2417 = vmatprep.mubr.bf16.mxu0 %v1490
      %2418 = vmatmul.mubr.bf16.gmra.mrb[0].mxu0 %v1489
      %v2419 = vpop.f32.mrb[0].mxu0
      %v2420 = vadd.f32 %v567, %v2419
      %v2421 = vpop.f32.mrb[0].mxu0
      %v2422 = vpop.f32.mrb[0].mxu0
      %v2423 = vadd.f32 %v567, %v2422
      %v2424 = vpop.f32.mrb[0].mxu0
      %2425 = vmatprep.mubr.bf16.mxu0 %v1498
      %2426 = vmatmul.mubr.bf16.gmra.mrb[0].mxu0 %v1497
      %v2427 = vpop.f32.mrb[0].mxu0
      %v2428 = vadd.f32 %v567, %v2427
      %v2429 = vpop.f32.mrb[0].mxu0
      %v2430 = vpop.f32.mrb[0].mxu0
      %v2431 = vadd.f32 %v567, %v2430
      %v2432 = vpop.f32.mrb[0].mxu0
      %2433 = vmatprep.mubr.bf16.mxu0 %v1506
      %2434 = vmatmul.mubr.bf16.gmra.mrb[0].mxu0 %v1505
      %v2435 = vpop.f32.mrb[0].mxu0
      %v2436 = vadd.f32 %v567, %v2435
      %v2437 = vpop.f32.mrb[0].mxu0
      %v2438 = vpop.f32.mrb[0].mxu0
      %v2439 = vadd.f32 %v567, %v2438
      %v2440 = vpop.f32.mrb[0].mxu0
      %2441 = vmatprep.mubr.bf16.mxu0 %v1514
      %2442 = vmatmul.mubr.bf16.gmra.mrb[0].mxu0 %v1513
      %v2443 = vpop.f32.mrb[0].mxu0
      %v2444 = vadd.f32 %v567, %v2443
      %v2445 = vpop.f32.mrb[0].mxu0
      %v2446 = vpop.f32.mrb[0].mxu0
      %v2447 = vadd.f32 %v567, %v2446
      %v2448 = vpop.f32.mrb[0].mxu0
      %2449 = vmatprep.mubr.bf16.mxu0 %v1522
      %2450 = vmatmul.mubr.bf16.gmra.mrb[0].mxu0 %v1521
      %v2451 = vpop.f32.mrb[0].mxu0
      %v2452 = vadd.f32 %v567, %v2451
      %v2453 = vpop.f32.mrb[0].mxu0
      %v2454 = vpop.f32.mrb[0].mxu0
      %v2455 = vadd.f32 %v567, %v2454
      %v2456 = vpop.f32.mrb[0].mxu0
      %2457 = vmatprep.mubr.bf16.mxu0 %v1530
      %2458 = vmatmul.mubr.bf16.gmra.mrb[0].mxu0 %v1529
      %v2459 = vpop.f32.mrb[0].mxu0
      %v2460 = vadd.f32 %v567, %v2459
      %v2461 = vpop.f32.mrb[0].mxu0
      %v2462 = vpop.f32.mrb[0].mxu0
      %v2463 = vadd.f32 %v567, %v2462
      %v2464 = vpop.f32.mrb[0].mxu0
      %2465 = vmatprep.mubr.bf16.mxu0 %v1538
      %2466 = vmatmul.mubr.bf16.gmra.mrb[0].mxu0 %v1537
      %v2467 = vpop.f32.mrb[0].mxu0
      %v2468 = vadd.f32 %v567, %v2467
      %v2469 = vpop.f32.mrb[0].mxu0
      %v2470 = vpop.f32.mrb[0].mxu0
      %v2471 = vadd.f32 %v567, %v2470
      %v2472 = vpop.f32.mrb[0].mxu0
      %2473 = vmatprep.mubr.bf16.mxu0 %v1546
      %2474 = vmatmul.mubr.bf16.gmra.mrb[0].mxu0 %v1545
      %v2475 = vpop.f32.mrb[0].mxu0
      %v2476 = vadd.f32 %v567, %v2475
      %v2477 = vpop.f32.mrb[0].mxu0
      %v2478 = vpop.f32.mrb[0].mxu0
      %v2479 = vadd.f32 %v567, %v2478
      %v2480 = vpop.f32.mrb[0].mxu0
      %2481 = vmatprep.mubr.bf16.mxu0 %v1554
      %2482 = vmatmul.mubr.bf16.gmra.mrb[0].mxu0 %v1553
      %v2483 = vpop.f32.mrb[0].mxu0
      %v2484 = vadd.f32 %v567, %v2483
      %v2485 = vpop.f32.mrb[0].mxu0
      %v2486 = vpop.f32.mrb[0].mxu0
      %v2487 = vadd.f32 %v567, %v2486
      %v2488 = vpop.f32.mrb[0].mxu0
      %2489 = vmatprep.mubr.bf16.mxu0 %v1562
      %2490 = vmatmul.mubr.bf16.gmra.mrb[0].mxu0 %v1561
      %v2491 = vpop.f32.mrb[0].mxu0
      %v2492 = vadd.f32 %v567, %v2491
      %v2493 = vpop.f32.mrb[0].mxu0
      %v2494 = vpop.f32.mrb[0].mxu0
      %v2495 = vadd.f32 %v567, %v2494
      %v2496 = vpop.f32.mrb[0].mxu0
      %2497 = vmatprep.mubr.bf16.mxu0 %v1570
      %2498 = vmatmul.mubr.bf16.gmra.mrb[0].mxu0 %v1569
      %v2499 = vpop.f32.mrb[0].mxu0
      %v2500 = vadd.f32 %v567, %v2499
      %v2501 = vpop.f32.mrb[0].mxu0
      %v2502 = vpop.f32.mrb[0].mxu0
      %v2503 = vadd.f32 %v567, %v2502
      %v2504 = vpop.f32.mrb[0].mxu0
      %2505 = vmatprep.mubr.bf16.mxu0 %v1578
      %2506 = vmatmul.mubr.bf16.gmra.mrb[0].mxu0 %v1577
      %v2507 = vpop.f32.mrb[0].mxu0
      %v2508 = vadd.f32 %v567, %v2507
      %v2509 = vpop.f32.mrb[0].mxu0
      %v2510 = vpop.f32.mrb[0].mxu0
      %v2511 = vadd.f32 %v567, %v2510
      %v2512 = vpop.f32.mrb[0].mxu0
      %2513 = vmatprep.mubr.bf16.mxu0 %v1586
      %2514 = vmatmul.mubr.bf16.gmra.mrb[0].mxu0 %v1585
      %v2515 = vpop.f32.mrb[0].mxu0
      %v2516 = vadd.f32 %v567, %v2515
      %v2517 = vpop.f32.mrb[0].mxu0
      %v2518 = vpop.f32.mrb[0].mxu0
      %v2519 = vadd.f32 %v567, %v2518
      %v2520 = vpop.f32.mrb[0].mxu0
      %2521 = vdwg.mxu0
      %2522 = vmatprep.subr.bf16.mxu0 0
      %2523 = vmatpush1.bf16.msra.mxu0 %v2121
      %2524 = vmatprep.subr.bf16.mxu0 0
      %2525 = vmatpush1.bf16.msra.mxu0 %v2122
      %2526 = vmatprep.subr.bf16.mxu0 0
      %2527 = vmatpush1.bf16.msra.mxu0 %v2123
      %2528 = vmatprep.subr.bf16.mxu0 0
      %2529 = vmatpush1.bf16.msra.mxu0 %v2124
      %2530 = vmatprep.subr.bf16.mxu0 0
      %2531 = vmatpush1.bf16.msra.mxu0 %v2125
      %2532 = vmatprep.subr.bf16.mxu0 0
      %2533 = vmatpush1.bf16.msra.mxu0 %v2126
      %2534 = vmatprep.subr.bf16.mxu0 0
      %2535 = vmatpush1.bf16.msra.mxu0 %v2127
      %2536 = vmatprep.subr.bf16.mxu0 0
      %2537 = vmatpush1.bf16.msra.mxu0 %v2128
      %2538 = vmatprep.subr.bf16.mxu0 0
      %2539 = vmatpush1.bf16.msra.mxu0 %v2129
      %2540 = vmatprep.subr.bf16.mxu0 0
      %2541 = vmatpush1.bf16.msra.mxu0 %v2130
      %2542 = vmatprep.subr.bf16.mxu0 0
      %2543 = vmatpush1.bf16.msra.mxu0 %v2131
      %2544 = vmatprep.subr.bf16.mxu0 0
      %2545 = vmatpush1.bf16.msra.mxu0 %v2132
      %2546 = vmatprep.subr.bf16.mxu0 0
      %2547 = vmatpush1.bf16.msra.mxu0 %v2133
      %2548 = vmatprep.subr.bf16.mxu0 0
      %2549 = vmatpush1.bf16.msra.mxu0 %v2134
      %2550 = vmatprep.subr.bf16.mxu0 0
      %2551 = vmatpush1.bf16.msra.mxu0 %v2135
      %2552 = vmatprep.subr.bf16.mxu0 0
      %2553 = vmatpush1.bf16.msra.mxu0 %v2136
      %2554 = vmatprep.mubr.bf16.mxu0 %v1340
      %2555 = vmatmul.mubr.bf16.gmra.mrb[0].mxu0 %v1339
      %v2556 = vpop.f32.mrb[0].mxu0
      %v2557 = vadd.f32 %v2268, %v2556
      %v2558 = vpop.f32.mrb[0].mxu0
      %v2559 = vpop.f32.mrb[0].mxu0
      %v2560 = vadd.f32 %v2271, %v2559
      %v2561 = vpop.f32.mrb[0].mxu0
      %2562 = vmatprep.mubr.bf16.mxu0 %v1348
      %2563 = vmatmul.mubr.bf16.gmra.mrb[0].mxu0 %v1347
      %v2564 = vpop.f32.mrb[0].mxu0
      %v2565 = vadd.f32 %v2276, %v2564
      %v2566 = vpop.f32.mrb[0].mxu0
      %v2567 = vpop.f32.mrb[0].mxu0
      %v2568 = vadd.f32 %v2279, %v2567
      %v2569 = vpop.f32.mrb[0].mxu0
      %2570 = vmatprep.mubr.bf16.mxu0 %v1356
      %2571 = vmatmul.mubr.bf16.gmra.mrb[0].mxu0 %v1355
      %v2572 = vpop.f32.mrb[0].mxu0
      %v2573 = vadd.f32 %v2284, %v2572
      %v2574 = vpop.f32.mrb[0].mxu0
      %v2575 = vpop.f32.mrb[0].mxu0
      %v2576 = vadd.f32 %v2287, %v2575
      %v2577 = vpop.f32.mrb[0].mxu0
      %2578 = vmatprep.mubr.bf16.mxu0 %v1364
      %2579 = vmatmul.mubr.bf16.gmra.mrb[0].mxu0 %v1363
      %v2580 = vpop.f32.mrb[0].mxu0
      %v2581 = vadd.f32 %v2292, %v2580
      %v2582 = vpop.f32.mrb[0].mxu0
      %v2583 = vpop.f32.mrb[0].mxu0
      %v2584 = vadd.f32 %v2295, %v2583
      %v2585 = vpop.f32.mrb[0].mxu0
      %2586 = vmatprep.mubr.bf16.mxu0 %v1372
      %2587 = vmatmul.mubr.bf16.gmra.mrb[0].mxu0 %v1371
      %v2588 = vpop.f32.mrb[0].mxu0
      %v2589 = vadd.f32 %v2300, %v2588
      %v2590 = vpop.f32.mrb[0].mxu0
      %v2591 = vpop.f32.mrb[0].mxu0
      %v2592 = vadd.f32 %v2303, %v2591
      %v2593 = vpop.f32.mrb[0].mxu0
      %2594 = vmatprep.mubr.bf16.mxu0 %v1380
      %2595 = vmatmul.mubr.bf16.gmra.mrb[0].mxu0 %v1379
      %v2596 = vpop.f32.mrb[0].mxu0
      %v2597 = vadd.f32 %v2308, %v2596
      %v2598 = vpop.f32.mrb[0].mxu0
      %v2599 = vpop.f32.mrb[0].mxu0
      %v2600 = vadd.f32 %v2311, %v2599
      %v2601 = vpop.f32.mrb[0].mxu0
      %2602 = vmatprep.mubr.bf16.mxu0 %v1388
      %2603 = vmatmul.mubr.bf16.gmra.mrb[0].mxu0 %v1387
      %v2604 = vpop.f32.mrb[0].mxu0
      %v2605 = vadd.f32 %v2316, %v2604
      %v2606 = vpop.f32.mrb[0].mxu0
      %v2607 = vpop.f32.mrb[0].mxu0
      %v2608 = vadd.f32 %v2319, %v2607
      %v2609 = vpop.f32.mrb[0].mxu0
      %2610 = vmatprep.mubr.bf16.mxu0 %v1396
      %2611 = vmatmul.mubr.bf16.gmra.mrb[0].mxu0 %v1395
      %v2612 = vpop.f32.mrb[0].mxu0
      %v2613 = vadd.f32 %v2324, %v2612
      %v2614 = vpop.f32.mrb[0].mxu0
      %v2615 = vpop.f32.mrb[0].mxu0
      %v2616 = vadd.f32 %v2327, %v2615
      %v2617 = vpop.f32.mrb[0].mxu0
      %2618 = vmatprep.mubr.bf16.mxu0 %v1404
      %2619 = vmatmul.mubr.bf16.gmra.mrb[0].mxu0 %v1403
      %v2620 = vpop.f32.mrb[0].mxu0
      %v2621 = vadd.f32 %v2332, %v2620
      %v2622 = vpop.f32.mrb[0].mxu0
      %v2623 = vpop.f32.mrb[0].mxu0
      %v2624 = vadd.f32 %v2335, %v2623
      %v2625 = vpop.f32.mrb[0].mxu0
      %2626 = vmatprep.mubr.bf16.mxu0 %v1412
      %2627 = vmatmul.mubr.bf16.gmra.mrb[0].mxu0 %v1411
      %v2628 = vpop.f32.mrb[0].mxu0
      %v2629 = vadd.f32 %v2340, %v2628
      %v2630 = vpop.f32.mrb[0].mxu0
      %v2631 = vpop.f32.mrb[0].mxu0
      %v2632 = vadd.f32 %v2343, %v2631
      %v2633 = vpop.f32.mrb[0].mxu0
      %2634 = vmatprep.mubr.bf16.mxu0 %v1420
      %2635 = vmatmul.mubr.bf16.gmra.mrb[0].mxu0 %v1419
      %v2636 = vpop.f32.mrb[0].mxu0
      %v2637 = vadd.f32 %v2348, %v2636
      %v2638 = vpop.f32.mrb[0].mxu0
      %v2639 = vpop.f32.mrb[0].mxu0
      %v2640 = vadd.f32 %v2351, %v2639
      %v2641 = vpop.f32.mrb[0].mxu0
      %2642 = vmatprep.mubr.bf16.mxu0 %v1428
      %2643 = vmatmul.mubr.bf16.gmra.mrb[0].mxu0 %v1427
      %v2644 = vpop.f32.mrb[0].mxu0
      %v2645 = vadd.f32 %v2356, %v2644
      %v2646 = vpop.f32.mrb[0].mxu0
      %v2647 = vpop.f32.mrb[0].mxu0
      %v2648 = vadd.f32 %v2359, %v2647
      %v2649 = vpop.f32.mrb[0].mxu0
      %2650 = vmatprep.mubr.bf16.mxu0 %v1436
      %2651 = vmatmul.mubr.bf16.gmra.mrb[0].mxu0 %v1435
      %v2652 = vpop.f32.mrb[0].mxu0
      %v2653 = vadd.f32 %v2364, %v2652
      %v2654 = vpop.f32.mrb[0].mxu0
      %v2655 = vpop.f32.mrb[0].mxu0
      %v2656 = vadd.f32 %v2367, %v2655
      %v2657 = vpop.f32.mrb[0].mxu0
      %2658 = vmatprep.mubr.bf16.mxu0 %v1444
      %2659 = vmatmul.mubr.bf16.gmra.mrb[0].mxu0 %v1443
      %v2660 = vpop.f32.mrb[0].mxu0
      %v2661 = vadd.f32 %v2372, %v2660
      %v2662 = vpop.f32.mrb[0].mxu0
      %v2663 = vpop.f32.mrb[0].mxu0
      %v2664 = vadd.f32 %v2375, %v2663
      %v2665 = vpop.f32.mrb[0].mxu0
      %2666 = vmatprep.mubr.bf16.mxu0 %v1452
      %2667 = vmatmul.mubr.bf16.gmra.mrb[0].mxu0 %v1451
      %v2668 = vpop.f32.mrb[0].mxu0
      %v2669 = vadd.f32 %v2380, %v2668
      %v2670 = vpop.f32.mrb[0].mxu0
      %v2671 = vpop.f32.mrb[0].mxu0
      %v2672 = vadd.f32 %v2383, %v2671
      %v2673 = vpop.f32.mrb[0].mxu0
      %2674 = vmatprep.mubr.bf16.mxu0 %v1460
      %2675 = vmatmul.mubr.bf16.gmra.mrb[0].mxu0 %v1459
      %v2676 = vpop.f32.mrb[0].mxu0
      %v2677 = vadd.f32 %v2388, %v2676
      %v2678 = vpop.f32.mrb[0].mxu0
      %v2679 = vpop.f32.mrb[0].mxu0
      %v2680 = vadd.f32 %v2391, %v2679
      %v2681 = vpop.f32.mrb[0].mxu0
      %2682 = vmatprep.mubr.bf16.mxu0 %v1468
      %2683 = vmatmul.mubr.bf16.gmra.mrb[0].mxu0 %v1467
      %v2684 = vpop.f32.mrb[0].mxu0
      %v2685 = vadd.f32 %v2396, %v2684
      %v2686 = vpop.f32.mrb[0].mxu0
      %v2687 = vpop.f32.mrb[0].mxu0
      %v2688 = vadd.f32 %v2399, %v2687
      %v2689 = vpop.f32.mrb[0].mxu0
      %2690 = vmatprep.mubr.bf16.mxu0 %v1476
      %2691 = vmatmul.mubr.bf16.gmra.mrb[0].mxu0 %v1475
      %v2692 = vpop.f32.mrb[0].mxu0
      %v2693 = vadd.f32 %v2404, %v2692
      %v2694 = vpop.f32.mrb[0].mxu0
      %v2695 = vpop.f32.mrb[0].mxu0
      %v2696 = vadd.f32 %v2407, %v2695
      %v2697 = vpop.f32.mrb[0].mxu0
      %2698 = vmatprep.mubr.bf16.mxu0 %v1484
      %2699 = vmatmul.mubr.bf16.gmra.mrb[0].mxu0 %v1483
      %v2700 = vpop.f32.mrb[0].mxu0
      %v2701 = vadd.f32 %v2412, %v2700
      %v2702 = vpop.f32.mrb[0].mxu0
      %v2703 = vpop.f32.mrb[0].mxu0
      %v2704 = vadd.f32 %v2415, %v2703
      %v2705 = vpop.f32.mrb[0].mxu0
      %2706 = vmatprep.mubr.bf16.mxu0 %v1492
      %2707 = vmatmul.mubr.bf16.gmra.mrb[0].mxu0 %v1491
      %v2708 = vpop.f32.mrb[0].mxu0
      %v2709 = vadd.f32 %v2420, %v2708
      %v2710 = vpop.f32.mrb[0].mxu0
      %v2711 = vpop.f32.mrb[0].mxu0
      %v2712 = vadd.f32 %v2423, %v2711
      %v2713 = vpop.f32.mrb[0].mxu0
      %2714 = vmatprep.mubr.bf16.mxu0 %v1500
      %2715 = vmatmul.mubr.bf16.gmra.mrb[0].mxu0 %v1499
      %v2716 = vpop.f32.mrb[0].mxu0
      %v2717 = vadd.f32 %v2428, %v2716
      %v2718 = vpop.f32.mrb[0].mxu0
      %v2719 = vpop.f32.mrb[0].mxu0
      %v2720 = vadd.f32 %v2431, %v2719
      %v2721 = vpop.f32.mrb[0].mxu0
      %2722 = vmatprep.mubr.bf16.mxu0 %v1508
      %2723 = vmatmul.mubr.bf16.gmra.mrb[0].mxu0 %v1507
      %v2724 = vpop.f32.mrb[0].mxu0
      %v2725 = vadd.f32 %v2436, %v2724
      %v2726 = vpop.f32.mrb[0].mxu0
      %v2727 = vpop.f32.mrb[0].mxu0
      %v2728 = vadd.f32 %v2439, %v2727
      %v2729 = vpop.f32.mrb[0].mxu0
      %2730 = vmatprep.mubr.bf16.mxu0 %v1516
      %2731 = vmatmul.mubr.bf16.gmra.mrb[0].mxu0 %v1515
      %v2732 = vpop.f32.mrb[0].mxu0
      %v2733 = vadd.f32 %v2444, %v2732
      %v2734 = vpop.f32.mrb[0].mxu0
      %v2735 = vpop.f32.mrb[0].mxu0
      %v2736 = vadd.f32 %v2447, %v2735
      %v2737 = vpop.f32.mrb[0].mxu0
      %2738 = vmatprep.mubr.bf16.mxu0 %v1524
      %2739 = vmatmul.mubr.bf16.gmra.mrb[0].mxu0 %v1523
      %v2740 = vpop.f32.mrb[0].mxu0
      %v2741 = vadd.f32 %v2452, %v2740
      %v2742 = vpop.f32.mrb[0].mxu0
      %v2743 = vpop.f32.mrb[0].mxu0
      %v2744 = vadd.f32 %v2455, %v2743
      %v2745 = vpop.f32.mrb[0].mxu0
      %2746 = vmatprep.mubr.bf16.mxu0 %v1532
      %2747 = vmatmul.mubr.bf16.gmra.mrb[0].mxu0 %v1531
      %v2748 = vpop.f32.mrb[0].mxu0
      %v2749 = vadd.f32 %v2460, %v2748
      %v2750 = vpop.f32.mrb[0].mxu0
      %v2751 = vpop.f32.mrb[0].mxu0
      %v2752 = vadd.f32 %v2463, %v2751
      %v2753 = vpop.f32.mrb[0].mxu0
      %2754 = vmatprep.mubr.bf16.mxu0 %v1540
      %2755 = vmatmul.mubr.bf16.gmra.mrb[0].mxu0 %v1539
      %v2756 = vpop.f32.mrb[0].mxu0
      %v2757 = vadd.f32 %v2468, %v2756
      %v2758 = vpop.f32.mrb[0].mxu0
      %v2759 = vpop.f32.mrb[0].mxu0
      %v2760 = vadd.f32 %v2471, %v2759
      %v2761 = vpop.f32.mrb[0].mxu0
      %2762 = vmatprep.mubr.bf16.mxu0 %v1548
      %2763 = vmatmul.mubr.bf16.gmra.mrb[0].mxu0 %v1547
      %v2764 = vpop.f32.mrb[0].mxu0
      %v2765 = vadd.f32 %v2476, %v2764
      %v2766 = vpop.f32.mrb[0].mxu0
      %v2767 = vpop.f32.mrb[0].mxu0
      %v2768 = vadd.f32 %v2479, %v2767
      %v2769 = vpop.f32.mrb[0].mxu0
      %2770 = vmatprep.mubr.bf16.mxu0 %v1556
      %2771 = vmatmul.mubr.bf16.gmra.mrb[0].mxu0 %v1555
      %v2772 = vpop.f32.mrb[0].mxu0
      %v2773 = vadd.f32 %v2484, %v2772
      %v2774 = vpop.f32.mrb[0].mxu0
      %v2775 = vpop.f32.mrb[0].mxu0
      %v2776 = vadd.f32 %v2487, %v2775
      %v2777 = vpop.f32.mrb[0].mxu0
      %2778 = vmatprep.mubr.bf16.mxu0 %v1564
      %2779 = vmatmul.mubr.bf16.gmra.mrb[0].mxu0 %v1563
      %v2780 = vpop.f32.mrb[0].mxu0
      %v2781 = vadd.f32 %v2492, %v2780
      %v2782 = vpop.f32.mrb[0].mxu0
      %v2783 = vpop.f32.mrb[0].mxu0
      %v2784 = vadd.f32 %v2495, %v2783
      %v2785 = vpop.f32.mrb[0].mxu0
      %2786 = vmatprep.mubr.bf16.mxu0 %v1572
      %2787 = vmatmul.mubr.bf16.gmra.mrb[0].mxu0 %v1571
      %v2788 = vpop.f32.mrb[0].mxu0
      %v2789 = vadd.f32 %v2500, %v2788
      %v2790 = vpop.f32.mrb[0].mxu0
      %v2791 = vpop.f32.mrb[0].mxu0
      %v2792 = vadd.f32 %v2503, %v2791
      %v2793 = vpop.f32.mrb[0].mxu0
      %2794 = vmatprep.mubr.bf16.mxu0 %v1580
      %2795 = vmatmul.mubr.bf16.gmra.mrb[0].mxu0 %v1579
      %v2796 = vpop.f32.mrb[0].mxu0
      %v2797 = vadd.f32 %v2508, %v2796
      %v2798 = vpop.f32.mrb[0].mxu0
      %v2799 = vpop.f32.mrb[0].mxu0
      %v2800 = vadd.f32 %v2511, %v2799
      %v2801 = vpop.f32.mrb[0].mxu0
      %2802 = vmatprep.mubr.bf16.mxu0 %v1588
      %2803 = vmatmul.mubr.bf16.gmra.mrb[0].mxu0 %v1587
      %v2804 = vpop.f32.mrb[0].mxu0
      %v2805 = vadd.f32 %v2516, %v2804
      %v2806 = vpop.f32.mrb[0].mxu0
      %v2807 = vpop.f32.mrb[0].mxu0
      %v2808 = vadd.f32 %v2519, %v2807
      %v2809 = vpop.f32.mrb[0].mxu0
      %2810 = vdwg.mxu0
      %2811 = vmatprep.subr.bf16.mxu0 0
      %2812 = vmatpush1.bf16.msra.mxu0 %v2137
      %2813 = vmatprep.subr.bf16.mxu0 0
      %2814 = vmatpush1.bf16.msra.mxu0 %v2138
      %2815 = vmatprep.subr.bf16.mxu0 0
      %2816 = vmatpush1.bf16.msra.mxu0 %v2139
      %2817 = vmatprep.subr.bf16.mxu0 0
      %2818 = vmatpush1.bf16.msra.mxu0 %v2140
      %2819 = vmatprep.subr.bf16.mxu0 0
      %2820 = vmatpush1.bf16.msra.mxu0 %v2141
      %2821 = vmatprep.subr.bf16.mxu0 0
      %2822 = vmatpush1.bf16.msra.mxu0 %v2142
      %2823 = vmatprep.subr.bf16.mxu0 0
      %2824 = vmatpush1.bf16.msra.mxu0 %v2143
      %2825 = vmatprep.subr.bf16.mxu0 0
      %2826 = vmatpush1.bf16.msra.mxu0 %v2144
      %2827 = vmatprep.subr.bf16.mxu0 0
      %2828 = vmatpush1.bf16.msra.mxu0 %v2145
      %2829 = vmatprep.subr.bf16.mxu0 0
      %2830 = vmatpush1.bf16.msra.mxu0 %v2146
      %2831 = vmatprep.subr.bf16.mxu0 0
      %2832 = vmatpush1.bf16.msra.mxu0 %v2147
      %2833 = vmatprep.subr.bf16.mxu0 0
      %2834 = vmatpush1.bf16.msra.mxu0 %v2148
      %2835 = vmatprep.subr.bf16.mxu0 0
      %2836 = vmatpush1.bf16.msra.mxu0 %v2149
      %2837 = vmatprep.subr.bf16.mxu0 0
      %2838 = vmatpush1.bf16.msra.mxu0 %v2150
      %2839 = vmatprep.subr.bf16.mxu0 0
      %2840 = vmatpush1.bf16.msra.mxu0 %v2151
      %2841 = vmatprep.subr.bf16.mxu0 0
      %2842 = vmatpush1.bf16.msra.mxu0 %v2152
      %2843 = vmatprep.mubr.bf16.mxu0 %v1342
      %2844 = vmatmul.mubr.bf16.gmra.mrb[0].mxu0 %v1341
      %v2845 = vpop.f32.mrb[0].mxu0
      %v2846 = vadd.f32 %v2557, %v2845
      %v2847 = vpop.f32.mrb[0].mxu0
      %v2848 = vpop.f32.mrb[0].mxu0
      %v2849 = vadd.f32 %v2560, %v2848
      %v2850 = vpop.f32.mrb[0].mxu0
      %2851 = vmatprep.mubr.bf16.mxu0 %v1350
      %2852 = vmatmul.mubr.bf16.gmra.mrb[0].mxu0 %v1349
      %v2853 = vpop.f32.mrb[0].mxu0
      %v2854 = vadd.f32 %v2565, %v2853
      %v2855 = vpop.f32.mrb[0].mxu0
      %v2856 = vpop.f32.mrb[0].mxu0
      %v2857 = vadd.f32 %v2568, %v2856
      %v2858 = vpop.f32.mrb[0].mxu0
      %2859 = vmatprep.mubr.bf16.mxu0 %v1358
      %2860 = vmatmul.mubr.bf16.gmra.mrb[0].mxu0 %v1357
      %v2861 = vpop.f32.mrb[0].mxu0
      %v2862 = vadd.f32 %v2573, %v2861
      %v2863 = vpop.f32.mrb[0].mxu0
      %v2864 = vpop.f32.mrb[0].mxu0
      %v2865 = vadd.f32 %v2576, %v2864
      %v2866 = vpop.f32.mrb[0].mxu0
      %2867 = vmatprep.mubr.bf16.mxu0 %v1366
      %2868 = vmatmul.mubr.bf16.gmra.mrb[0].mxu0 %v1365
      %v2869 = vpop.f32.mrb[0].mxu0
      %v2870 = vadd.f32 %v2581, %v2869
      %v2871 = vpop.f32.mrb[0].mxu0
      %v2872 = vpop.f32.mrb[0].mxu0
      %v2873 = vadd.f32 %v2584, %v2872
      %v2874 = vpop.f32.mrb[0].mxu0
      %2875 = vmatprep.mubr.bf16.mxu0 %v1374
      %2876 = vmatmul.mubr.bf16.gmra.mrb[0].mxu0 %v1373
      %v2877 = vpop.f32.mrb[0].mxu0
      %v2878 = vadd.f32 %v2589, %v2877
      %v2879 = vpop.f32.mrb[0].mxu0
      %v2880 = vpop.f32.mrb[0].mxu0
      %v2881 = vadd.f32 %v2592, %v2880
      %v2882 = vpop.f32.mrb[0].mxu0
      %2883 = vmatprep.mubr.bf16.mxu0 %v1382
      %2884 = vmatmul.mubr.bf16.gmra.mrb[0].mxu0 %v1381
      %v2885 = vpop.f32.mrb[0].mxu0
      %v2886 = vadd.f32 %v2597, %v2885
      %v2887 = vpop.f32.mrb[0].mxu0
      %v2888 = vpop.f32.mrb[0].mxu0
      %v2889 = vadd.f32 %v2600, %v2888
      %v2890 = vpop.f32.mrb[0].mxu0
      %2891 = vmatprep.mubr.bf16.mxu0 %v1390
      %2892 = vmatmul.mubr.bf16.gmra.mrb[0].mxu0 %v1389
      %v2893 = vpop.f32.mrb[0].mxu0
      %v2894 = vadd.f32 %v2605, %v2893
      %v2895 = vpop.f32.mrb[0].mxu0
      %v2896 = vpop.f32.mrb[0].mxu0
      %v2897 = vadd.f32 %v2608, %v2896
      %v2898 = vpop.f32.mrb[0].mxu0
      %2899 = vmatprep.mubr.bf16.mxu0 %v1398
      %2900 = vmatmul.mubr.bf16.gmra.mrb[0].mxu0 %v1397
      %v2901 = vpop.f32.mrb[0].mxu0
      %v2902 = vadd.f32 %v2613, %v2901
      %v2903 = vpop.f32.mrb[0].mxu0
      %v2904 = vpop.f32.mrb[0].mxu0
      %v2905 = vadd.f32 %v2616, %v2904
      %v2906 = vpop.f32.mrb[0].mxu0
      %2907 = vmatprep.mubr.bf16.mxu0 %v1406
      %2908 = vmatmul.mubr.bf16.gmra.mrb[0].mxu0 %v1405
      %v2909 = vpop.f32.mrb[0].mxu0
      %v2910 = vadd.f32 %v2621, %v2909
      %v2911 = vpop.f32.mrb[0].mxu0
      %v2912 = vpop.f32.mrb[0].mxu0
      %v2913 = vadd.f32 %v2624, %v2912
      %v2914 = vpop.f32.mrb[0].mxu0
      %2915 = vmatprep.mubr.bf16.mxu0 %v1414
      %2916 = vmatmul.mubr.bf16.gmra.mrb[0].mxu0 %v1413
      %v2917 = vpop.f32.mrb[0].mxu0
      %v2918 = vadd.f32 %v2629, %v2917
      %v2919 = vpop.f32.mrb[0].mxu0
      %v2920 = vpop.f32.mrb[0].mxu0
      %v2921 = vadd.f32 %v2632, %v2920
      %v2922 = vpop.f32.mrb[0].mxu0
      %2923 = vmatprep.mubr.bf16.mxu0 %v1422
      %2924 = vmatmul.mubr.bf16.gmra.mrb[0].mxu0 %v1421
      %v2925 = vpop.f32.mrb[0].mxu0
      %v2926 = vadd.f32 %v2637, %v2925
      %v2927 = vpop.f32.mrb[0].mxu0
      %v2928 = vpop.f32.mrb[0].mxu0
      %v2929 = vadd.f32 %v2640, %v2928
      %v2930 = vpop.f32.mrb[0].mxu0
      %2931 = vmatprep.mubr.bf16.mxu0 %v1430
      %2932 = vmatmul.mubr.bf16.gmra.mrb[0].mxu0 %v1429
      %v2933 = vpop.f32.mrb[0].mxu0
      %v2934 = vadd.f32 %v2645, %v2933
      %v2935 = vpop.f32.mrb[0].mxu0
      %v2936 = vpop.f32.mrb[0].mxu0
      %v2937 = vadd.f32 %v2648, %v2936
      %v2938 = vpop.f32.mrb[0].mxu0
      %2939 = vmatprep.mubr.bf16.mxu0 %v1438
      %2940 = vmatmul.mubr.bf16.gmra.mrb[0].mxu0 %v1437
      %v2941 = vpop.f32.mrb[0].mxu0
      %v2942 = vadd.f32 %v2653, %v2941
      %v2943 = vpop.f32.mrb[0].mxu0
      %v2944 = vpop.f32.mrb[0].mxu0
      %v2945 = vadd.f32 %v2656, %v2944
      %v2946 = vpop.f32.mrb[0].mxu0
      %2947 = vmatprep.mubr.bf16.mxu0 %v1446
      %2948 = vmatmul.mubr.bf16.gmra.mrb[0].mxu0 %v1445
      %v2949 = vpop.f32.mrb[0].mxu0
      %v2950 = vadd.f32 %v2661, %v2949
      %v2951 = vpop.f32.mrb[0].mxu0
      %v2952 = vpop.f32.mrb[0].mxu0
      %v2953 = vadd.f32 %v2664, %v2952
      %v2954 = vpop.f32.mrb[0].mxu0
      %2955 = vmatprep.mubr.bf16.mxu0 %v1454
      %2956 = vmatmul.mubr.bf16.gmra.mrb[0].mxu0 %v1453
      %v2957 = vpop.f32.mrb[0].mxu0
      %v2958 = vadd.f32 %v2669, %v2957
      %v2959 = vpop.f32.mrb[0].mxu0
      %v2960 = vpop.f32.mrb[0].mxu0
      %v2961 = vadd.f32 %v2672, %v2960
      %v2962 = vpop.f32.mrb[0].mxu0
      %2963 = vmatprep.mubr.bf16.mxu0 %v1462
      %2964 = vmatmul.mubr.bf16.gmra.mrb[0].mxu0 %v1461
      %v2965 = vpop.f32.mrb[0].mxu0
      %v2966 = vadd.f32 %v2677, %v2965
      %v2967 = vpop.f32.mrb[0].mxu0
      %v2968 = vpop.f32.mrb[0].mxu0
      %v2969 = vadd.f32 %v2680, %v2968
      %v2970 = vpop.f32.mrb[0].mxu0
      %2971 = vmatprep.mubr.bf16.mxu0 %v1470
      %2972 = vmatmul.mubr.bf16.gmra.mrb[0].mxu0 %v1469
      %v2973 = vpop.f32.mrb[0].mxu0
      %v2974 = vadd.f32 %v2685, %v2973
      %v2975 = vpop.f32.mrb[0].mxu0
      %v2976 = vpop.f32.mrb[0].mxu0
      %v2977 = vadd.f32 %v2688, %v2976
      %v2978 = vpop.f32.mrb[0].mxu0
      %2979 = vmatprep.mubr.bf16.mxu0 %v1478
      %2980 = vmatmul.mubr.bf16.gmra.mrb[0].mxu0 %v1477
      %v2981 = vpop.f32.mrb[0].mxu0
      %v2982 = vadd.f32 %v2693, %v2981
      %v2983 = vpop.f32.mrb[0].mxu0
      %v2984 = vpop.f32.mrb[0].mxu0
      %v2985 = vadd.f32 %v2696, %v2984
      %v2986 = vpop.f32.mrb[0].mxu0
      %2987 = vmatprep.mubr.bf16.mxu0 %v1486
      %2988 = vmatmul.mubr.bf16.gmra.mrb[0].mxu0 %v1485
      %v2989 = vpop.f32.mrb[0].mxu0
      %v2990 = vadd.f32 %v2701, %v2989
      %v2991 = vpop.f32.mrb[0].mxu0
      %v2992 = vpop.f32.mrb[0].mxu0
      %v2993 = vadd.f32 %v2704, %v2992
      %v2994 = vpop.f32.mrb[0].mxu0
      %2995 = vmatprep.mubr.bf16.mxu0 %v1494
      %2996 = vmatmul.mubr.bf16.gmra.mrb[0].mxu0 %v1493
      %v2997 = vpop.f32.mrb[0].mxu0
      %v2998 = vadd.f32 %v2709, %v2997
      %v2999 = vpop.f32.mrb[0].mxu0
      %v3000 = vpop.f32.mrb[0].mxu0
      %v3001 = vadd.f32 %v2712, %v3000
      %v3002 = vpop.f32.mrb[0].mxu0
      %3003 = vmatprep.mubr.bf16.mxu0 %v1502
      %3004 = vmatmul.mubr.bf16.gmra.mrb[0].mxu0 %v1501
      %v3005 = vpop.f32.mrb[0].mxu0
      %v3006 = vadd.f32 %v2717, %v3005
      %v3007 = vpop.f32.mrb[0].mxu0
      %v3008 = vpop.f32.mrb[0].mxu0
      %v3009 = vadd.f32 %v2720, %v3008
      %v3010 = vpop.f32.mrb[0].mxu0
      %3011 = vmatprep.mubr.bf16.mxu0 %v1510
      %3012 = vmatmul.mubr.bf16.gmra.mrb[0].mxu0 %v1509
      %v3013 = vpop.f32.mrb[0].mxu0
      %v3014 = vadd.f32 %v2725, %v3013
      %v3015 = vpop.f32.mrb[0].mxu0
      %v3016 = vpop.f32.mrb[0].mxu0
      %v3017 = vadd.f32 %v2728, %v3016
      %v3018 = vpop.f32.mrb[0].mxu0
      %3019 = vmatprep.mubr.bf16.mxu0 %v1518
      %3020 = vmatmul.mubr.bf16.gmra.mrb[0].mxu0 %v1517
      %v3021 = vpop.f32.mrb[0].mxu0
      %v3022 = vadd.f32 %v2733, %v3021
      %v3023 = vpop.f32.mrb[0].mxu0
      %v3024 = vpop.f32.mrb[0].mxu0
      %v3025 = vadd.f32 %v2736, %v3024
      %v3026 = vpop.f32.mrb[0].mxu0
      %3027 = vmatprep.mubr.bf16.mxu0 %v1526
      %3028 = vmatmul.mubr.bf16.gmra.mrb[0].mxu0 %v1525
      %v3029 = vpop.f32.mrb[0].mxu0
      %v3030 = vadd.f32 %v2741, %v3029
      %v3031 = vpop.f32.mrb[0].mxu0
      %v3032 = vpop.f32.mrb[0].mxu0
      %v3033 = vadd.f32 %v2744, %v3032
      %v3034 = vpop.f32.mrb[0].mxu0
      %3035 = vmatprep.mubr.bf16.mxu0 %v1534
      %3036 = vmatmul.mubr.bf16.gmra.mrb[0].mxu0 %v1533
      %v3037 = vpop.f32.mrb[0].mxu0
      %v3038 = vadd.f32 %v2749, %v3037
      %v3039 = vpop.f32.mrb[0].mxu0
      %v3040 = vpop.f32.mrb[0].mxu0
      %v3041 = vadd.f32 %v2752, %v3040
      %v3042 = vpop.f32.mrb[0].mxu0
      %3043 = vmatprep.mubr.bf16.mxu0 %v1542
      %3044 = vmatmul.mubr.bf16.gmra.mrb[0].mxu0 %v1541
      %v3045 = vpop.f32.mrb[0].mxu0
      %v3046 = vadd.f32 %v2757, %v3045
      %v3047 = vpop.f32.mrb[0].mxu0
      %v3048 = vpop.f32.mrb[0].mxu0
      %v3049 = vadd.f32 %v2760, %v3048
      %v3050 = vpop.f32.mrb[0].mxu0
      %3051 = vmatprep.mubr.bf16.mxu0 %v1550
      %3052 = vmatmul.mubr.bf16.gmra.mrb[0].mxu0 %v1549
      %v3053 = vpop.f32.mrb[0].mxu0
      %v3054 = vadd.f32 %v2765, %v3053
      %v3055 = vpop.f32.mrb[0].mxu0
      %v3056 = vpop.f32.mrb[0].mxu0
      %v3057 = vadd.f32 %v2768, %v3056
      %v3058 = vpop.f32.mrb[0].mxu0
      %3059 = vmatprep.mubr.bf16.mxu0 %v1558
      %3060 = vmatmul.mubr.bf16.gmra.mrb[0].mxu0 %v1557
      %v3061 = vpop.f32.mrb[0].mxu0
      %v3062 = vadd.f32 %v2773, %v3061
      %v3063 = vpop.f32.mrb[0].mxu0
      %v3064 = vpop.f32.mrb[0].mxu0
      %v3065 = vadd.f32 %v2776, %v3064
      %v3066 = vpop.f32.mrb[0].mxu0
      %3067 = vmatprep.mubr.bf16.mxu0 %v1566
      %3068 = vmatmul.mubr.bf16.gmra.mrb[0].mxu0 %v1565
      %v3069 = vpop.f32.mrb[0].mxu0
      %v3070 = vadd.f32 %v2781, %v3069
      %v3071 = vpop.f32.mrb[0].mxu0
      %v3072 = vpop.f32.mrb[0].mxu0
      %v3073 = vadd.f32 %v2784, %v3072
      %v3074 = vpop.f32.mrb[0].mxu0
      %3075 = vmatprep.mubr.bf16.mxu0 %v1574
      %3076 = vmatmul.mubr.bf16.gmra.mrb[0].mxu0 %v1573
      %v3077 = vpop.f32.mrb[0].mxu0
      %v3078 = vadd.f32 %v2789, %v3077
      %v3079 = vpop.f32.mrb[0].mxu0
      %v3080 = vpop.f32.mrb[0].mxu0
      %v3081 = vadd.f32 %v2792, %v3080
      %v3082 = vpop.f32.mrb[0].mxu0
      %3083 = vmatprep.mubr.bf16.mxu0 %v1582
      %3084 = vmatmul.mubr.bf16.gmra.mrb[0].mxu0 %v1581
      %v3085 = vpop.f32.mrb[0].mxu0
      %v3086 = vadd.f32 %v2797, %v3085
      %v3087 = vpop.f32.mrb[0].mxu0
      %v3088 = vpop.f32.mrb[0].mxu0
      %v3089 = vadd.f32 %v2800, %v3088
      %v3090 = vpop.f32.mrb[0].mxu0
      %3091 = vmatprep.mubr.bf16.mxu0 %v1590
      %3092 = vmatmul.mubr.bf16.gmra.mrb[0].mxu0 %v1589
      %v3093 = vpop.f32.mrb[0].mxu0
      %v3094 = vadd.f32 %v2805, %v3093
      %v3095 = vpop.f32.mrb[0].mxu0
      %v3096 = vpop.f32.mrb[0].mxu0
      %v3097 = vadd.f32 %v2808, %v3096
      %v3098 = vpop.f32.mrb[0].mxu0
      %3099 = vdwg.mxu0
      %3100 = vmatprep.subr.bf16.mxu0 0
      %3101 = vmatpush1.bf16.msra.mxu0 %v2153
      %3102 = vmatprep.subr.bf16.mxu0 0
      %3103 = vmatpush1.bf16.msra.mxu0 %v2154
      %3104 = vmatprep.subr.bf16.mxu0 0
      %3105 = vmatpush1.bf16.msra.mxu0 %v2155
      %3106 = vmatprep.subr.bf16.mxu0 0
      %3107 = vmatpush1.bf16.msra.mxu0 %v2156
      %3108 = vmatprep.subr.bf16.mxu0 0
      %3109 = vmatpush1.bf16.msra.mxu0 %v2157
      %3110 = vmatprep.subr.bf16.mxu0 0
      %3111 = vmatpush1.bf16.msra.mxu0 %v2158
      %3112 = vmatprep.subr.bf16.mxu0 0
      %3113 = vmatpush1.bf16.msra.mxu0 %v2159
      %3114 = vmatprep.subr.bf16.mxu0 0
      %3115 = vmatpush1.bf16.msra.mxu0 %v2160
      %3116 = vmatprep.subr.bf16.mxu0 0
      %3117 = vmatpush1.bf16.msra.mxu0 %v2161
      %3118 = vmatprep.subr.bf16.mxu0 0
      %3119 = vmatpush1.bf16.msra.mxu0 %v2162
      %3120 = vmatprep.subr.bf16.mxu0 0
      %3121 = vmatpush1.bf16.msra.mxu0 %v2163
      %3122 = vmatprep.subr.bf16.mxu0 0
      %3123 = vmatpush1.bf16.msra.mxu0 %v2164
      %3124 = vmatprep.subr.bf16.mxu0 0
      %3125 = vmatpush1.bf16.msra.mxu0 %v2165
      %3126 = vmatprep.subr.bf16.mxu0 0
      %3127 = vmatpush1.bf16.msra.mxu0 %v2166
      %3128 = vmatprep.subr.bf16.mxu0 0
      %3129 = vmatpush1.bf16.msra.mxu0 %v2167
      %3130 = vmatprep.subr.bf16.mxu0 0
      %3131 = vmatpush1.bf16.msra.mxu0 %v2168
      %3132 = vmatprep.mubr.bf16.mxu0 %v1344
      %3133 = vmatmul.mubr.bf16.gmra.mrb[0].mxu0 %v1343
      %v3134 = vpop.f32.mrb[0].mxu0
      %v3135 = vadd.f32 %v2846, %v3134
      %v3136 = vpop.f32.mrb[0].mxu0
      %v3137 = vpop.f32.mrb[0].mxu0
      %v3138 = vadd.f32 %v2849, %v3137
      %v3139 = vpop.f32.mrb[0].mxu0
      %3140 = vmatprep.mubr.bf16.mxu0 %v1352
      %3141 = vmatmul.mubr.bf16.gmra.mrb[0].mxu0 %v1351
      %v3142 = vpop.f32.mrb[0].mxu0
      %v3143 = vadd.f32 %v2854, %v3142
      %v3144 = vpop.f32.mrb[0].mxu0
      %v3145 = vpop.f32.mrb[0].mxu0
      %v3146 = vadd.f32 %v2857, %v3145
      %v3147 = vpop.f32.mrb[0].mxu0
      %3148 = vmatprep.mubr.bf16.mxu0 %v1360
      %3149 = vmatmul.mubr.bf16.gmra.mrb[0].mxu0 %v1359
      %v3150 = vpop.f32.mrb[0].mxu0
      %v3151 = vadd.f32 %v2862, %v3150
      %v3152 = vpop.f32.mrb[0].mxu0
      %v3153 = vpop.f32.mrb[0].mxu0
      %v3154 = vadd.f32 %v2865, %v3153
      %v3155 = vpop.f32.mrb[0].mxu0
      %3156 = vmatprep.mubr.bf16.mxu0 %v1368
      %3157 = vmatmul.mubr.bf16.gmra.mrb[0].mxu0 %v1367
      %v3158 = vpop.f32.mrb[0].mxu0
      %v3159 = vadd.f32 %v2870, %v3158
      %v3160 = vpop.f32.mrb[0].mxu0
      %v3161 = vpop.f32.mrb[0].mxu0
      %v3162 = vadd.f32 %v2873, %v3161
      %v3163 = vpop.f32.mrb[0].mxu0
      %3164 = vmatprep.mubr.bf16.mxu0 %v1376
      %3165 = vmatmul.mubr.bf16.gmra.mrb[0].mxu0 %v1375
      %v3166 = vpop.f32.mrb[0].mxu0
      %v3167 = vadd.f32 %v2878, %v3166
      %v3168 = vpop.f32.mrb[0].mxu0
      %v3169 = vpop.f32.mrb[0].mxu0
      %v3170 = vadd.f32 %v2881, %v3169
      %v3171 = vpop.f32.mrb[0].mxu0
      %3172 = vmatprep.mubr.bf16.mxu0 %v1384
      %3173 = vmatmul.mubr.bf16.gmra.mrb[0].mxu0 %v1383
      %v3174 = vpop.f32.mrb[0].mxu0
      %v3175 = vadd.f32 %v2886, %v3174
      %v3176 = vpop.f32.mrb[0].mxu0
      %v3177 = vpop.f32.mrb[0].mxu0
      %v3178 = vadd.f32 %v2889, %v3177
      %v3179 = vpop.f32.mrb[0].mxu0
      %3180 = vmatprep.mubr.bf16.mxu0 %v1392
      %3181 = vmatmul.mubr.bf16.gmra.mrb[0].mxu0 %v1391
      %v3182 = vpop.f32.mrb[0].mxu0
      %v3183 = vadd.f32 %v2894, %v3182
      %v3184 = vpop.f32.mrb[0].mxu0
      %v3185 = vpop.f32.mrb[0].mxu0
      %v3186 = vadd.f32 %v2897, %v3185
      %v3187 = vpop.f32.mrb[0].mxu0
      %3188 = vmatprep.mubr.bf16.mxu0 %v1400
      %3189 = vmatmul.mubr.bf16.gmra.mrb[0].mxu0 %v1399
      %v3190 = vpop.f32.mrb[0].mxu0
      %v3191 = vadd.f32 %v2902, %v3190
      %v3192 = vpop.f32.mrb[0].mxu0
      %v3193 = vpop.f32.mrb[0].mxu0
      %v3194 = vadd.f32 %v2905, %v3193
      %v3195 = vpop.f32.mrb[0].mxu0
      %3196 = vmatprep.mubr.bf16.mxu0 %v1408
      %3197 = vmatmul.mubr.bf16.gmra.mrb[0].mxu0 %v1407
      %v3198 = vpop.f32.mrb[0].mxu0
      %v3199 = vadd.f32 %v2910, %v3198
      %v3200 = vpop.f32.mrb[0].mxu0
      %v3201 = vpop.f32.mrb[0].mxu0
      %v3202 = vadd.f32 %v2913, %v3201
      %v3203 = vpop.f32.mrb[0].mxu0
      %3204 = vmatprep.mubr.bf16.mxu0 %v1416
      %3205 = vmatmul.mubr.bf16.gmra.mrb[0].mxu0 %v1415
      %v3206 = vpop.f32.mrb[0].mxu0
      %v3207 = vadd.f32 %v2918, %v3206
      %v3208 = vpop.f32.mrb[0].mxu0
      %v3209 = vpop.f32.mrb[0].mxu0
      %v3210 = vadd.f32 %v2921, %v3209
      %v3211 = vpop.f32.mrb[0].mxu0
      %3212 = vmatprep.mubr.bf16.mxu0 %v1424
      %3213 = vmatmul.mubr.bf16.gmra.mrb[0].mxu0 %v1423
      %v3214 = vpop.f32.mrb[0].mxu0
      %v3215 = vadd.f32 %v2926, %v3214
      %v3216 = vpop.f32.mrb[0].mxu0
      %v3217 = vpop.f32.mrb[0].mxu0
      %v3218 = vadd.f32 %v2929, %v3217
      %v3219 = vpop.f32.mrb[0].mxu0
      %3220 = vmatprep.mubr.bf16.mxu0 %v1432
      %3221 = vmatmul.mubr.bf16.gmra.mrb[0].mxu0 %v1431
      %v3222 = vpop.f32.mrb[0].mxu0
      %v3223 = vadd.f32 %v2934, %v3222
      %v3224 = vpop.f32.mrb[0].mxu0
      %v3225 = vpop.f32.mrb[0].mxu0
      %v3226 = vadd.f32 %v2937, %v3225
      %v3227 = vpop.f32.mrb[0].mxu0
      %3228 = vmatprep.mubr.bf16.mxu0 %v1440
      %3229 = vmatmul.mubr.bf16.gmra.mrb[0].mxu0 %v1439
      %v3230 = vpop.f32.mrb[0].mxu0
      %v3231 = vadd.f32 %v2942, %v3230
      %v3232 = vpop.f32.mrb[0].mxu0
      %v3233 = vpop.f32.mrb[0].mxu0
      %v3234 = vadd.f32 %v2945, %v3233
      %v3235 = vpop.f32.mrb[0].mxu0
      %3236 = vmatprep.mubr.bf16.mxu0 %v1448
      %3237 = vmatmul.mubr.bf16.gmra.mrb[0].mxu0 %v1447
      %v3238 = vpop.f32.mrb[0].mxu0
      %v3239 = vadd.f32 %v2950, %v3238
      %v3240 = vpop.f32.mrb[0].mxu0
      %v3241 = vpop.f32.mrb[0].mxu0
      %v3242 = vadd.f32 %v2953, %v3241
      %v3243 = vpop.f32.mrb[0].mxu0
      %3244 = vmatprep.mubr.bf16.mxu0 %v1456
      %3245 = vmatmul.mubr.bf16.gmra.mrb[0].mxu0 %v1455
      %v3246 = vpop.f32.mrb[0].mxu0
      %v3247 = vadd.f32 %v2958, %v3246
      %v3248 = vpop.f32.mrb[0].mxu0
      %v3249 = vpop.f32.mrb[0].mxu0
      %v3250 = vadd.f32 %v2961, %v3249
      %v3251 = vpop.f32.mrb[0].mxu0
      %3252 = vmatprep.mubr.bf16.mxu0 %v1464
      %3253 = vmatmul.mubr.bf16.gmra.mrb[0].mxu0 %v1463
      %v3254 = vpop.f32.mrb[0].mxu0
      %v3255 = vadd.f32 %v2966, %v3254
      %v3256 = vpop.f32.mrb[0].mxu0
      %v3257 = vpop.f32.mrb[0].mxu0
      %v3258 = vadd.f32 %v2969, %v3257
      %v3259 = vpop.f32.mrb[0].mxu0
      %3260 = vmatprep.mubr.bf16.mxu0 %v1472
      %3261 = vmatmul.mubr.bf16.gmra.mrb[0].mxu0 %v1471
      %v3262 = vpop.f32.mrb[0].mxu0
      %v3263 = vadd.f32 %v2974, %v3262
      %v3264 = vpop.f32.mrb[0].mxu0
      %v3265 = vpop.f32.mrb[0].mxu0
      %v3266 = vadd.f32 %v2977, %v3265
      %v3267 = vpop.f32.mrb[0].mxu0
      %3268 = vmatprep.mubr.bf16.mxu0 %v1480
      %3269 = vmatmul.mubr.bf16.gmra.mrb[0].mxu0 %v1479
      %v3270 = vpop.f32.mrb[0].mxu0
      %v3271 = vadd.f32 %v2982, %v3270
      %v3272 = vpop.f32.mrb[0].mxu0
      %v3273 = vpop.f32.mrb[0].mxu0
      %v3274 = vadd.f32 %v2985, %v3273
      %v3275 = vpop.f32.mrb[0].mxu0
      %3276 = vmatprep.mubr.bf16.mxu0 %v1488
      %3277 = vmatmul.mubr.bf16.gmra.mrb[0].mxu0 %v1487
      %v3278 = vpop.f32.mrb[0].mxu0
      %v3279 = vadd.f32 %v2990, %v3278
      %v3280 = vpop.f32.mrb[0].mxu0
      %v3281 = vpop.f32.mrb[0].mxu0
      %v3282 = vadd.f32 %v2993, %v3281
      %v3283 = vpop.f32.mrb[0].mxu0
      %3284 = vmatprep.mubr.bf16.mxu0 %v1496
      %3285 = vmatmul.mubr.bf16.gmra.mrb[0].mxu0 %v1495
      %v3286 = vpop.f32.mrb[0].mxu0
      %v3287 = vadd.f32 %v2998, %v3286
      %v3288 = vpop.f32.mrb[0].mxu0
      %v3289 = vpop.f32.mrb[0].mxu0
      %v3290 = vadd.f32 %v3001, %v3289
      %v3291 = vpop.f32.mrb[0].mxu0
      %3292 = vmatprep.mubr.bf16.mxu0 %v1504
      %3293 = vmatmul.mubr.bf16.gmra.mrb[0].mxu0 %v1503
      %v3294 = vpop.f32.mrb[0].mxu0
      %v3295 = vadd.f32 %v3006, %v3294
      %v3296 = vpop.f32.mrb[0].mxu0
      %v3297 = vpop.f32.mrb[0].mxu0
      %v3298 = vadd.f32 %v3009, %v3297
      %v3299 = vpop.f32.mrb[0].mxu0
      %3300 = vmatprep.mubr.bf16.mxu0 %v1512
      %3301 = vmatmul.mubr.bf16.gmra.mrb[0].mxu0 %v1511
      %v3302 = vpop.f32.mrb[0].mxu0
      %v3303 = vadd.f32 %v3014, %v3302
      %v3304 = vpop.f32.mrb[0].mxu0
      %v3305 = vpop.f32.mrb[0].mxu0
      %v3306 = vadd.f32 %v3017, %v3305
      %v3307 = vpop.f32.mrb[0].mxu0
      %3308 = vmatprep.mubr.bf16.mxu0 %v1520
      %3309 = vmatmul.mubr.bf16.gmra.mrb[0].mxu0 %v1519
      %v3310 = vpop.f32.mrb[0].mxu0
      %v3311 = vadd.f32 %v3022, %v3310
      %v3312 = vpop.f32.mrb[0].mxu0
      %v3313 = vpop.f32.mrb[0].mxu0
      %v3314 = vadd.f32 %v3025, %v3313
      %v3315 = vpop.f32.mrb[0].mxu0
      %3316 = vmatprep.mubr.bf16.mxu0 %v1528
      %3317 = vmatmul.mubr.bf16.gmra.mrb[0].mxu0 %v1527
      %v3318 = vpop.f32.mrb[0].mxu0
      %v3319 = vadd.f32 %v3030, %v3318
      %v3320 = vpop.f32.mrb[0].mxu0
      %v3321 = vpop.f32.mrb[0].mxu0
      %v3322 = vadd.f32 %v3033, %v3321
      %v3323 = vpop.f32.mrb[0].mxu0
      %3324 = vmatprep.mubr.bf16.mxu0 %v1536
      %3325 = vmatmul.mubr.bf16.gmra.mrb[0].mxu0 %v1535
      %v3326 = vpop.f32.mrb[0].mxu0
      %v3327 = vadd.f32 %v3038, %v3326
      %v3328 = vpop.f32.mrb[0].mxu0
      %v3329 = vpop.f32.mrb[0].mxu0
      %v3330 = vadd.f32 %v3041, %v3329
      %v3331 = vpop.f32.mrb[0].mxu0
      %3332 = vmatprep.mubr.bf16.mxu0 %v1544
      %3333 = vmatmul.mubr.bf16.gmra.mrb[0].mxu0 %v1543
      %v3334 = vpop.f32.mrb[0].mxu0
      %v3335 = vadd.f32 %v3046, %v3334
      %v3336 = vpop.f32.mrb[0].mxu0
      %v3337 = vpop.f32.mrb[0].mxu0
      %v3338 = vadd.f32 %v3049, %v3337
      %v3339 = vpop.f32.mrb[0].mxu0
      %3340 = vmatprep.mubr.bf16.mxu0 %v1552
      %3341 = vmatmul.mubr.bf16.gmra.mrb[0].mxu0 %v1551
      %v3342 = vpop.f32.mrb[0].mxu0
      %v3343 = vadd.f32 %v3054, %v3342
      %v3344 = vpop.f32.mrb[0].mxu0
      %v3345 = vpop.f32.mrb[0].mxu0
      %v3346 = vadd.f32 %v3057, %v3345
      %v3347 = vpop.f32.mrb[0].mxu0
      %3348 = vmatprep.mubr.bf16.mxu0 %v1560
      %3349 = vmatmul.mubr.bf16.gmra.mrb[0].mxu0 %v1559
      %v3350 = vpop.f32.mrb[0].mxu0
      %v3351 = vadd.f32 %v3062, %v3350
      %v3352 = vpop.f32.mrb[0].mxu0
      %v3353 = vpop.f32.mrb[0].mxu0
      %v3354 = vadd.f32 %v3065, %v3353
      %v3355 = vpop.f32.mrb[0].mxu0
      %3356 = vmatprep.mubr.bf16.mxu0 %v1568
      %3357 = vmatmul.mubr.bf16.gmra.mrb[0].mxu0 %v1567
      %v3358 = vpop.f32.mrb[0].mxu0
      %v3359 = vadd.f32 %v3070, %v3358
      %v3360 = vpop.f32.mrb[0].mxu0
      %v3361 = vpop.f32.mrb[0].mxu0
      %v3362 = vadd.f32 %v3073, %v3361
      %v3363 = vpop.f32.mrb[0].mxu0
      %3364 = vmatprep.mubr.bf16.mxu0 %v1576
      %3365 = vmatmul.mubr.bf16.gmra.mrb[0].mxu0 %v1575
      %v3366 = vpop.f32.mrb[0].mxu0
      %v3367 = vadd.f32 %v3078, %v3366
      %v3368 = vpop.f32.mrb[0].mxu0
      %v3369 = vpop.f32.mrb[0].mxu0
      %v3370 = vadd.f32 %v3081, %v3369
      %v3371 = vpop.f32.mrb[0].mxu0
      %3372 = vmatprep.mubr.bf16.mxu0 %v1584
      %3373 = vmatmul.mubr.bf16.gmra.mrb[0].mxu0 %v1583
      %v3374 = vpop.f32.mrb[0].mxu0
      %v3375 = vadd.f32 %v3086, %v3374
      %v3376 = vpop.f32.mrb[0].mxu0
      %v3377 = vpop.f32.mrb[0].mxu0
      %v3378 = vadd.f32 %v3089, %v3377
      %v3379 = vpop.f32.mrb[0].mxu0
      %3380 = vmatprep.mubr.bf16.mxu0 %v1592
      %3381 = vmatmul.mubr.bf16.gmra.mrb[0].mxu0 %v1591
      %v3382 = vpop.f32.mrb[0].mxu0
      %v3383 = vadd.f32 %v3094, %v3382
      %v3384 = vpop.f32.mrb[0].mxu0
      %v3385 = vpop.f32.mrb[0].mxu0
      %v3386 = vadd.f32 %v3097, %v3385
      %v3387 = vpop.f32.mrb[0].mxu0
      %3388 = vdwg.mxu0
      %3389 = vmax.xlane.f32.xlu0 %v3135
      %v3390 = vpop.xlane.xlu0 %3389
      %3391 = vmax.xlane.f32.xlu0 %v3138
      %v3392 = vpop.xlane.xlu0 %3391
      %3393 = vmax.xlane.f32.xlu0 %v3143
      %v3394 = vpop.xlane.xlu0 %3393
      %3395 = vmax.xlane.f32.xlu0 %v3146
      %v3396 = vpop.xlane.xlu0 %3395
      %3397 = vmax.xlane.f32.xlu0 %v3151
      %v3398 = vpop.xlane.xlu0 %3397
      %3399 = vmax.xlane.f32.xlu0 %v3154
      %v3400 = vpop.xlane.xlu0 %3399
      %3401 = vmax.xlane.f32.xlu0 %v3159
      %v3402 = vpop.xlane.xlu0 %3401
      %3403 = vmax.xlane.f32.xlu0 %v3162
      %v3404 = vpop.xlane.xlu0 %3403
      %3405 = vmax.xlane.f32.xlu0 %v3167
      %v3406 = vpop.xlane.xlu0 %3405
      %3407 = vmax.xlane.f32.xlu0 %v3170
      %v3408 = vpop.xlane.xlu0 %3407
      %3409 = vmax.xlane.f32.xlu0 %v3175
      %v3410 = vpop.xlane.xlu0 %3409
      %3411 = vmax.xlane.f32.xlu0 %v3178
      %v3412 = vpop.xlane.xlu0 %3411
      %3413 = vmax.xlane.f32.xlu0 %v3183
      %v3414 = vpop.xlane.xlu0 %3413
      %3415 = vmax.xlane.f32.xlu0 %v3186
      %v3416 = vpop.xlane.xlu0 %3415
      %3417 = vmax.xlane.f32.xlu0 %v3191
      %v3418 = vpop.xlane.xlu0 %3417
      %3419 = vmax.xlane.f32.xlu0 %v3194
      %v3420 = vpop.xlane.xlu0 %3419
      %3421 = vmax.xlane.f32.xlu0 %v3199
      %v3422 = vpop.xlane.xlu0 %3421
      %3423 = vmax.xlane.f32.xlu0 %v3202
      %v3424 = vpop.xlane.xlu0 %3423
      %3425 = vmax.xlane.f32.xlu0 %v3207
      %v3426 = vpop.xlane.xlu0 %3425
      %3427 = vmax.xlane.f32.xlu0 %v3210
      %v3428 = vpop.xlane.xlu0 %3427
      %3429 = vmax.xlane.f32.xlu0 %v3215
      %v3430 = vpop.xlane.xlu0 %3429
      %3431 = vmax.xlane.f32.xlu0 %v3218
      %v3432 = vpop.xlane.xlu0 %3431
      %3433 = vmax.xlane.f32.xlu0 %v3223
      %v3434 = vpop.xlane.xlu0 %3433
      %3435 = vmax.xlane.f32.xlu0 %v3226
      %v3436 = vpop.xlane.xlu0 %3435
      %3437 = vmax.xlane.f32.xlu0 %v3231
      %v3438 = vpop.xlane.xlu0 %3437
      %3439 = vmax.xlane.f32.xlu0 %v3234
      %v3440 = vpop.xlane.xlu0 %3439
      %3441 = vmax.xlane.f32.xlu0 %v3239
      %v3442 = vpop.xlane.xlu0 %3441
      %3443 = vmax.xlane.f32.xlu0 %v3242
      %v3444 = vpop.xlane.xlu0 %3443
      %3445 = vmax.xlane.f32.xlu0 %v3247
      %v3446 = vpop.xlane.xlu0 %3445
      %3447 = vmax.xlane.f32.xlu0 %v3250
      %v3448 = vpop.xlane.xlu0 %3447
      %3449 = vmax.xlane.f32.xlu0 %v3255
      %v3450 = vpop.xlane.xlu0 %3449
      %3451 = vmax.xlane.f32.xlu0 %v3258
      %v3452 = vpop.xlane.xlu0 %3451
      %3453 = vmax.xlane.f32.xlu0 %v3263
      %v3454 = vpop.xlane.xlu0 %3453
      %3455 = vmax.xlane.f32.xlu0 %v3266
      %v3456 = vpop.xlane.xlu0 %3455
      %3457 = vmax.xlane.f32.xlu0 %v3271
      %v3458 = vpop.xlane.xlu0 %3457
      %3459 = vmax.xlane.f32.xlu0 %v3274
      %v3460 = vpop.xlane.xlu0 %3459
      %3461 = vmax.xlane.f32.xlu0 %v3279
      %v3462 = vpop.xlane.xlu0 %3461
      %3463 = vmax.xlane.f32.xlu0 %v3282
      %v3464 = vpop.xlane.xlu0 %3463
      %3465 = vmax.xlane.f32.xlu0 %v3287
      %v3466 = vpop.xlane.xlu0 %3465
      %3467 = vmax.xlane.f32.xlu0 %v3290
      %v3468 = vpop.xlane.xlu0 %3467
      %3469 = vmax.xlane.f32.xlu0 %v3295
      %v3470 = vpop.xlane.xlu0 %3469
      %3471 = vmax.xlane.f32.xlu0 %v3298
      %v3472 = vpop.xlane.xlu0 %3471
      %3473 = vmax.xlane.f32.xlu0 %v3303
      %v3474 = vpop.xlane.xlu0 %3473
      %3475 = vmax.xlane.f32.xlu0 %v3306
      %v3476 = vpop.xlane.xlu0 %3475
      %3477 = vmax.xlane.f32.xlu0 %v3311
      %v3478 = vpop.xlane.xlu0 %3477
      %3479 = vmax.xlane.f32.xlu0 %v3314
      %v3480 = vpop.xlane.xlu0 %3479
      %3481 = vmax.xlane.f32.xlu0 %v3319
      %v3482 = vpop.xlane.xlu0 %3481
      %3483 = vmax.xlane.f32.xlu0 %v3322
      %v3484 = vpop.xlane.xlu0 %3483
      %3485 = vmax.xlane.f32.xlu0 %v3327
      %v3486 = vpop.xlane.xlu0 %3485
      %3487 = vmax.xlane.f32.xlu0 %v3330
      %v3488 = vpop.xlane.xlu0 %3487
      %3489 = vmax.xlane.f32.xlu0 %v3335
      %v3490 = vpop.xlane.xlu0 %3489
      %3491 = vmax.xlane.f32.xlu0 %v3338
      %v3492 = vpop.xlane.xlu0 %3491
      %3493 = vmax.xlane.f32.xlu0 %v3343
      %v3494 = vpop.xlane.xlu0 %3493
      %3495 = vmax.xlane.f32.xlu0 %v3346
      %v3496 = vpop.xlane.xlu0 %3495
      %3497 = vmax.xlane.f32.xlu0 %v3351
      %v3498 = vpop.xlane.xlu0 %3497
      %3499 = vmax.xlane.f32.xlu0 %v3354
      %v3500 = vpop.xlane.xlu0 %3499
      %3501 = vmax.xlane.f32.xlu0 %v3359
      %v3502 = vpop.xlane.xlu0 %3501
      %3503 = vmax.xlane.f32.xlu0 %v3362
      %v3504 = vpop.xlane.xlu0 %3503
      %3505 = vmax.xlane.f32.xlu0 %v3367
      %v3506 = vpop.xlane.xlu0 %3505
      %3507 = vmax.xlane.f32.xlu0 %v3370
      %v3508 = vpop.xlane.xlu0 %3507
      %3509 = vmax.xlane.f32.xlu0 %v3375
      %v3510 = vpop.xlane.xlu0 %3509
      %3511 = vmax.xlane.f32.xlu0 %v3378
      %v3512 = vpop.xlane.xlu0 %3511
      %3513 = vmax.xlane.f32.xlu0 %v3383
      %v3514 = vpop.xlane.xlu0 %3513
      %3515 = vmax.xlane.f32.xlu0 %v3386
      %v3516 = vpop.xlane.xlu0 %3515
      %v3517 = vsub.f32 %v3135, %v3390
      %v3518 = vsub.f32 %v3138, %v3392
      %v3519 = vsub.f32 %v3143, %v3394
      %v3520 = vsub.f32 %v3146, %v3396
      %v3521 = vsub.f32 %v3151, %v3398
      %v3522 = vsub.f32 %v3154, %v3400
      %v3523 = vsub.f32 %v3159, %v3402
      %v3524 = vsub.f32 %v3162, %v3404
      %v3525 = vsub.f32 %v3167, %v3406
      %v3526 = vsub.f32 %v3170, %v3408
      %v3527 = vsub.f32 %v3175, %v3410
      %v3528 = vsub.f32 %v3178, %v3412
      %v3529 = vsub.f32 %v3183, %v3414
      %v3530 = vsub.f32 %v3186, %v3416
      %v3531 = vsub.f32 %v3191, %v3418
      %v3532 = vsub.f32 %v3194, %v3420
      %v3533 = vsub.f32 %v3199, %v3422
      %v3534 = vsub.f32 %v3202, %v3424
      %v3535 = vsub.f32 %v3207, %v3426
      %v3536 = vsub.f32 %v3210, %v3428
      %v3537 = vsub.f32 %v3215, %v3430
      %v3538 = vsub.f32 %v3218, %v3432
      %v3539 = vsub.f32 %v3223, %v3434
      %v3540 = vsub.f32 %v3226, %v3436
      %v3541 = vsub.f32 %v3231, %v3438
      %v3542 = vsub.f32 %v3234, %v3440
      %v3543 = vsub.f32 %v3239, %v3442
      %v3544 = vsub.f32 %v3242, %v3444
      %v3545 = vsub.f32 %v3247, %v3446
      %v3546 = vsub.f32 %v3250, %v3448
      %v3547 = vsub.f32 %v3255, %v3450
      %v3548 = vsub.f32 %v3258, %v3452
      %v3549 = vsub.f32 %v3263, %v3454
      %v3550 = vsub.f32 %v3266, %v3456
      %v3551 = vsub.f32 %v3271, %v3458
      %v3552 = vsub.f32 %v3274, %v3460
      %v3553 = vsub.f32 %v3279, %v3462
      %v3554 = vsub.f32 %v3282, %v3464
      %v3555 = vsub.f32 %v3287, %v3466
      %v3556 = vsub.f32 %v3290, %v3468
      %v3557 = vsub.f32 %v3295, %v3470
      %v3558 = vsub.f32 %v3298, %v3472
      %v3559 = vsub.f32 %v3303, %v3474
      %v3560 = vsub.f32 %v3306, %v3476
      %v3561 = vsub.f32 %v3311, %v3478
      %v3562 = vsub.f32 %v3314, %v3480
      %v3563 = vsub.f32 %v3319, %v3482
      %v3564 = vsub.f32 %v3322, %v3484
      %v3565 = vsub.f32 %v3327, %v3486
      %v3566 = vsub.f32 %v3330, %v3488
      %v3567 = vsub.f32 %v3335, %v3490
      %v3568 = vsub.f32 %v3338, %v3492
      %v3569 = vsub.f32 %v3343, %v3494
      %v3570 = vsub.f32 %v3346, %v3496
      %v3571 = vsub.f32 %v3351, %v3498
      %v3572 = vsub.f32 %v3354, %v3500
      %v3573 = vsub.f32 %v3359, %v3502
      %v3574 = vsub.f32 %v3362, %v3504
      %v3575 = vsub.f32 %v3367, %v3506
      %v3576 = vsub.f32 %v3370, %v3508
      %v3577 = vsub.f32 %v3375, %v3510
      %v3578 = vsub.f32 %v3378, %v3512
      %v3579 = vsub.f32 %v3383, %v3514
      %v3580 = vsub.f32 %v3386, %v3516
      %v3581 = vmul.f32 %v3517, 1.442695
      %v3582 = vpow.pop %v3581
      %v3583 = vmul.f32 %v3518, 1.442695
      %v3584 = vpow.pop %v3583
      %v3585 = vmul.f32 %v3519, 1.442695
      %v3586 = vpow.pop %v3585
      %v3587 = vmul.f32 %v3520, 1.442695
      %v3588 = vpow.pop %v3587
      %v3589 = vmul.f32 %v3521, 1.442695
      %v3590 = vpow.pop %v3589
      %v3591 = vmul.f32 %v3522, 1.442695
      %v3592 = vpow.pop %v3591
      %v3593 = vmul.f32 %v3523, 1.442695
      %v3594 = vpow.pop %v3593
      %v3595 = vmul.f32 %v3524, 1.442695
      %v3596 = vpow.pop %v3595
      %v3597 = vmul.f32 %v3525, 1.442695
      %v3598 = vpow.pop %v3597
      %v3599 = vmul.f32 %v3526, 1.442695
      %v3600 = vpow.pop %v3599
      %v3601 = vmul.f32 %v3527, 1.442695
      %v3602 = vpow.pop %v3601
      %v3603 = vmul.f32 %v3528, 1.442695
      %v3604 = vpow.pop %v3603
      %v3605 = vmul.f32 %v3529, 1.442695
      %v3606 = vpow.pop %v3605
      %v3607 = vmul.f32 %v3530, 1.442695
      %v3608 = vpow.pop %v3607
      %v3609 = vmul.f32 %v3531, 1.442695
      %v3610 = vpow.pop %v3609
      %v3611 = vmul.f32 %v3532, 1.442695
      %v3612 = vpow.pop %v3611
      %v3613 = vmul.f32 %v3533, 1.442695
      %v3614 = vpow.pop %v3613
      %v3615 = vmul.f32 %v3534, 1.442695
      %v3616 = vpow.pop %v3615
      %v3617 = vmul.f32 %v3535, 1.442695
      %v3618 = vpow.pop %v3617
      %v3619 = vmul.f32 %v3536, 1.442695
      %v3620 = vpow.pop %v3619
      %v3621 = vmul.f32 %v3537, 1.442695
      %v3622 = vpow.pop %v3621
      %v3623 = vmul.f32 %v3538, 1.442695
      %v3624 = vpow.pop %v3623
      %v3625 = vmul.f32 %v3539, 1.442695
      %v3626 = vpow.pop %v3625
      %v3627 = vmul.f32 %v3540, 1.442695
      %v3628 = vpow.pop %v3627
      %v3629 = vmul.f32 %v3541, 1.442695
      %v3630 = vpow.pop %v3629
      %v3631 = vmul.f32 %v3542, 1.442695
      %v3632 = vpow.pop %v3631
      %v3633 = vmul.f32 %v3543, 1.442695
      %v3634 = vpow.pop %v3633
      %v3635 = vmul.f32 %v3544, 1.442695
      %v3636 = vpow.pop %v3635
      %v3637 = vmul.f32 %v3545, 1.442695
      %v3638 = vpow.pop %v3637
      %v3639 = vmul.f32 %v3546, 1.442695
      %v3640 = vpow.pop %v3639
      %v3641 = vmul.f32 %v3547, 1.442695
      %v3642 = vpow.pop %v3641
      %v3643 = vmul.f32 %v3548, 1.442695
      %v3644 = vpow.pop %v3643
      %v3645 = vmul.f32 %v3549, 1.442695
      %v3646 = vpow.pop %v3645
      %v3647 = vmul.f32 %v3550, 1.442695
      %v3648 = vpow.pop %v3647
      %v3649 = vmul.f32 %v3551, 1.442695
      %v3650 = vpow.pop %v3649
      %v3651 = vmul.f32 %v3552, 1.442695
      %v3652 = vpow.pop %v3651
      %v3653 = vmul.f32 %v3553, 1.442695
      %v3654 = vpow.pop %v3653
      %v3655 = vmul.f32 %v3554, 1.442695
      %v3656 = vpow.pop %v3655
      %v3657 = vmul.f32 %v3555, 1.442695
      %v3658 = vpow.pop %v3657
      %v3659 = vmul.f32 %v3556, 1.442695
      %v3660 = vpow.pop %v3659
      %v3661 = vmul.f32 %v3557, 1.442695
      %v3662 = vpow.pop %v3661
      %v3663 = vmul.f32 %v3558, 1.442695
      %v3664 = vpow.pop %v3663
      %v3665 = vmul.f32 %v3559, 1.442695
      %v3666 = vpow.pop %v3665
      %v3667 = vmul.f32 %v3560, 1.442695
      %v3668 = vpow.pop %v3667
      %v3669 = vmul.f32 %v3561, 1.442695
      %v3670 = vpow.pop %v3669
      %v3671 = vmul.f32 %v3562, 1.442695
      %v3672 = vpow.pop %v3671
      %v3673 = vmul.f32 %v3563, 1.442695
      %v3674 = vpow.pop %v3673
      %v3675 = vmul.f32 %v3564, 1.442695
      %v3676 = vpow.pop %v3675
      %v3677 = vmul.f32 %v3565, 1.442695
      %v3678 = vpow.pop %v3677
      %v3679 = vmul.f32 %v3566, 1.442695
      %v3680 = vpow.pop %v3679
      %v3681 = vmul.f32 %v3567, 1.442695
      %v3682 = vpow.pop %v3681
      %v3683 = vmul.f32 %v3568, 1.442695
      %v3684 = vpow.pop %v3683
      %v3685 = vmul.f32 %v3569, 1.442695
      %v3686 = vpow.pop %v3685
      %v3687 = vmul.f32 %v3570, 1.442695
      %v3688 = vpow.pop %v3687
      %v3689 = vmul.f32 %v3571, 1.442695
      %v3690 = vpow.pop %v3689
      %v3691 = vmul.f32 %v3572, 1.442695
      %v3692 = vpow.pop %v3691
      %v3693 = vmul.f32 %v3573, 1.442695
      %v3694 = vpow.pop %v3693
      %v3695 = vmul.f32 %v3574, 1.442695
      %v3696 = vpow.pop %v3695
      %v3697 = vmul.f32 %v3575, 1.442695
      %v3698 = vpow.pop %v3697
      %v3699 = vmul.f32 %v3576, 1.442695
      %v3700 = vpow.pop %v3699
      %v3701 = vmul.f32 %v3577, 1.442695
      %v3702 = vpow.pop %v3701
      %v3703 = vmul.f32 %v3578, 1.442695
      %v3704 = vpow.pop %v3703
      %v3705 = vmul.f32 %v3579, 1.442695
      %v3706 = vpow.pop %v3705
      %v3707 = vmul.f32 %v3580, 1.442695
      %v3708 = vpow.pop %v3707
      %3709 = vadd.xlane.f32.xlu0 %v3582
      %v3710 = vpop.xlane.xlu0 %3709
      %3711 = vadd.xlane.f32.xlu0 %v3584
      %v3712 = vpop.xlane.xlu0 %3711
      %3713 = vadd.xlane.f32.xlu0 %v3586
      %v3714 = vpop.xlane.xlu0 %3713
      %3715 = vadd.xlane.f32.xlu0 %v3588
      %v3716 = vpop.xlane.xlu0 %3715
      %3717 = vadd.xlane.f32.xlu0 %v3590
      %v3718 = vpop.xlane.xlu0 %3717
      %3719 = vadd.xlane.f32.xlu0 %v3592
      %v3720 = vpop.xlane.xlu0 %3719
      %3721 = vadd.xlane.f32.xlu0 %v3594
      %v3722 = vpop.xlane.xlu0 %3721
      %3723 = vadd.xlane.f32.xlu0 %v3596
      %v3724 = vpop.xlane.xlu0 %3723
      %3725 = vadd.xlane.f32.xlu0 %v3598
      %v3726 = vpop.xlane.xlu0 %3725
      %3727 = vadd.xlane.f32.xlu0 %v3600
      %v3728 = vpop.xlane.xlu0 %3727
      %3729 = vadd.xlane.f32.xlu0 %v3602
      %v3730 = vpop.xlane.xlu0 %3729
      %3731 = vadd.xlane.f32.xlu0 %v3604
      %v3732 = vpop.xlane.xlu0 %3731
      %3733 = vadd.xlane.f32.xlu0 %v3606
      %v3734 = vpop.xlane.xlu0 %3733
      %3735 = vadd.xlane.f32.xlu0 %v3608
      %v3736 = vpop.xlane.xlu0 %3735
      %3737 = vadd.xlane.f32.xlu0 %v3610
      %v3738 = vpop.xlane.xlu0 %3737
      %3739 = vadd.xlane.f32.xlu0 %v3612
      %v3740 = vpop.xlane.xlu0 %3739
      %3741 = vadd.xlane.f32.xlu0 %v3614
      %v3742 = vpop.xlane.xlu0 %3741
      %3743 = vadd.xlane.f32.xlu0 %v3616
      %v3744 = vpop.xlane.xlu0 %3743
      %3745 = vadd.xlane.f32.xlu0 %v3618
      %v3746 = vpop.xlane.xlu0 %3745
      %3747 = vadd.xlane.f32.xlu0 %v3620
      %v3748 = vpop.xlane.xlu0 %3747
      %3749 = vadd.xlane.f32.xlu0 %v3622
      %v3750 = vpop.xlane.xlu0 %3749
      %3751 = vadd.xlane.f32.xlu0 %v3624
      %v3752 = vpop.xlane.xlu0 %3751
      %3753 = vadd.xlane.f32.xlu0 %v3626
      %v3754 = vpop.xlane.xlu0 %3753
      %3755 = vadd.xlane.f32.xlu0 %v3628
      %v3756 = vpop.xlane.xlu0 %3755
      %3757 = vadd.xlane.f32.xlu0 %v3630
      %v3758 = vpop.xlane.xlu0 %3757
      %3759 = vadd.xlane.f32.xlu0 %v3632
      %v3760 = vpop.xlane.xlu0 %3759
      %3761 = vadd.xlane.f32.xlu0 %v3634
      %v3762 = vpop.xlane.xlu0 %3761
      %3763 = vadd.xlane.f32.xlu0 %v3636
      %v3764 = vpop.xlane.xlu0 %3763
      %3765 = vadd.xlane.f32.xlu0 %v3638
      %v3766 = vpop.xlane.xlu0 %3765
      %3767 = vadd.xlane.f32.xlu0 %v3640
      %v3768 = vpop.xlane.xlu0 %3767
      %3769 = vadd.xlane.f32.xlu0 %v3642
      %v3770 = vpop.xlane.xlu0 %3769
      %3771 = vadd.xlane.f32.xlu0 %v3644
      %v3772 = vpop.xlane.xlu0 %3771
      %3773 = vadd.xlane.f32.xlu0 %v3646
      %v3774 = vpop.xlane.xlu0 %3773
      %3775 = vadd.xlane.f32.xlu0 %v3648
      %v3776 = vpop.xlane.xlu0 %3775
      %3777 = vadd.xlane.f32.xlu0 %v3650
      %v3778 = vpop.xlane.xlu0 %3777
      %3779 = vadd.xlane.f32.xlu0 %v3652
      %v3780 = vpop.xlane.xlu0 %3779
      %3781 = vadd.xlane.f32.xlu0 %v3654
      %v3782 = vpop.xlane.xlu0 %3781
      %3783 = vadd.xlane.f32.xlu0 %v3656
      %v3784 = vpop.xlane.xlu0 %3783
      %3785 = vadd.xlane.f32.xlu0 %v3658
      %v3786 = vpop.xlane.xlu0 %3785
      %3787 = vadd.xlane.f32.xlu0 %v3660
      %v3788 = vpop.xlane.xlu0 %3787
      %3789 = vadd.xlane.f32.xlu0 %v3662
      %v3790 = vpop.xlane.xlu0 %3789
      %3791 = vadd.xlane.f32.xlu0 %v3664
      %v3792 = vpop.xlane.xlu0 %3791
      %3793 = vadd.xlane.f32.xlu0 %v3666
      %v3794 = vpop.xlane.xlu0 %3793
      %3795 = vadd.xlane.f32.xlu0 %v3668
      %v3796 = vpop.xlane.xlu0 %3795
      %3797 = vadd.xlane.f32.xlu0 %v3670
      %v3798 = vpop.xlane.xlu0 %3797
      %3799 = vadd.xlane.f32.xlu0 %v3672
      %v3800 = vpop.xlane.xlu0 %3799
      %3801 = vadd.xlane.f32.xlu0 %v3674
      %v3802 = vpop.xlane.xlu0 %3801
      %3803 = vadd.xlane.f32.xlu0 %v3676
      %v3804 = vpop.xlane.xlu0 %3803
      %3805 = vadd.xlane.f32.xlu0 %v3678
      %v3806 = vpop.xlane.xlu0 %3805
      %3807 = vadd.xlane.f32.xlu0 %v3680
      %v3808 = vpop.xlane.xlu0 %3807
      %3809 = vadd.xlane.f32.xlu0 %v3682
      %v3810 = vpop.xlane.xlu0 %3809
      %3811 = vadd.xlane.f32.xlu0 %v3684
      %v3812 = vpop.xlane.xlu0 %3811
      %3813 = vadd.xlane.f32.xlu0 %v3686
      %v3814 = vpop.xlane.xlu0 %3813
      %3815 = vadd.xlane.f32.xlu0 %v3688
      %v3816 = vpop.xlane.xlu0 %3815
      %3817 = vadd.xlane.f32.xlu0 %v3690
      %v3818 = vpop.xlane.xlu0 %3817
      %3819 = vadd.xlane.f32.xlu0 %v3692
      %v3820 = vpop.xlane.xlu0 %3819
      %3821 = vadd.xlane.f32.xlu0 %v3694
      %v3822 = vpop.xlane.xlu0 %3821
      %3823 = vadd.xlane.f32.xlu0 %v3696
      %v3824 = vpop.xlane.xlu0 %3823
      %3825 = vadd.xlane.f32.xlu0 %v3698
      %v3826 = vpop.xlane.xlu0 %3825
      %3827 = vadd.xlane.f32.xlu0 %v3700
      %v3828 = vpop.xlane.xlu0 %3827
      %3829 = vadd.xlane.f32.xlu0 %v3702
      %v3830 = vpop.xlane.xlu0 %3829
      %3831 = vadd.xlane.f32.xlu0 %v3704
      %v3832 = vpop.xlane.xlu0 %3831
      %3833 = vadd.xlane.f32.xlu0 %v3706
      %v3834 = vpop.xlane.xlu0 %3833
      %3835 = vadd.xlane.f32.xlu0 %v3708
      %v3836 = vpop.xlane.xlu0 %3835
      %v3837 = vlog2.pop %v3710
      %v3838 = vmul.f32 %v3837, 0.6931472
      %v3839 = vlog2.pop %v3712
      %v3840 = vmul.f32 %v3839, 0.6931472
      %v3841 = vlog2.pop %v3714
      %v3842 = vmul.f32 %v3841, 0.6931472
      %v3843 = vlog2.pop %v3716
      %v3844 = vmul.f32 %v3843, 0.6931472
      %v3845 = vlog2.pop %v3718
      %v3846 = vmul.f32 %v3845, 0.6931472
      %v3847 = vlog2.pop %v3720
      %v3848 = vmul.f32 %v3847, 0.6931472
      %v3849 = vlog2.pop %v3722
      %v3850 = vmul.f32 %v3849, 0.6931472
      %v3851 = vlog2.pop %v3724
      %v3852 = vmul.f32 %v3851, 0.6931472
      %v3853 = vlog2.pop %v3726
      %v3854 = vmul.f32 %v3853, 0.6931472
      %v3855 = vlog2.pop %v3728
      %v3856 = vmul.f32 %v3855, 0.6931472
      %v3857 = vlog2.pop %v3730
      %v3858 = vmul.f32 %v3857, 0.6931472
      %v3859 = vlog2.pop %v3732
      %v3860 = vmul.f32 %v3859, 0.6931472
      %v3861 = vlog2.pop %v3734
      %v3862 = vmul.f32 %v3861, 0.6931472
      %v3863 = vlog2.pop %v3736
      %v3864 = vmul.f32 %v3863, 0.6931472
      %v3865 = vlog2.pop %v3738
      %v3866 = vmul.f32 %v3865, 0.6931472
      %v3867 = vlog2.pop %v3740
      %v3868 = vmul.f32 %v3867, 0.6931472
      %v3869 = vlog2.pop %v3742
      %v3870 = vmul.f32 %v3869, 0.6931472
      %v3871 = vlog2.pop %v3744
      %v3872 = vmul.f32 %v3871, 0.6931472
      %v3873 = vlog2.pop %v3746
      %v3874 = vmul.f32 %v3873, 0.6931472
      %v3875 = vlog2.pop %v3748
      %v3876 = vmul.f32 %v3875, 0.6931472
      %v3877 = vlog2.pop %v3750
      %v3878 = vmul.f32 %v3877, 0.6931472
      %v3879 = vlog2.pop %v3752
      %v3880 = vmul.f32 %v3879, 0.6931472
      %v3881 = vlog2.pop %v3754
      %v3882 = vmul.f32 %v3881, 0.6931472
      %v3883 = vlog2.pop %v3756
      %v3884 = vmul.f32 %v3883, 0.6931472
      %v3885 = vlog2.pop %v3758
      %v3886 = vmul.f32 %v3885, 0.6931472
      %v3887 = vlog2.pop %v3760
      %v3888 = vmul.f32 %v3887, 0.6931472
      %v3889 = vlog2.pop %v3762
      %v3890 = vmul.f32 %v3889, 0.6931472
      %v3891 = vlog2.pop %v3764
      %v3892 = vmul.f32 %v3891, 0.6931472
      %v3893 = vlog2.pop %v3766
      %v3894 = vmul.f32 %v3893, 0.6931472
      %v3895 = vlog2.pop %v3768
      %v3896 = vmul.f32 %v3895, 0.6931472
      %v3897 = vlog2.pop %v3770
      %v3898 = vmul.f32 %v3897, 0.6931472
      %v3899 = vlog2.pop %v3772
      %v3900 = vmul.f32 %v3899, 0.6931472
      %v3901 = vlog2.pop %v3774
      %v3902 = vmul.f32 %v3901, 0.6931472
      %v3903 = vlog2.pop %v3776
      %v3904 = vmul.f32 %v3903, 0.6931472
      %v3905 = vlog2.pop %v3778
      %v3906 = vmul.f32 %v3905, 0.6931472
      %v3907 = vlog2.pop %v3780
      %v3908 = vmul.f32 %v3907, 0.6931472
      %v3909 = vlog2.pop %v3782
      %v3910 = vmul.f32 %v3909, 0.6931472
      %v3911 = vlog2.pop %v3784
      %v3912 = vmul.f32 %v3911, 0.6931472
      %v3913 = vlog2.pop %v3786
      %v3914 = vmul.f32 %v3913, 0.6931472
      %v3915 = vlog2.pop %v3788
      %v3916 = vmul.f32 %v3915, 0.6931472
      %v3917 = vlog2.pop %v3790
      %v3918 = vmul.f32 %v3917, 0.6931472
      %v3919 = vlog2.pop %v3792
      %v3920 = vmul.f32 %v3919, 0.6931472
      %v3921 = vlog2.pop %v3794
      %v3922 = vmul.f32 %v3921, 0.6931472
      %v3923 = vlog2.pop %v3796
      %v3924 = vmul.f32 %v3923, 0.6931472
      %v3925 = vlog2.pop %v3798
      %v3926 = vmul.f32 %v3925, 0.6931472
      %v3927 = vlog2.pop %v3800
      %v3928 = vmul.f32 %v3927, 0.6931472
      %v3929 = vlog2.pop %v3802
      %v3930 = vmul.f32 %v3929, 0.6931472
      %v3931 = vlog2.pop %v3804
      %v3932 = vmul.f32 %v3931, 0.6931472
      %v3933 = vlog2.pop %v3806
      %v3934 = vmul.f32 %v3933, 0.6931472
      %v3935 = vlog2.pop %v3808
      %v3936 = vmul.f32 %v3935, 0.6931472
      %v3937 = vlog2.pop %v3810
      %v3938 = vmul.f32 %v3937, 0.6931472
      %v3939 = vlog2.pop %v3812
      %v3940 = vmul.f32 %v3939, 0.6931472
      %v3941 = vlog2.pop %v3814
      %v3942 = vmul.f32 %v3941, 0.6931472
      %v3943 = vlog2.pop %v3816
      %v3944 = vmul.f32 %v3943, 0.6931472
      %v3945 = vlog2.pop %v3818
      %v3946 = vmul.f32 %v3945, 0.6931472
      %v3947 = vlog2.pop %v3820
      %v3948 = vmul.f32 %v3947, 0.6931472
      %v3949 = vlog2.pop %v3822
      %v3950 = vmul.f32 %v3949, 0.6931472
      %v3951 = vlog2.pop %v3824
      %v3952 = vmul.f32 %v3951, 0.6931472
      %v3953 = vlog2.pop %v3826
      %v3954 = vmul.f32 %v3953, 0.6931472
      %v3955 = vlog2.pop %v3828
      %v3956 = vmul.f32 %v3955, 0.6931472
      %v3957 = vlog2.pop %v3830
      %v3958 = vmul.f32 %v3957, 0.6931472
      %v3959 = vlog2.pop %v3832
      %v3960 = vmul.f32 %v3959, 0.6931472
      %v3961 = vlog2.pop %v3834
      %v3962 = vmul.f32 %v3961, 0.6931472
      %v3963 = vlog2.pop %v3836
      %v3964 = vmul.f32 %v3963, 0.6931472
      %v3965 = vsub.f32 %v3517, %v3838
      %v3966 = vsub.f32 %v3518, %v3840
      %v3967 = vsub.f32 %v3519, %v3842
      %v3968 = vsub.f32 %v3520, %v3844
      %v3969 = vsub.f32 %v3521, %v3846
      %v3970 = vsub.f32 %v3522, %v3848
      %v3971 = vsub.f32 %v3523, %v3850
      %v3972 = vsub.f32 %v3524, %v3852
      %v3973 = vsub.f32 %v3525, %v3854
      %v3974 = vsub.f32 %v3526, %v3856
      %v3975 = vsub.f32 %v3527, %v3858
      %v3976 = vsub.f32 %v3528, %v3860
      %v3977 = vsub.f32 %v3529, %v3862
      %v3978 = vsub.f32 %v3530, %v3864
      %v3979 = vsub.f32 %v3531, %v3866
      %v3980 = vsub.f32 %v3532, %v3868
      %v3981 = vsub.f32 %v3533, %v3870
      %v3982 = vsub.f32 %v3534, %v3872
      %v3983 = vsub.f32 %v3535, %v3874
      %v3984 = vsub.f32 %v3536, %v3876
      %v3985 = vsub.f32 %v3537, %v3878
      %v3986 = vsub.f32 %v3538, %v3880
      %v3987 = vsub.f32 %v3539, %v3882
      %v3988 = vsub.f32 %v3540, %v3884
      %v3989 = vsub.f32 %v3541, %v3886
      %v3990 = vsub.f32 %v3542, %v3888
      %v3991 = vsub.f32 %v3543, %v3890
      %v3992 = vsub.f32 %v3544, %v3892
      %v3993 = vsub.f32 %v3545, %v3894
      %v3994 = vsub.f32 %v3546, %v3896
      %v3995 = vsub.f32 %v3547, %v3898
      %v3996 = vsub.f32 %v3548, %v3900
      %v3997 = vsub.f32 %v3549, %v3902
      %v3998 = vsub.f32 %v3550, %v3904
      %v3999 = vsub.f32 %v3551, %v3906
      %v4000 = vsub.f32 %v3552, %v3908
      %v4001 = vsub.f32 %v3553, %v3910
      %v4002 = vsub.f32 %v3554, %v3912
      %v4003 = vsub.f32 %v3555, %v3914
      %v4004 = vsub.f32 %v3556, %v3916
      %v4005 = vsub.f32 %v3557, %v3918
      %v4006 = vsub.f32 %v3558, %v3920
      %v4007 = vsub.f32 %v3559, %v3922
      %v4008 = vsub.f32 %v3560, %v3924
      %v4009 = vsub.f32 %v3561, %v3926
      %v4010 = vsub.f32 %v3562, %v3928
      %v4011 = vsub.f32 %v3563, %v3930
      %v4012 = vsub.f32 %v3564, %v3932
      %v4013 = vsub.f32 %v3565, %v3934
      %v4014 = vsub.f32 %v3566, %v3936
      %v4015 = vsub.f32 %v3567, %v3938
      %v4016 = vsub.f32 %v3568, %v3940
      %v4017 = vsub.f32 %v3569, %v3942
      %v4018 = vsub.f32 %v3570, %v3944
      %v4019 = vsub.f32 %v3571, %v3946
      %v4020 = vsub.f32 %v3572, %v3948
      %v4021 = vsub.f32 %v3573, %v3950
      %v4022 = vsub.f32 %v3574, %v3952
      %v4023 = vsub.f32 %v3575, %v3954
      %v4024 = vsub.f32 %v3576, %v3956
      %v4025 = vsub.f32 %v3577, %v3958
      %v4026 = vsub.f32 %v3578, %v3960
      %v4027 = vsub.f32 %v3579, %v3962
      %v4028 = vsub.f32 %v3580, %v3964
      %4029 = vst [vmem:[%s175] sm:$0xff] %v3965
      %4030 = vst [vmem:[%s175 + $0x8] sm:$0xff] %v3966
      %4031 = vst [vmem:[%s175 + $0x10] sm:$0xff] %v3967
      %4032 = vst [vmem:[%s175 + $0x18] sm:$0xff] %v3968
      %4033 = vst [vmem:[%s175 + $0x20] sm:$0xff] %v3969
      %4034 = vst [vmem:[%s175 + $0x28] sm:$0xff] %v3970
      %4035 = vst [vmem:[%s175 + $0x30] sm:$0xff] %v3971
      %4036 = vst [vmem:[%s175 + $0x38] sm:$0xff] %v3972
      %4037 = vst [vmem:[%s175 + $0x40] sm:$0xff] %v3973
      %4038 = vst [vmem:[%s175 + $0x48] sm:$0xff] %v3974
      %4039 = vst [vmem:[%s175 + $0x50] sm:$0xff] %v3975
      %4040 = vst [vmem:[%s175 + $0x58] sm:$0xff] %v3976
      %4041 = vst [vmem:[%s175 + $0x60] sm:$0xff] %v3977
      %4042 = vst [vmem:[%s175 + $0x68] sm:$0xff] %v3978
      %4043 = vst [vmem:[%s175 + $0x70] sm:$0xff] %v3979
      %4044 = vst [vmem:[%s175 + $0x78] sm:$0xff] %v3980
      %4045 = vst [vmem:[%s175 + $0x80] sm:$0xff] %v3981
      %4046 = vst [vmem:[%s175 + $0x88] sm:$0xff] %v3982
      %4047 = vst [vmem:[%s175 + $0x90] sm:$0xff] %v3983
      %4048 = vst [vmem:[%s175 + $0x98] sm:$0xff] %v3984
      %4049 = vst [vmem:[%s175 + $0xa0] sm:$0xff] %v3985
      %4050 = vst [vmem:[%s175 + $0xa8] sm:$0xff] %v3986
      %4051 = vst [vmem:[%s175 + $0xb0] sm:$0xff] %v3987
      %4052 = vst [vmem:[%s175 + $0xb8] sm:$0xff] %v3988
      %4053 = vst [vmem:[%s175 + $0xc0] sm:$0xff] %v3989
      %4054 = vst [vmem:[%s175 + $0xc8] sm:$0xff] %v3990
      %4055 = vst [vmem:[%s175 + $0xd0] sm:$0xff] %v3991
      %4056 = vst [vmem:[%s175 + $0xd8] sm:$0xff] %v3992
      %4057 = vst [vmem:[%s175 + $0xe0] sm:$0xff] %v3993
      %4058 = vst [vmem:[%s175 + $0xe8] sm:$0xff] %v3994
      %4059 = vst [vmem:[%s175 + $0xf0] sm:$0xff] %v3995
      %4060 = vst [vmem:[%s175 + $0xf8] sm:$0xff] %v3996
      %4061 = vst [vmem:[%s175 + $0x100] sm:$0xff] %v3997
      %4062 = vst [vmem:[%s175 + $0x108] sm:$0xff] %v3998
      %4063 = vst [vmem:[%s175 + $0x110] sm:$0xff] %v3999
      %4064 = vst [vmem:[%s175 + $0x118] sm:$0xff] %v4000
      %4065 = vst [vmem:[%s175 + $0x120] sm:$0xff] %v4001
      %4066 = vst [vmem:[%s175 + $0x128] sm:$0xff] %v4002
      %4067 = vst [vmem:[%s175 + $0x130] sm:$0xff] %v4003
      %4068 = vst [vmem:[%s175 + $0x138] sm:$0xff] %v4004
      %4069 = vst [vmem:[%s175 + $0x140] sm:$0xff] %v4005
      %4070 = vst [vmem:[%s175 + $0x148] sm:$0xff] %v4006
      %4071 = vst [vmem:[%s175 + $0x150] sm:$0xff] %v4007
      %4072 = vst [vmem:[%s175 + $0x158] sm:$0xff] %v4008
      %4073 = vst [vmem:[%s175 + $0x160] sm:$0xff] %v4009
      %4074 = vst [vmem:[%s175 + $0x168] sm:$0xff] %v4010
      %4075 = vst [vmem:[%s175 + $0x170] sm:$0xff] %v4011
      %4076 = vst [vmem:[%s175 + $0x178] sm:$0xff] %v4012
      %4077 = vst [vmem:[%s175 + $0x180] sm:$0xff] %v4013
      %4078 = vst [vmem:[%s175 + $0x188] sm:$0xff] %v4014
      %4079 = vst [vmem:[%s175 + $0x190] sm:$0xff] %v4015
      %4080 = vst [vmem:[%s175 + $0x198] sm:$0xff] %v4016
      %4081 = vst [vmem:[%s175 + $0x1a0] sm:$0xff] %v4017
      %4082 = vst [vmem:[%s175 + $0x1a8] sm:$0xff] %v4018
      %4083 = vst [vmem:[%s175 + $0x1b0] sm:$0xff] %v4019
      %4084 = vst [vmem:[%s175 + $0x1b8] sm:$0xff] %v4020
      %4085 = vst [vmem:[%s175 + $0x1c0] sm:$0xff] %v4021
      %4086 = vst [vmem:[%s175 + $0x1c8] sm:$0xff] %v4022
      %4087 = vst [vmem:[%s175 + $0x1d0] sm:$0xff] %v4023
      %4088 = vst [vmem:[%s175 + $0x1d8] sm:$0xff] %v4024
      %4089 = vst [vmem:[%s175 + $0x1e0] sm:$0xff] %v4025
      %4090 = vst [vmem:[%s175 + $0x1e8] sm:$0xff] %v4026
      %4091 = vst [vmem:[%s175 + $0x1f0] sm:$0xff] %v4027
      %4092 = vst [vmem:[%s175 + $0x1f8] sm:$0xff] %v4028
      %s4093 = smul.u32 64, %s14
      %p4094 = scmp.lt.s32.totalorder %s4093, 127
      %s4095 = scalar_select %p4094, %s4093, 127
      %s4096 = smul.addr %s4095, 8
      %s4097 = scalar_lea.vmem %s3, %s4096
      // Predicated region
      $region33: #{gcn_forward_prepared.3} parent=31 // pred_check
        %p4098 = pneg %p100
      $region34: #{gcn_forward_prepared.3} parent=31 // pred_check_branch
        %4100 = sbr.rel (%p4098) target = $region36
      $region35: #{gcn_forward_prepared.3} parent=31 // pred_region
        %s4101 = smul.u32 64, %s14
      $region36: #{gcn_forward_prepared.3} parent=31 // pred_fallthru
        _
    $region32: #{gcn_forward_prepared.3} parent=5 // pred_fallthru
      _
    %p4102 = scmp.le.s32.totalorder 2, %s9
    // Predicated region
    $region37: #{gcn_forward_prepared.3} parent=5 // pred_check
      %p4103 = pneg %p4102
    $region38: #{gcn_forward_prepared.3} parent=5 // pred_check_branch
      %4105 = sbr.rel (%p4103) target = $region40
    $region39: #{gcn_forward_prepared.3} parent=5 // pred_region
      %s4106 = ssub.s32 %s9, 2
      // Predicated region
      $region41: #{gcn_forward_prepared.3} parent=39 // pred_check
        %p4107 = pneg %p106
      $region42: #{gcn_forward_prepared.3} parent=39 // pred_check_branch
        %4109 = sbr.rel (%p4107) target = $region44
      $region43: #{gcn_forward_prepared.3} parent=39 // pred_region
        %s4110 = smul.u32 64, %s15
        %p4111 = scmp.lt.s32.totalorder %s4110, 127
        %s4112 = scalar_select %p4111, %s4110, 127
        %s4113 = smul.addr %s4112, 8
        %s4114 = scalar_lea.vmem %s3, %s4113
      $region44: #{gcn_forward_prepared.3} parent=39 // pred_fallthru
        _
    $region40: #{gcn_forward_prepared.3} parent=5 // pred_fallthru
      _
  $region6: #{gcn_forward_prepared.3} parent=0 // loop_footer
    %s13 = sadd.s32 1, %s9
  $region7: #{gcn_forward_prepared.3} parent=0 // loop_footer_branch
    %8 = sbr.rel target = $region3
  $region8: #{gcn_forward_prepared.3} parent=0 // loop_exit
    _

// kernel: gcn_forward_prepared.2
$region0: #{gcn_forward_prepared.2}
  #allocation0 [shape = 'u32[]', space=smem, size = 0x4, offset = 0x4, fixed_abs, tag = 'smem constant byte address 0x4 - core index']
  #allocation1 [shape = 'u32[144,128]{1,0:T(1,128)}', space=vmem, size = 0x12000, scoped, tag = 'internal scratch']
  %s0 = inlined_call_operand.hbm [shape: bf16[1024,1024], index: 0, kind: input, shape index: {}]
  %s1 = inlined_call_operand.hbm [shape: bf16[1024,128], index: 1, kind: input, shape index: {}]
  %s2 = inlined_call_operand.hbm [shape: bf16[128,128], index: 2, kind: input, shape index: {}]
  %s3 = inlined_call_operand.hbm [shape: f32[1,128], index: 3, kind: input, shape index: {}]
  %s4 = inlined_call_operand.vmem [shape: bf16[1024,128], index: 4, kind: output, shape index: {}]
  %s5 = sld [smem:[#allocation0]]
  $region65: #{gcn_forward_prepared.2} parent=0
    _
  %s7 = ssub.s32 1, %s5
  %s8 = scalar_select 0, %s7, %s5
  $region1: #{gcn_forward_prepared.2} parent=0
    #allocation2 [shape = 'u8[2097152]{0}', space=vmem, size = 0x200000, scoped, tag = 'input window, operand 0']
    #allocation3 [shape = 's32[2]{0}', space=sflag, size = 0x8, scoped, tag = 'scoped memory for gcn_forward_prepared.2']
    #allocation4 [shape = 'u8[262144]{0}', space=vmem, size = 0x40000, scoped, tag = 'input window, operand 1, single buffered']
    #allocation5 [shape = 's32[1]{0}', space=sflag, size = 0x4, scoped, tag = 'scoped memory for gcn_forward_prepared.2']
    #allocation6 [shape = 'u8[32768]{0}', space=vmem, size = 0x8000, scoped, tag = 'input window, operand 2, single buffered']
    #allocation7 [shape = 'u8[512]{0}', space=vmem, size = 0x400, scoped, tag = 'input window, operand 3, single buffered']
    #allocation8 [shape = 's32[1]{0}', space=sflag, size = 0x4, scoped, tag = 'scoped memory for gcn_forward_prepared.2']
    %9 = vsyncpa [#allocation3], 0
    %s10 = scalar_lea.sflag [#allocation3], 1
    %11 = vsyncpa %s10, 0
    %12 = vsyncpa [#allocation5], 0
    %13 = vsyncpa [#allocation8], 0
    loop: start=0, step=1, limit=4
    $region2: #{gcn_forward_prepared.2} parent=1 // loop_pre_header
      _
    $region3: #{gcn_forward_prepared.2} parent=1 // loop_header
      %s15 = sphi 0, %s19
      %p16 = scmp.ge.s32.totalorder %s15, 4
      %s25 = sphi 0, %s27
      %s28 = sphi 0, %s25
      %s29 = sphi 0, %s28
      %s45 = sphi 0, %s29
      %s49 = sphi 0, %s49
      %s51 = sphi 0, %s49
      %s52 = sphi 0, %s51
      %s66 = sphi 0, %s52
      %s70 = sphi 0, %s70
      %s72 = sphi 0, %s70
      %s73 = sphi 0, %s72
      %s87 = sphi 0, %s73
      %s91 = sphi 0, %s91
      %s93 = sphi 0, %s91
      %s94 = sphi 0, %s93
      %s108 = sphi 0, %s94
      %s114 = sphi 0, %s116
      %s117 = sphi 0, %s114
      %s118 = sphi 0, %s117
      %s134 = sphi 0, %s118
    $region4: #{gcn_forward_prepared.2} parent=1 // loop_header_branch
      %18 = sbr.rel (%p16) target = $region8
    $region5: #{gcn_forward_prepared.2} parent=1 // loop_body
      %s20 = ssub.s32 %s15, 1
      %s21 = ssub.s32 %s15, 2
      %s22 = sadd.s32 %s15, 1
      %s23 = ssub.s32 %s15, %s22
      %p24 = scmp.eq.s32.totalorder %s23, 0
      %s26 = sadd.s32 %s25, 1
      %s27 = scalar_select %p24, %s25, %s26
      %p30 = pneg %p24
      %p31 = scmp.eq.s32.totalorder %s15, 1
      %p32 = por %p30, %p31
      %p33 = scmp.ne.s32.totalorder %s25, %s28
      %p34 = scmp.eq.s32.totalorder %s15, 0
      %p35 = por %p33, %p34
      %p36 = scmp.ne.s32.totalorder %s25, %s28
      %p37 = scmp.eq.s32.totalorder %s20, 1
      %p38 = por %p36, %p37
      %p39 = scmp.ne.s32.totalorder %s28, %s29
      %p40 = scmp.eq.s32.totalorder %s20, 0
      %p41 = por %p39, %p40
      %p42 = scmp.ne.s32.totalorder %s28, %s29
      %p43 = scmp.eq.s32.totalorder %s21, 1
      %p44 = por %p42, %p43
      %p46 = scmp.ne.s32.totalorder %s29, %s45
      %p47 = scmp.eq.s32.totalorder %s21, 0
      %p48 = por %p46, %p47
      %s50 = sadd.s32 %s49, 1
      %p53 = scmp.eq.s32.totalorder %s15, 1
      %p54 = scmp.ne.s32.totalorder %s49, %s51
      %p55 = scmp.eq.s32.totalorder %s15, 0
      %p56 = por %p54, %p55
      %p57 = scmp.ne.s32.totalorder %s49, %s51
      %p58 = scmp.eq.s32.totalorder %s20, 1
      %p59 = por %p57, %p58
      %p60 = scmp.ne.s32.totalorder %s51, %s52
      %p61 = scmp.eq.s32.totalorder %s20, 0
      %p62 = por %p60, %p61
      %p63 = scmp.ne.s32.totalorder %s51, %s52
      %p64 = scmp.eq.s32.totalorder %s21, 1
      %p65 = por %p63, %p64
      %p67 = scmp.ne.s32.totalorder %s52, %s66
      %p68 = scmp.eq.s32.totalorder %s21, 0
      %p69 = por %p67, %p68
      %s71 = sadd.s32 %s70, 1
      %p74 = scmp.eq.s32.totalorder %s15, 1
      %p75 = scmp.ne.s32.totalorder %s70, %s72
      %p76 = scmp.eq.s32.totalorder %s15, 0
      %p77 = por %p75, %p76
      %p78 = scmp.ne.s32.totalorder %s70, %s72
      %p79 = scmp.eq.s32.totalorder %s20, 1
      %p80 = por %p78, %p79
      %p81 = scmp.ne.s32.totalorder %s72, %s73
      %p82 = scmp.eq.s32.totalorder %s20, 0
      %p83 = por %p81, %p82
      %p84 = scmp.ne.s32.totalorder %s72, %s73
      %p85 = scmp.eq.s32.totalorder %s21, 1
      %p86 = por %p84, %p85
      %p88 = scmp.ne.s32.totalorder %s73, %s87
      %p89 = scmp.eq.s32.totalorder %s21, 0
      %p90 = por %p88, %p89
      %s92 = sadd.s32 %s91, 1
      %p95 = scmp.eq.s32.totalorder %s15, 1
      %p96 = scmp.ne.s32.totalorder %s91, %s93
      %p97 = scmp.eq.s32.totalorder %s15, 0
      %p98 = por %p96, %p97
      %p99 = scmp.ne.s32.totalorder %s91, %s93
      %p100 = scmp.eq.s32.totalorder %s20, 1
      %p101 = por %p99, %p100
      %p102 = scmp.ne.s32.totalorder %s93, %s94
      %p103 = scmp.eq.s32.totalorder %s20, 0
      %p104 = por %p102, %p103
      %p105 = scmp.ne.s32.totalorder %s93, %s94
      %p106 = scmp.eq.s32.totalorder %s21, 1
      %p107 = por %p105, %p106
      %p109 = scmp.ne.s32.totalorder %s94, %s108
      %p110 = scmp.eq.s32.totalorder %s21, 0
      %p111 = por %p109, %p110
      %s112 = ssub.s32 %s15, %s22
      %p113 = scmp.eq.s32.totalorder %s112, 0
      %s115 = sadd.s32 %s114, 1
      %s116 = scalar_select %p113, %s114, %s115
      %p119 = pneg %p113
      %p120 = scmp.eq.s32.totalorder %s15, 1
      %p121 = por %p119, %p120
      %p122 = scmp.ne.s32.totalorder %s114, %s117
      %p123 = scmp.eq.s32.totalorder %s15, 0
      %p124 = por %p122, %p123
      %p125 = scmp.ne.s32.totalorder %s114, %s117
      %p126 = scmp.eq.s32.totalorder %s20, 1
      %p127 = por %p125, %p126
      %p128 = scmp.ne.s32.totalorder %s117, %s118
      %p129 = scmp.eq.s32.totalorder %s20, 0
      %p130 = por %p128, %p129
      %p131 = scmp.ne.s32.totalorder %s117, %s118
      %p132 = scmp.eq.s32.totalorder %s21, 1
      %p133 = por %p131, %p132
      %p135 = scmp.ne.s32.totalorder %s118, %s134
      %p136 = scmp.eq.s32.totalorder %s21, 0
      %p137 = por %p135, %p136
      %p138 = scmp.le.s32.totalorder 1, %s15
      %p139 = scmp.lt.s32.totalorder %s15, 3
      %p140 = pnand %p138, %p139
      %p141 = pneg %p140
      // Predicated region
      $region9: #{gcn_forward_prepared.2} parent=5 // pred_check
        _
      $region10: #{gcn_forward_prepared.2} parent=5 // pred_check_branch
        %143 = sbr.rel (%p140) target = $region12
      $region11: #{gcn_forward_prepared.2} parent=5 // pred_region
        %s144 = ssub.s32 %s15, 1
        // Predicated region
        $region13: #{gcn_forward_prepared.2} parent=11 // pred_check
          %p145 = pneg %p62
        $region14: #{gcn_forward_prepared.2} parent=11 // pred_check_branch
          %147 = sbr.rel (%p145) target = $region16
        $region15: #{gcn_forward_prepared.2} parent=11 // pred_region
          %s149 = ssub.s32 8192, 8192
          %150 = vsyncadd [#allocation5], %s149
          %s151 = sshll.u32 [#allocation4], 4
          %s152 = int_to_ptr.vmem [resolvable:$true] %s151
          %157 = dma.hbm_to_vmem [thread:$0]  %s1, 8192, %s152, [#allocation5], 64, 64, 4
        $region16: #{gcn_forward_prepared.2} parent=11 // pred_fallthru
          _
        // Predicated region
        $region17: #{gcn_forward_prepared.2} parent=11 // pred_check
          %p158 = pneg %p83
        $region18: #{gcn_forward_prepared.2} parent=11 // pred_check_branch
          %160 = sbr.rel (%p158) target = $region20
        $region19: #{gcn_forward_prepared.2} parent=11 // pred_region
          %s162 = ssub.s32 1024, 1024
          %163 = vsyncadd [#allocation5], %s162
          %s164 = sshll.u32 [#allocation6], 4
          %s165 = int_to_ptr.vmem [resolvable:$true] %s164
          %170 = dma.hbm_to_vmem [thread:$0]  %s2, 1024, %s165, [#allocation5], 64, 64, 4
        $region20: #{gcn_forward_prepared.2} parent=11 // pred_fallthru
          _
        // Predicated region
        $region21: #{gcn_forward_prepared.2} parent=11 // pred_check
          %p171 = pneg %p104
        $region22: #{gcn_forward_prepared.2} parent=11 // pred_check_branch
          %173 = sbr.rel (%p171) target = $region24
        $region23: #{gcn_forward_prepared.2} parent=11 // pred_region
          %s175 = ssub.s32 16, 16
          %176 = vsyncadd [#allocation8], %s175
          %s178 = sshll.u32 [#allocation7], 4
          %s179 = int_to_ptr.vmem [resolvable:$true] %s178
          %181 = dma.hbm_to_vmem [thread:$0]  %s3, 16, %s179, [#allocation8]
        $region24: #{gcn_forward_prepared.2} parent=11 // pred_fallthru
          _
      $region12: #{gcn_forward_prepared.2} parent=5 // pred_fallthru
        _
      %p182 = scmp.lt.s32.totalorder %s15, 2
      // Predicated region
      $region25: #{gcn_forward_prepared.2} parent=5 // pred_check
        %p183 = pneg %p182
      $region26: #{gcn_forward_prepared.2} parent=5 // pred_check_branch
        %185 = sbr.rel (%p183) target = $region28
      $region27: #{gcn_forward_prepared.2} parent=5 // pred_region
        // Predicated region
        $region29: #{gcn_forward_prepared.2} parent=27 // pred_check
          %p186 = pneg %p35
        $region30: #{gcn_forward_prepared.2} parent=27 // pred_check_branch
          %188 = sbr.rel (%p186) target = $region32
        $region31: #{gcn_forward_prepared.2} parent=27 // pred_region
          %s189 = sand.u32 %s25, 1
          %s190 = scalar_lea.sflag [#allocation3], %s189
          %s191 = sand.u32 %s25, 1
          %s192 = smul.addr %s191, 2048
          %s193 = scalar_lea.vmem [#allocation2], %s192
          %s194 = smul.u32 64, %s15
          %s196 = ssub.s32 32768, 32768
          %197 = vsyncadd %s190, %s196
          %s198 = smul.addr %s194, 8
          %s199 = smul.addr %s198, 64
          %s200 = scalar_lea.hbm %s0, %s199
          %s201 = sshll.u32 %s193, 4
          %s202 = int_to_ptr.vmem [resolvable:$true] %s201
          %207 = dma.hbm_to_vmem [thread:$0]  %s200, 32768, %s202, %s190, 512, 512, 32
        $region32: #{gcn_forward_prepared.2} parent=27 // pred_fallthru
          _
      $region28: #{gcn_forward_prepared.2} parent=5 // pred_fallthru
        _
      %p208 = scmp.le.s32.totalorder 1, %s15
      %p209 = scmp.lt.s32.totalorder %s15, 3
      %p210 = pnand %p208, %p209
      %p211 = pneg %p210
      // Predicated region
      $region33: #{gcn_forward_prepared.2} parent=5 // pred_check
        _
      $region34: #{gcn_forward_prepared.2} parent=5 // pred_check_branch
        %213 = sbr.rel (%p210) target = $region36
      $region35: #{gcn_forward_prepared.2} parent=5 // pred_region
        %s214 = ssub.s32 %s15, 1
        %s215 = sand.u32 %s28, 1
        %s216 = scalar_lea.sflag [#allocation3], %s215
        %s217 = sand.u32 %s28, 1
        %s218 = smul.addr %s217, 2048
        %s219 = scalar_lea.vmem [#allocation2], %s218
        // Predicated region
        $region37: #{gcn_forward_prepared.2} parent=35 // pred_check
          %p220 = pneg %p41
        $region38: #{gcn_forward_prepared.2} parent=35 // pred_check_branch
          %222 = sbr.rel (%p220) target = $region40
        $region39: #{gcn_forward_prepared.2} parent=35 // pred_region
          %223 = dma.done %s216, 32768
        $region40: #{gcn_forward_prepared.2} parent=35 // pred_fallthru
          _
        // Predicated region
        $region41: #{gcn_forward_prepared.2} parent=35 // pred_check
          %p224 = pneg %p62
        $region42: #{gcn_forward_prepared.2} parent=35 // pred_check_branch
          %226 = sbr.rel (%p224) target = $region44
        $region43: #{gcn_forward_prepared.2} parent=35 // pred_region
          %227 = dma.done [#allocation5], 8192
        $region44: #{gcn_forward_prepared.2} parent=35 // pred_fallthru
          _
        // Predicated region
        $region45: #{gcn_forward_prepared.2} parent=35 // pred_check
          %p228 = pneg %p83
        $region46: #{gcn_forward_prepared.2} parent=35 // pred_check_branch
          %230 = sbr.rel (%p228) target = $region48
        $region47: #{gcn_forward_prepared.2} parent=35 // pred_region
          %231 = dma.done [#allocation5], 1024
        $region48: #{gcn_forward_prepared.2} parent=35 // pred_fallthru
          _
        // Predicated region
        $region49: #{gcn_forward_prepared.2} parent=35 // pred_check
          %p232 = pneg %p104
        $region50: #{gcn_forward_prepared.2} parent=35 // pred_check_branch
          %234 = sbr.rel (%p232) target = $region52
        $region51: #{gcn_forward_prepared.2} parent=35 // pred_region
          %235 = dma.done [#allocation8], 16
        $region52: #{gcn_forward_prepared.2} parent=35 // pred_fallthru
          _
        %s236 = sand.u32 %s28, 1
        %s237 = scalar_lea.sflag [#allocation3], %s236
        %s238 = sand.u32 %s28, 1
        %s239 = smul.addr %s238, 2048
        %s240 = scalar_lea.vmem [#allocation2], %s239
        %p241 = pneg %p41
        %p242 = pneg %p38
        %p243 = pneg %p62
        %p244 = pneg %p59
        %p245 = pneg %p83
        %p246 = pneg %p80
        %p247 = pneg %p104
        %p248 = pneg %p101
        %p249 = pneg %p130
        %p250 = pneg %p127
        %s251 = smul.u32 64, %s20
        %p252 = scmp.lt.s32.totalorder %s251, 127
        %s253 = scalar_select %p252, %s251, 127
        %s254 = smul.addr %s253, 4
        %s255 = scalar_lea.vmem %s4, %s254
        %s256 = smul.u32 64, %s20
        %s257 = smul.u32 64, %s20
        %p258 = scmp.lt.s32.totalorder %s257, 127
        %s259 = scalar_select %p258, %s257, 127
        %s260 = smul.addr %s259, 4
        %s261 = scalar_lea.vmem %s4, %s260
        %s262 = smul.u32 64, %s20
        %v264 = vld [vmem:[%s219] sm:$0xff]
        %v265 = vld [vmem:[%s219 + $0x8] sm:$0xff]
        %v266 = vld [vmem:[%s219 + $0x10] sm:$0xff]
        %v267 = vld [vmem:[%s219 + $0x18] sm:$0xff]
        %v268 = vld [vmem:[%s219 + $0x20] sm:$0xff]
        %v269 = vld [vmem:[%s219 + $0x28] sm:$0xff]
        %v270 = vld [vmem:[%s219 + $0x30] sm:$0xff]
        %v271 = vld [vmem:[%s219 + $0x38] sm:$0xff]
        %v272 = vld [vmem:[%s219 + $0x40] sm:$0xff]
        %v273 = vld [vmem:[%s219 + $0x48] sm:$0xff]
        %v274 = vld [vmem:[%s219 + $0x50] sm:$0xff]
        %v275 = vld [vmem:[%s219 + $0x58] sm:$0xff]
        %v276 = vld [vmem:[%s219 + $0x60] sm:$0xff]
        %v277 = vld [vmem:[%s219 + $0x68] sm:$0xff]
        %v278 = vld [vmem:[%s219 + $0x70] sm:$0xff]
        %v279 = vld [vmem:[%s219 + $0x78] sm:$0xff]
        %v280 = vld [vmem:[%s219 + $0x80] sm:$0xff]
        %v281 = vld [vmem:[%s219 + $0x88] sm:$0xff]
        %v282 = vld [vmem:[%s219 + $0x90] sm:$0xff]
        %v283 = vld [vmem:[%s219 + $0x98] sm:$0xff]
        %v284 = vld [vmem:[%s219 + $0xa0] sm:$0xff]
        %v285 = vld [vmem:[%s219 + $0xa8] sm:$0xff]
        %v286 = vld [vmem:[%s219 + $0xb0] sm:$0xff]
        %v287 = vld [vmem:[%s219 + $0xb8] sm:$0xff]
        %v288 = vld [vmem:[%s219 + $0xc0] sm:$0xff]
        %v289 = vld [vmem:[%s219 + $0xc8] sm:$0xff]
        %v290 = vld [vmem:[%s219 + $0xd0] sm:$0xff]
        %v291 = vld [vmem:[%s219 + $0xd8] sm:$0xff]
        %v292 = vld [vmem:[%s219 + $0xe0] sm:$0xff]
        %v293 = vld [vmem:[%s219 + $0xe8] sm:$0xff]
        %v294 = vld [vmem:[%s219 + $0xf0] sm:$0xff]
        %v295 = vld [vmem:[%s219 + $0xf8] sm:$0xff]
        %v296 = vld [vmem:[%s219 + $0x100] sm:$0xff]
        %v297 = vld [vmem:[%s219 + $0x108] sm:$0xff]
        %v298 = vld [vmem:[%s219 + $0x110] sm:$0xff]
        %v299 = vld [vmem:[%s219 + $0x118] sm:$0xff]
        %v300 = vld [vmem:[%s219 + $0x120] sm:$0xff]
        %v301 = vld [vmem:[%s219 + $0x128] sm:$0xff]
        %v302 = vld [vmem:[%s219 + $0x130] sm:$0xff]
        %v303 = vld [vmem:[%s219 + $0x138] sm:$0xff]
        %v304 = vld [vmem:[%s219 + $0x140] sm:$0xff]
        %v305 = vld [vmem:[%s219 + $0x148] sm:$0xff]
        %v306 = vld [vmem:[%s219 + $0x150] sm:$0xff]
        %v307 = vld [vmem:[%s219 + $0x158] sm:$0xff]
        %v308 = vld [vmem:[%s219 + $0x160] sm:$0xff]
        %v309 = vld [vmem:[%s219 + $0x168] sm:$0xff]
        %v310 = vld [vmem:[%s219 + $0x170] sm:$0xff]
        %v311 = vld [vmem:[%s219 + $0x178] sm:$0xff]
        %v312 = vld [vmem:[%s219 + $0x180] sm:$0xff]
        %v313 = vld [vmem:[%s219 + $0x188] sm:$0xff]
        %v314 = vld [vmem:[%s219 + $0x190] sm:$0xff]
        %v315 = vld [vmem:[%s219 + $0x198] sm:$0xff]
        %v316 = vld [vmem:[%s219 + $0x1a0] sm:$0xff]
        %v317 = vld [vmem:[%s219 + $0x1a8] sm:$0xff]
        %v318 = vld [vmem:[%s219 + $0x1b0] sm:$0xff]
        %v319 = vld [vmem:[%s219 + $0x1b8] sm:$0xff]
        %v320 = vld [vmem:[%s219 + $0x1c0] sm:$0xff]
        %v321 = vld [vmem:[%s219 + $0x1c8] sm:$0xff]
        %v322 = vld [vmem:[%s219 + $0x1d0] sm:$0xff]
        %v323 = vld [vmem:[%s219 + $0x1d8] sm:$0xff]
        %v324 = vld [vmem:[%s219 + $0x1e0] sm:$0xff]
        %v325 = vld [vmem:[%s219 + $0x1e8] sm:$0xff]
        %v326 = vld [vmem:[%s219 + $0x1f0] sm:$0xff]
        %v327 = vld [vmem:[%s219 + $0x1f8] sm:$0xff]
        %v328 = vld [vmem:[%s219 + $0x200] sm:$0xff]
        %v329 = vld [vmem:[%s219 + $0x208] sm:$0xff]
        %v330 = vld [vmem:[%s219 + $0x210] sm:$0xff]
        %v331 = vld [vmem:[%s219 + $0x218] sm:$0xff]
        %v332 = vld [vmem:[%s219 + $0x220] sm:$0xff]
        %v333 = vld [vmem:[%s219 + $0x228] sm:$0xff]
        %v334 = vld [vmem:[%s219 + $0x230] sm:$0xff]
        %v335 = vld [vmem:[%s219 + $0x238] sm:$0xff]
        %v336 = vld [vmem:[%s219 + $0x240] sm:$0xff]
        %v337 = vld [vmem:[%s219 + $0x248] sm:$0xff]
        %v338 = vld [vmem:[%s219 + $0x250] sm:$0xff]
        %v339 = vld [vmem:[%s219 + $0x258] sm:$0xff]
        %v340 = vld [vmem:[%s219 + $0x260] sm:$0xff]
        %v341 = vld [vmem:[%s219 + $0x268] sm:$0xff]
        %v342 = vld [vmem:[%s219 + $0x270] sm:$0xff]
        %v343 = vld [vmem:[%s219 + $0x278] sm:$0xff]
        %v344 = vld [vmem:[%s219 + $0x280] sm:$0xff]
        %v345 = vld [vmem:[%s219 + $0x288] sm:$0xff]
        %v346 = vld [vmem:[%s219 + $0x290] sm:$0xff]
        %v347 = vld [vmem:[%s219 + $0x298] sm:$0xff]
        %v348 = vld [vmem:[%s219 + $0x2a0] sm:$0xff]
        %v349 = vld [vmem:[%s219 + $0x2a8] sm:$0xff]
        %v350 = vld [vmem:[%s219 + $0x2b0] sm:$0xff]
        %v351 = vld [vmem:[%s219 + $0x2b8] sm:$0xff]
        %v352 = vld [vmem:[%s219 + $0x2c0] sm:$0xff]
        %v353 = vld [vmem:[%s219 + $0x2c8] sm:$0xff]
        %v354 = vld [vmem:[%s219 + $0x2d0] sm:$0xff]
        %v355 = vld [vmem:[%s219 + $0x2d8] sm:$0xff]
        %v356 = vld [vmem:[%s219 + $0x2e0] sm:$0xff]
        %v357 = vld [vmem:[%s219 + $0x2e8] sm:$0xff]
        %v358 = vld [vmem:[%s219 + $0x2f0] sm:$0xff]
        %v359 = vld [vmem:[%s219 + $0x2f8] sm:$0xff]
        %v360 = vld [vmem:[%s219 + $0x300] sm:$0xff]
        %v361 = vld [vmem:[%s219 + $0x308] sm:$0xff]
        %v362 = vld [vmem:[%s219 + $0x310] sm:$0xff]
        %v363 = vld [vmem:[%s219 + $0x318] sm:$0xff]
        %v364 = vld [vmem:[%s219 + $0x320] sm:$0xff]
        %v365 = vld [vmem:[%s219 + $0x328] sm:$0xff]
        %v366 = vld [vmem:[%s219 + $0x330] sm:$0xff]
        %v367 = vld [vmem:[%s219 + $0x338] sm:$0xff]
        %v368 = vld [vmem:[%s219 + $0x340] sm:$0xff]
        %v369 = vld [vmem:[%s219 + $0x348] sm:$0xff]
        %v370 = vld [vmem:[%s219 + $0x350] sm:$0xff]
        %v371 = vld [vmem:[%s219 + $0x358] sm:$0xff]
        %v372 = vld [vmem:[%s219 + $0x360] sm:$0xff]
        %v373 = vld [vmem:[%s219 + $0x368] sm:$0xff]
        %v374 = vld [vmem:[%s219 + $0x370] sm:$0xff]
        %v375 = vld [vmem:[%s219 + $0x378] sm:$0xff]
        %v376 = vld [vmem:[%s219 + $0x380] sm:$0xff]
        %v377 = vld [vmem:[%s219 + $0x388] sm:$0xff]
        %v378 = vld [vmem:[%s219 + $0x390] sm:$0xff]
        %v379 = vld [vmem:[%s219 + $0x398] sm:$0xff]
        %v380 = vld [vmem:[%s219 + $0x3a0] sm:$0xff]
        %v381 = vld [vmem:[%s219 + $0x3a8] sm:$0xff]
        %v382 = vld [vmem:[%s219 + $0x3b0] sm:$0xff]
        %v383 = vld [vmem:[%s219 + $0x3b8] sm:$0xff]
        %v384 = vld [vmem:[%s219 + $0x3c0] sm:$0xff]
        %v385 = vld [vmem:[%s219 + $0x3c8] sm:$0xff]
        %v386 = vld [vmem:[%s219 + $0x3d0] sm:$0xff]
        %v387 = vld [vmem:[%s219 + $0x3d8] sm:$0xff]
        %v388 = vld [vmem:[%s219 + $0x3e0] sm:$0xff]
        %v389 = vld [vmem:[%s219 + $0x3e8] sm:$0xff]
        %v390 = vld [vmem:[%s219 + $0x3f0] sm:$0xff]
        %v391 = vld [vmem:[%s219 + $0x3f8] sm:$0xff]
        %v392 = vld [vmem:[%s219 + $0x400] sm:$0xff]
        %v393 = vld [vmem:[%s219 + $0x408] sm:$0xff]
        %v394 = vld [vmem:[%s219 + $0x410] sm:$0xff]
        %v395 = vld [vmem:[%s219 + $0x418] sm:$0xff]
        %v396 = vld [vmem:[%s219 + $0x420] sm:$0xff]
        %v397 = vld [vmem:[%s219 + $0x428] sm:$0xff]
        %v398 = vld [vmem:[%s219 + $0x430] sm:$0xff]
        %v399 = vld [vmem:[%s219 + $0x438] sm:$0xff]
        %v400 = vld [vmem:[%s219 + $0x440] sm:$0xff]
        %v401 = vld [vmem:[%s219 + $0x448] sm:$0xff]
        %v402 = vld [vmem:[%s219 + $0x450] sm:$0xff]
        %v403 = vld [vmem:[%s219 + $0x458] sm:$0xff]
        %v404 = vld [vmem:[%s219 + $0x460] sm:$0xff]
        %v405 = vld [vmem:[%s219 + $0x468] sm:$0xff]
        %v406 = vld [vmem:[%s219 + $0x470] sm:$0xff]
        %v407 = vld [vmem:[%s219 + $0x478] sm:$0xff]
        %v408 = vld [vmem:[%s219 + $0x480] sm:$0xff]
        %v409 = vld [vmem:[%s219 + $0x488] sm:$0xff]
        %v410 = vld [vmem:[%s219 + $0x490] sm:$0xff]
        %v411 = vld [vmem:[%s219 + $0x498] sm:$0xff]
        %v412 = vld [vmem:[%s219 + $0x4a0] sm:$0xff]
        %v413 = vld [vmem:[%s219 + $0x4a8] sm:$0xff]
        %v414 = vld [vmem:[%s219 + $0x4b0] sm:$0xff]
        %v415 = vld [vmem:[%s219 + $0x4b8] sm:$0xff]
        %v416 = vld [vmem:[%s219 + $0x4c0] sm:$0xff]
        %v417 = vld [vmem:[%s219 + $0x4c8] sm:$0xff]
        %v418 = vld [vmem:[%s219 + $0x4d0] sm:$0xff]
        %v419 = vld [vmem:[%s219 + $0x4d8] sm:$0xff]
        %v420 = vld [vmem:[%s219 + $0x4e0] sm:$0xff]
        %v421 = vld [vmem:[%s219 + $0x4e8] sm:$0xff]
        %v422 = vld [vmem:[%s219 + $0x4f0] sm:$0xff]
        %v423 = vld [vmem:[%s219 + $0x4f8] sm:$0xff]
        %v424 = vld [vmem:[%s219 + $0x500] sm:$0xff]
        %v425 = vld [vmem:[%s219 + $0x508] sm:$0xff]
        %v426 = vld [vmem:[%s219 + $0x510] sm:$0xff]
        %v427 = vld [vmem:[%s219 + $0x518] sm:$0xff]
        %v428 = vld [vmem:[%s219 + $0x520] sm:$0xff]
        %v429 = vld [vmem:[%s219 + $0x528] sm:$0xff]
        %v430 = vld [vmem:[%s219 + $0x530] sm:$0xff]
        %v431 = vld [vmem:[%s219 + $0x538] sm:$0xff]
        %v432 = vld [vmem:[%s219 + $0x540] sm:$0xff]
        %v433 = vld [vmem:[%s219 + $0x548] sm:$0xff]
        %v434 = vld [vmem:[%s219 + $0x550] sm:$0xff]
        %v435 = vld [vmem:[%s219 + $0x558] sm:$0xff]
        %v436 = vld [vmem:[%s219 + $0x560] sm:$0xff]
        %v437 = vld [vmem:[%s219 + $0x568] sm:$0xff]
        %v438 = vld [vmem:[%s219 + $0x570] sm:$0xff]
        %v439 = vld [vmem:[%s219 + $0x578] sm:$0xff]
        %v440 = vld [vmem:[%s219 + $0x580] sm:$0xff]
        %v441 = vld [vmem:[%s219 + $0x588] sm:$0xff]
        %v442 = vld [vmem:[%s219 + $0x590] sm:$0xff]
        %v443 = vld [vmem:[%s219 + $0x598] sm:$0xff]
        %v444 = vld [vmem:[%s219 + $0x5a0] sm:$0xff]
        %v445 = vld [vmem:[%s219 + $0x5a8] sm:$0xff]
        %v446 = vld [vmem:[%s219 + $0x5b0] sm:$0xff]
        %v447 = vld [vmem:[%s219 + $0x5b8] sm:$0xff]
        %v448 = vld [vmem:[%s219 + $0x5c0] sm:$0xff]
        %v449 = vld [vmem:[%s219 + $0x5c8] sm:$0xff]
        %v450 = vld [vmem:[%s219 + $0x5d0] sm:$0xff]
        %v451 = vld [vmem:[%s219 + $0x5d8] sm:$0xff]
        %v452 = vld [vmem:[%s219 + $0x5e0] sm:$0xff]
        %v453 = vld [vmem:[%s219 + $0x5e8] sm:$0xff]
        %v454 = vld [vmem:[%s219 + $0x5f0] sm:$0xff]
        %v455 = vld [vmem:[%s219 + $0x5f8] sm:$0xff]
        %v456 = vld [vmem:[%s219 + $0x600] sm:$0xff]
        %v457 = vld [vmem:[%s219 + $0x608] sm:$0xff]
        %v458 = vld [vmem:[%s219 + $0x610] sm:$0xff]
        %v459 = vld [vmem:[%s219 + $0x618] sm:$0xff]
        %v460 = vld [vmem:[%s219 + $0x620] sm:$0xff]
        %v461 = vld [vmem:[%s219 + $0x628] sm:$0xff]
        %v462 = vld [vmem:[%s219 + $0x630] sm:$0xff]
        %v463 = vld [vmem:[%s219 + $0x638] sm:$0xff]
        %v464 = vld [vmem:[%s219 + $0x640] sm:$0xff]
        %v465 = vld [vmem:[%s219 + $0x648] sm:$0xff]
        %v466 = vld [vmem:[%s219 + $0x650] sm:$0xff]
        %v467 = vld [vmem:[%s219 + $0x658] sm:$0xff]
        %v468 = vld [vmem:[%s219 + $0x660] sm:$0xff]
        %v469 = vld [vmem:[%s219 + $0x668] sm:$0xff]
        %v470 = vld [vmem:[%s219 + $0x670] sm:$0xff]
        %v471 = vld [vmem:[%s219 + $0x678] sm:$0xff]
        %v472 = vld [vmem:[%s219 + $0x680] sm:$0xff]
        %v473 = vld [vmem:[%s219 + $0x688] sm:$0xff]
        %v474 = vld [vmem:[%s219 + $0x690] sm:$0xff]
        %v475 = vld [vmem:[%s219 + $0x698] sm:$0xff]
        %v476 = vld [vmem:[%s219 + $0x6a0] sm:$0xff]
        %v477 = vld [vmem:[%s219 + $0x6a8] sm:$0xff]
        %v478 = vld [vmem:[%s219 + $0x6b0] sm:$0xff]
        %v479 = vld [vmem:[%s219 + $0x6b8] sm:$0xff]
        %v480 = vld [vmem:[%s219 + $0x6c0] sm:$0xff]
        %v481 = vld [vmem:[%s219 + $0x6c8] sm:$0xff]
        %v482 = vld [vmem:[%s219 + $0x6d0] sm:$0xff]
        %v483 = vld [vmem:[%s219 + $0x6d8] sm:$0xff]
        %v484 = vld [vmem:[%s219 + $0x6e0] sm:$0xff]
        %v485 = vld [vmem:[%s219 + $0x6e8] sm:$0xff]
        %v486 = vld [vmem:[%s219 + $0x6f0] sm:$0xff]
        %v487 = vld [vmem:[%s219 + $0x6f8] sm:$0xff]
        %v488 = vld [vmem:[%s219 + $0x700] sm:$0xff]
        %v489 = vld [vmem:[%s219 + $0x708] sm:$0xff]
        %v490 = vld [vmem:[%s219 + $0x710] sm:$0xff]
        %v491 = vld [vmem:[%s219 + $0x718] sm:$0xff]
        %v492 = vld [vmem:[%s219 + $0x720] sm:$0xff]
        %v493 = vld [vmem:[%s219 + $0x728] sm:$0xff]
        %v494 = vld [vmem:[%s219 + $0x730] sm:$0xff]
        %v495 = vld [vmem:[%s219 + $0x738] sm:$0xff]
        %v496 = vld [vmem:[%s219 + $0x740] sm:$0xff]
        %v497 = vld [vmem:[%s219 + $0x748] sm:$0xff]
        %v498 = vld [vmem:[%s219 + $0x750] sm:$0xff]
        %v499 = vld [vmem:[%s219 + $0x758] sm:$0xff]
        %v500 = vld [vmem:[%s219 + $0x760] sm:$0xff]
        %v501 = vld [vmem:[%s219 + $0x768] sm:$0xff]
        %v502 = vld [vmem:[%s219 + $0x770] sm:$0xff]
        %v503 = vld [vmem:[%s219 + $0x778] sm:$0xff]
        %v504 = vld [vmem:[%s219 + $0x780] sm:$0xff]
        %v505 = vld [vmem:[%s219 + $0x788] sm:$0xff]
        %v506 = vld [vmem:[%s219 + $0x790] sm:$0xff]
        %v507 = vld [vmem:[%s219 + $0x798] sm:$0xff]
        %v508 = vld [vmem:[%s219 + $0x7a0] sm:$0xff]
        %v509 = vld [vmem:[%s219 + $0x7a8] sm:$0xff]
        %v510 = vld [vmem:[%s219 + $0x7b0] sm:$0xff]
        %v511 = vld [vmem:[%s219 + $0x7b8] sm:$0xff]
        %v512 = vld [vmem:[%s219 + $0x7c0] sm:$0xff]
        %v513 = vld [vmem:[%s219 + $0x7c8] sm:$0xff]
        %v514 = vld [vmem:[%s219 + $0x7d0] sm:$0xff]
        %v515 = vld [vmem:[%s219 + $0x7d8] sm:$0xff]
        %v516 = vld [vmem:[%s219 + $0x7e0] sm:$0xff]
        %v517 = vld [vmem:[%s219 + $0x7e8] sm:$0xff]
        %v518 = vld [vmem:[%s219 + $0x7f0] sm:$0xff]
        %v519 = vld [vmem:[%s219 + $0x7f8] sm:$0xff]
        %v520 = vld [vmem:[#allocation4] sm:$0xf]
        %v521 = vld [vmem:[#allocation4 + $0x4] sm:$0xf]
        %v522 = vld [vmem:[#allocation4 + $0x8] sm:$0xf]
        %v523 = vld [vmem:[#allocation4 + $0xc] sm:$0xf]
        %v524 = vld [vmem:[#allocation4 + $0x10] sm:$0xf]
        %v525 = vld [vmem:[#allocation4 + $0x14] sm:$0xf]
        %v526 = vld [vmem:[#allocation4 + $0x18] sm:$0xf]
        %v527 = vld [vmem:[#allocation4 + $0x1c] sm:$0xf]
        %v528 = vld [vmem:[#allocation4 + $0x20] sm:$0xf]
        %v529 = vld [vmem:[#allocation4 + $0x24] sm:$0xf]
        %v530 = vld [vmem:[#allocation4 + $0x28] sm:$0xf]
        %v531 = vld [vmem:[#allocation4 + $0x2c] sm:$0xf]
        %v532 = vld [vmem:[#allocation4 + $0x30] sm:$0xf]
        %v533 = vld [vmem:[#allocation4 + $0x34] sm:$0xf]
        %v534 = vld [vmem:[#allocation4 + $0x38] sm:$0xf]
        %v535 = vld [vmem:[#allocation4 + $0x3c] sm:$0xf]
        %v536 = vld [vmem:[#allocation4 + $0x40] sm:$0xf]
        %v537 = vld [vmem:[#allocation4 + $0x44] sm:$0xf]
        %v538 = vld [vmem:[#allocation4 + $0x48] sm:$0xf]
        %v539 = vld [vmem:[#allocation4 + $0x4c] sm:$0xf]
        %v540 = vld [vmem:[#allocation4 + $0x50] sm:$0xf]
        %v541 = vld [vmem:[#allocation4 + $0x54] sm:$0xf]
        %v542 = vld [vmem:[#allocation4 + $0x58] sm:$0xf]
        %v543 = vld [vmem:[#allocation4 + $0x5c] sm:$0xf]
        %v544 = vld [vmem:[#allocation4 + $0x60] sm:$0xf]
        %v545 = vld [vmem:[#allocation4 + $0x64] sm:$0xf]
        %v546 = vld [vmem:[#allocation4 + $0x68] sm:$0xf]
        %v547 = vld [vmem:[#allocation4 + $0x6c] sm:$0xf]
        %v548 = vld [vmem:[#allocation4 + $0x70] sm:$0xf]
        %v549 = vld [vmem:[#allocation4 + $0x74] sm:$0xf]
        %v550 = vld [vmem:[#allocation4 + $0x78] sm:$0xf]
        %v551 = vld [vmem:[#allocation4 + $0x7c] sm:$0xf]
        %v552 = vld [vmem:[#allocation4 + $0x80] sm:$0xf]
        %v553 = vld [vmem:[#allocation4 + $0x84] sm:$0xf]
        %v554 = vld [vmem:[#allocation4 + $0x88] sm:$0xf]
        %v555 = vld [vmem:[#allocation4 + $0x8c] sm:$0xf]
        %v556 = vld [vmem:[#allocation4 + $0x90] sm:$0xf]
        %v557 = vld [vmem:[#allocation4 + $0x94] sm:$0xf]
        %v558 = vld [vmem:[#allocation4 + $0x98] sm:$0xf]
        %v559 = vld [vmem:[#allocation4 + $0x9c] sm:$0xf]
        %v560 = vld [vmem:[#allocation4 + $0xa0] sm:$0xf]
        %v561 = vld [vmem:[#allocation4 + $0xa4] sm:$0xf]
        %v562 = vld [vmem:[#allocation4 + $0xa8] sm:$0xf]
        %v563 = vld [vmem:[#allocation4 + $0xac] sm:$0xf]
        %v564 = vld [vmem:[#allocation4 + $0xb0] sm:$0xf]
        %v565 = vld [vmem:[#allocation4 + $0xb4] sm:$0xf]
        %v566 = vld [vmem:[#allocation4 + $0xb8] sm:$0xf]
        %v567 = vld [vmem:[#allocation4 + $0xbc] sm:$0xf]
        %v568 = vld [vmem:[#allocation4 + $0xc0] sm:$0xf]
        %v569 = vld [vmem:[#allocation4 + $0xc4] sm:$0xf]
        %v570 = vld [vmem:[#allocation4 + $0xc8] sm:$0xf]
        %v571 = vld [vmem:[#allocation4 + $0xcc] sm:$0xf]
        %v572 = vld [vmem:[#allocation4 + $0xd0] sm:$0xf]
        %v573 = vld [vmem:[#allocation4 + $0xd4] sm:$0xf]
        %v574 = vld [vmem:[#allocation4 + $0xd8] sm:$0xf]
        %v575 = vld [vmem:[#allocation4 + $0xdc] sm:$0xf]
        %v576 = vld [vmem:[#allocation4 + $0xe0] sm:$0xf]
        %v577 = vld [vmem:[#allocation4 + $0xe4] sm:$0xf]
        %v578 = vld [vmem:[#allocation4 + $0xe8] sm:$0xf]
        %v579 = vld [vmem:[#allocation4 + $0xec] sm:$0xf]
        %v580 = vld [vmem:[#allocation4 + $0xf0] sm:$0xf]
        %v581 = vld [vmem:[#allocation4 + $0xf4] sm:$0xf]
        %v582 = vld [vmem:[#allocation4 + $0xf8] sm:$0xf]
        %v583 = vld [vmem:[#allocation4 + $0xfc] sm:$0xf]
        %v584 = vld [vmem:[#allocation4 + $0x100] sm:$0xf]
        %v585 = vld [vmem:[#allocation4 + $0x104] sm:$0xf]
        %v586 = vld [vmem:[#allocation4 + $0x108] sm:$0xf]
        %v587 = vld [vmem:[#allocation4 + $0x10c] sm:$0xf]
        %v588 = vld [vmem:[#allocation4 + $0x110] sm:$0xf]
        %v589 = vld [vmem:[#allocation4 + $0x114] sm:$0xf]
        %v590 = vld [vmem:[#allocation4 + $0x118] sm:$0xf]
        %v591 = vld [vmem:[#allocation4 + $0x11c] sm:$0xf]
        %v592 = vld [vmem:[#allocation4 + $0x120] sm:$0xf]
        %v593 = vld [vmem:[#allocation4 + $0x124] sm:$0xf]
        %v594 = vld [vmem:[#allocation4 + $0x128] sm:$0xf]
        %v595 = vld [vmem:[#allocation4 + $0x12c] sm:$0xf]
        %v596 = vld [vmem:[#allocation4 + $0x130] sm:$0xf]
        %v597 = vld [vmem:[#allocation4 + $0x134] sm:$0xf]
        %v598 = vld [vmem:[#allocation4 + $0x138] sm:$0xf]
        %v599 = vld [vmem:[#allocation4 + $0x13c] sm:$0xf]
        %v600 = vld [vmem:[#allocation4 + $0x140] sm:$0xf]
        %v601 = vld [vmem:[#allocation4 + $0x144] sm:$0xf]
        %v602 = vld [vmem:[#allocation4 + $0x148] sm:$0xf]
        %v603 = vld [vmem:[#allocation4 + $0x14c] sm:$0xf]
        %v604 = vld [vmem:[#allocation4 + $0x150] sm:$0xf]
        %v605 = vld [vmem:[#allocation4 + $0x154] sm:$0xf]
        %v606 = vld [vmem:[#allocation4 + $0x158] sm:$0xf]
        %v607 = vld [vmem:[#allocation4 + $0x15c] sm:$0xf]
        %v608 = vld [vmem:[#allocation4 + $0x160] sm:$0xf]
        %v609 = vld [vmem:[#allocation4 + $0x164] sm:$0xf]
        %v610 = vld [vmem:[#allocation4 + $0x168] sm:$0xf]
        %v611 = vld [vmem:[#allocation4 + $0x16c] sm:$0xf]
        %v612 = vld [vmem:[#allocation4 + $0x170] sm:$0xf]
        %v613 = vld [vmem:[#allocation4 + $0x174] sm:$0xf]
        %v614 = vld [vmem:[#allocation4 + $0x178] sm:$0xf]
        %v615 = vld [vmem:[#allocation4 + $0x17c] sm:$0xf]
        %v616 = vld [vmem:[#allocation4 + $0x180] sm:$0xf]
        %v617 = vld [vmem:[#allocation4 + $0x184] sm:$0xf]
        %v618 = vld [vmem:[#allocation4 + $0x188] sm:$0xf]
        %v619 = vld [vmem:[#allocation4 + $0x18c] sm:$0xf]
        %v620 = vld [vmem:[#allocation4 + $0x190] sm:$0xf]
        %v621 = vld [vmem:[#allocation4 + $0x194] sm:$0xf]
        %v622 = vld [vmem:[#allocation4 + $0x198] sm:$0xf]
        %v623 = vld [vmem:[#allocation4 + $0x19c] sm:$0xf]
        %v624 = vld [vmem:[#allocation4 + $0x1a0] sm:$0xf]
        %v625 = vld [vmem:[#allocation4 + $0x1a4] sm:$0xf]
        %v626 = vld [vmem:[#allocation4 + $0x1a8] sm:$0xf]
        %v627 = vld [vmem:[#allocation4 + $0x1ac] sm:$0xf]
        %v628 = vld [vmem:[#allocation4 + $0x1b0] sm:$0xf]
        %v629 = vld [vmem:[#allocation4 + $0x1b4] sm:$0xf]
        %v630 = vld [vmem:[#allocation4 + $0x1b8] sm:$0xf]
        %v631 = vld [vmem:[#allocation4 + $0x1bc] sm:$0xf]
        %v632 = vld [vmem:[#allocation4 + $0x1c0] sm:$0xf]
        %v633 = vld [vmem:[#allocation4 + $0x1c4] sm:$0xf]
        %v634 = vld [vmem:[#allocation4 + $0x1c8] sm:$0xf]
        %v635 = vld [vmem:[#allocation4 + $0x1cc] sm:$0xf]
        %v636 = vld [vmem:[#allocation4 + $0x1d0] sm:$0xf]
        %v637 = vld [vmem:[#allocation4 + $0x1d4] sm:$0xf]
        %v638 = vld [vmem:[#allocation4 + $0x1d8] sm:$0xf]
        %v639 = vld [vmem:[#allocation4 + $0x1dc] sm:$0xf]
        %v640 = vld [vmem:[#allocation4 + $0x1e0] sm:$0xf]
        %v641 = vld [vmem:[#allocation4 + $0x1e4] sm:$0xf]
        %v642 = vld [vmem:[#allocation4 + $0x1e8] sm:$0xf]
        %v643 = vld [vmem:[#allocation4 + $0x1ec] sm:$0xf]
        %v644 = vld [vmem:[#allocation4 + $0x1f0] sm:$0xf]
        %v645 = vld [vmem:[#allocation4 + $0x1f4] sm:$0xf]
        %v646 = vld [vmem:[#allocation4 + $0x1f8] sm:$0xf]
        %v647 = vld [vmem:[#allocation4 + $0x1fc] sm:$0xf]
        %v648 = vld [vmem:[#allocation7] sm:$0x1]
        %v650 = vlaneseq
        %v651 = vshrl.u32 %v650, 7
        %v652 = vsub.s32 0, %v651
        %v653 = vrot.slane %v648, %v652
        %v911 = vunpack.c.l.b16 %v264
        %v912 = vunpack.c.h.b16 %v264
        %v913 = vunpack.c.l.b16 %v265
        %v914 = vunpack.c.h.b16 %v265
        %v915 = vunpack.c.l.b16 %v266
        %v916 = vunpack.c.h.b16 %v266
        %v917 = vunpack.c.l.b16 %v267
        %v918 = vunpack.c.h.b16 %v267
        %v919 = vunpack.c.l.b16 %v268
        %v920 = vunpack.c.h.b16 %v268
        %v921 = vunpack.c.l.b16 %v269
        %v922 = vunpack.c.h.b16 %v269
        %v923 = vunpack.c.l.b16 %v270
        %v924 = vunpack.c.h.b16 %v270
        %v925 = vunpack.c.l.b16 %v271
        %v926 = vunpack.c.h.b16 %v271
        %v927 = vunpack.c.l.b16 %v272
        %v928 = vunpack.c.h.b16 %v272
        %v929 = vunpack.c.l.b16 %v273
        %v930 = vunpack.c.h.b16 %v273
        %v931 = vunpack.c.l.b16 %v274
        %v932 = vunpack.c.h.b16 %v274
        %v933 = vunpack.c.l.b16 %v275
        %v934 = vunpack.c.h.b16 %v275
        %v935 = vunpack.c.l.b16 %v276
        %v936 = vunpack.c.h.b16 %v276
        %v937 = vunpack.c.l.b16 %v277
        %v938 = vunpack.c.h.b16 %v277
        %v939 = vunpack.c.l.b16 %v278
        %v940 = vunpack.c.h.b16 %v278
        %v941 = vunpack.c.l.b16 %v279
        %v942 = vunpack.c.h.b16 %v279
        %v943 = vunpack.c.l.b16 %v280
        %v944 = vunpack.c.h.b16 %v280
        %v945 = vunpack.c.l.b16 %v281
        %v946 = vunpack.c.h.b16 %v281
        %v947 = vunpack.c.l.b16 %v282
        %v948 = vunpack.c.h.b16 %v282
        %v949 = vunpack.c.l.b16 %v283
        %v950 = vunpack.c.h.b16 %v283
        %v951 = vunpack.c.l.b16 %v284
        %v952 = vunpack.c.h.b16 %v284
        %v953 = vunpack.c.l.b16 %v285
        %v954 = vunpack.c.h.b16 %v285
        %v955 = vunpack.c.l.b16 %v286
        %v956 = vunpack.c.h.b16 %v286
        %v957 = vunpack.c.l.b16 %v287
        %v958 = vunpack.c.h.b16 %v287
        %v959 = vunpack.c.l.b16 %v288
        %v960 = vunpack.c.h.b16 %v288
        %v961 = vunpack.c.l.b16 %v289
        %v962 = vunpack.c.h.b16 %v289
        %v963 = vunpack.c.l.b16 %v290
        %v964 = vunpack.c.h.b16 %v290
        %v965 = vunpack.c.l.b16 %v291
        %v966 = vunpack.c.h.b16 %v291
        %v967 = vunpack.c.l.b16 %v292
        %v968 = vunpack.c.h.b16 %v292
        %v969 = vunpack.c.l.b16 %v293
        %v970 = vunpack.c.h.b16 %v293
        %v971 = vunpack.c.l.b16 %v294
        %v972 = vunpack.c.h.b16 %v294
        %v973 = vunpack.c.l.b16 %v295
        %v974 = vunpack.c.h.b16 %v295
        %v975 = vunpack.c.l.b16 %v296
        %v976 = vunpack.c.h.b16 %v296
        %v977 = vunpack.c.l.b16 %v297
        %v978 = vunpack.c.h.b16 %v297
        %v979 = vunpack.c.l.b16 %v298
        %v980 = vunpack.c.h.b16 %v298
        %v981 = vunpack.c.l.b16 %v299
        %v982 = vunpack.c.h.b16 %v299
        %v983 = vunpack.c.l.b16 %v300
        %v984 = vunpack.c.h.b16 %v300
        %v985 = vunpack.c.l.b16 %v301
        %v986 = vunpack.c.h.b16 %v301
        %v987 = vunpack.c.l.b16 %v302
        %v988 = vunpack.c.h.b16 %v302
        %v989 = vunpack.c.l.b16 %v303
        %v990 = vunpack.c.h.b16 %v303
        %v991 = vunpack.c.l.b16 %v304
        %v992 = vunpack.c.h.b16 %v304
        %v993 = vunpack.c.l.b16 %v305
        %v994 = vunpack.c.h.b16 %v305
        %v995 = vunpack.c.l.b16 %v306
        %v996 = vunpack.c.h.b16 %v306
        %v997 = vunpack.c.l.b16 %v307
        %v998 = vunpack.c.h.b16 %v307
        %v999 = vunpack.c.l.b16 %v308
        %v1000 = vunpack.c.h.b16 %v308
        %v1001 = vunpack.c.l.b16 %v309
        %v1002 = vunpack.c.h.b16 %v309
        %v1003 = vunpack.c.l.b16 %v310
        %v1004 = vunpack.c.h.b16 %v310
        %v1005 = vunpack.c.l.b16 %v311
        %v1006 = vunpack.c.h.b16 %v311
        %v1007 = vunpack.c.l.b16 %v312
        %v1008 = vunpack.c.h.b16 %v312
        %v1009 = vunpack.c.l.b16 %v313
        %v1010 = vunpack.c.h.b16 %v313
        %v1011 = vunpack.c.l.b16 %v314
        %v1012 = vunpack.c.h.b16 %v314
        %v1013 = vunpack.c.l.b16 %v315
        %v1014 = vunpack.c.h.b16 %v315
        %v1015 = vunpack.c.l.b16 %v316
        %v1016 = vunpack.c.h.b16 %v316
        %v1017 = vunpack.c.l.b16 %v317
        %v1018 = vunpack.c.h.b16 %v317
        %v1019 = vunpack.c.l.b16 %v318
        %v1020 = vunpack.c.h.b16 %v318
        %v1021 = vunpack.c.l.b16 %v319
        %v1022 = vunpack.c.h.b16 %v319
        %v1023 = vunpack.c.l.b16 %v320
        %v1024 = vunpack.c.h.b16 %v320
        %v1025 = vunpack.c.l.b16 %v321
        %v1026 = vunpack.c.h.b16 %v321
        %v1027 = vunpack.c.l.b16 %v322
        %v1028 = vunpack.c.h.b16 %v322
        %v1029 = vunpack.c.l.b16 %v323
        %v1030 = vunpack.c.h.b16 %v323
        %v1031 = vunpack.c.l.b16 %v324
        %v1032 = vunpack.c.h.b16 %v324
        %v1033 = vunpack.c.l.b16 %v325
        %v1034 = vunpack.c.h.b16 %v325
        %v1035 = vunpack.c.l.b16 %v326
        %v1036 = vunpack.c.h.b16 %v326
        %v1037 = vunpack.c.l.b16 %v327
        %v1038 = vunpack.c.h.b16 %v327
        %v1039 = vunpack.c.l.b16 %v328
        %v1040 = vunpack.c.h.b16 %v328
        %v1041 = vunpack.c.l.b16 %v329
        %v1042 = vunpack.c.h.b16 %v329
        %v1043 = vunpack.c.l.b16 %v330
        %v1044 = vunpack.c.h.b16 %v330
        %v1045 = vunpack.c.l.b16 %v331
        %v1046 = vunpack.c.h.b16 %v331
        %v1047 = vunpack.c.l.b16 %v332
        %v1048 = vunpack.c.h.b16 %v332
        %v1049 = vunpack.c.l.b16 %v333
        %v1050 = vunpack.c.h.b16 %v333
        %v1051 = vunpack.c.l.b16 %v334
        %v1052 = vunpack.c.h.b16 %v334
        %v1053 = vunpack.c.l.b16 %v335
        %v1054 = vunpack.c.h.b16 %v335
        %v1055 = vunpack.c.l.b16 %v336
        %v1056 = vunpack.c.h.b16 %v336
        %v1057 = vunpack.c.l.b16 %v337
        %v1058 = vunpack.c.h.b16 %v337
        %v1059 = vunpack.c.l.b16 %v338
        %v1060 = vunpack.c.h.b16 %v338
        %v1061 = vunpack.c.l.b16 %v339
        %v1062 = vunpack.c.h.b16 %v339
        %v1063 = vunpack.c.l.b16 %v340
        %v1064 = vunpack.c.h.b16 %v340
        %v1065 = vunpack.c.l.b16 %v341
        %v1066 = vunpack.c.h.b16 %v341
        %v1067 = vunpack.c.l.b16 %v342
        %v1068 = vunpack.c.h.b16 %v342
        %v1069 = vunpack.c.l.b16 %v343
        %v1070 = vunpack.c.h.b16 %v343
        %v1071 = vunpack.c.l.b16 %v344
        %v1072 = vunpack.c.h.b16 %v344
        %v1073 = vunpack.c.l.b16 %v345
        %v1074 = vunpack.c.h.b16 %v345
        %v1075 = vunpack.c.l.b16 %v346
        %v1076 = vunpack.c.h.b16 %v346
        %v1077 = vunpack.c.l.b16 %v347
        %v1078 = vunpack.c.h.b16 %v347
        %v1079 = vunpack.c.l.b16 %v348
        %v1080 = vunpack.c.h.b16 %v348
        %v1081 = vunpack.c.l.b16 %v349
        %v1082 = vunpack.c.h.b16 %v349
        %v1083 = vunpack.c.l.b16 %v350
        %v1084 = vunpack.c.h.b16 %v350
        %v1085 = vunpack.c.l.b16 %v351
        %v1086 = vunpack.c.h.b16 %v351
        %v1087 = vunpack.c.l.b16 %v352
        %v1088 = vunpack.c.h.b16 %v352
        %v1089 = vunpack.c.l.b16 %v353
        %v1090 = vunpack.c.h.b16 %v353
        %v1091 = vunpack.c.l.b16 %v354
        %v1092 = vunpack.c.h.b16 %v354
        %v1093 = vunpack.c.l.b16 %v355
        %v1094 = vunpack.c.h.b16 %v355
        %v1095 = vunpack.c.l.b16 %v356
        %v1096 = vunpack.c.h.b16 %v356
        %v1097 = vunpack.c.l.b16 %v357
        %v1098 = vunpack.c.h.b16 %v357
        %v1099 = vunpack.c.l.b16 %v358
        %v1100 = vunpack.c.h.b16 %v358
        %v1101 = vunpack.c.l.b16 %v359
        %v1102 = vunpack.c.h.b16 %v359
        %v1103 = vunpack.c.l.b16 %v360
        %v1104 = vunpack.c.h.b16 %v360
        %v1105 = vunpack.c.l.b16 %v361
        %v1106 = vunpack.c.h.b16 %v361
        %v1107 = vunpack.c.l.b16 %v362
        %v1108 = vunpack.c.h.b16 %v362
        %v1109 = vunpack.c.l.b16 %v363
        %v1110 = vunpack.c.h.b16 %v363
        %v1111 = vunpack.c.l.b16 %v364
        %v1112 = vunpack.c.h.b16 %v364
        %v1113 = vunpack.c.l.b16 %v365
        %v1114 = vunpack.c.h.b16 %v365
        %v1115 = vunpack.c.l.b16 %v366
        %v1116 = vunpack.c.h.b16 %v366
        %v1117 = vunpack.c.l.b16 %v367
        %v1118 = vunpack.c.h.b16 %v367
        %v1119 = vunpack.c.l.b16 %v368
        %v1120 = vunpack.c.h.b16 %v368
        %v1121 = vunpack.c.l.b16 %v369
        %v1122 = vunpack.c.h.b16 %v369
        %v1123 = vunpack.c.l.b16 %v370
        %v1124 = vunpack.c.h.b16 %v370
        %v1125 = vunpack.c.l.b16 %v371
        %v1126 = vunpack.c.h.b16 %v371
        %v1127 = vunpack.c.l.b16 %v372
        %v1128 = vunpack.c.h.b16 %v372
        %v1129 = vunpack.c.l.b16 %v373
        %v1130 = vunpack.c.h.b16 %v373
        %v1131 = vunpack.c.l.b16 %v374
        %v1132 = vunpack.c.h.b16 %v374
        %v1133 = vunpack.c.l.b16 %v375
        %v1134 = vunpack.c.h.b16 %v375
        %v1135 = vunpack.c.l.b16 %v376
        %v1136 = vunpack.c.h.b16 %v376
        %v1137 = vunpack.c.l.b16 %v377
        %v1138 = vunpack.c.h.b16 %v377
        %v1139 = vunpack.c.l.b16 %v378
        %v1140 = vunpack.c.h.b16 %v378
        %v1141 = vunpack.c.l.b16 %v379
        %v1142 = vunpack.c.h.b16 %v379
        %v1143 = vunpack.c.l.b16 %v380
        %v1144 = vunpack.c.h.b16 %v380
        %v1145 = vunpack.c.l.b16 %v381
        %v1146 = vunpack.c.h.b16 %v381
        %v1147 = vunpack.c.l.b16 %v382
        %v1148 = vunpack.c.h.b16 %v382
        %v1149 = vunpack.c.l.b16 %v383
        %v1150 = vunpack.c.h.b16 %v383
        %v1151 = vunpack.c.l.b16 %v384
        %v1152 = vunpack.c.h.b16 %v384
        %v1153 = vunpack.c.l.b16 %v385
        %v1154 = vunpack.c.h.b16 %v385
        %v1155 = vunpack.c.l.b16 %v386
        %v1156 = vunpack.c.h.b16 %v386
        %v1157 = vunpack.c.l.b16 %v387
        %v1158 = vunpack.c.h.b16 %v387
        %v1159 = vunpack.c.l.b16 %v388
        %v1160 = vunpack.c.h.b16 %v388
        %v1161 = vunpack.c.l.b16 %v389
        %v1162 = vunpack.c.h.b16 %v389
        %v1163 = vunpack.c.l.b16 %v390
        %v1164 = vunpack.c.h.b16 %v390
        %v1165 = vunpack.c.l.b16 %v391
        %v1166 = vunpack.c.h.b16 %v391
        %v1167 = vunpack.c.l.b16 %v392
        %v1168 = vunpack.c.h.b16 %v392
        %v1169 = vunpack.c.l.b16 %v393
        %v1170 = vunpack.c.h.b16 %v393
        %v1171 = vunpack.c.l.b16 %v394
        %v1172 = vunpack.c.h.b16 %v394
        %v1173 = vunpack.c.l.b16 %v395
        %v1174 = vunpack.c.h.b16 %v395
        %v1175 = vunpack.c.l.b16 %v396
        %v1176 = vunpack.c.h.b16 %v396
        %v1177 = vunpack.c.l.b16 %v397
        %v1178 = vunpack.c.h.b16 %v397
        %v1179 = vunpack.c.l.b16 %v398
        %v1180 = vunpack.c.h.b16 %v398
        %v1181 = vunpack.c.l.b16 %v399
        %v1182 = vunpack.c.h.b16 %v399
        %v1183 = vunpack.c.l.b16 %v400
        %v1184 = vunpack.c.h.b16 %v400
        %v1185 = vunpack.c.l.b16 %v401
        %v1186 = vunpack.c.h.b16 %v401
        %v1187 = vunpack.c.l.b16 %v402
        %v1188 = vunpack.c.h.b16 %v402
        %v1189 = vunpack.c.l.b16 %v403
        %v1190 = vunpack.c.h.b16 %v403
        %v1191 = vunpack.c.l.b16 %v404
        %v1192 = vunpack.c.h.b16 %v404
        %v1193 = vunpack.c.l.b16 %v405
        %v1194 = vunpack.c.h.b16 %v405
        %v1195 = vunpack.c.l.b16 %v406
        %v1196 = vunpack.c.h.b16 %v406
        %v1197 = vunpack.c.l.b16 %v407
        %v1198 = vunpack.c.h.b16 %v407
        %v1199 = vunpack.c.l.b16 %v408
        %v1200 = vunpack.c.h.b16 %v408
        %v1201 = vunpack.c.l.b16 %v409
        %v1202 = vunpack.c.h.b16 %v409
        %v1203 = vunpack.c.l.b16 %v410
        %v1204 = vunpack.c.h.b16 %v410
        %v1205 = vunpack.c.l.b16 %v411
        %v1206 = vunpack.c.h.b16 %v411
        %v1207 = vunpack.c.l.b16 %v412
        %v1208 = vunpack.c.h.b16 %v412
        %v1209 = vunpack.c.l.b16 %v413
        %v1210 = vunpack.c.h.b16 %v413
        %v1211 = vunpack.c.l.b16 %v414
        %v1212 = vunpack.c.h.b16 %v414
        %v1213 = vunpack.c.l.b16 %v415
        %v1214 = vunpack.c.h.b16 %v415
        %v1215 = vunpack.c.l.b16 %v416
        %v1216 = vunpack.c.h.b16 %v416
        %v1217 = vunpack.c.l.b16 %v417
        %v1218 = vunpack.c.h.b16 %v417
        %v1219 = vunpack.c.l.b16 %v418
        %v1220 = vunpack.c.h.b16 %v418
        %v1221 = vunpack.c.l.b16 %v419
        %v1222 = vunpack.c.h.b16 %v419
        %v1223 = vunpack.c.l.b16 %v420
        %v1224 = vunpack.c.h.b16 %v420
        %v1225 = vunpack.c.l.b16 %v421
        %v1226 = vunpack.c.h.b16 %v421
        %v1227 = vunpack.c.l.b16 %v422
        %v1228 = vunpack.c.h.b16 %v422
        %v1229 = vunpack.c.l.b16 %v423
        %v1230 = vunpack.c.h.b16 %v423
        %v1231 = vunpack.c.l.b16 %v424
        %v1232 = vunpack.c.h.b16 %v424
        %v1233 = vunpack.c.l.b16 %v425
        %v1234 = vunpack.c.h.b16 %v425
        %v1235 = vunpack.c.l.b16 %v426
        %v1236 = vunpack.c.h.b16 %v426
        %v1237 = vunpack.c.l.b16 %v427
        %v1238 = vunpack.c.h.b16 %v427
        %v1239 = vunpack.c.l.b16 %v428
        %v1240 = vunpack.c.h.b16 %v428
        %v1241 = vunpack.c.l.b16 %v429
        %v1242 = vunpack.c.h.b16 %v429
        %v1243 = vunpack.c.l.b16 %v430
        %v1244 = vunpack.c.h.b16 %v430
        %v1245 = vunpack.c.l.b16 %v431
        %v1246 = vunpack.c.h.b16 %v431
        %v1247 = vunpack.c.l.b16 %v432
        %v1248 = vunpack.c.h.b16 %v432
        %v1249 = vunpack.c.l.b16 %v433
        %v1250 = vunpack.c.h.b16 %v433
        %v1251 = vunpack.c.l.b16 %v434
        %v1252 = vunpack.c.h.b16 %v434
        %v1253 = vunpack.c.l.b16 %v435
        %v1254 = vunpack.c.h.b16 %v435
        %v1255 = vunpack.c.l.b16 %v436
        %v1256 = vunpack.c.h.b16 %v436
        %v1257 = vunpack.c.l.b16 %v437
        %v1258 = vunpack.c.h.b16 %v437
        %v1259 = vunpack.c.l.b16 %v438
        %v1260 = vunpack.c.h.b16 %v438
        %v1261 = vunpack.c.l.b16 %v439
        %v1262 = vunpack.c.h.b16 %v439
        %v1263 = vunpack.c.l.b16 %v440
        %v1264 = vunpack.c.h.b16 %v440
        %v1265 = vunpack.c.l.b16 %v441
        %v1266 = vunpack.c.h.b16 %v441
        %v1267 = vunpack.c.l.b16 %v442
        %v1268 = vunpack.c.h.b16 %v442
        %v1269 = vunpack.c.l.b16 %v443
        %v1270 = vunpack.c.h.b16 %v443
        %v1271 = vunpack.c.l.b16 %v444
        %v1272 = vunpack.c.h.b16 %v444
        %v1273 = vunpack.c.l.b16 %v445
        %v1274 = vunpack.c.h.b16 %v445
        %v1275 = vunpack.c.l.b16 %v446
        %v1276 = vunpack.c.h.b16 %v446
        %v1277 = vunpack.c.l.b16 %v447
        %v1278 = vunpack.c.h.b16 %v447
        %v1279 = vunpack.c.l.b16 %v448
        %v1280 = vunpack.c.h.b16 %v448
        %v1281 = vunpack.c.l.b16 %v449
        %v1282 = vunpack.c.h.b16 %v449
        %v1283 = vunpack.c.l.b16 %v450
        %v1284 = vunpack.c.h.b16 %v450
        %v1285 = vunpack.c.l.b16 %v451
        %v1286 = vunpack.c.h.b16 %v451
        %v1287 = vunpack.c.l.b16 %v452
        %v1288 = vunpack.c.h.b16 %v452
        %v1289 = vunpack.c.l.b16 %v453
        %v1290 = vunpack.c.h.b16 %v453
        %v1291 = vunpack.c.l.b16 %v454
        %v1292 = vunpack.c.h.b16 %v454
        %v1293 = vunpack.c.l.b16 %v455
        %v1294 = vunpack.c.h.b16 %v455
        %v1295 = vunpack.c.l.b16 %v456
        %v1296 = vunpack.c.h.b16 %v456
        %v1297 = vunpack.c.l.b16 %v457
        %v1298 = vunpack.c.h.b16 %v457
        %v1299 = vunpack.c.l.b16 %v458
        %v1300 = vunpack.c.h.b16 %v458
        %v1301 = vunpack.c.l.b16 %v459
        %v1302 = vunpack.c.h.b16 %v459
        %v1303 = vunpack.c.l.b16 %v460
        %v1304 = vunpack.c.h.b16 %v460
        %v1305 = vunpack.c.l.b16 %v461
        %v1306 = vunpack.c.h.b16 %v461
        %v1307 = vunpack.c.l.b16 %v462
        %v1308 = vunpack.c.h.b16 %v462
        %v1309 = vunpack.c.l.b16 %v463
        %v1310 = vunpack.c.h.b16 %v463
        %v1311 = vunpack.c.l.b16 %v464
        %v1312 = vunpack.c.h.b16 %v464
        %v1313 = vunpack.c.l.b16 %v465
        %v1314 = vunpack.c.h.b16 %v465
        %v1315 = vunpack.c.l.b16 %v466
        %v1316 = vunpack.c.h.b16 %v466
        %v1317 = vunpack.c.l.b16 %v467
        %v1318 = vunpack.c.h.b16 %v467
        %v1319 = vunpack.c.l.b16 %v468
        %v1320 = vunpack.c.h.b16 %v468
        %v1321 = vunpack.c.l.b16 %v469
        %v1322 = vunpack.c.h.b16 %v469
        %v1323 = vunpack.c.l.b16 %v470
        %v1324 = vunpack.c.h.b16 %v470
        %v1325 = vunpack.c.l.b16 %v471
        %v1326 = vunpack.c.h.b16 %v471
        %v1327 = vunpack.c.l.b16 %v472
        %v1328 = vunpack.c.h.b16 %v472
        %v1329 = vunpack.c.l.b16 %v473
        %v1330 = vunpack.c.h.b16 %v473
        %v1331 = vunpack.c.l.b16 %v474
        %v1332 = vunpack.c.h.b16 %v474
        %v1333 = vunpack.c.l.b16 %v475
        %v1334 = vunpack.c.h.b16 %v475
        %v1335 = vunpack.c.l.b16 %v476
        %v1336 = vunpack.c.h.b16 %v476
        %v1337 = vunpack.c.l.b16 %v477
        %v1338 = vunpack.c.h.b16 %v477
        %v1339 = vunpack.c.l.b16 %v478
        %v1340 = vunpack.c.h.b16 %v478
        %v1341 = vunpack.c.l.b16 %v479
        %v1342 = vunpack.c.h.b16 %v479
        %v1343 = vunpack.c.l.b16 %v480
        %v1344 = vunpack.c.h.b16 %v480
        %v1345 = vunpack.c.l.b16 %v481
        %v1346 = vunpack.c.h.b16 %v481
        %v1347 = vunpack.c.l.b16 %v482
        %v1348 = vunpack.c.h.b16 %v482
        %v1349 = vunpack.c.l.b16 %v483
        %v1350 = vunpack.c.h.b16 %v483
        %v1351 = vunpack.c.l.b16 %v484
        %v1352 = vunpack.c.h.b16 %v484
        %v1353 = vunpack.c.l.b16 %v485
        %v1354 = vunpack.c.h.b16 %v485
        %v1355 = vunpack.c.l.b16 %v486
        %v1356 = vunpack.c.h.b16 %v486
        %v1357 = vunpack.c.l.b16 %v487
        %v1358 = vunpack.c.h.b16 %v487
        %v1359 = vunpack.c.l.b16 %v488
        %v1360 = vunpack.c.h.b16 %v488
        %v1361 = vunpack.c.l.b16 %v489
        %v1362 = vunpack.c.h.b16 %v489
        %v1363 = vunpack.c.l.b16 %v490
        %v1364 = vunpack.c.h.b16 %v490
        %v1365 = vunpack.c.l.b16 %v491
        %v1366 = vunpack.c.h.b16 %v491
        %v1367 = vunpack.c.l.b16 %v492
        %v1368 = vunpack.c.h.b16 %v492
        %v1369 = vunpack.c.l.b16 %v493
        %v1370 = vunpack.c.h.b16 %v493
        %v1371 = vunpack.c.l.b16 %v494
        %v1372 = vunpack.c.h.b16 %v494
        %v1373 = vunpack.c.l.b16 %v495
        %v1374 = vunpack.c.h.b16 %v495
        %v1375 = vunpack.c.l.b16 %v496
        %v1376 = vunpack.c.h.b16 %v496
        %v1377 = vunpack.c.l.b16 %v497
        %v1378 = vunpack.c.h.b16 %v497
        %v1379 = vunpack.c.l.b16 %v498
        %v1380 = vunpack.c.h.b16 %v498
        %v1381 = vunpack.c.l.b16 %v499
        %v1382 = vunpack.c.h.b16 %v499
        %v1383 = vunpack.c.l.b16 %v500
        %v1384 = vunpack.c.h.b16 %v500
        %v1385 = vunpack.c.l.b16 %v501
        %v1386 = vunpack.c.h.b16 %v501
        %v1387 = vunpack.c.l.b16 %v502
        %v1388 = vunpack.c.h.b16 %v502
        %v1389 = vunpack.c.l.b16 %v503
        %v1390 = vunpack.c.h.b16 %v503
        %v1391 = vunpack.c.l.b16 %v504
        %v1392 = vunpack.c.h.b16 %v504
        %v1393 = vunpack.c.l.b16 %v505
        %v1394 = vunpack.c.h.b16 %v505
        %v1395 = vunpack.c.l.b16 %v506
        %v1396 = vunpack.c.h.b16 %v506
        %v1397 = vunpack.c.l.b16 %v507
        %v1398 = vunpack.c.h.b16 %v507
        %v1399 = vunpack.c.l.b16 %v508
        %v1400 = vunpack.c.h.b16 %v508
        %v1401 = vunpack.c.l.b16 %v509
        %v1402 = vunpack.c.h.b16 %v509
        %v1403 = vunpack.c.l.b16 %v510
        %v1404 = vunpack.c.h.b16 %v510
        %v1405 = vunpack.c.l.b16 %v511
        %v1406 = vunpack.c.h.b16 %v511
        %v1407 = vunpack.c.l.b16 %v512
        %v1408 = vunpack.c.h.b16 %v512
        %v1409 = vunpack.c.l.b16 %v513
        %v1410 = vunpack.c.h.b16 %v513
        %v1411 = vunpack.c.l.b16 %v514
        %v1412 = vunpack.c.h.b16 %v514
        %v1413 = vunpack.c.l.b16 %v515
        %v1414 = vunpack.c.h.b16 %v515
        %v1415 = vunpack.c.l.b16 %v516
        %v1416 = vunpack.c.h.b16 %v516
        %v1417 = vunpack.c.l.b16 %v517
        %v1418 = vunpack.c.h.b16 %v517
        %v1419 = vunpack.c.l.b16 %v518
        %v1420 = vunpack.c.h.b16 %v518
        %v1421 = vunpack.c.l.b16 %v519
        %v1422 = vunpack.c.h.b16 %v519
        %v1423 = vpack.c.b16 %v919, %v911
        %v1424 = vpack.c.b16 %v920, %v912
        %v1425 = vpack.c.b16 %v921, %v913
        %v1426 = vpack.c.b16 %v922, %v914
        %v1427 = vpack.c.b16 %v923, %v915
        %v1428 = vpack.c.b16 %v924, %v916
        %v1429 = vpack.c.b16 %v925, %v917
        %v1430 = vpack.c.b16 %v926, %v918
        %v1431 = vpack.c.b16 %v935, %v927
        %v1432 = vpack.c.b16 %v936, %v928
        %v1433 = vpack.c.b16 %v937, %v929
        %v1434 = vpack.c.b16 %v938, %v930
        %v1435 = vpack.c.b16 %v939, %v931
        %v1436 = vpack.c.b16 %v940, %v932
        %v1437 = vpack.c.b16 %v941, %v933
        %v1438 = vpack.c.b16 %v942, %v934
        %v1439 = vpack.c.b16 %v951, %v943
        %v1440 = vpack.c.b16 %v952, %v944
        %v1441 = vpack.c.b16 %v953, %v945
        %v1442 = vpack.c.b16 %v954, %v946
        %v1443 = vpack.c.b16 %v955, %v947
        %v1444 = vpack.c.b16 %v956, %v948
        %v1445 = vpack.c.b16 %v957, %v949
        %v1446 = vpack.c.b16 %v958, %v950
        %v1447 = vpack.c.b16 %v967, %v959
        %v1448 = vpack.c.b16 %v968, %v960
        %v1449 = vpack.c.b16 %v969, %v961
        %v1450 = vpack.c.b16 %v970, %v962
        %v1451 = vpack.c.b16 %v971, %v963
        %v1452 = vpack.c.b16 %v972, %v964
        %v1453 = vpack.c.b16 %v973, %v965
        %v1454 = vpack.c.b16 %v974, %v966
        %v1455 = vpack.c.b16 %v983, %v975
        %v1456 = vpack.c.b16 %v984, %v976
        %v1457 = vpack.c.b16 %v985, %v977
        %v1458 = vpack.c.b16 %v986, %v978
        %v1459 = vpack.c.b16 %v987, %v979
        %v1460 = vpack.c.b16 %v988, %v980
        %v1461 = vpack.c.b16 %v989, %v981
        %v1462 = vpack.c.b16 %v990, %v982
        %v1463 = vpack.c.b16 %v999, %v991
        %v1464 = vpack.c.b16 %v1000, %v992
        %v1465 = vpack.c.b16 %v1001, %v993
        %v1466 = vpack.c.b16 %v1002, %v994
        %v1467 = vpack.c.b16 %v1003, %v995
        %v1468 = vpack.c.b16 %v1004, %v996
        %v1469 = vpack.c.b16 %v1005, %v997
        %v1470 = vpack.c.b16 %v1006, %v998
        %v1471 = vpack.c.b16 %v1015, %v1007
        %v1472 = vpack.c.b16 %v1016, %v1008
        %v1473 = vpack.c.b16 %v1017, %v1009
        %v1474 = vpack.c.b16 %v1018, %v1010
        %v1475 = vpack.c.b16 %v1019, %v1011
        %v1476 = vpack.c.b16 %v1020, %v1012
        %v1477 = vpack.c.b16 %v1021, %v1013
        %v1478 = vpack.c.b16 %v1022, %v1014
        %v1479 = vpack.c.b16 %v1031, %v1023
        %v1480 = vpack.c.b16 %v1032, %v1024
        %v1481 = vpack.c.b16 %v1033, %v1025
        %v1482 = vpack.c.b16 %v1034, %v1026
        %v1483 = vpack.c.b16 %v1035, %v1027
        %v1484 = vpack.c.b16 %v1036, %v1028
        %v1485 = vpack.c.b16 %v1037, %v1029
        %v1486 = vpack.c.b16 %v1038, %v1030
        %v1487 = vpack.c.b16 %v1047, %v1039
        %v1488 = vpack.c.b16 %v1048, %v1040
        %v1489 = vpack.c.b16 %v1049, %v1041
        %v1490 = vpack.c.b16 %v1050, %v1042
        %v1491 = vpack.c.b16 %v1051, %v1043
        %v1492 = vpack.c.b16 %v1052, %v1044
        %v1493 = vpack.c.b16 %v1053, %v1045
        %v1494 = vpack.c.b16 %v1054, %v1046
        %v1495 = vpack.c.b16 %v1063, %v1055
        %v1496 = vpack.c.b16 %v1064, %v1056
        %v1497 = vpack.c.b16 %v1065, %v1057
        %v1498 = vpack.c.b16 %v1066, %v1058
        %v1499 = vpack.c.b16 %v1067, %v1059
        %v1500 = vpack.c.b16 %v1068, %v1060
        %v1501 = vpack.c.b16 %v1069, %v1061
        %v1502 = vpack.c.b16 %v1070, %v1062
        %v1503 = vpack.c.b16 %v1079, %v1071
        %v1504 = vpack.c.b16 %v1080, %v1072
        %v1505 = vpack.c.b16 %v1081, %v1073
        %v1506 = vpack.c.b16 %v1082, %v1074
        %v1507 = vpack.c.b16 %v1083, %v1075
        %v1508 = vpack.c.b16 %v1084, %v1076
        %v1509 = vpack.c.b16 %v1085, %v1077
        %v1510 = vpack.c.b16 %v1086, %v1078
        %v1511 = vpack.c.b16 %v1095, %v1087
        %v1512 = vpack.c.b16 %v1096, %v1088
        %v1513 = vpack.c.b16 %v1097, %v1089
        %v1514 = vpack.c.b16 %v1098, %v1090
        %v1515 = vpack.c.b16 %v1099, %v1091
        %v1516 = vpack.c.b16 %v1100, %v1092
        %v1517 = vpack.c.b16 %v1101, %v1093
        %v1518 = vpack.c.b16 %v1102, %v1094
        %v1519 = vpack.c.b16 %v1111, %v1103
        %v1520 = vpack.c.b16 %v1112, %v1104
        %v1521 = vpack.c.b16 %v1113, %v1105
        %v1522 = vpack.c.b16 %v1114, %v1106
        %v1523 = vpack.c.b16 %v1115, %v1107
        %v1524 = vpack.c.b16 %v1116, %v1108
        %v1525 = vpack.c.b16 %v1117, %v1109
        %v1526 = vpack.c.b16 %v1118, %v1110
        %v1527 = vpack.c.b16 %v1127, %v1119
        %v1528 = vpack.c.b16 %v1128, %v1120
        %v1529 = vpack.c.b16 %v1129, %v1121
        %v1530 = vpack.c.b16 %v1130, %v1122
        %v1531 = vpack.c.b16 %v1131, %v1123
        %v1532 = vpack.c.b16 %v1132, %v1124
        %v1533 = vpack.c.b16 %v1133, %v1125
        %v1534 = vpack.c.b16 %v1134, %v1126
        %v1535 = vpack.c.b16 %v1143, %v1135
        %v1536 = vpack.c.b16 %v1144, %v1136
        %v1537 = vpack.c.b16 %v1145, %v1137
        %v1538 = vpack.c.b16 %v1146, %v1138
        %v1539 = vpack.c.b16 %v1147, %v1139
        %v1540 = vpack.c.b16 %v1148, %v1140
        %v1541 = vpack.c.b16 %v1149, %v1141
        %v1542 = vpack.c.b16 %v1150, %v1142
        %v1543 = vpack.c.b16 %v1159, %v1151
        %v1544 = vpack.c.b16 %v1160, %v1152
        %v1545 = vpack.c.b16 %v1161, %v1153
        %v1546 = vpack.c.b16 %v1162, %v1154
        %v1547 = vpack.c.b16 %v1163, %v1155
        %v1548 = vpack.c.b16 %v1164, %v1156
        %v1549 = vpack.c.b16 %v1165, %v1157
        %v1550 = vpack.c.b16 %v1166, %v1158
        %v1551 = vpack.c.b16 %v1175, %v1167
        %v1552 = vpack.c.b16 %v1176, %v1168
        %v1553 = vpack.c.b16 %v1177, %v1169
        %v1554 = vpack.c.b16 %v1178, %v1170
        %v1555 = vpack.c.b16 %v1179, %v1171
        %v1556 = vpack.c.b16 %v1180, %v1172
        %v1557 = vpack.c.b16 %v1181, %v1173
        %v1558 = vpack.c.b16 %v1182, %v1174
        %v1559 = vpack.c.b16 %v1191, %v1183
        %v1560 = vpack.c.b16 %v1192, %v1184
        %v1561 = vpack.c.b16 %v1193, %v1185
        %v1562 = vpack.c.b16 %v1194, %v1186
        %v1563 = vpack.c.b16 %v1195, %v1187
        %v1564 = vpack.c.b16 %v1196, %v1188
        %v1565 = vpack.c.b16 %v1197, %v1189
        %v1566 = vpack.c.b16 %v1198, %v1190
        %v1567 = vpack.c.b16 %v1207, %v1199
        %v1568 = vpack.c.b16 %v1208, %v1200
        %v1569 = vpack.c.b16 %v1209, %v1201
        %v1570 = vpack.c.b16 %v1210, %v1202
        %v1571 = vpack.c.b16 %v1211, %v1203
        %v1572 = vpack.c.b16 %v1212, %v1204
        %v1573 = vpack.c.b16 %v1213, %v1205
        %v1574 = vpack.c.b16 %v1214, %v1206
        %v1575 = vpack.c.b16 %v1223, %v1215
        %v1576 = vpack.c.b16 %v1224, %v1216
        %v1577 = vpack.c.b16 %v1225, %v1217
        %v1578 = vpack.c.b16 %v1226, %v1218
        %v1579 = vpack.c.b16 %v1227, %v1219
        %v1580 = vpack.c.b16 %v1228, %v1220
        %v1581 = vpack.c.b16 %v1229, %v1221
        %v1582 = vpack.c.b16 %v1230, %v1222
        %v1583 = vpack.c.b16 %v1239, %v1231
        %v1584 = vpack.c.b16 %v1240, %v1232
        %v1585 = vpack.c.b16 %v1241, %v1233
        %v1586 = vpack.c.b16 %v1242, %v1234
        %v1587 = vpack.c.b16 %v1243, %v1235
        %v1588 = vpack.c.b16 %v1244, %v1236
        %v1589 = vpack.c.b16 %v1245, %v1237
        %v1590 = vpack.c.b16 %v1246, %v1238
        %v1591 = vpack.c.b16 %v1255, %v1247
        %v1592 = vpack.c.b16 %v1256, %v1248
        %v1593 = vpack.c.b16 %v1257, %v1249
        %v1594 = vpack.c.b16 %v1258, %v1250
        %v1595 = vpack.c.b16 %v1259, %v1251
        %v1596 = vpack.c.b16 %v1260, %v1252
        %v1597 = vpack.c.b16 %v1261, %v1253
        %v1598 = vpack.c.b16 %v1262, %v1254
        %v1599 = vpack.c.b16 %v1271, %v1263
        %v1600 = vpack.c.b16 %v1272, %v1264
        %v1601 = vpack.c.b16 %v1273, %v1265
        %v1602 = vpack.c.b16 %v1274, %v1266
        %v1603 = vpack.c.b16 %v1275, %v1267
        %v1604 = vpack.c.b16 %v1276, %v1268
        %v1605 = vpack.c.b16 %v1277, %v1269
        %v1606 = vpack.c.b16 %v1278, %v1270
        %v1607 = vpack.c.b16 %v1287, %v1279
        %v1608 = vpack.c.b16 %v1288, %v1280
        %v1609 = vpack.c.b16 %v1289, %v1281
        %v1610 = vpack.c.b16 %v1290, %v1282
        %v1611 = vpack.c.b16 %v1291, %v1283
        %v1612 = vpack.c.b16 %v1292, %v1284
        %v1613 = vpack.c.b16 %v1293, %v1285
        %v1614 = vpack.c.b16 %v1294, %v1286
        %v1615 = vpack.c.b16 %v1303, %v1295
        %v1616 = vpack.c.b16 %v1304, %v1296
        %v1617 = vpack.c.b16 %v1305, %v1297
        %v1618 = vpack.c.b16 %v1306, %v1298
        %v1619 = vpack.c.b16 %v1307, %v1299
        %v1620 = vpack.c.b16 %v1308, %v1300
        %v1621 = vpack.c.b16 %v1309, %v1301
        %v1622 = vpack.c.b16 %v1310, %v1302
        %v1623 = vpack.c.b16 %v1319, %v1311
        %v1624 = vpack.c.b16 %v1320, %v1312
        %v1625 = vpack.c.b16 %v1321, %v1313
        %v1626 = vpack.c.b16 %v1322, %v1314
        %v1627 = vpack.c.b16 %v1323, %v1315
        %v1628 = vpack.c.b16 %v1324, %v1316
        %v1629 = vpack.c.b16 %v1325, %v1317
        %v1630 = vpack.c.b16 %v1326, %v1318
        %v1631 = vpack.c.b16 %v1335, %v1327
        %v1632 = vpack.c.b16 %v1336, %v1328
        %v1633 = vpack.c.b16 %v1337, %v1329
        %v1634 = vpack.c.b16 %v1338, %v1330
        %v1635 = vpack.c.b16 %v1339, %v1331
        %v1636 = vpack.c.b16 %v1340, %v1332
        %v1637 = vpack.c.b16 %v1341, %v1333
        %v1638 = vpack.c.b16 %v1342, %v1334
        %v1639 = vpack.c.b16 %v1351, %v1343
        %v1640 = vpack.c.b16 %v1352, %v1344
        %v1641 = vpack.c.b16 %v1353, %v1345
        %v1642 = vpack.c.b16 %v1354, %v1346
        %v1643 = vpack.c.b16 %v1355, %v1347
        %v1644 = vpack.c.b16 %v1356, %v1348
        %v1645 = vpack.c.b16 %v1357, %v1349
        %v1646 = vpack.c.b16 %v1358, %v1350
        %v1647 = vpack.c.b16 %v1367, %v1359
        %v1648 = vpack.c.b16 %v1368, %v1360
        %v1649 = vpack.c.b16 %v1369, %v1361
        %v1650 = vpack.c.b16 %v1370, %v1362
        %v1651 = vpack.c.b16 %v1371, %v1363
        %v1652 = vpack.c.b16 %v1372, %v1364
        %v1653 = vpack.c.b16 %v1373, %v1365
        %v1654 = vpack.c.b16 %v1374, %v1366
        %v1655 = vpack.c.b16 %v1383, %v1375
        %v1656 = vpack.c.b16 %v1384, %v1376
        %v1657 = vpack.c.b16 %v1385, %v1377
        %v1658 = vpack.c.b16 %v1386, %v1378
        %v1659 = vpack.c.b16 %v1387, %v1379
        %v1660 = vpack.c.b16 %v1388, %v1380
        %v1661 = vpack.c.b16 %v1389, %v1381
        %v1662 = vpack.c.b16 %v1390, %v1382
        %v1663 = vpack.c.b16 %v1399, %v1391
        %v1664 = vpack.c.b16 %v1400, %v1392
        %v1665 = vpack.c.b16 %v1401, %v1393
        %v1666 = vpack.c.b16 %v1402, %v1394
        %v1667 = vpack.c.b16 %v1403, %v1395
        %v1668 = vpack.c.b16 %v1404, %v1396
        %v1669 = vpack.c.b16 %v1405, %v1397
        %v1670 = vpack.c.b16 %v1406, %v1398
        %v1671 = vpack.c.b16 %v1415, %v1407
        %v1672 = vpack.c.b16 %v1416, %v1408
        %v1673 = vpack.c.b16 %v1417, %v1409
        %v1674 = vpack.c.b16 %v1418, %v1410
        %v1675 = vpack.c.b16 %v1419, %v1411
        %v1676 = vpack.c.b16 %v1420, %v1412
        %v1677 = vpack.c.b16 %v1421, %v1413
        %v1678 = vpack.c.b16 %v1422, %v1414
        %v2063 = vunpack.c.l.b16 %v520
        %v2064 = vunpack.c.l.b16 %v521
        %v2065 = vunpack.c.l.b16 %v522
        %v2066 = vunpack.c.l.b16 %v523
        %v2067 = vunpack.c.l.b16 %v524
        %v2068 = vunpack.c.l.b16 %v525
        %v2069 = vunpack.c.l.b16 %v526
        %v2070 = vunpack.c.l.b16 %v527
        %v2071 = vunpack.c.l.b16 %v528
        %v2072 = vunpack.c.l.b16 %v529
        %v2073 = vunpack.c.l.b16 %v530
        %v2074 = vunpack.c.l.b16 %v531
        %v2075 = vunpack.c.l.b16 %v532
        %v2076 = vunpack.c.l.b16 %v533
        %v2077 = vunpack.c.l.b16 %v534
        %v2078 = vunpack.c.l.b16 %v535
        %v2079 = vunpack.c.l.b16 %v536
        %v2080 = vunpack.c.l.b16 %v537
        %v2081 = vunpack.c.l.b16 %v538
        %v2082 = vunpack.c.l.b16 %v539
        %v2083 = vunpack.c.l.b16 %v540
        %v2084 = vunpack.c.l.b16 %v541
        %v2085 = vunpack.c.l.b16 %v542
        %v2086 = vunpack.c.l.b16 %v543
        %v2087 = vunpack.c.l.b16 %v544
        %v2088 = vunpack.c.l.b16 %v545
        %v2089 = vunpack.c.l.b16 %v546
        %v2090 = vunpack.c.l.b16 %v547
        %v2091 = vunpack.c.l.b16 %v548
        %v2092 = vunpack.c.l.b16 %v549
        %v2093 = vunpack.c.l.b16 %v550
        %v2094 = vunpack.c.l.b16 %v551
        %v2095 = vunpack.c.l.b16 %v552
        %v2096 = vunpack.c.l.b16 %v553
        %v2097 = vunpack.c.l.b16 %v554
        %v2098 = vunpack.c.l.b16 %v555
        %v2099 = vunpack.c.l.b16 %v556
        %v2100 = vunpack.c.l.b16 %v557
        %v2101 = vunpack.c.l.b16 %v558
        %v2102 = vunpack.c.l.b16 %v559
        %v2103 = vunpack.c.l.b16 %v560
        %v2104 = vunpack.c.l.b16 %v561
        %v2105 = vunpack.c.l.b16 %v562
        %v2106 = vunpack.c.l.b16 %v563
        %v2107 = vunpack.c.l.b16 %v564
        %v2108 = vunpack.c.l.b16 %v565
        %v2109 = vunpack.c.l.b16 %v566
        %v2110 = vunpack.c.l.b16 %v567
        %v2111 = vunpack.c.l.b16 %v568
        %v2112 = vunpack.c.l.b16 %v569
        %v2113 = vunpack.c.l.b16 %v570
        %v2114 = vunpack.c.l.b16 %v571
        %v2115 = vunpack.c.l.b16 %v572
        %v2116 = vunpack.c.l.b16 %v573
        %v2117 = vunpack.c.l.b16 %v574
        %v2118 = vunpack.c.l.b16 %v575
        %v2119 = vunpack.c.l.b16 %v576
        %v2120 = vunpack.c.l.b16 %v577
        %v2121 = vunpack.c.l.b16 %v578
        %v2122 = vunpack.c.l.b16 %v579
        %v2123 = vunpack.c.l.b16 %v580
        %v2124 = vunpack.c.l.b16 %v581
        %v2125 = vunpack.c.l.b16 %v582
        %v2126 = vunpack.c.l.b16 %v583
        %v2127 = vunpack.c.l.b16 %v584
        %v2128 = vunpack.c.l.b16 %v585
        %v2129 = vunpack.c.l.b16 %v586
        %v2130 = vunpack.c.l.b16 %v587
        %v2131 = vunpack.c.l.b16 %v588
        %v2132 = vunpack.c.l.b16 %v589
        %v2133 = vunpack.c.l.b16 %v590
        %v2134 = vunpack.c.l.b16 %v591
        %v2135 = vunpack.c.l.b16 %v592
        %v2136 = vunpack.c.l.b16 %v593
        %v2137 = vunpack.c.l.b16 %v594
        %v2138 = vunpack.c.l.b16 %v595
        %v2139 = vunpack.c.l.b16 %v596
        %v2140 = vunpack.c.l.b16 %v597
        %v2141 = vunpack.c.l.b16 %v598
        %v2142 = vunpack.c.l.b16 %v599
        %v2143 = vunpack.c.l.b16 %v600
        %v2144 = vunpack.c.l.b16 %v601
        %v2145 = vunpack.c.l.b16 %v602
        %v2146 = vunpack.c.l.b16 %v603
        %v2147 = vunpack.c.l.b16 %v604
        %v2148 = vunpack.c.l.b16 %v605
        %v2149 = vunpack.c.l.b16 %v606
        %v2150 = vunpack.c.l.b16 %v607
        %v2151 = vunpack.c.l.b16 %v608
        %v2152 = vunpack.c.l.b16 %v609
        %v2153 = vunpack.c.l.b16 %v610
        %v2154 = vunpack.c.l.b16 %v611
        %v2155 = vunpack.c.l.b16 %v612
        %v2156 = vunpack.c.l.b16 %v613
        %v2157 = vunpack.c.l.b16 %v614
        %v2158 = vunpack.c.l.b16 %v615
        %v2159 = vunpack.c.l.b16 %v616
        %v2160 = vunpack.c.l.b16 %v617
        %v2161 = vunpack.c.l.b16 %v618
        %v2162 = vunpack.c.l.b16 %v619
        %v2163 = vunpack.c.l.b16 %v620
        %v2164 = vunpack.c.l.b16 %v621
        %v2165 = vunpack.c.l.b16 %v622
        %v2166 = vunpack.c.l.b16 %v623
        %v2167 = vunpack.c.l.b16 %v624
        %v2168 = vunpack.c.l.b16 %v625
        %v2169 = vunpack.c.l.b16 %v626
        %v2170 = vunpack.c.l.b16 %v627
        %v2171 = vunpack.c.l.b16 %v628
        %v2172 = vunpack.c.l.b16 %v629
        %v2173 = vunpack.c.l.b16 %v630
        %v2174 = vunpack.c.l.b16 %v631
        %v2175 = vunpack.c.l.b16 %v632
        %v2176 = vunpack.c.l.b16 %v633
        %v2177 = vunpack.c.l.b16 %v634
        %v2178 = vunpack.c.l.b16 %v635
        %v2179 = vunpack.c.l.b16 %v636
        %v2180 = vunpack.c.l.b16 %v637
        %v2181 = vunpack.c.l.b16 %v638
        %v2182 = vunpack.c.l.b16 %v639
        %v2183 = vunpack.c.l.b16 %v640
        %v2184 = vunpack.c.l.b16 %v641
        %v2185 = vunpack.c.l.b16 %v642
        %v2186 = vunpack.c.l.b16 %v643
        %v2187 = vunpack.c.l.b16 %v644
        %v2188 = vunpack.c.l.b16 %v645
        %v2189 = vunpack.c.l.b16 %v646
        %v2190 = vunpack.c.l.b16 %v647
        %v2191 = vpack.c.b16 %v2064, %v2063
        %v2192 = vpack.c.b16 %v2066, %v2065
        %v2193 = vpack.c.b16 %v2068, %v2067
        %v2194 = vpack.c.b16 %v2070, %v2069
        %v2195 = vpack.c.b16 %v2072, %v2071
        %v2196 = vpack.c.b16 %v2074, %v2073
        %v2197 = vpack.c.b16 %v2076, %v2075
        %v2198 = vpack.c.b16 %v2078, %v2077
        %v2199 = vpack.c.b16 %v2080, %v2079
        %v2200 = vpack.c.b16 %v2082, %v2081
        %v2201 = vpack.c.b16 %v2084, %v2083
        %v2202 = vpack.c.b16 %v2086, %v2085
        %v2203 = vpack.c.b16 %v2088, %v2087
        %v2204 = vpack.c.b16 %v2090, %v2089
        %v2205 = vpack.c.b16 %v2092, %v2091
        %v2206 = vpack.c.b16 %v2094, %v2093
        %v2207 = vpack.c.b16 %v2096, %v2095
        %v2208 = vpack.c.b16 %v2098, %v2097
        %v2209 = vpack.c.b16 %v2100, %v2099
        %v2210 = vpack.c.b16 %v2102, %v2101
        %v2211 = vpack.c.b16 %v2104, %v2103
        %v2212 = vpack.c.b16 %v2106, %v2105
        %v2213 = vpack.c.b16 %v2108, %v2107
        %v2214 = vpack.c.b16 %v2110, %v2109
        %v2215 = vpack.c.b16 %v2112, %v2111
        %v2216 = vpack.c.b16 %v2114, %v2113
        %v2217 = vpack.c.b16 %v2116, %v2115
        %v2218 = vpack.c.b16 %v2118, %v2117
        %v2219 = vpack.c.b16 %v2120, %v2119
        %v2220 = vpack.c.b16 %v2122, %v2121
        %v2221 = vpack.c.b16 %v2124, %v2123
        %v2222 = vpack.c.b16 %v2126, %v2125
        %v2223 = vpack.c.b16 %v2128, %v2127
        %v2224 = vpack.c.b16 %v2130, %v2129
        %v2225 = vpack.c.b16 %v2132, %v2131
        %v2226 = vpack.c.b16 %v2134, %v2133
        %v2227 = vpack.c.b16 %v2136, %v2135
        %v2228 = vpack.c.b16 %v2138, %v2137
        %v2229 = vpack.c.b16 %v2140, %v2139
        %v2230 = vpack.c.b16 %v2142, %v2141
        %v2231 = vpack.c.b16 %v2144, %v2143
        %v2232 = vpack.c.b16 %v2146, %v2145
        %v2233 = vpack.c.b16 %v2148, %v2147
        %v2234 = vpack.c.b16 %v2150, %v2149
        %v2235 = vpack.c.b16 %v2152, %v2151
        %v2236 = vpack.c.b16 %v2154, %v2153
        %v2237 = vpack.c.b16 %v2156, %v2155
        %v2238 = vpack.c.b16 %v2158, %v2157
        %v2239 = vpack.c.b16 %v2160, %v2159
        %v2240 = vpack.c.b16 %v2162, %v2161
        %v2241 = vpack.c.b16 %v2164, %v2163
        %v2242 = vpack.c.b16 %v2166, %v2165
        %v2243 = vpack.c.b16 %v2168, %v2167
        %v2244 = vpack.c.b16 %v2170, %v2169
        %v2245 = vpack.c.b16 %v2172, %v2171
        %v2246 = vpack.c.b16 %v2174, %v2173
        %v2247 = vpack.c.b16 %v2176, %v2175
        %v2248 = vpack.c.b16 %v2178, %v2177
        %v2249 = vpack.c.b16 %v2180, %v2179
        %v2250 = vpack.c.b16 %v2182, %v2181
        %v2251 = vpack.c.b16 %v2184, %v2183
        %v2252 = vpack.c.b16 %v2186, %v2185
        %v2253 = vpack.c.b16 %v2188, %v2187
        %v2254 = vpack.c.b16 %v2190, %v2189
        %2319 = vmatprep.subr.bf16.mxu0 0
        %2320 = vmatpush1.bf16.msra.mxu0 %v2191
        %2321 = vmatprep.subr.bf16.mxu0 0
        %2322 = vmatpush1.bf16.msra.mxu0 %v2192
        %2323 = vmatprep.subr.bf16.mxu0 0
        %2324 = vmatpush1.bf16.msra.mxu0 %v2193
        %2325 = vmatprep.subr.bf16.mxu0 0
        %2326 = vmatpush1.bf16.msra.mxu0 %v2194
        %2327 = vmatprep.subr.bf16.mxu0 0
        %2328 = vmatpush1.bf16.msra.mxu0 %v2195
        %2329 = vmatprep.subr.bf16.mxu0 0
        %2330 = vmatpush1.bf16.msra.mxu0 %v2196
        %2331 = vmatprep.subr.bf16.mxu0 0
        %2332 = vmatpush1.bf16.msra.mxu0 %v2197
        %2333 = vmatprep.subr.bf16.mxu0 0
        %2334 = vmatpush1.bf16.msra.mxu0 %v2198
        %2335 = vmatprep.subr.bf16.mxu0 0
        %2336 = vmatpush1.bf16.msra.mxu0 %v2199
        %2337 = vmatprep.subr.bf16.mxu0 0
        %2338 = vmatpush1.bf16.msra.mxu0 %v2200
        %2339 = vmatprep.subr.bf16.mxu0 0
        %2340 = vmatpush1.bf16.msra.mxu0 %v2201
        %2341 = vmatprep.subr.bf16.mxu0 0
        %2342 = vmatpush1.bf16.msra.mxu0 %v2202
        %2343 = vmatprep.subr.bf16.mxu0 0
        %2344 = vmatpush1.bf16.msra.mxu0 %v2203
        %2345 = vmatprep.subr.bf16.mxu0 0
        %2346 = vmatpush1.bf16.msra.mxu0 %v2204
        %2347 = vmatprep.subr.bf16.mxu0 0
        %2348 = vmatpush1.bf16.msra.mxu0 %v2205
        %2349 = vmatprep.subr.bf16.mxu0 0
        %2350 = vmatpush1.bf16.msra.mxu0 %v2206
        %2351 = vmatprep.mubr.bf16.mxu0 %v1424
        %2352 = vmatmul.mubr.bf16.gmra.mrb[0].mxu0 %v1423
        %v2353 = vpop.f32.mrb[0].mxu0
        %v2354 = vadd.f32 %v653, %v2353
        %v2355 = vpop.f32.mrb[0].mxu0
        %v2356 = vpop.f32.mrb[0].mxu0
        %v2357 = vadd.f32 %v653, %v2356
        %v2358 = vpop.f32.mrb[0].mxu0
        %2359 = vmatprep.mubr.bf16.mxu0 %v1432
        %2360 = vmatmul.mubr.bf16.gmra.mrb[0].mxu0 %v1431
        %v2361 = vpop.f32.mrb[0].mxu0
        %v2362 = vadd.f32 %v653, %v2361
        %v2363 = vpop.f32.mrb[0].mxu0
        %v2364 = vpop.f32.mrb[0].mxu0
        %v2365 = vadd.f32 %v653, %v2364
        %v2366 = vpop.f32.mrb[0].mxu0
        %2367 = vmatprep.mubr.bf16.mxu0 %v1440
        %2368 = vmatmul.mubr.bf16.gmra.mrb[0].mxu0 %v1439
        %v2369 = vpop.f32.mrb[0].mxu0
        %v2370 = vadd.f32 %v653, %v2369
        %v2371 = vpop.f32.mrb[0].mxu0
        %v2372 = vpop.f32.mrb[0].mxu0
        %v2373 = vadd.f32 %v653, %v2372
        %v2374 = vpop.f32.mrb[0].mxu0
        %2375 = vmatprep.mubr.bf16.mxu0 %v1448
        %2376 = vmatmul.mubr.bf16.gmra.mrb[0].mxu0 %v1447
        %v2377 = vpop.f32.mrb[0].mxu0
        %v2378 = vadd.f32 %v653, %v2377
        %v2379 = vpop.f32.mrb[0].mxu0
        %v2380 = vpop.f32.mrb[0].mxu0
        %v2381 = vadd.f32 %v653, %v2380
        %v2382 = vpop.f32.mrb[0].mxu0
        %2383 = vmatprep.mubr.bf16.mxu0 %v1456
        %2384 = vmatmul.mubr.bf16.gmra.mrb[0].mxu0 %v1455
        %v2385 = vpop.f32.mrb[0].mxu0
        %v2386 = vadd.f32 %v653, %v2385
        %v2387 = vpop.f32.mrb[0].mxu0
        %v2388 = vpop.f32.mrb[0].mxu0
        %v2389 = vadd.f32 %v653, %v2388
        %v2390 = vpop.f32.mrb[0].mxu0
        %2391 = vmatprep.mubr.bf16.mxu0 %v1464
        %2392 = vmatmul.mubr.bf16.gmra.mrb[0].mxu0 %v1463
        %v2393 = vpop.f32.mrb[0].mxu0
        %v2394 = vadd.f32 %v653, %v2393
        %v2395 = vpop.f32.mrb[0].mxu0
        %v2396 = vpop.f32.mrb[0].mxu0
        %v2397 = vadd.f32 %v653, %v2396
        %v2398 = vpop.f32.mrb[0].mxu0
        %2399 = vmatprep.mubr.bf16.mxu0 %v1472
        %2400 = vmatmul.mubr.bf16.gmra.mrb[0].mxu0 %v1471
        %v2401 = vpop.f32.mrb[0].mxu0
        %v2402 = vadd.f32 %v653, %v2401
        %v2403 = vpop.f32.mrb[0].mxu0
        %v2404 = vpop.f32.mrb[0].mxu0
        %v2405 = vadd.f32 %v653, %v2404
        %v2406 = vpop.f32.mrb[0].mxu0
        %2407 = vmatprep.mubr.bf16.mxu0 %v1480
        %2408 = vmatmul.mubr.bf16.gmra.mrb[0].mxu0 %v1479
        %v2409 = vpop.f32.mrb[0].mxu0
        %v2410 = vadd.f32 %v653, %v2409
        %v2411 = vpop.f32.mrb[0].mxu0
        %v2412 = vpop.f32.mrb[0].mxu0
        %v2413 = vadd.f32 %v653, %v2412
        %v2414 = vpop.f32.mrb[0].mxu0
        %2415 = vmatprep.mubr.bf16.mxu0 %v1488
        %2416 = vmatmul.mubr.bf16.gmra.mrb[0].mxu0 %v1487
        %v2417 = vpop.f32.mrb[0].mxu0
        %v2418 = vadd.f32 %v653, %v2417
        %v2419 = vpop.f32.mrb[0].mxu0
        %v2420 = vpop.f32.mrb[0].mxu0
        %v2421 = vadd.f32 %v653, %v2420
        %v2422 = vpop.f32.mrb[0].mxu0
        %2423 = vmatprep.mubr.bf16.mxu0 %v1496
        %2424 = vmatmul.mubr.bf16.gmra.mrb[0].mxu0 %v1495
        %v2425 = vpop.f32.mrb[0].mxu0
        %v2426 = vadd.f32 %v653, %v2425
        %v2427 = vpop.f32.mrb[0].mxu0
        %v2428 = vpop.f32.mrb[0].mxu0
        %v2429 = vadd.f32 %v653, %v2428
        %v2430 = vpop.f32.mrb[0].mxu0
        %2431 = vmatprep.mubr.bf16.mxu0 %v1504
        %2432 = vmatmul.mubr.bf16.gmra.mrb[0].mxu0 %v1503
        %v2433 = vpop.f32.mrb[0].mxu0
        %v2434 = vadd.f32 %v653, %v2433
        %v2435 = vpop.f32.mrb[0].mxu0
        %v2436 = vpop.f32.mrb[0].mxu0
        %v2437 = vadd.f32 %v653, %v2436
        %v2438 = vpop.f32.mrb[0].mxu0
        %2439 = vmatprep.mubr.bf16.mxu0 %v1512
        %2440 = vmatmul.mubr.bf16.gmra.mrb[0].mxu0 %v1511
        %v2441 = vpop.f32.mrb[0].mxu0
        %v2442 = vadd.f32 %v653, %v2441
        %v2443 = vpop.f32.mrb[0].mxu0
        %v2444 = vpop.f32.mrb[0].mxu0
        %v2445 = vadd.f32 %v653, %v2444
        %v2446 = vpop.f32.mrb[0].mxu0
        %2447 = vmatprep.mubr.bf16.mxu0 %v1520
        %2448 = vmatmul.mubr.bf16.gmra.mrb[0].mxu0 %v1519
        %v2449 = vpop.f32.mrb[0].mxu0
        %v2450 = vadd.f32 %v653, %v2449
        %v2451 = vpop.f32.mrb[0].mxu0
        %v2452 = vpop.f32.mrb[0].mxu0
        %v2453 = vadd.f32 %v653, %v2452
        %v2454 = vpop.f32.mrb[0].mxu0
        %2455 = vmatprep.mubr.bf16.mxu0 %v1528
        %2456 = vmatmul.mubr.bf16.gmra.mrb[0].mxu0 %v1527
        %v2457 = vpop.f32.mrb[0].mxu0
        %v2458 = vadd.f32 %v653, %v2457
        %v2459 = vpop.f32.mrb[0].mxu0
        %v2460 = vpop.f32.mrb[0].mxu0
        %v2461 = vadd.f32 %v653, %v2460
        %v2462 = vpop.f32.mrb[0].mxu0
        %2463 = vmatprep.mubr.bf16.mxu0 %v1536
        %2464 = vmatmul.mubr.bf16.gmra.mrb[0].mxu0 %v1535
        %v2465 = vpop.f32.mrb[0].mxu0
        %v2466 = vadd.f32 %v653, %v2465
        %v2467 = vpop.f32.mrb[0].mxu0
        %v2468 = vpop.f32.mrb[0].mxu0
        %v2469 = vadd.f32 %v653, %v2468
        %v2470 = vpop.f32.mrb[0].mxu0
        %2471 = vmatprep.mubr.bf16.mxu0 %v1544
        %2472 = vmatmul.mubr.bf16.gmra.mrb[0].mxu0 %v1543
        %v2473 = vpop.f32.mrb[0].mxu0
        %v2474 = vadd.f32 %v653, %v2473
        %v2475 = vpop.f32.mrb[0].mxu0
        %v2476 = vpop.f32.mrb[0].mxu0
        %v2477 = vadd.f32 %v653, %v2476
        %v2478 = vpop.f32.mrb[0].mxu0
        %2479 = vmatprep.mubr.bf16.mxu0 %v1552
        %2480 = vmatmul.mubr.bf16.gmra.mrb[0].mxu0 %v1551
        %v2481 = vpop.f32.mrb[0].mxu0
        %v2482 = vadd.f32 %v653, %v2481
        %v2483 = vpop.f32.mrb[0].mxu0
        %v2484 = vpop.f32.mrb[0].mxu0
        %v2485 = vadd.f32 %v653, %v2484
        %v2486 = vpop.f32.mrb[0].mxu0
        %2487 = vmatprep.mubr.bf16.mxu0 %v1560
        %2488 = vmatmul.mubr.bf16.gmra.mrb[0].mxu0 %v1559
        %v2489 = vpop.f32.mrb[0].mxu0
        %v2490 = vadd.f32 %v653, %v2489
        %v2491 = vpop.f32.mrb[0].mxu0
        %v2492 = vpop.f32.mrb[0].mxu0
        %v2493 = vadd.f32 %v653, %v2492
        %v2494 = vpop.f32.mrb[0].mxu0
        %2495 = vmatprep.mubr.bf16.mxu0 %v1568
        %2496 = vmatmul.mubr.bf16.gmra.mrb[0].mxu0 %v1567
        %v2497 = vpop.f32.mrb[0].mxu0
        %v2498 = vadd.f32 %v653, %v2497
        %v2499 = vpop.f32.mrb[0].mxu0
        %v2500 = vpop.f32.mrb[0].mxu0
        %v2501 = vadd.f32 %v653, %v2500
        %v2502 = vpop.f32.mrb[0].mxu0
        %2503 = vmatprep.mubr.bf16.mxu0 %v1576
        %2504 = vmatmul.mubr.bf16.gmra.mrb[0].mxu0 %v1575
        %v2505 = vpop.f32.mrb[0].mxu0
        %v2506 = vadd.f32 %v653, %v2505
        %v2507 = vpop.f32.mrb[0].mxu0
        %v2508 = vpop.f32.mrb[0].mxu0
        %v2509 = vadd.f32 %v653, %v2508
        %v2510 = vpop.f32.mrb[0].mxu0
        %2511 = vmatprep.mubr.bf16.mxu0 %v1584
        %2512 = vmatmul.mubr.bf16.gmra.mrb[0].mxu0 %v1583
        %v2513 = vpop.f32.mrb[0].mxu0
        %v2514 = vadd.f32 %v653, %v2513
        %v2515 = vpop.f32.mrb[0].mxu0
        %v2516 = vpop.f32.mrb[0].mxu0
        %v2517 = vadd.f32 %v653, %v2516
        %v2518 = vpop.f32.mrb[0].mxu0
        %2519 = vmatprep.mubr.bf16.mxu0 %v1592
        %2520 = vmatmul.mubr.bf16.gmra.mrb[0].mxu0 %v1591
        %v2521 = vpop.f32.mrb[0].mxu0
        %v2522 = vadd.f32 %v653, %v2521
        %v2523 = vpop.f32.mrb[0].mxu0
        %v2524 = vpop.f32.mrb[0].mxu0
        %v2525 = vadd.f32 %v653, %v2524
        %v2526 = vpop.f32.mrb[0].mxu0
        %2527 = vmatprep.mubr.bf16.mxu0 %v1600
        %2528 = vmatmul.mubr.bf16.gmra.mrb[0].mxu0 %v1599
        %v2529 = vpop.f32.mrb[0].mxu0
        %v2530 = vadd.f32 %v653, %v2529
        %v2531 = vpop.f32.mrb[0].mxu0
        %v2532 = vpop.f32.mrb[0].mxu0
        %v2533 = vadd.f32 %v653, %v2532
        %v2534 = vpop.f32.mrb[0].mxu0
        %2535 = vmatprep.mubr.bf16.mxu0 %v1608
        %2536 = vmatmul.mubr.bf16.gmra.mrb[0].mxu0 %v1607
        %v2537 = vpop.f32.mrb[0].mxu0
        %v2538 = vadd.f32 %v653, %v2537
        %v2539 = vpop.f32.mrb[0].mxu0
        %v2540 = vpop.f32.mrb[0].mxu0
        %v2541 = vadd.f32 %v653, %v2540
        %v2542 = vpop.f32.mrb[0].mxu0
        %2543 = vmatprep.mubr.bf16.mxu0 %v1616
        %2544 = vmatmul.mubr.bf16.gmra.mrb[0].mxu0 %v1615
        %v2545 = vpop.f32.mrb[0].mxu0
        %v2546 = vadd.f32 %v653, %v2545
        %v2547 = vpop.f32.mrb[0].mxu0
        %v2548 = vpop.f32.mrb[0].mxu0
        %v2549 = vadd.f32 %v653, %v2548
        %v2550 = vpop.f32.mrb[0].mxu0
        %2551 = vmatprep.mubr.bf16.mxu0 %v1624
        %2552 = vmatmul.mubr.bf16.gmra.mrb[0].mxu0 %v1623
        %v2553 = vpop.f32.mrb[0].mxu0
        %v2554 = vadd.f32 %v653, %v2553
        %v2555 = vpop.f32.mrb[0].mxu0
        %v2556 = vpop.f32.mrb[0].mxu0
        %v2557 = vadd.f32 %v653, %v2556
        %v2558 = vpop.f32.mrb[0].mxu0
        %2559 = vmatprep.mubr.bf16.mxu0 %v1632
        %2560 = vmatmul.mubr.bf16.gmra.mrb[0].mxu0 %v1631
        %v2561 = vpop.f32.mrb[0].mxu0
        %v2562 = vadd.f32 %v653, %v2561
        %v2563 = vpop.f32.mrb[0].mxu0
        %v2564 = vpop.f32.mrb[0].mxu0
        %v2565 = vadd.f32 %v653, %v2564
        %v2566 = vpop.f32.mrb[0].mxu0
        %2567 = vmatprep.mubr.bf16.mxu0 %v1640
        %2568 = vmatmul.mubr.bf16.gmra.mrb[0].mxu0 %v1639
        %v2569 = vpop.f32.mrb[0].mxu0
        %v2570 = vadd.f32 %v653, %v2569
        %v2571 = vpop.f32.mrb[0].mxu0
        %v2572 = vpop.f32.mrb[0].mxu0
        %v2573 = vadd.f32 %v653, %v2572
        %v2574 = vpop.f32.mrb[0].mxu0
        %2575 = vmatprep.mubr.bf16.mxu0 %v1648
        %2576 = vmatmul.mubr.bf16.gmra.mrb[0].mxu0 %v1647
        %v2577 = vpop.f32.mrb[0].mxu0
        %v2578 = vadd.f32 %v653, %v2577
        %v2579 = vpop.f32.mrb[0].mxu0
        %v2580 = vpop.f32.mrb[0].mxu0
        %v2581 = vadd.f32 %v653, %v2580
        %v2582 = vpop.f32.mrb[0].mxu0
        %2583 = vmatprep.mubr.bf16.mxu0 %v1656
        %2584 = vmatmul.mubr.bf16.gmra.mrb[0].mxu0 %v1655
        %v2585 = vpop.f32.mrb[0].mxu0
        %v2586 = vadd.f32 %v653, %v2585
        %v2587 = vpop.f32.mrb[0].mxu0
        %v2588 = vpop.f32.mrb[0].mxu0
        %v2589 = vadd.f32 %v653, %v2588
        %v2590 = vpop.f32.mrb[0].mxu0
        %2591 = vmatprep.mubr.bf16.mxu0 %v1664
        %2592 = vmatmul.mubr.bf16.gmra.mrb[0].mxu0 %v1663
        %v2593 = vpop.f32.mrb[0].mxu0
        %v2594 = vadd.f32 %v653, %v2593
        %v2595 = vpop.f32.mrb[0].mxu0
        %v2596 = vpop.f32.mrb[0].mxu0
        %v2597 = vadd.f32 %v653, %v2596
        %v2598 = vpop.f32.mrb[0].mxu0
        %2599 = vmatprep.mubr.bf16.mxu0 %v1672
        %2600 = vmatmul.mubr.bf16.gmra.mrb[0].mxu0 %v1671
        %v2601 = vpop.f32.mrb[0].mxu0
        %v2602 = vadd.f32 %v653, %v2601
        %v2603 = vpop.f32.mrb[0].mxu0
        %v2604 = vpop.f32.mrb[0].mxu0
        %v2605 = vadd.f32 %v653, %v2604
        %v2606 = vpop.f32.mrb[0].mxu0
        %2607 = vdwg.mxu0
        %2608 = vmatprep.subr.bf16.mxu0 0
        %2609 = vmatpush1.bf16.msra.mxu0 %v2207
        %2610 = vmatprep.subr.bf16.mxu0 0
        %2611 = vmatpush1.bf16.msra.mxu0 %v2208
        %2612 = vmatprep.subr.bf16.mxu0 0
        %2613 = vmatpush1.bf16.msra.mxu0 %v2209
        %2614 = vmatprep.subr.bf16.mxu0 0
        %2615 = vmatpush1.bf16.msra.mxu0 %v2210
        %2616 = vmatprep.subr.bf16.mxu0 0
        %2617 = vmatpush1.bf16.msra.mxu0 %v2211
        %2618 = vmatprep.subr.bf16.mxu0 0
        %2619 = vmatpush1.bf16.msra.mxu0 %v2212
        %2620 = vmatprep.subr.bf16.mxu0 0
        %2621 = vmatpush1.bf16.msra.mxu0 %v2213
        %2622 = vmatprep.subr.bf16.mxu0 0
        %2623 = vmatpush1.bf16.msra.mxu0 %v2214
        %2624 = vmatprep.subr.bf16.mxu0 0
        %2625 = vmatpush1.bf16.msra.mxu0 %v2215
        %2626 = vmatprep.subr.bf16.mxu0 0
        %2627 = vmatpush1.bf16.msra.mxu0 %v2216
        %2628 = vmatprep.subr.bf16.mxu0 0
        %2629 = vmatpush1.bf16.msra.mxu0 %v2217
        %2630 = vmatprep.subr.bf16.mxu0 0
        %2631 = vmatpush1.bf16.msra.mxu0 %v2218
        %2632 = vmatprep.subr.bf16.mxu0 0
        %2633 = vmatpush1.bf16.msra.mxu0 %v2219
        %2634 = vmatprep.subr.bf16.mxu0 0
        %2635 = vmatpush1.bf16.msra.mxu0 %v2220
        %2636 = vmatprep.subr.bf16.mxu0 0
        %2637 = vmatpush1.bf16.msra.mxu0 %v2221
        %2638 = vmatprep.subr.bf16.mxu0 0
        %2639 = vmatpush1.bf16.msra.mxu0 %v2222
        %2640 = vmatprep.mubr.bf16.mxu0 %v1426
        %2641 = vmatmul.mubr.bf16.gmra.mrb[0].mxu0 %v1425
        %v2642 = vpop.f32.mrb[0].mxu0
        %v2643 = vadd.f32 %v2354, %v2642
        %v2644 = vpop.f32.mrb[0].mxu0
        %v2645 = vpop.f32.mrb[0].mxu0
        %v2646 = vadd.f32 %v2357, %v2645
        %v2647 = vpop.f32.mrb[0].mxu0
        %2648 = vmatprep.mubr.bf16.mxu0 %v1434
        %2649 = vmatmul.mubr.bf16.gmra.mrb[0].mxu0 %v1433
        %v2650 = vpop.f32.mrb[0].mxu0
        %v2651 = vadd.f32 %v2362, %v2650
        %v2652 = vpop.f32.mrb[0].mxu0
        %v2653 = vpop.f32.mrb[0].mxu0
        %v2654 = vadd.f32 %v2365, %v2653
        %v2655 = vpop.f32.mrb[0].mxu0
        %2656 = vmatprep.mubr.bf16.mxu0 %v1442
        %2657 = vmatmul.mubr.bf16.gmra.mrb[0].mxu0 %v1441
        %v2658 = vpop.f32.mrb[0].mxu0
        %v2659 = vadd.f32 %v2370, %v2658
        %v2660 = vpop.f32.mrb[0].mxu0
        %v2661 = vpop.f32.mrb[0].mxu0
        %v2662 = vadd.f32 %v2373, %v2661
        %v2663 = vpop.f32.mrb[0].mxu0
        %2664 = vmatprep.mubr.bf16.mxu0 %v1450
        %2665 = vmatmul.mubr.bf16.gmra.mrb[0].mxu0 %v1449
        %v2666 = vpop.f32.mrb[0].mxu0
        %v2667 = vadd.f32 %v2378, %v2666
        %v2668 = vpop.f32.mrb[0].mxu0
        %v2669 = vpop.f32.mrb[0].mxu0
        %v2670 = vadd.f32 %v2381, %v2669
        %v2671 = vpop.f32.mrb[0].mxu0
        %2672 = vmatprep.mubr.bf16.mxu0 %v1458
        %2673 = vmatmul.mubr.bf16.gmra.mrb[0].mxu0 %v1457
        %v2674 = vpop.f32.mrb[0].mxu0
        %v2675 = vadd.f32 %v2386, %v2674
        %v2676 = vpop.f32.mrb[0].mxu0
        %v2677 = vpop.f32.mrb[0].mxu0
        %v2678 = vadd.f32 %v2389, %v2677
        %v2679 = vpop.f32.mrb[0].mxu0
        %2680 = vmatprep.mubr.bf16.mxu0 %v1466
        %2681 = vmatmul.mubr.bf16.gmra.mrb[0].mxu0 %v1465
        %v2682 = vpop.f32.mrb[0].mxu0
        %v2683 = vadd.f32 %v2394, %v2682
        %v2684 = vpop.f32.mrb[0].mxu0
        %v2685 = vpop.f32.mrb[0].mxu0
        %v2686 = vadd.f32 %v2397, %v2685
        %v2687 = vpop.f32.mrb[0].mxu0
        %2688 = vmatprep.mubr.bf16.mxu0 %v1474
        %2689 = vmatmul.mubr.bf16.gmra.mrb[0].mxu0 %v1473
        %v2690 = vpop.f32.mrb[0].mxu0
        %v2691 = vadd.f32 %v2402, %v2690
        %v2692 = vpop.f32.mrb[0].mxu0
        %v2693 = vpop.f32.mrb[0].mxu0
        %v2694 = vadd.f32 %v2405, %v2693
        %v2695 = vpop.f32.mrb[0].mxu0
        %2696 = vmatprep.mubr.bf16.mxu0 %v1482
        %2697 = vmatmul.mubr.bf16.gmra.mrb[0].mxu0 %v1481
        %v2698 = vpop.f32.mrb[0].mxu0
        %v2699 = vadd.f32 %v2410, %v2698
        %v2700 = vpop.f32.mrb[0].mxu0
        %v2701 = vpop.f32.mrb[0].mxu0
        %v2702 = vadd.f32 %v2413, %v2701
        %v2703 = vpop.f32.mrb[0].mxu0
        %2704 = vmatprep.mubr.bf16.mxu0 %v1490
        %2705 = vmatmul.mubr.bf16.gmra.mrb[0].mxu0 %v1489
        %v2706 = vpop.f32.mrb[0].mxu0
        %v2707 = vadd.f32 %v2418, %v2706
        %v2708 = vpop.f32.mrb[0].mxu0
        %v2709 = vpop.f32.mrb[0].mxu0
        %v2710 = vadd.f32 %v2421, %v2709
        %v2711 = vpop.f32.mrb[0].mxu0
        %2712 = vmatprep.mubr.bf16.mxu0 %v1498
        %2713 = vmatmul.mubr.bf16.gmra.mrb[0].mxu0 %v1497
        %v2714 = vpop.f32.mrb[0].mxu0
        %v2715 = vadd.f32 %v2426, %v2714
        %v2716 = vpop.f32.mrb[0].mxu0
        %v2717 = vpop.f32.mrb[0].mxu0
        %v2718 = vadd.f32 %v2429, %v2717
        %v2719 = vpop.f32.mrb[0].mxu0
        %2720 = vmatprep.mubr.bf16.mxu0 %v1506
        %2721 = vmatmul.mubr.bf16.gmra.mrb[0].mxu0 %v1505
        %v2722 = vpop.f32.mrb[0].mxu0
        %v2723 = vadd.f32 %v2434, %v2722
        %v2724 = vpop.f32.mrb[0].mxu0
        %v2725 = vpop.f32.mrb[0].mxu0
        %v2726 = vadd.f32 %v2437, %v2725
        %v2727 = vpop.f32.mrb[0].mxu0
        %2728 = vmatprep.mubr.bf16.mxu0 %v1514
        %2729 = vmatmul.mubr.bf16.gmra.mrb[0].mxu0 %v1513
        %v2730 = vpop.f32.mrb[0].mxu0
        %v2731 = vadd.f32 %v2442, %v2730
        %v2732 = vpop.f32.mrb[0].mxu0
        %v2733 = vpop.f32.mrb[0].mxu0
        %v2734 = vadd.f32 %v2445, %v2733
        %v2735 = vpop.f32.mrb[0].mxu0
        %2736 = vmatprep.mubr.bf16.mxu0 %v1522
        %2737 = vmatmul.mubr.bf16.gmra.mrb[0].mxu0 %v1521
        %v2738 = vpop.f32.mrb[0].mxu0
        %v2739 = vadd.f32 %v2450, %v2738
        %v2740 = vpop.f32.mrb[0].mxu0
        %v2741 = vpop.f32.mrb[0].mxu0
        %v2742 = vadd.f32 %v2453, %v2741
        %v2743 = vpop.f32.mrb[0].mxu0
        %2744 = vmatprep.mubr.bf16.mxu0 %v1530
        %2745 = vmatmul.mubr.bf16.gmra.mrb[0].mxu0 %v1529
        %v2746 = vpop.f32.mrb[0].mxu0
        %v2747 = vadd.f32 %v2458, %v2746
        %v2748 = vpop.f32.mrb[0].mxu0
        %v2749 = vpop.f32.mrb[0].mxu0
        %v2750 = vadd.f32 %v2461, %v2749
        %v2751 = vpop.f32.mrb[0].mxu0
        %2752 = vmatprep.mubr.bf16.mxu0 %v1538
        %2753 = vmatmul.mubr.bf16.gmra.mrb[0].mxu0 %v1537
        %v2754 = vpop.f32.mrb[0].mxu0
        %v2755 = vadd.f32 %v2466, %v2754
        %v2756 = vpop.f32.mrb[0].mxu0
        %v2757 = vpop.f32.mrb[0].mxu0
        %v2758 = vadd.f32 %v2469, %v2757
        %v2759 = vpop.f32.mrb[0].mxu0
        %2760 = vmatprep.mubr.bf16.mxu0 %v1546
        %2761 = vmatmul.mubr.bf16.gmra.mrb[0].mxu0 %v1545
        %v2762 = vpop.f32.mrb[0].mxu0
        %v2763 = vadd.f32 %v2474, %v2762
        %v2764 = vpop.f32.mrb[0].mxu0
        %v2765 = vpop.f32.mrb[0].mxu0
        %v2766 = vadd.f32 %v2477, %v2765
        %v2767 = vpop.f32.mrb[0].mxu0
        %2768 = vmatprep.mubr.bf16.mxu0 %v1554
        %2769 = vmatmul.mubr.bf16.gmra.mrb[0].mxu0 %v1553
        %v2770 = vpop.f32.mrb[0].mxu0
        %v2771 = vadd.f32 %v2482, %v2770
        %v2772 = vpop.f32.mrb[0].mxu0
        %v2773 = vpop.f32.mrb[0].mxu0
        %v2774 = vadd.f32 %v2485, %v2773
        %v2775 = vpop.f32.mrb[0].mxu0
        %2776 = vmatprep.mubr.bf16.mxu0 %v1562
        %2777 = vmatmul.mubr.bf16.gmra.mrb[0].mxu0 %v1561
        %v2778 = vpop.f32.mrb[0].mxu0
        %v2779 = vadd.f32 %v2490, %v2778
        %v2780 = vpop.f32.mrb[0].mxu0
        %v2781 = vpop.f32.mrb[0].mxu0
        %v2782 = vadd.f32 %v2493, %v2781
        %v2783 = vpop.f32.mrb[0].mxu0
        %2784 = vmatprep.mubr.bf16.mxu0 %v1570
        %2785 = vmatmul.mubr.bf16.gmra.mrb[0].mxu0 %v1569
        %v2786 = vpop.f32.mrb[0].mxu0
        %v2787 = vadd.f32 %v2498, %v2786
        %v2788 = vpop.f32.mrb[0].mxu0
        %v2789 = vpop.f32.mrb[0].mxu0
        %v2790 = vadd.f32 %v2501, %v2789
        %v2791 = vpop.f32.mrb[0].mxu0
        %2792 = vmatprep.mubr.bf16.mxu0 %v1578
        %2793 = vmatmul.mubr.bf16.gmra.mrb[0].mxu0 %v1577
        %v2794 = vpop.f32.mrb[0].mxu0
        %v2795 = vadd.f32 %v2506, %v2794
        %v2796 = vpop.f32.mrb[0].mxu0
        %v2797 = vpop.f32.mrb[0].mxu0
        %v2798 = vadd.f32 %v2509, %v2797
        %v2799 = vpop.f32.mrb[0].mxu0
        %2800 = vmatprep.mubr.bf16.mxu0 %v1586
        %2801 = vmatmul.mubr.bf16.gmra.mrb[0].mxu0 %v1585
        %v2802 = vpop.f32.mrb[0].mxu0
        %v2803 = vadd.f32 %v2514, %v2802
        %v2804 = vpop.f32.mrb[0].mxu0
        %v2805 = vpop.f32.mrb[0].mxu0
        %v2806 = vadd.f32 %v2517, %v2805
        %v2807 = vpop.f32.mrb[0].mxu0
        %2808 = vmatprep.mubr.bf16.mxu0 %v1594
        %2809 = vmatmul.mubr.bf16.gmra.mrb[0].mxu0 %v1593
        %v2810 = vpop.f32.mrb[0].mxu0
        %v2811 = vadd.f32 %v2522, %v2810
        %v2812 = vpop.f32.mrb[0].mxu0
        %v2813 = vpop.f32.mrb[0].mxu0
        %v2814 = vadd.f32 %v2525, %v2813
        %v2815 = vpop.f32.mrb[0].mxu0
        %2816 = vmatprep.mubr.bf16.mxu0 %v1602
        %2817 = vmatmul.mubr.bf16.gmra.mrb[0].mxu0 %v1601
        %v2818 = vpop.f32.mrb[0].mxu0
        %v2819 = vadd.f32 %v2530, %v2818
        %v2820 = vpop.f32.mrb[0].mxu0
        %v2821 = vpop.f32.mrb[0].mxu0
        %v2822 = vadd.f32 %v2533, %v2821
        %v2823 = vpop.f32.mrb[0].mxu0
        %2824 = vmatprep.mubr.bf16.mxu0 %v1610
        %2825 = vmatmul.mubr.bf16.gmra.mrb[0].mxu0 %v1609
        %v2826 = vpop.f32.mrb[0].mxu0
        %v2827 = vadd.f32 %v2538, %v2826
        %v2828 = vpop.f32.mrb[0].mxu0
        %v2829 = vpop.f32.mrb[0].mxu0
        %v2830 = vadd.f32 %v2541, %v2829
        %v2831 = vpop.f32.mrb[0].mxu0
        %2832 = vmatprep.mubr.bf16.mxu0 %v1618
        %2833 = vmatmul.mubr.bf16.gmra.mrb[0].mxu0 %v1617
        %v2834 = vpop.f32.mrb[0].mxu0
        %v2835 = vadd.f32 %v2546, %v2834
        %v2836 = vpop.f32.mrb[0].mxu0
        %v2837 = vpop.f32.mrb[0].mxu0
        %v2838 = vadd.f32 %v2549, %v2837
        %v2839 = vpop.f32.mrb[0].mxu0
        %2840 = vmatprep.mubr.bf16.mxu0 %v1626
        %2841 = vmatmul.mubr.bf16.gmra.mrb[0].mxu0 %v1625
        %v2842 = vpop.f32.mrb[0].mxu0
        %v2843 = vadd.f32 %v2554, %v2842
        %v2844 = vpop.f32.mrb[0].mxu0
        %v2845 = vpop.f32.mrb[0].mxu0
        %v2846 = vadd.f32 %v2557, %v2845
        %v2847 = vpop.f32.mrb[0].mxu0
        %2848 = vmatprep.mubr.bf16.mxu0 %v1634
        %2849 = vmatmul.mubr.bf16.gmra.mrb[0].mxu0 %v1633
        %v2850 = vpop.f32.mrb[0].mxu0
        %v2851 = vadd.f32 %v2562, %v2850
        %v2852 = vpop.f32.mrb[0].mxu0
        %v2853 = vpop.f32.mrb[0].mxu0
        %v2854 = vadd.f32 %v2565, %v2853
        %v2855 = vpop.f32.mrb[0].mxu0
        %2856 = vmatprep.mubr.bf16.mxu0 %v1642
        %2857 = vmatmul.mubr.bf16.gmra.mrb[0].mxu0 %v1641
        %v2858 = vpop.f32.mrb[0].mxu0
        %v2859 = vadd.f32 %v2570, %v2858
        %v2860 = vpop.f32.mrb[0].mxu0
        %v2861 = vpop.f32.mrb[0].mxu0
        %v2862 = vadd.f32 %v2573, %v2861
        %v2863 = vpop.f32.mrb[0].mxu0
        %2864 = vmatprep.mubr.bf16.mxu0 %v1650
        %2865 = vmatmul.mubr.bf16.gmra.mrb[0].mxu0 %v1649
        %v2866 = vpop.f32.mrb[0].mxu0
        %v2867 = vadd.f32 %v2578, %v2866
        %v2868 = vpop.f32.mrb[0].mxu0
        %v2869 = vpop.f32.mrb[0].mxu0
        %v2870 = vadd.f32 %v2581, %v2869
        %v2871 = vpop.f32.mrb[0].mxu0
        %2872 = vmatprep.mubr.bf16.mxu0 %v1658
        %2873 = vmatmul.mubr.bf16.gmra.mrb[0].mxu0 %v1657
        %v2874 = vpop.f32.mrb[0].mxu0
        %v2875 = vadd.f32 %v2586, %v2874
        %v2876 = vpop.f32.mrb[0].mxu0
        %v2877 = vpop.f32.mrb[0].mxu0
        %v2878 = vadd.f32 %v2589, %v2877
        %v2879 = vpop.f32.mrb[0].mxu0
        %2880 = vmatprep.mubr.bf16.mxu0 %v1666
        %2881 = vmatmul.mubr.bf16.gmra.mrb[0].mxu0 %v1665
        %v2882 = vpop.f32.mrb[0].mxu0
        %v2883 = vadd.f32 %v2594, %v2882
        %v2884 = vpop.f32.mrb[0].mxu0
        %v2885 = vpop.f32.mrb[0].mxu0
        %v2886 = vadd.f32 %v2597, %v2885
        %v2887 = vpop.f32.mrb[0].mxu0
        %2888 = vmatprep.mubr.bf16.mxu0 %v1674
        %2889 = vmatmul.mubr.bf16.gmra.mrb[0].mxu0 %v1673
        %v2890 = vpop.f32.mrb[0].mxu0
        %v2891 = vadd.f32 %v2602, %v2890
        %v2892 = vpop.f32.mrb[0].mxu0
        %v2893 = vpop.f32.mrb[0].mxu0
        %v2894 = vadd.f32 %v2605, %v2893
        %v2895 = vpop.f32.mrb[0].mxu0
        %2896 = vdwg.mxu0
        %2897 = vmatprep.subr.bf16.mxu0 0
        %2898 = vmatpush1.bf16.msra.mxu0 %v2223
        %2899 = vmatprep.subr.bf16.mxu0 0
        %2900 = vmatpush1.bf16.msra.mxu0 %v2224
        %2901 = vmatprep.subr.bf16.mxu0 0
        %2902 = vmatpush1.bf16.msra.mxu0 %v2225
        %2903 = vmatprep.subr.bf16.mxu0 0
        %2904 = vmatpush1.bf16.msra.mxu0 %v2226
        %2905 = vmatprep.subr.bf16.mxu0 0
        %2906 = vmatpush1.bf16.msra.mxu0 %v2227
        %2907 = vmatprep.subr.bf16.mxu0 0
        %2908 = vmatpush1.bf16.msra.mxu0 %v2228
        %2909 = vmatprep.subr.bf16.mxu0 0
        %2910 = vmatpush1.bf16.msra.mxu0 %v2229
        %2911 = vmatprep.subr.bf16.mxu0 0
        %2912 = vmatpush1.bf16.msra.mxu0 %v2230
        %2913 = vmatprep.subr.bf16.mxu0 0
        %2914 = vmatpush1.bf16.msra.mxu0 %v2231
        %2915 = vmatprep.subr.bf16.mxu0 0
        %2916 = vmatpush1.bf16.msra.mxu0 %v2232
        %2917 = vmatprep.subr.bf16.mxu0 0
        %2918 = vmatpush1.bf16.msra.mxu0 %v2233
        %2919 = vmatprep.subr.bf16.mxu0 0
        %2920 = vmatpush1.bf16.msra.mxu0 %v2234
        %2921 = vmatprep.subr.bf16.mxu0 0
        %2922 = vmatpush1.bf16.msra.mxu0 %v2235
        %2923 = vmatprep.subr.bf16.mxu0 0
        %2924 = vmatpush1.bf16.msra.mxu0 %v2236
        %2925 = vmatprep.subr.bf16.mxu0 0
        %2926 = vmatpush1.bf16.msra.mxu0 %v2237
        %2927 = vmatprep.subr.bf16.mxu0 0
        %2928 = vmatpush1.bf16.msra.mxu0 %v2238
        %2929 = vmatprep.mubr.bf16.mxu0 %v1428
        %2930 = vmatmul.mubr.bf16.gmra.mrb[0].mxu0 %v1427
        %v2931 = vpop.f32.mrb[0].mxu0
        %v2932 = vadd.f32 %v2643, %v2931
        %v2933 = vpop.f32.mrb[0].mxu0
        %v2934 = vpop.f32.mrb[0].mxu0
        %v2935 = vadd.f32 %v2646, %v2934
        %v2936 = vpop.f32.mrb[0].mxu0
        %2937 = vmatprep.mubr.bf16.mxu0 %v1436
        %2938 = vmatmul.mubr.bf16.gmra.mrb[0].mxu0 %v1435
        %v2939 = vpop.f32.mrb[0].mxu0
        %v2940 = vadd.f32 %v2651, %v2939
        %v2941 = vpop.f32.mrb[0].mxu0
        %v2942 = vpop.f32.mrb[0].mxu0
        %v2943 = vadd.f32 %v2654, %v2942
        %v2944 = vpop.f32.mrb[0].mxu0
        %2945 = vmatprep.mubr.bf16.mxu0 %v1444
        %2946 = vmatmul.mubr.bf16.gmra.mrb[0].mxu0 %v1443
        %v2947 = vpop.f32.mrb[0].mxu0
        %v2948 = vadd.f32 %v2659, %v2947
        %v2949 = vpop.f32.mrb[0].mxu0
        %v2950 = vpop.f32.mrb[0].mxu0
        %v2951 = vadd.f32 %v2662, %v2950
        %v2952 = vpop.f32.mrb[0].mxu0
        %2953 = vmatprep.mubr.bf16.mxu0 %v1452
        %2954 = vmatmul.mubr.bf16.gmra.mrb[0].mxu0 %v1451
        %v2955 = vpop.f32.mrb[0].mxu0
        %v2956 = vadd.f32 %v2667, %v2955
        %v2957 = vpop.f32.mrb[0].mxu0
        %v2958 = vpop.f32.mrb[0].mxu0
        %v2959 = vadd.f32 %v2670, %v2958
        %v2960 = vpop.f32.mrb[0].mxu0
        %2961 = vmatprep.mubr.bf16.mxu0 %v1460
        %2962 = vmatmul.mubr.bf16.gmra.mrb[0].mxu0 %v1459
        %v2963 = vpop.f32.mrb[0].mxu0
        %v2964 = vadd.f32 %v2675, %v2963
        %v2965 = vpop.f32.mrb[0].mxu0
        %v2966 = vpop.f32.mrb[0].mxu0
        %v2967 = vadd.f32 %v2678, %v2966
        %v2968 = vpop.f32.mrb[0].mxu0
        %2969 = vmatprep.mubr.bf16.mxu0 %v1468
        %2970 = vmatmul.mubr.bf16.gmra.mrb[0].mxu0 %v1467
        %v2971 = vpop.f32.mrb[0].mxu0
        %v2972 = vadd.f32 %v2683, %v2971
        %v2973 = vpop.f32.mrb[0].mxu0
        %v2974 = vpop.f32.mrb[0].mxu0
        %v2975 = vadd.f32 %v2686, %v2974
        %v2976 = vpop.f32.mrb[0].mxu0
        %2977 = vmatprep.mubr.bf16.mxu0 %v1476
        %2978 = vmatmul.mubr.bf16.gmra.mrb[0].mxu0 %v1475
        %v2979 = vpop.f32.mrb[0].mxu0
        %v2980 = vadd.f32 %v2691, %v2979
        %v2981 = vpop.f32.mrb[0].mxu0
        %v2982 = vpop.f32.mrb[0].mxu0
        %v2983 = vadd.f32 %v2694, %v2982
        %v2984 = vpop.f32.mrb[0].mxu0
        %2985 = vmatprep.mubr.bf16.mxu0 %v1484
        %2986 = vmatmul.mubr.bf16.gmra.mrb[0].mxu0 %v1483
        %v2987 = vpop.f32.mrb[0].mxu0
        %v2988 = vadd.f32 %v2699, %v2987
        %v2989 = vpop.f32.mrb[0].mxu0
        %v2990 = vpop.f32.mrb[0].mxu0
        %v2991 = vadd.f32 %v2702, %v2990
        %v2992 = vpop.f32.mrb[0].mxu0
        %2993 = vmatprep.mubr.bf16.mxu0 %v1492
        %2994 = vmatmul.mubr.bf16.gmra.mrb[0].mxu0 %v1491
        %v2995 = vpop.f32.mrb[0].mxu0
        %v2996 = vadd.f32 %v2707, %v2995
        %v2997 = vpop.f32.mrb[0].mxu0
        %v2998 = vpop.f32.mrb[0].mxu0
        %v2999 = vadd.f32 %v2710, %v2998
        %v3000 = vpop.f32.mrb[0].mxu0
        %3001 = vmatprep.mubr.bf16.mxu0 %v1500
        %3002 = vmatmul.mubr.bf16.gmra.mrb[0].mxu0 %v1499
        %v3003 = vpop.f32.mrb[0].mxu0
        %v3004 = vadd.f32 %v2715, %v3003
        %v3005 = vpop.f32.mrb[0].mxu0
        %v3006 = vpop.f32.mrb[0].mxu0
        %v3007 = vadd.f32 %v2718, %v3006
        %v3008 = vpop.f32.mrb[0].mxu0
        %3009 = vmatprep.mubr.bf16.mxu0 %v1508
        %3010 = vmatmul.mubr.bf16.gmra.mrb[0].mxu0 %v1507
        %v3011 = vpop.f32.mrb[0].mxu0
        %v3012 = vadd.f32 %v2723, %v3011
        %v3013 = vpop.f32.mrb[0].mxu0
        %v3014 = vpop.f32.mrb[0].mxu0
        %v3015 = vadd.f32 %v2726, %v3014
        %v3016 = vpop.f32.mrb[0].mxu0
        %3017 = vmatprep.mubr.bf16.mxu0 %v1516
        %3018 = vmatmul.mubr.bf16.gmra.mrb[0].mxu0 %v1515
        %v3019 = vpop.f32.mrb[0].mxu0
        %v3020 = vadd.f32 %v2731, %v3019
        %v3021 = vpop.f32.mrb[0].mxu0
        %v3022 = vpop.f32.mrb[0].mxu0
        %v3023 = vadd.f32 %v2734, %v3022
        %v3024 = vpop.f32.mrb[0].mxu0
        %3025 = vmatprep.mubr.bf16.mxu0 %v1524
        %3026 = vmatmul.mubr.bf16.gmra.mrb[0].mxu0 %v1523
        %v3027 = vpop.f32.mrb[0].mxu0
        %v3028 = vadd.f32 %v2739, %v3027
        %v3029 = vpop.f32.mrb[0].mxu0
        %v3030 = vpop.f32.mrb[0].mxu0
        %v3031 = vadd.f32 %v2742, %v3030
        %v3032 = vpop.f32.mrb[0].mxu0
        %3033 = vmatprep.mubr.bf16.mxu0 %v1532
        %3034 = vmatmul.mubr.bf16.gmra.mrb[0].mxu0 %v1531
        %v3035 = vpop.f32.mrb[0].mxu0
        %v3036 = vadd.f32 %v2747, %v3035
        %v3037 = vpop.f32.mrb[0].mxu0
        %v3038 = vpop.f32.mrb[0].mxu0
        %v3039 = vadd.f32 %v2750, %v3038
        %v3040 = vpop.f32.mrb[0].mxu0
        %3041 = vmatprep.mubr.bf16.mxu0 %v1540
        %3042 = vmatmul.mubr.bf16.gmra.mrb[0].mxu0 %v1539
        %v3043 = vpop.f32.mrb[0].mxu0
        %v3044 = vadd.f32 %v2755, %v3043
        %v3045 = vpop.f32.mrb[0].mxu0
        %v3046 = vpop.f32.mrb[0].mxu0
        %v3047 = vadd.f32 %v2758, %v3046
        %v3048 = vpop.f32.mrb[0].mxu0
        %3049 = vmatprep.mubr.bf16.mxu0 %v1548
        %3050 = vmatmul.mubr.bf16.gmra.mrb[0].mxu0 %v1547
        %v3051 = vpop.f32.mrb[0].mxu0
        %v3052 = vadd.f32 %v2763, %v3051
        %v3053 = vpop.f32.mrb[0].mxu0
        %v3054 = vpop.f32.mrb[0].mxu0
        %v3055 = vadd.f32 %v2766, %v3054
        %v3056 = vpop.f32.mrb[0].mxu0
        %3057 = vmatprep.mubr.bf16.mxu0 %v1556
        %3058 = vmatmul.mubr.bf16.gmra.mrb[0].mxu0 %v1555
        %v3059 = vpop.f32.mrb[0].mxu0
        %v3060 = vadd.f32 %v2771, %v3059
        %v3061 = vpop.f32.mrb[0].mxu0
        %v3062 = vpop.f32.mrb[0].mxu0
        %v3063 = vadd.f32 %v2774, %v3062
        %v3064 = vpop.f32.mrb[0].mxu0
        %3065 = vmatprep.mubr.bf16.mxu0 %v1564
        %3066 = vmatmul.mubr.bf16.gmra.mrb[0].mxu0 %v1563
        %v3067 = vpop.f32.mrb[0].mxu0
        %v3068 = vadd.f32 %v2779, %v3067
        %v3069 = vpop.f32.mrb[0].mxu0
        %v3070 = vpop.f32.mrb[0].mxu0
        %v3071 = vadd.f32 %v2782, %v3070
        %v3072 = vpop.f32.mrb[0].mxu0
        %3073 = vmatprep.mubr.bf16.mxu0 %v1572
        %3074 = vmatmul.mubr.bf16.gmra.mrb[0].mxu0 %v1571
        %v3075 = vpop.f32.mrb[0].mxu0
        %v3076 = vadd.f32 %v2787, %v3075
        %v3077 = vpop.f32.mrb[0].mxu0
        %v3078 = vpop.f32.mrb[0].mxu0
        %v3079 = vadd.f32 %v2790, %v3078
        %v3080 = vpop.f32.mrb[0].mxu0
        %3081 = vmatprep.mubr.bf16.mxu0 %v1580
        %3082 = vmatmul.mubr.bf16.gmra.mrb[0].mxu0 %v1579
        %v3083 = vpop.f32.mrb[0].mxu0
        %v3084 = vadd.f32 %v2795, %v3083
        %v3085 = vpop.f32.mrb[0].mxu0
        %v3086 = vpop.f32.mrb[0].mxu0
        %v3087 = vadd.f32 %v2798, %v3086
        %v3088 = vpop.f32.mrb[0].mxu0
        %3089 = vmatprep.mubr.bf16.mxu0 %v1588
        %3090 = vmatmul.mubr.bf16.gmra.mrb[0].mxu0 %v1587
        %v3091 = vpop.f32.mrb[0].mxu0
        %v3092 = vadd.f32 %v2803, %v3091
        %v3093 = vpop.f32.mrb[0].mxu0
        %v3094 = vpop.f32.mrb[0].mxu0
        %v3095 = vadd.f32 %v2806, %v3094
        %v3096 = vpop.f32.mrb[0].mxu0
        %3097 = vmatprep.mubr.bf16.mxu0 %v1596
        %3098 = vmatmul.mubr.bf16.gmra.mrb[0].mxu0 %v1595
        %v3099 = vpop.f32.mrb[0].mxu0
        %v3100 = vadd.f32 %v2811, %v3099
        %v3101 = vpop.f32.mrb[0].mxu0
        %v3102 = vpop.f32.mrb[0].mxu0
        %v3103 = vadd.f32 %v2814, %v3102
        %v3104 = vpop.f32.mrb[0].mxu0
        %3105 = vmatprep.mubr.bf16.mxu0 %v1604
        %3106 = vmatmul.mubr.bf16.gmra.mrb[0].mxu0 %v1603
        %v3107 = vpop.f32.mrb[0].mxu0
        %v3108 = vadd.f32 %v2819, %v3107
        %v3109 = vpop.f32.mrb[0].mxu0
        %v3110 = vpop.f32.mrb[0].mxu0
        %v3111 = vadd.f32 %v2822, %v3110
        %v3112 = vpop.f32.mrb[0].mxu0
        %3113 = vmatprep.mubr.bf16.mxu0 %v1612
        %3114 = vmatmul.mubr.bf16.gmra.mrb[0].mxu0 %v1611
        %v3115 = vpop.f32.mrb[0].mxu0
        %v3116 = vadd.f32 %v2827, %v3115
        %v3117 = vpop.f32.mrb[0].mxu0
        %v3118 = vpop.f32.mrb[0].mxu0
        %v3119 = vadd.f32 %v2830, %v3118
        %v3120 = vpop.f32.mrb[0].mxu0
        %3121 = vmatprep.mubr.bf16.mxu0 %v1620
        %3122 = vmatmul.mubr.bf16.gmra.mrb[0].mxu0 %v1619
        %v3123 = vpop.f32.mrb[0].mxu0
        %v3124 = vadd.f32 %v2835, %v3123
        %v3125 = vpop.f32.mrb[0].mxu0
        %v3126 = vpop.f32.mrb[0].mxu0
        %v3127 = vadd.f32 %v2838, %v3126
        %v3128 = vpop.f32.mrb[0].mxu0
        %3129 = vmatprep.mubr.bf16.mxu0 %v1628
        %3130 = vmatmul.mubr.bf16.gmra.mrb[0].mxu0 %v1627
        %v3131 = vpop.f32.mrb[0].mxu0
        %v3132 = vadd.f32 %v2843, %v3131
        %v3133 = vpop.f32.mrb[0].mxu0
        %v3134 = vpop.f32.mrb[0].mxu0
        %v3135 = vadd.f32 %v2846, %v3134
        %v3136 = vpop.f32.mrb[0].mxu0
        %3137 = vmatprep.mubr.bf16.mxu0 %v1636
        %3138 = vmatmul.mubr.bf16.gmra.mrb[0].mxu0 %v1635
        %v3139 = vpop.f32.mrb[0].mxu0
        %v3140 = vadd.f32 %v2851, %v3139
        %v3141 = vpop.f32.mrb[0].mxu0
        %v3142 = vpop.f32.mrb[0].mxu0
        %v3143 = vadd.f32 %v2854, %v3142
        %v3144 = vpop.f32.mrb[0].mxu0
        %3145 = vmatprep.mubr.bf16.mxu0 %v1644
        %3146 = vmatmul.mubr.bf16.gmra.mrb[0].mxu0 %v1643
        %v3147 = vpop.f32.mrb[0].mxu0
        %v3148 = vadd.f32 %v2859, %v3147
        %v3149 = vpop.f32.mrb[0].mxu0
        %v3150 = vpop.f32.mrb[0].mxu0
        %v3151 = vadd.f32 %v2862, %v3150
        %v3152 = vpop.f32.mrb[0].mxu0
        %3153 = vmatprep.mubr.bf16.mxu0 %v1652
        %3154 = vmatmul.mubr.bf16.gmra.mrb[0].mxu0 %v1651
        %v3155 = vpop.f32.mrb[0].mxu0
        %v3156 = vadd.f32 %v2867, %v3155
        %v3157 = vpop.f32.mrb[0].mxu0
        %v3158 = vpop.f32.mrb[0].mxu0
        %v3159 = vadd.f32 %v2870, %v3158
        %v3160 = vpop.f32.mrb[0].mxu0
        %3161 = vmatprep.mubr.bf16.mxu0 %v1660
        %3162 = vmatmul.mubr.bf16.gmra.mrb[0].mxu0 %v1659
        %v3163 = vpop.f32.mrb[0].mxu0
        %v3164 = vadd.f32 %v2875, %v3163
        %v3165 = vpop.f32.mrb[0].mxu0
        %v3166 = vpop.f32.mrb[0].mxu0
        %v3167 = vadd.f32 %v2878, %v3166
        %v3168 = vpop.f32.mrb[0].mxu0
        %3169 = vmatprep.mubr.bf16.mxu0 %v1668
        %3170 = vmatmul.mubr.bf16.gmra.mrb[0].mxu0 %v1667
        %v3171 = vpop.f32.mrb[0].mxu0
        %v3172 = vadd.f32 %v2883, %v3171
        %v3173 = vpop.f32.mrb[0].mxu0
        %v3174 = vpop.f32.mrb[0].mxu0
        %v3175 = vadd.f32 %v2886, %v3174
        %v3176 = vpop.f32.mrb[0].mxu0
        %3177 = vmatprep.mubr.bf16.mxu0 %v1676
        %3178 = vmatmul.mubr.bf16.gmra.mrb[0].mxu0 %v1675
        %v3179 = vpop.f32.mrb[0].mxu0
        %v3180 = vadd.f32 %v2891, %v3179
        %v3181 = vpop.f32.mrb[0].mxu0
        %v3182 = vpop.f32.mrb[0].mxu0
        %v3183 = vadd.f32 %v2894, %v3182
        %v3184 = vpop.f32.mrb[0].mxu0
        %3185 = vdwg.mxu0
        %3186 = vmatprep.subr.bf16.mxu0 0
        %3187 = vmatpush1.bf16.msra.mxu0 %v2239
        %3188 = vmatprep.subr.bf16.mxu0 0
        %3189 = vmatpush1.bf16.msra.mxu0 %v2240
        %3190 = vmatprep.subr.bf16.mxu0 0
        %3191 = vmatpush1.bf16.msra.mxu0 %v2241
        %3192 = vmatprep.subr.bf16.mxu0 0
        %3193 = vmatpush1.bf16.msra.mxu0 %v2242
        %3194 = vmatprep.subr.bf16.mxu0 0
        %3195 = vmatpush1.bf16.msra.mxu0 %v2243
        %3196 = vmatprep.subr.bf16.mxu0 0
        %3197 = vmatpush1.bf16.msra.mxu0 %v2244
        %3198 = vmatprep.subr.bf16.mxu0 0
        %3199 = vmatpush1.bf16.msra.mxu0 %v2245
        %3200 = vmatprep.subr.bf16.mxu0 0
        %3201 = vmatpush1.bf16.msra.mxu0 %v2246
        %3202 = vmatprep.subr.bf16.mxu0 0
        %3203 = vmatpush1.bf16.msra.mxu0 %v2247
        %3204 = vmatprep.subr.bf16.mxu0 0
        %3205 = vmatpush1.bf16.msra.mxu0 %v2248
        %3206 = vmatprep.subr.bf16.mxu0 0
        %3207 = vmatpush1.bf16.msra.mxu0 %v2249
        %3208 = vmatprep.subr.bf16.mxu0 0
        %3209 = vmatpush1.bf16.msra.mxu0 %v2250
        %3210 = vmatprep.subr.bf16.mxu0 0
        %3211 = vmatpush1.bf16.msra.mxu0 %v2251
        %3212 = vmatprep.subr.bf16.mxu0 0
        %3213 = vmatpush1.bf16.msra.mxu0 %v2252
        %3214 = vmatprep.subr.bf16.mxu0 0
        %3215 = vmatpush1.bf16.msra.mxu0 %v2253
        %3216 = vmatprep.subr.bf16.mxu0 0
        %3217 = vmatpush1.bf16.msra.mxu0 %v2254
        %3218 = vmatprep.mubr.bf16.mxu0 %v1430
        %3219 = vmatmul.mubr.bf16.gmra.mrb[0].mxu0 %v1429
        %v3220 = vpop.f32.mrb[0].mxu0
        %v3221 = vadd.f32 %v2932, %v3220
        %v3222 = vpop.f32.mrb[0].mxu0
        %v3223 = vpop.f32.mrb[0].mxu0
        %v3224 = vadd.f32 %v2935, %v3223
        %v3225 = vpop.f32.mrb[0].mxu0
        %3226 = vmatprep.mubr.bf16.mxu0 %v1438
        %3227 = vmatmul.mubr.bf16.gmra.mrb[0].mxu0 %v1437
        %v3228 = vpop.f32.mrb[0].mxu0
        %v3229 = vadd.f32 %v2940, %v3228
        %v3230 = vpop.f32.mrb[0].mxu0
        %v3231 = vpop.f32.mrb[0].mxu0
        %v3232 = vadd.f32 %v2943, %v3231
        %v3233 = vpop.f32.mrb[0].mxu0
        %3234 = vmatprep.mubr.bf16.mxu0 %v1446
        %3235 = vmatmul.mubr.bf16.gmra.mrb[0].mxu0 %v1445
        %v3236 = vpop.f32.mrb[0].mxu0
        %v3237 = vadd.f32 %v2948, %v3236
        %v3238 = vpop.f32.mrb[0].mxu0
        %v3239 = vpop.f32.mrb[0].mxu0
        %v3240 = vadd.f32 %v2951, %v3239
        %v3241 = vpop.f32.mrb[0].mxu0
        %3242 = vmatprep.mubr.bf16.mxu0 %v1454
        %3243 = vmatmul.mubr.bf16.gmra.mrb[0].mxu0 %v1453
        %v3244 = vpop.f32.mrb[0].mxu0
        %v3245 = vadd.f32 %v2956, %v3244
        %v3246 = vpop.f32.mrb[0].mxu0
        %v3247 = vpop.f32.mrb[0].mxu0
        %v3248 = vadd.f32 %v2959, %v3247
        %v3249 = vpop.f32.mrb[0].mxu0
        %3250 = vmatprep.mubr.bf16.mxu0 %v1462
        %3251 = vmatmul.mubr.bf16.gmra.mrb[0].mxu0 %v1461
        %v3252 = vpop.f32.mrb[0].mxu0
        %v3253 = vadd.f32 %v2964, %v3252
        %v3254 = vpop.f32.mrb[0].mxu0
        %v3255 = vpop.f32.mrb[0].mxu0
        %v3256 = vadd.f32 %v2967, %v3255
        %v3257 = vpop.f32.mrb[0].mxu0
        %3258 = vmatprep.mubr.bf16.mxu0 %v1470
        %3259 = vmatmul.mubr.bf16.gmra.mrb[0].mxu0 %v1469
        %v3260 = vpop.f32.mrb[0].mxu0
        %v3261 = vadd.f32 %v2972, %v3260
        %v3262 = vpop.f32.mrb[0].mxu0
        %v3263 = vpop.f32.mrb[0].mxu0
        %v3264 = vadd.f32 %v2975, %v3263
        %v3265 = vpop.f32.mrb[0].mxu0
        %3266 = vmatprep.mubr.bf16.mxu0 %v1478
        %3267 = vmatmul.mubr.bf16.gmra.mrb[0].mxu0 %v1477
        %v3268 = vpop.f32.mrb[0].mxu0
        %v3269 = vadd.f32 %v2980, %v3268
        %v3270 = vpop.f32.mrb[0].mxu0
        %v3271 = vpop.f32.mrb[0].mxu0
        %v3272 = vadd.f32 %v2983, %v3271
        %v3273 = vpop.f32.mrb[0].mxu0
        %3274 = vmatprep.mubr.bf16.mxu0 %v1486
        %3275 = vmatmul.mubr.bf16.gmra.mrb[0].mxu0 %v1485
        %v3276 = vpop.f32.mrb[0].mxu0
        %v3277 = vadd.f32 %v2988, %v3276
        %v3278 = vpop.f32.mrb[0].mxu0
        %v3279 = vpop.f32.mrb[0].mxu0
        %v3280 = vadd.f32 %v2991, %v3279
        %v3281 = vpop.f32.mrb[0].mxu0
        %3282 = vmatprep.mubr.bf16.mxu0 %v1494
        %3283 = vmatmul.mubr.bf16.gmra.mrb[0].mxu0 %v1493
        %v3284 = vpop.f32.mrb[0].mxu0
        %v3285 = vadd.f32 %v2996, %v3284
        %v3286 = vpop.f32.mrb[0].mxu0
        %v3287 = vpop.f32.mrb[0].mxu0
        %v3288 = vadd.f32 %v2999, %v3287
        %v3289 = vpop.f32.mrb[0].mxu0
        %3290 = vmatprep.mubr.bf16.mxu0 %v1502
        %3291 = vmatmul.mubr.bf16.gmra.mrb[0].mxu0 %v1501
        %v3292 = vpop.f32.mrb[0].mxu0
        %v3293 = vadd.f32 %v3004, %v3292
        %v3294 = vpop.f32.mrb[0].mxu0
        %v3295 = vpop.f32.mrb[0].mxu0
        %v3296 = vadd.f32 %v3007, %v3295
        %v3297 = vpop.f32.mrb[0].mxu0
        %3298 = vmatprep.mubr.bf16.mxu0 %v1510
        %3299 = vmatmul.mubr.bf16.gmra.mrb[0].mxu0 %v1509
        %v3300 = vpop.f32.mrb[0].mxu0
        %v3301 = vadd.f32 %v3012, %v3300
        %v3302 = vpop.f32.mrb[0].mxu0
        %v3303 = vpop.f32.mrb[0].mxu0
        %v3304 = vadd.f32 %v3015, %v3303
        %v3305 = vpop.f32.mrb[0].mxu0
        %3306 = vmatprep.mubr.bf16.mxu0 %v1518
        %3307 = vmatmul.mubr.bf16.gmra.mrb[0].mxu0 %v1517
        %v3308 = vpop.f32.mrb[0].mxu0
        %v3309 = vadd.f32 %v3020, %v3308
        %v3310 = vpop.f32.mrb[0].mxu0
        %v3311 = vpop.f32.mrb[0].mxu0
        %v3312 = vadd.f32 %v3023, %v3311
        %v3313 = vpop.f32.mrb[0].mxu0
        %3314 = vmatprep.mubr.bf16.mxu0 %v1526
        %3315 = vmatmul.mubr.bf16.gmra.mrb[0].mxu0 %v1525
        %v3316 = vpop.f32.mrb[0].mxu0
        %v3317 = vadd.f32 %v3028, %v3316
        %v3318 = vpop.f32.mrb[0].mxu0
        %v3319 = vpop.f32.mrb[0].mxu0
        %v3320 = vadd.f32 %v3031, %v3319
        %v3321 = vpop.f32.mrb[0].mxu0
        %3322 = vmatprep.mubr.bf16.mxu0 %v1534
        %3323 = vmatmul.mubr.bf16.gmra.mrb[0].mxu0 %v1533
        %v3324 = vpop.f32.mrb[0].mxu0
        %v3325 = vadd.f32 %v3036, %v3324
        %v3326 = vpop.f32.mrb[0].mxu0
        %v3327 = vpop.f32.mrb[0].mxu0
        %v3328 = vadd.f32 %v3039, %v3327
        %v3329 = vpop.f32.mrb[0].mxu0
        %3330 = vmatprep.mubr.bf16.mxu0 %v1542
        %3331 = vmatmul.mubr.bf16.gmra.mrb[0].mxu0 %v1541
        %v3332 = vpop.f32.mrb[0].mxu0
        %v3333 = vadd.f32 %v3044, %v3332
        %v3334 = vpop.f32.mrb[0].mxu0
        %v3335 = vpop.f32.mrb[0].mxu0
        %v3336 = vadd.f32 %v3047, %v3335
        %v3337 = vpop.f32.mrb[0].mxu0
        %3338 = vmatprep.mubr.bf16.mxu0 %v1550
        %3339 = vmatmul.mubr.bf16.gmra.mrb[0].mxu0 %v1549
        %v3340 = vpop.f32.mrb[0].mxu0
        %v3341 = vadd.f32 %v3052, %v3340
        %v3342 = vpop.f32.mrb[0].mxu0
        %v3343 = vpop.f32.mrb[0].mxu0
        %v3344 = vadd.f32 %v3055, %v3343
        %v3345 = vpop.f32.mrb[0].mxu0
        %3346 = vmatprep.mubr.bf16.mxu0 %v1558
        %3347 = vmatmul.mubr.bf16.gmra.mrb[0].mxu0 %v1557
        %v3348 = vpop.f32.mrb[0].mxu0
        %v3349 = vadd.f32 %v3060, %v3348
        %v3350 = vpop.f32.mrb[0].mxu0
        %v3351 = vpop.f32.mrb[0].mxu0
        %v3352 = vadd.f32 %v3063, %v3351
        %v3353 = vpop.f32.mrb[0].mxu0
        %3354 = vmatprep.mubr.bf16.mxu0 %v1566
        %3355 = vmatmul.mubr.bf16.gmra.mrb[0].mxu0 %v1565
        %v3356 = vpop.f32.mrb[0].mxu0
        %v3357 = vadd.f32 %v3068, %v3356
        %v3358 = vpop.f32.mrb[0].mxu0
        %v3359 = vpop.f32.mrb[0].mxu0
        %v3360 = vadd.f32 %v3071, %v3359
        %v3361 = vpop.f32.mrb[0].mxu0
        %3362 = vmatprep.mubr.bf16.mxu0 %v1574
        %3363 = vmatmul.mubr.bf16.gmra.mrb[0].mxu0 %v1573
        %v3364 = vpop.f32.mrb[0].mxu0
        %v3365 = vadd.f32 %v3076, %v3364
        %v3366 = vpop.f32.mrb[0].mxu0
        %v3367 = vpop.f32.mrb[0].mxu0
        %v3368 = vadd.f32 %v3079, %v3367
        %v3369 = vpop.f32.mrb[0].mxu0
        %3370 = vmatprep.mubr.bf16.mxu0 %v1582
        %3371 = vmatmul.mubr.bf16.gmra.mrb[0].mxu0 %v1581
        %v3372 = vpop.f32.mrb[0].mxu0
        %v3373 = vadd.f32 %v3084, %v3372
        %v3374 = vpop.f32.mrb[0].mxu0
        %v3375 = vpop.f32.mrb[0].mxu0
        %v3376 = vadd.f32 %v3087, %v3375
        %v3377 = vpop.f32.mrb[0].mxu0
        %3378 = vmatprep.mubr.bf16.mxu0 %v1590
        %3379 = vmatmul.mubr.bf16.gmra.mrb[0].mxu0 %v1589
        %v3380 = vpop.f32.mrb[0].mxu0
        %v3381 = vadd.f32 %v3092, %v3380
        %v3382 = vpop.f32.mrb[0].mxu0
        %v3383 = vpop.f32.mrb[0].mxu0
        %v3384 = vadd.f32 %v3095, %v3383
        %v3385 = vpop.f32.mrb[0].mxu0
        %3386 = vmatprep.mubr.bf16.mxu0 %v1598
        %3387 = vmatmul.mubr.bf16.gmra.mrb[0].mxu0 %v1597
        %v3388 = vpop.f32.mrb[0].mxu0
        %v3389 = vadd.f32 %v3100, %v3388
        %v3390 = vpop.f32.mrb[0].mxu0
        %v3391 = vpop.f32.mrb[0].mxu0
        %v3392 = vadd.f32 %v3103, %v3391
        %v3393 = vpop.f32.mrb[0].mxu0
        %3394 = vmatprep.mubr.bf16.mxu0 %v1606
        %3395 = vmatmul.mubr.bf16.gmra.mrb[0].mxu0 %v1605
        %v3396 = vpop.f32.mrb[0].mxu0
        %v3397 = vadd.f32 %v3108, %v3396
        %v3398 = vpop.f32.mrb[0].mxu0
        %v3399 = vpop.f32.mrb[0].mxu0
        %v3400 = vadd.f32 %v3111, %v3399
        %v3401 = vpop.f32.mrb[0].mxu0
        %3402 = vmatprep.mubr.bf16.mxu0 %v1614
        %3403 = vmatmul.mubr.bf16.gmra.mrb[0].mxu0 %v1613
        %v3404 = vpop.f32.mrb[0].mxu0
        %v3405 = vadd.f32 %v3116, %v3404
        %v3406 = vpop.f32.mrb[0].mxu0
        %v3407 = vpop.f32.mrb[0].mxu0
        %v3408 = vadd.f32 %v3119, %v3407
        %v3409 = vpop.f32.mrb[0].mxu0
        %3410 = vmatprep.mubr.bf16.mxu0 %v1622
        %3411 = vmatmul.mubr.bf16.gmra.mrb[0].mxu0 %v1621
        %v3412 = vpop.f32.mrb[0].mxu0
        %v3413 = vadd.f32 %v3124, %v3412
        %v3414 = vpop.f32.mrb[0].mxu0
        %v3415 = vpop.f32.mrb[0].mxu0
        %v3416 = vadd.f32 %v3127, %v3415
        %v3417 = vpop.f32.mrb[0].mxu0
        %3418 = vmatprep.mubr.bf16.mxu0 %v1630
        %3419 = vmatmul.mubr.bf16.gmra.mrb[0].mxu0 %v1629
        %v3420 = vpop.f32.mrb[0].mxu0
        %v3421 = vadd.f32 %v3132, %v3420
        %v3422 = vpop.f32.mrb[0].mxu0
        %v3423 = vpop.f32.mrb[0].mxu0
        %v3424 = vadd.f32 %v3135, %v3423
        %v3425 = vpop.f32.mrb[0].mxu0
        %3426 = vmatprep.mubr.bf16.mxu0 %v1638
        %3427 = vmatmul.mubr.bf16.gmra.mrb[0].mxu0 %v1637
        %v3428 = vpop.f32.mrb[0].mxu0
        %v3429 = vadd.f32 %v3140, %v3428
        %v3430 = vpop.f32.mrb[0].mxu0
        %v3431 = vpop.f32.mrb[0].mxu0
        %v3432 = vadd.f32 %v3143, %v3431
        %v3433 = vpop.f32.mrb[0].mxu0
        %3434 = vmatprep.mubr.bf16.mxu0 %v1646
        %3435 = vmatmul.mubr.bf16.gmra.mrb[0].mxu0 %v1645
        %v3436 = vpop.f32.mrb[0].mxu0
        %v3437 = vadd.f32 %v3148, %v3436
        %v3438 = vpop.f32.mrb[0].mxu0
        %v3439 = vpop.f32.mrb[0].mxu0
        %v3440 = vadd.f32 %v3151, %v3439
        %v3441 = vpop.f32.mrb[0].mxu0
        %3442 = vmatprep.mubr.bf16.mxu0 %v1654
        %3443 = vmatmul.mubr.bf16.gmra.mrb[0].mxu0 %v1653
        %v3444 = vpop.f32.mrb[0].mxu0
        %v3445 = vadd.f32 %v3156, %v3444
        %v3446 = vpop.f32.mrb[0].mxu0
        %v3447 = vpop.f32.mrb[0].mxu0
        %v3448 = vadd.f32 %v3159, %v3447
        %v3449 = vpop.f32.mrb[0].mxu0
        %3450 = vmatprep.mubr.bf16.mxu0 %v1662
        %3451 = vmatmul.mubr.bf16.gmra.mrb[0].mxu0 %v1661
        %v3452 = vpop.f32.mrb[0].mxu0
        %v3453 = vadd.f32 %v3164, %v3452
        %v3454 = vpop.f32.mrb[0].mxu0
        %v3455 = vpop.f32.mrb[0].mxu0
        %v3456 = vadd.f32 %v3167, %v3455
        %v3457 = vpop.f32.mrb[0].mxu0
        %3458 = vmatprep.mubr.bf16.mxu0 %v1670
        %3459 = vmatmul.mubr.bf16.gmra.mrb[0].mxu0 %v1669
        %v3460 = vpop.f32.mrb[0].mxu0
        %v3461 = vadd.f32 %v3172, %v3460
        %v3462 = vpop.f32.mrb[0].mxu0
        %v3463 = vpop.f32.mrb[0].mxu0
        %v3464 = vadd.f32 %v3175, %v3463
        %v3465 = vpop.f32.mrb[0].mxu0
        %3466 = vmatprep.mubr.bf16.mxu0 %v1678
        %3467 = vmatmul.mubr.bf16.gmra.mrb[0].mxu0 %v1677
        %v3468 = vpop.f32.mrb[0].mxu0
        %v3469 = vadd.f32 %v3180, %v3468
        %v3470 = vpop.f32.mrb[0].mxu0
        %v3471 = vpop.f32.mrb[0].mxu0
        %v3472 = vadd.f32 %v3183, %v3471
        %v3473 = vpop.f32.mrb[0].mxu0
        %3474 = vdwg.mxu0
        %v3475 = vmax.f32 %v3221, 0.0
        %v3476 = vmax.f32 %v3224, 0.0
        %v3477 = vmax.f32 %v3229, 0.0
        %v3478 = vmax.f32 %v3232, 0.0
        %v3479 = vmax.f32 %v3237, 0.0
        %v3480 = vmax.f32 %v3240, 0.0
        %v3481 = vmax.f32 %v3245, 0.0
        %v3482 = vmax.f32 %v3248, 0.0
        %v3483 = vmax.f32 %v3253, 0.0
        %v3484 = vmax.f32 %v3256, 0.0
        %v3485 = vmax.f32 %v3261, 0.0
        %v3486 = vmax.f32 %v3264, 0.0
        %v3487 = vmax.f32 %v3269, 0.0
        %v3488 = vmax.f32 %v3272, 0.0
        %v3489 = vmax.f32 %v3277, 0.0
        %v3490 = vmax.f32 %v3280, 0.0
        %v3491 = vmax.f32 %v3285, 0.0
        %v3492 = vmax.f32 %v3288, 0.0
        %v3493 = vmax.f32 %v3293, 0.0
        %v3494 = vmax.f32 %v3296, 0.0
        %v3495 = vmax.f32 %v3301, 0.0
        %v3496 = vmax.f32 %v3304, 0.0
        %v3497 = vmax.f32 %v3309, 0.0
        %v3498 = vmax.f32 %v3312, 0.0
        %v3499 = vmax.f32 %v3317, 0.0
        %v3500 = vmax.f32 %v3320, 0.0
        %v3501 = vmax.f32 %v3325, 0.0
        %v3502 = vmax.f32 %v3328, 0.0
        %v3503 = vmax.f32 %v3333, 0.0
        %v3504 = vmax.f32 %v3336, 0.0
        %v3505 = vmax.f32 %v3341, 0.0
        %v3506 = vmax.f32 %v3344, 0.0
        %v3507 = vmax.f32 %v3349, 0.0
        %v3508 = vmax.f32 %v3352, 0.0
        %v3509 = vmax.f32 %v3357, 0.0
        %v3510 = vmax.f32 %v3360, 0.0
        %v3511 = vmax.f32 %v3365, 0.0
        %v3512 = vmax.f32 %v3368, 0.0
        %v3513 = vmax.f32 %v3373, 0.0
        %v3514 = vmax.f32 %v3376, 0.0
        %v3515 = vmax.f32 %v3381, 0.0
        %v3516 = vmax.f32 %v3384, 0.0
        %v3517 = vmax.f32 %v3389, 0.0
        %v3518 = vmax.f32 %v3392, 0.0
        %v3519 = vmax.f32 %v3397, 0.0
        %v3520 = vmax.f32 %v3400, 0.0
        %v3521 = vmax.f32 %v3405, 0.0
        %v3522 = vmax.f32 %v3408, 0.0
        %v3523 = vmax.f32 %v3413, 0.0
        %v3524 = vmax.f32 %v3416, 0.0
        %v3525 = vmax.f32 %v3421, 0.0
        %v3526 = vmax.f32 %v3424, 0.0
        %v3527 = vmax.f32 %v3429, 0.0
        %v3528 = vmax.f32 %v3432, 0.0
        %v3529 = vmax.f32 %v3437, 0.0
        %v3530 = vmax.f32 %v3440, 0.0
        %v3531 = vmax.f32 %v3445, 0.0
        %v3532 = vmax.f32 %v3448, 0.0
        %v3533 = vmax.f32 %v3453, 0.0
        %v3534 = vmax.f32 %v3456, 0.0
        %v3535 = vmax.f32 %v3461, 0.0
        %v3536 = vmax.f32 %v3464, 0.0
        %v3537 = vmax.f32 %v3469, 0.0
        %v3538 = vmax.f32 %v3472, 0.0
        %v3539 = vpack.c.bf16 %v3476, %v3475
        %v3540 = vpack.c.bf16 %v3478, %v3477
        %v3541 = vpack.c.bf16 %v3480, %v3479
        %v3542 = vpack.c.bf16 %v3482, %v3481
        %v3543 = vpack.c.bf16 %v3484, %v3483
        %v3544 = vpack.c.bf16 %v3486, %v3485
        %v3545 = vpack.c.bf16 %v3488, %v3487
        %v3546 = vpack.c.bf16 %v3490, %v3489
        %v3547 = vpack.c.bf16 %v3492, %v3491
        %v3548 = vpack.c.bf16 %v3494, %v3493
        %v3549 = vpack.c.bf16 %v3496, %v3495
        %v3550 = vpack.c.bf16 %v3498, %v3497
        %v3551 = vpack.c.bf16 %v3500, %v3499
        %v3552 = vpack.c.bf16 %v3502, %v3501
        %v3553 = vpack.c.bf16 %v3504, %v3503
        %v3554 = vpack.c.bf16 %v3506, %v3505
        %v3555 = vpack.c.bf16 %v3508, %v3507
        %v3556 = vpack.c.bf16 %v3510, %v3509
        %v3557 = vpack.c.bf16 %v3512, %v3511
        %v3558 = vpack.c.bf16 %v3514, %v3513
        %v3559 = vpack.c.bf16 %v3516, %v3515
        %v3560 = vpack.c.bf16 %v3518, %v3517
        %v3561 = vpack.c.bf16 %v3520, %v3519
        %v3562 = vpack.c.bf16 %v3522, %v3521
        %v3563 = vpack.c.bf16 %v3524, %v3523
        %v3564 = vpack.c.bf16 %v3526, %v3525
        %v3565 = vpack.c.bf16 %v3528, %v3527
        %v3566 = vpack.c.bf16 %v3530, %v3529
        %v3567 = vpack.c.bf16 %v3532, %v3531
        %v3568 = vpack.c.bf16 %v3534, %v3533
        %v3569 = vpack.c.bf16 %v3536, %v3535
        %v3570 = vpack.c.bf16 %v3538, %v3537
        %v3571 = vld [vmem:[#allocation6] sm:$0xf]
        %v3572 = vld [vmem:[#allocation6 + $0x4] sm:$0xf]
        %v3573 = vld [vmem:[#allocation6 + $0x8] sm:$0xf]
        %v3574 = vld [vmem:[#allocation6 + $0xc] sm:$0xf]
        %v3575 = vld [vmem:[#allocation6 + $0x10] sm:$0xf]
        %v3576 = vld [vmem:[#allocation6 + $0x14] sm:$0xf]
        %v3577 = vld [vmem:[#allocation6 + $0x18] sm:$0xf]
        %v3578 = vld [vmem:[#allocation6 + $0x1c] sm:$0xf]
        %v3579 = vld [vmem:[#allocation6 + $0x20] sm:$0xf]
        %v3580 = vld [vmem:[#allocation6 + $0x24] sm:$0xf]
        %v3581 = vld [vmem:[#allocation6 + $0x28] sm:$0xf]
        %v3582 = vld [vmem:[#allocation6 + $0x2c] sm:$0xf]
        %v3583 = vld [vmem:[#allocation6 + $0x30] sm:$0xf]
        %v3584 = vld [vmem:[#allocation6 + $0x34] sm:$0xf]
        %v3585 = vld [vmem:[#allocation6 + $0x38] sm:$0xf]
        %v3586 = vld [vmem:[#allocation6 + $0x3c] sm:$0xf]
        %v3603 = vunpack.c.l.b16 %v3571
        %v3604 = vunpack.c.l.b16 %v3572
        %v3605 = vunpack.c.l.b16 %v3573
        %v3606 = vunpack.c.l.b16 %v3574
        %v3607 = vunpack.c.l.b16 %v3575
        %v3608 = vunpack.c.l.b16 %v3576
        %v3609 = vunpack.c.l.b16 %v3577
        %v3610 = vunpack.c.l.b16 %v3578
        %v3611 = vunpack.c.l.b16 %v3579
        %v3612 = vunpack.c.l.b16 %v3580
        %v3613 = vunpack.c.l.b16 %v3581
        %v3614 = vunpack.c.l.b16 %v3582
        %v3615 = vunpack.c.l.b16 %v3583
        %v3616 = vunpack.c.l.b16 %v3584
        %v3617 = vunpack.c.l.b16 %v3585
        %v3618 = vunpack.c.l.b16 %v3586
        %v3619 = vpack.c.b16 %v3604, %v3603
        %v3620 = vpack.c.b16 %v3606, %v3605
        %v3621 = vpack.c.b16 %v3608, %v3607
        %v3622 = vpack.c.b16 %v3610, %v3609
        %v3623 = vpack.c.b16 %v3612, %v3611
        %v3624 = vpack.c.b16 %v3614, %v3613
        %v3625 = vpack.c.b16 %v3616, %v3615
        %v3626 = vpack.c.b16 %v3618, %v3617
        %3635 = vmatprep.subr.bf16.mxu0 0
        %3636 = vmatpush1.bf16.msra.mxu0 %v3619
        %3637 = vmatprep.subr.bf16.mxu0 0
        %3638 = vmatpush1.bf16.msra.mxu0 %v3620
        %3639 = vmatprep.subr.bf16.mxu0 0
        %3640 = vmatpush1.bf16.msra.mxu0 %v3621
        %3641 = vmatprep.subr.bf16.mxu0 0
        %3642 = vmatpush1.bf16.msra.mxu0 %v3622
        %3643 = vmatprep.subr.bf16.mxu0 0
        %3644 = vmatpush1.bf16.msra.mxu0 %v3623
        %3645 = vmatprep.subr.bf16.mxu0 0
        %3646 = vmatpush1.bf16.msra.mxu0 %v3624
        %3647 = vmatprep.subr.bf16.mxu0 0
        %3648 = vmatpush1.bf16.msra.mxu0 %v3625
        %3649 = vmatprep.subr.bf16.mxu0 0
        %3650 = vmatpush1.bf16.msra.mxu0 %v3626
        %3651 = vmatprep.subr.bf16.mxu0 0
        %3652 = vmatpush1.bf16.msra.mxu0 0
        %3653 = vmatprep.subr.bf16.mxu0 0
        %3654 = vmatpush1.bf16.msra.mxu0 0
        %3655 = vmatprep.subr.bf16.mxu0 0
        %3656 = vmatpush1.bf16.msra.mxu0 0
        %3657 = vmatprep.subr.bf16.mxu0 0
        %3658 = vmatpush1.bf16.msra.mxu0 0
        %3659 = vmatprep.subr.bf16.mxu0 0
        %3660 = vmatpush1.bf16.msra.mxu0 0
        %3661 = vmatprep.subr.bf16.mxu0 0
        %3662 = vmatpush1.bf16.msra.mxu0 0
        %3663 = vmatprep.subr.bf16.mxu0 0
        %3664 = vmatpush1.bf16.msra.mxu0 0
        %3665 = vmatprep.subr.bf16.mxu0 0
        %3666 = vmatpush1.bf16.msra.mxu0 0
        %3667 = vmatprep.mubr.bf16.mxu0 0
        %3668 = vmatmul.mubr.bf16.gmra.mrb[0].mxu0 %v3539
        %v3669 = vpop.f32.mrb[0].mxu0
        %v3670 = vadd.f32 0.0, %v3669
        %v3671 = vpop.f32.mrb[0].mxu0
        %v3672 = vpop.f32.mrb[0].mxu0
        %v3673 = vadd.f32 0.0, %v3672
        %v3674 = vpop.f32.mrb[0].mxu0
        %3675 = vmatprep.mubr.bf16.mxu0 0
        %3676 = vmatmul.mubr.bf16.gmra.mrb[0].mxu0 %v3540
        %v3677 = vpop.f32.mrb[0].mxu0
        %v3678 = vadd.f32 0.0, %v3677
        %v3679 = vpop.f32.mrb[0].mxu0
        %v3680 = vpop.f32.mrb[0].mxu0
        %v3681 = vadd.f32 0.0, %v3680
        %v3682 = vpop.f32.mrb[0].mxu0
        %3683 = vmatprep.mubr.bf16.mxu0 0
        %3684 = vmatmul.mubr.bf16.gmra.mrb[0].mxu0 %v3541
        %v3685 = vpop.f32.mrb[0].mxu0
        %v3686 = vadd.f32 0.0, %v3685
        %v3687 = vpop.f32.mrb[0].mxu0
        %v3688 = vpop.f32.mrb[0].mxu0
        %v3689 = vadd.f32 0.0, %v3688
        %v3690 = vpop.f32.mrb[0].mxu0
        %3691 = vmatprep.mubr.bf16.mxu0 0
        %3692 = vmatmul.mubr.bf16.gmra.mrb[0].mxu0 %v3542
        %v3693 = vpop.f32.mrb[0].mxu0
        %v3694 = vadd.f32 0.0, %v3693
        %v3695 = vpop.f32.mrb[0].mxu0
        %v3696 = vpop.f32.mrb[0].mxu0
        %v3697 = vadd.f32 0.0, %v3696
        %v3698 = vpop.f32.mrb[0].mxu0
        %3699 = vmatprep.mubr.bf16.mxu0 0
        %3700 = vmatmul.mubr.bf16.gmra.mrb[0].mxu0 %v3543
        %v3701 = vpop.f32.mrb[0].mxu0
        %v3702 = vadd.f32 0.0, %v3701
        %v3703 = vpop.f32.mrb[0].mxu0
        %v3704 = vpop.f32.mrb[0].mxu0
        %v3705 = vadd.f32 0.0, %v3704
        %v3706 = vpop.f32.mrb[0].mxu0
        %3707 = vmatprep.mubr.bf16.mxu0 0
        %3708 = vmatmul.mubr.bf16.gmra.mrb[0].mxu0 %v3544
        %v3709 = vpop.f32.mrb[0].mxu0
        %v3710 = vadd.f32 0.0, %v3709
        %v3711 = vpop.f32.mrb[0].mxu0
        %v3712 = vpop.f32.mrb[0].mxu0
        %v3713 = vadd.f32 0.0, %v3712
        %v3714 = vpop.f32.mrb[0].mxu0
        %3715 = vmatprep.mubr.bf16.mxu0 0
        %3716 = vmatmul.mubr.bf16.gmra.mrb[0].mxu0 %v3545
        %v3717 = vpop.f32.mrb[0].mxu0
        %v3718 = vadd.f32 0.0, %v3717
        %v3719 = vpop.f32.mrb[0].mxu0
        %v3720 = vpop.f32.mrb[0].mxu0
        %v3721 = vadd.f32 0.0, %v3720
        %v3722 = vpop.f32.mrb[0].mxu0
        %3723 = vmatprep.mubr.bf16.mxu0 0
        %3724 = vmatmul.mubr.bf16.gmra.mrb[0].mxu0 %v3546
        %v3725 = vpop.f32.mrb[0].mxu0
        %v3726 = vadd.f32 0.0, %v3725
        %v3727 = vpop.f32.mrb[0].mxu0
        %v3728 = vpop.f32.mrb[0].mxu0
        %v3729 = vadd.f32 0.0, %v3728
        %v3730 = vpop.f32.mrb[0].mxu0
        %3731 = vmatprep.mubr.bf16.mxu0 0
        %3732 = vmatmul.mubr.bf16.gmra.mrb[0].mxu0 %v3547
        %v3733 = vpop.f32.mrb[0].mxu0
        %v3734 = vadd.f32 0.0, %v3733
        %v3735 = vpop.f32.mrb[0].mxu0
        %v3736 = vpop.f32.mrb[0].mxu0
        %v3737 = vadd.f32 0.0, %v3736
        %v3738 = vpop.f32.mrb[0].mxu0
        %3739 = vmatprep.mubr.bf16.mxu0 0
        %3740 = vmatmul.mubr.bf16.gmra.mrb[0].mxu0 %v3548
        %v3741 = vpop.f32.mrb[0].mxu0
        %v3742 = vadd.f32 0.0, %v3741
        %v3743 = vpop.f32.mrb[0].mxu0
        %v3744 = vpop.f32.mrb[0].mxu0
        %v3745 = vadd.f32 0.0, %v3744
        %v3746 = vpop.f32.mrb[0].mxu0
        %3747 = vmatprep.mubr.bf16.mxu0 0
        %3748 = vmatmul.mubr.bf16.gmra.mrb[0].mxu0 %v3549
        %v3749 = vpop.f32.mrb[0].mxu0
        %v3750 = vadd.f32 0.0, %v3749
        %v3751 = vpop.f32.mrb[0].mxu0
        %v3752 = vpop.f32.mrb[0].mxu0
        %v3753 = vadd.f32 0.0, %v3752
        %v3754 = vpop.f32.mrb[0].mxu0
        %3755 = vmatprep.mubr.bf16.mxu0 0
        %3756 = vmatmul.mubr.bf16.gmra.mrb[0].mxu0 %v3550
        %v3757 = vpop.f32.mrb[0].mxu0
        %v3758 = vadd.f32 0.0, %v3757
        %v3759 = vpop.f32.mrb[0].mxu0
        %v3760 = vpop.f32.mrb[0].mxu0
        %v3761 = vadd.f32 0.0, %v3760
        %v3762 = vpop.f32.mrb[0].mxu0
        %3763 = vmatprep.mubr.bf16.mxu0 0
        %3764 = vmatmul.mubr.bf16.gmra.mrb[0].mxu0 %v3551
        %v3765 = vpop.f32.mrb[0].mxu0
        %v3766 = vadd.f32 0.0, %v3765
        %v3767 = vpop.f32.mrb[0].mxu0
        %v3768 = vpop.f32.mrb[0].mxu0
        %v3769 = vadd.f32 0.0, %v3768
        %v3770 = vpop.f32.mrb[0].mxu0
        %3771 = vmatprep.mubr.bf16.mxu0 0
        %3772 = vmatmul.mubr.bf16.gmra.mrb[0].mxu0 %v3552
        %v3773 = vpop.f32.mrb[0].mxu0
        %v3774 = vadd.f32 0.0, %v3773
        %v3775 = vpop.f32.mrb[0].mxu0
        %v3776 = vpop.f32.mrb[0].mxu0
        %v3777 = vadd.f32 0.0, %v3776
        %v3778 = vpop.f32.mrb[0].mxu0
        %3779 = vmatprep.mubr.bf16.mxu0 0
        %3780 = vmatmul.mubr.bf16.gmra.mrb[0].mxu0 %v3553
        %v3781 = vpop.f32.mrb[0].mxu0
        %v3782 = vadd.f32 0.0, %v3781
        %v3783 = vpop.f32.mrb[0].mxu0
        %v3784 = vpop.f32.mrb[0].mxu0
        %v3785 = vadd.f32 0.0, %v3784
        %v3786 = vpop.f32.mrb[0].mxu0
        %3787 = vmatprep.mubr.bf16.mxu0 0
        %3788 = vmatmul.mubr.bf16.gmra.mrb[0].mxu0 %v3554
        %v3789 = vpop.f32.mrb[0].mxu0
        %v3790 = vadd.f32 0.0, %v3789
        %v3791 = vpop.f32.mrb[0].mxu0
        %v3792 = vpop.f32.mrb[0].mxu0
        %v3793 = vadd.f32 0.0, %v3792
        %v3794 = vpop.f32.mrb[0].mxu0
        %3795 = vmatprep.mubr.bf16.mxu0 0
        %3796 = vmatmul.mubr.bf16.gmra.mrb[0].mxu0 %v3555
        %v3797 = vpop.f32.mrb[0].mxu0
        %v3798 = vadd.f32 0.0, %v3797
        %v3799 = vpop.f32.mrb[0].mxu0
        %v3800 = vpop.f32.mrb[0].mxu0
        %v3801 = vadd.f32 0.0, %v3800
        %v3802 = vpop.f32.mrb[0].mxu0
        %3803 = vmatprep.mubr.bf16.mxu0 0
        %3804 = vmatmul.mubr.bf16.gmra.mrb[0].mxu0 %v3556
        %v3805 = vpop.f32.mrb[0].mxu0
        %v3806 = vadd.f32 0.0, %v3805
        %v3807 = vpop.f32.mrb[0].mxu0
        %v3808 = vpop.f32.mrb[0].mxu0
        %v3809 = vadd.f32 0.0, %v3808
        %v3810 = vpop.f32.mrb[0].mxu0
        %3811 = vmatprep.mubr.bf16.mxu0 0
        %3812 = vmatmul.mubr.bf16.gmra.mrb[0].mxu0 %v3557
        %v3813 = vpop.f32.mrb[0].mxu0
        %v3814 = vadd.f32 0.0, %v3813
        %v3815 = vpop.f32.mrb[0].mxu0
        %v3816 = vpop.f32.mrb[0].mxu0
        %v3817 = vadd.f32 0.0, %v3816
        %v3818 = vpop.f32.mrb[0].mxu0
        %3819 = vmatprep.mubr.bf16.mxu0 0
        %3820 = vmatmul.mubr.bf16.gmra.mrb[0].mxu0 %v3558
        %v3821 = vpop.f32.mrb[0].mxu0
        %v3822 = vadd.f32 0.0, %v3821
        %v3823 = vpop.f32.mrb[0].mxu0
        %v3824 = vpop.f32.mrb[0].mxu0
        %v3825 = vadd.f32 0.0, %v3824
        %v3826 = vpop.f32.mrb[0].mxu0
        %3827 = vmatprep.mubr.bf16.mxu0 0
        %3828 = vmatmul.mubr.bf16.gmra.mrb[0].mxu0 %v3559
        %v3829 = vpop.f32.mrb[0].mxu0
        %v3830 = vadd.f32 0.0, %v3829
        %v3831 = vpop.f32.mrb[0].mxu0
        %v3832 = vpop.f32.mrb[0].mxu0
        %v3833 = vadd.f32 0.0, %v3832
        %v3834 = vpop.f32.mrb[0].mxu0
        %3835 = vmatprep.mubr.bf16.mxu0 0
        %3836 = vmatmul.mubr.bf16.gmra.mrb[0].mxu0 %v3560
        %v3837 = vpop.f32.mrb[0].mxu0
        %v3838 = vadd.f32 0.0, %v3837
        %v3839 = vpop.f32.mrb[0].mxu0
        %v3840 = vpop.f32.mrb[0].mxu0
        %v3841 = vadd.f32 0.0, %v3840
        %v3842 = vpop.f32.mrb[0].mxu0
        %3843 = vmatprep.mubr.bf16.mxu0 0
        %3844 = vmatmul.mubr.bf16.gmra.mrb[0].mxu0 %v3561
        %v3845 = vpop.f32.mrb[0].mxu0
        %v3846 = vadd.f32 0.0, %v3845
        %v3847 = vpop.f32.mrb[0].mxu0
        %v3848 = vpop.f32.mrb[0].mxu0
        %v3849 = vadd.f32 0.0, %v3848
        %v3850 = vpop.f32.mrb[0].mxu0
        %3851 = vmatprep.mubr.bf16.mxu0 0
        %3852 = vmatmul.mubr.bf16.gmra.mrb[0].mxu0 %v3562
        %v3853 = vpop.f32.mrb[0].mxu0
        %v3854 = vadd.f32 0.0, %v3853
        %v3855 = vpop.f32.mrb[0].mxu0
        %v3856 = vpop.f32.mrb[0].mxu0
        %v3857 = vadd.f32 0.0, %v3856
        %v3858 = vpop.f32.mrb[0].mxu0
        %3859 = vmatprep.mubr.bf16.mxu0 0
        %3860 = vmatmul.mubr.bf16.gmra.mrb[0].mxu0 %v3563
        %v3861 = vpop.f32.mrb[0].mxu0
        %v3862 = vadd.f32 0.0, %v3861
        %v3863 = vpop.f32.mrb[0].mxu0
        %v3864 = vpop.f32.mrb[0].mxu0
        %v3865 = vadd.f32 0.0, %v3864
        %v3866 = vpop.f32.mrb[0].mxu0
        %3867 = vmatprep.mubr.bf16.mxu0 0
        %3868 = vmatmul.mubr.bf16.gmra.mrb[0].mxu0 %v3564
        %v3869 = vpop.f32.mrb[0].mxu0
        %v3870 = vadd.f32 0.0, %v3869
        %v3871 = vpop.f32.mrb[0].mxu0
        %v3872 = vpop.f32.mrb[0].mxu0
        %v3873 = vadd.f32 0.0, %v3872
        %v3874 = vpop.f32.mrb[0].mxu0
        %3875 = vmatprep.mubr.bf16.mxu0 0
        %3876 = vmatmul.mubr.bf16.gmra.mrb[0].mxu0 %v3565
        %v3877 = vpop.f32.mrb[0].mxu0
        %v3878 = vadd.f32 0.0, %v3877
        %v3879 = vpop.f32.mrb[0].mxu0
        %v3880 = vpop.f32.mrb[0].mxu0
        %v3881 = vadd.f32 0.0, %v3880
        %v3882 = vpop.f32.mrb[0].mxu0
        %3883 = vmatprep.mubr.bf16.mxu0 0
        %3884 = vmatmul.mubr.bf16.gmra.mrb[0].mxu0 %v3566
        %v3885 = vpop.f32.mrb[0].mxu0
        %v3886 = vadd.f32 0.0, %v3885
        %v3887 = vpop.f32.mrb[0].mxu0
        %v3888 = vpop.f32.mrb[0].mxu0
        %v3889 = vadd.f32 0.0, %v3888
        %v3890 = vpop.f32.mrb[0].mxu0
        %3891 = vmatprep.mubr.bf16.mxu0 0
        %3892 = vmatmul.mubr.bf16.gmra.mrb[0].mxu0 %v3567
        %v3893 = vpop.f32.mrb[0].mxu0
        %v3894 = vadd.f32 0.0, %v3893
        %v3895 = vpop.f32.mrb[0].mxu0
        %v3896 = vpop.f32.mrb[0].mxu0
        %v3897 = vadd.f32 0.0, %v3896
        %v3898 = vpop.f32.mrb[0].mxu0
        %3899 = vmatprep.mubr.bf16.mxu0 0
        %3900 = vmatmul.mubr.bf16.gmra.mrb[0].mxu0 %v3568
        %v3901 = vpop.f32.mrb[0].mxu0
        %v3902 = vadd.f32 0.0, %v3901
        %v3903 = vpop.f32.mrb[0].mxu0
        %v3904 = vpop.f32.mrb[0].mxu0
        %v3905 = vadd.f32 0.0, %v3904
        %v3906 = vpop.f32.mrb[0].mxu0
        %3907 = vmatprep.mubr.bf16.mxu0 0
        %3908 = vmatmul.mubr.bf16.gmra.mrb[0].mxu0 %v3569
        %v3909 = vpop.f32.mrb[0].mxu0
        %v3910 = vadd.f32 0.0, %v3909
        %v3911 = vpop.f32.mrb[0].mxu0
        %v3912 = vpop.f32.mrb[0].mxu0
        %v3913 = vadd.f32 0.0, %v3912
        %v3914 = vpop.f32.mrb[0].mxu0
        %3915 = vmatprep.mubr.bf16.mxu0 0
        %3916 = vmatmul.mubr.bf16.gmra.mrb[0].mxu0 %v3570
        %v3917 = vpop.f32.mrb[0].mxu0
        %v3918 = vadd.f32 0.0, %v3917
        %v3919 = vpop.f32.mrb[0].mxu0
        %v3920 = vpop.f32.mrb[0].mxu0
        %v3921 = vadd.f32 0.0, %v3920
        %v3922 = vpop.f32.mrb[0].mxu0
        %3923 = vdwg.mxu0
        %v3924 = vpack.c.bf16 %v3673, %v3670
        %v3925 = vpack.c.bf16 %v3681, %v3678
        %v3926 = vpack.c.bf16 %v3689, %v3686
        %v3927 = vpack.c.bf16 %v3697, %v3694
        %v3928 = vpack.c.bf16 %v3705, %v3702
        %v3929 = vpack.c.bf16 %v3713, %v3710
        %v3930 = vpack.c.bf16 %v3721, %v3718
        %v3931 = vpack.c.bf16 %v3729, %v3726
        %v3932 = vpack.c.bf16 %v3737, %v3734
        %v3933 = vpack.c.bf16 %v3745, %v3742
        %v3934 = vpack.c.bf16 %v3753, %v3750
        %v3935 = vpack.c.bf16 %v3761, %v3758
        %v3936 = vpack.c.bf16 %v3769, %v3766
        %v3937 = vpack.c.bf16 %v3777, %v3774
        %v3938 = vpack.c.bf16 %v3785, %v3782
        %v3939 = vpack.c.bf16 %v3793, %v3790
        %v3940 = vpack.c.bf16 %v3801, %v3798
        %v3941 = vpack.c.bf16 %v3809, %v3806
        %v3942 = vpack.c.bf16 %v3817, %v3814
        %v3943 = vpack.c.bf16 %v3825, %v3822
        %v3944 = vpack.c.bf16 %v3833, %v3830
        %v3945 = vpack.c.bf16 %v3841, %v3838
        %v3946 = vpack.c.bf16 %v3849, %v3846
        %v3947 = vpack.c.bf16 %v3857, %v3854
        %v3948 = vpack.c.bf16 %v3865, %v3862
        %v3949 = vpack.c.bf16 %v3873, %v3870
        %v3950 = vpack.c.bf16 %v3881, %v3878
        %v3951 = vpack.c.bf16 %v3889, %v3886
        %v3952 = vpack.c.bf16 %v3897, %v3894
        %v3953 = vpack.c.bf16 %v3905, %v3902
        %v3954 = vpack.c.bf16 %v3913, %v3910
        %v3955 = vpack.c.bf16 %v3921, %v3918
        %v3988 = vunpack.c.l.b16 %v3924
        %v3989 = vunpack.c.h.b16 %v3924
        %v3990 = vunpack.c.l.b16 %v3925
        %v3991 = vunpack.c.h.b16 %v3925
        %v3992 = vunpack.c.l.b16 %v3926
        %v3993 = vunpack.c.h.b16 %v3926
        %v3994 = vunpack.c.l.b16 %v3927
        %v3995 = vunpack.c.h.b16 %v3927
        %v3996 = vunpack.c.l.b16 %v3928
        %v3997 = vunpack.c.h.b16 %v3928
        %v3998 = vunpack.c.l.b16 %v3929
        %v3999 = vunpack.c.h.b16 %v3929
        %v4000 = vunpack.c.l.b16 %v3930
        %v4001 = vunpack.c.h.b16 %v3930
        %v4002 = vunpack.c.l.b16 %v3931
        %v4003 = vunpack.c.h.b16 %v3931
        %v4004 = vunpack.c.l.b16 %v3932
        %v4005 = vunpack.c.h.b16 %v3932
        %v4006 = vunpack.c.l.b16 %v3933
        %v4007 = vunpack.c.h.b16 %v3933
        %v4008 = vunpack.c.l.b16 %v3934
        %v4009 = vunpack.c.h.b16 %v3934
        %v4010 = vunpack.c.l.b16 %v3935
        %v4011 = vunpack.c.h.b16 %v3935
        %v4012 = vunpack.c.l.b16 %v3936
        %v4013 = vunpack.c.h.b16 %v3936
        %v4014 = vunpack.c.l.b16 %v3937
        %v4015 = vunpack.c.h.b16 %v3937
        %v4016 = vunpack.c.l.b16 %v3938
        %v4017 = vunpack.c.h.b16 %v3938
        %v4018 = vunpack.c.l.b16 %v3939
        %v4019 = vunpack.c.h.b16 %v3939
        %v4020 = vunpack.c.l.b16 %v3940
        %v4021 = vunpack.c.h.b16 %v3940
        %v4022 = vunpack.c.l.b16 %v3941
        %v4023 = vunpack.c.h.b16 %v3941
        %v4024 = vunpack.c.l.b16 %v3942
        %v4025 = vunpack.c.h.b16 %v3942
        %v4026 = vunpack.c.l.b16 %v3943
        %v4027 = vunpack.c.h.b16 %v3943
        %v4028 = vunpack.c.l.b16 %v3944
        %v4029 = vunpack.c.h.b16 %v3944
        %v4030 = vunpack.c.l.b16 %v3945
        %v4031 = vunpack.c.h.b16 %v3945
        %v4032 = vunpack.c.l.b16 %v3946
        %v4033 = vunpack.c.h.b16 %v3946
        %v4034 = vunpack.c.l.b16 %v3947
        %v4035 = vunpack.c.h.b16 %v3947
        %v4036 = vunpack.c.l.b16 %v3948
        %v4037 = vunpack.c.h.b16 %v3948
        %v4038 = vunpack.c.l.b16 %v3949
        %v4039 = vunpack.c.h.b16 %v3949
        %v4040 = vunpack.c.l.b16 %v3950
        %v4041 = vunpack.c.h.b16 %v3950
        %v4042 = vunpack.c.l.b16 %v3951
        %v4043 = vunpack.c.h.b16 %v3951
        %v4044 = vunpack.c.l.b16 %v3952
        %v4045 = vunpack.c.h.b16 %v3952
        %v4046 = vunpack.c.l.b16 %v3953
        %v4047 = vunpack.c.h.b16 %v3953
        %v4048 = vunpack.c.l.b16 %v3954
        %v4049 = vunpack.c.h.b16 %v3954
        %v4050 = vunpack.c.l.b16 %v3955
        %v4051 = vunpack.c.h.b16 %v3955
        %v4052 = vpack.c.b16 %v3988, %v3988
        %v4053 = vpack.c.b16 %v3989, %v3989
        %v4054 = vpack.c.b16 %v3990, %v3990
        %v4055 = vpack.c.b16 %v3991, %v3991
        %v4056 = vpack.c.b16 %v3992, %v3992
        %v4057 = vpack.c.b16 %v3993, %v3993
        %v4058 = vpack.c.b16 %v3994, %v3994
        %v4059 = vpack.c.b16 %v3995, %v3995
        %v4060 = vpack.c.b16 %v3996, %v3996
        %v4061 = vpack.c.b16 %v3997, %v3997
        %v4062 = vpack.c.b16 %v3998, %v3998
        %v4063 = vpack.c.b16 %v3999, %v3999
        %v4064 = vpack.c.b16 %v4000, %v4000
        %v4065 = vpack.c.b16 %v4001, %v4001
        %v4066 = vpack.c.b16 %v4002, %v4002
        %v4067 = vpack.c.b16 %v4003, %v4003
        %v4068 = vpack.c.b16 %v4004, %v4004
        %v4069 = vpack.c.b16 %v4005, %v4005
        %v4070 = vpack.c.b16 %v4006, %v4006
        %v4071 = vpack.c.b16 %v4007, %v4007
        %v4072 = vpack.c.b16 %v4008, %v4008
        %v4073 = vpack.c.b16 %v4009, %v4009
        %v4074 = vpack.c.b16 %v4010, %v4010
        %v4075 = vpack.c.b16 %v4011, %v4011
        %v4076 = vpack.c.b16 %v4012, %v4012
        %v4077 = vpack.c.b16 %v4013, %v4013
        %v4078 = vpack.c.b16 %v4014, %v4014
        %v4079 = vpack.c.b16 %v4015, %v4015
        %v4080 = vpack.c.b16 %v4016, %v4016
        %v4081 = vpack.c.b16 %v4017, %v4017
        %v4082 = vpack.c.b16 %v4018, %v4018
        %v4083 = vpack.c.b16 %v4019, %v4019
        %v4084 = vpack.c.b16 %v4020, %v4020
        %v4085 = vpack.c.b16 %v4021, %v4021
        %v4086 = vpack.c.b16 %v4022, %v4022
        %v4087 = vpack.c.b16 %v4023, %v4023
        %v4088 = vpack.c.b16 %v4024, %v4024
        %v4089 = vpack.c.b16 %v4025, %v4025
        %v4090 = vpack.c.b16 %v4026, %v4026
        %v4091 = vpack.c.b16 %v4027, %v4027
        %v4092 = vpack.c.b16 %v4028, %v4028
        %v4093 = vpack.c.b16 %v4029, %v4029
        %v4094 = vpack.c.b16 %v4030, %v4030
        %v4095 = vpack.c.b16 %v4031, %v4031
        %v4096 = vpack.c.b16 %v4032, %v4032
        %v4097 = vpack.c.b16 %v4033, %v4033
        %v4098 = vpack.c.b16 %v4034, %v4034
        %v4099 = vpack.c.b16 %v4035, %v4035
        %v4100 = vpack.c.b16 %v4036, %v4036
        %v4101 = vpack.c.b16 %v4037, %v4037
        %v4102 = vpack.c.b16 %v4038, %v4038
        %v4103 = vpack.c.b16 %v4039, %v4039
        %v4104 = vpack.c.b16 %v4040, %v4040
        %v4105 = vpack.c.b16 %v4041, %v4041
        %v4106 = vpack.c.b16 %v4042, %v4042
        %v4107 = vpack.c.b16 %v4043, %v4043
        %v4108 = vpack.c.b16 %v4044, %v4044
        %v4109 = vpack.c.b16 %v4045, %v4045
        %v4110 = vpack.c.b16 %v4046, %v4046
        %v4111 = vpack.c.b16 %v4047, %v4047
        %v4112 = vpack.c.b16 %v4048, %v4048
        %v4113 = vpack.c.b16 %v4049, %v4049
        %v4114 = vpack.c.b16 %v4050, %v4050
        %v4115 = vpack.c.b16 %v4051, %v4051
        %4180 = vst [vmem:[%s261] sm:$0xf] %v4052
        %4181 = vst [vmem:[%s261 + $0x4] sm:$0xf] %v4053
        %4182 = vst [vmem:[%s261 + $0x8] sm:$0xf] %v4054
        %4183 = vst [vmem:[%s261 + $0xc] sm:$0xf] %v4055
        %4184 = vst [vmem:[%s261 + $0x10] sm:$0xf] %v4056
        %4185 = vst [vmem:[%s261 + $0x14] sm:$0xf] %v4057
        %4186 = vst [vmem:[%s261 + $0x18] sm:$0xf] %v4058
        %4187 = vst [vmem:[%s261 + $0x1c] sm:$0xf] %v4059
        %4188 = vst [vmem:[%s261 + $0x20] sm:$0xf] %v4060
        %4189 = vst [vmem:[%s261 + $0x24] sm:$0xf] %v4061
        %4190 = vst [vmem:[%s261 + $0x28] sm:$0xf] %v4062
        %4191 = vst [vmem:[%s261 + $0x2c] sm:$0xf] %v4063
        %4192 = vst [vmem:[%s261 + $0x30] sm:$0xf] %v4064
        %4193 = vst [vmem:[%s261 + $0x34] sm:$0xf] %v4065
        %4194 = vst [vmem:[%s261 + $0x38] sm:$0xf] %v4066
        %4195 = vst [vmem:[%s261 + $0x3c] sm:$0xf] %v4067
        %4196 = vst [vmem:[%s261 + $0x40] sm:$0xf] %v4068
        %4197 = vst [vmem:[%s261 + $0x44] sm:$0xf] %v4069
        %4198 = vst [vmem:[%s261 + $0x48] sm:$0xf] %v4070
        %4199 = vst [vmem:[%s261 + $0x4c] sm:$0xf] %v4071
        %4200 = vst [vmem:[%s261 + $0x50] sm:$0xf] %v4072
        %4201 = vst [vmem:[%s261 + $0x54] sm:$0xf] %v4073
        %4202 = vst [vmem:[%s261 + $0x58] sm:$0xf] %v4074
        %4203 = vst [vmem:[%s261 + $0x5c] sm:$0xf] %v4075
        %4204 = vst [vmem:[%s261 + $0x60] sm:$0xf] %v4076
        %4205 = vst [vmem:[%s261 + $0x64] sm:$0xf] %v4077
        %4206 = vst [vmem:[%s261 + $0x68] sm:$0xf] %v4078
        %4207 = vst [vmem:[%s261 + $0x6c] sm:$0xf] %v4079
        %4208 = vst [vmem:[%s261 + $0x70] sm:$0xf] %v4080
        %4209 = vst [vmem:[%s261 + $0x74] sm:$0xf] %v4081
        %4210 = vst [vmem:[%s261 + $0x78] sm:$0xf] %v4082
        %4211 = vst [vmem:[%s261 + $0x7c] sm:$0xf] %v4083
        %4212 = vst [vmem:[%s261 + $0x80] sm:$0xf] %v4084
        %4213 = vst [vmem:[%s261 + $0x84] sm:$0xf] %v4085
        %4214 = vst [vmem:[%s261 + $0x88] sm:$0xf] %v4086
        %4215 = vst [vmem:[%s261 + $0x8c] sm:$0xf] %v4087
        %4216 = vst [vmem:[%s261 + $0x90] sm:$0xf] %v4088
        %4217 = vst [vmem:[%s261 + $0x94] sm:$0xf] %v4089
        %4218 = vst [vmem:[%s261 + $0x98] sm:$0xf] %v4090
        %4219 = vst [vmem:[%s261 + $0x9c] sm:$0xf] %v4091
        %4220 = vst [vmem:[%s261 + $0xa0] sm:$0xf] %v4092
        %4221 = vst [vmem:[%s261 + $0xa4] sm:$0xf] %v4093
        %4222 = vst [vmem:[%s261 + $0xa8] sm:$0xf] %v4094
        %4223 = vst [vmem:[%s261 + $0xac] sm:$0xf] %v4095
        %4224 = vst [vmem:[%s261 + $0xb0] sm:$0xf] %v4096
        %4225 = vst [vmem:[%s261 + $0xb4] sm:$0xf] %v4097
        %4226 = vst [vmem:[%s261 + $0xb8] sm:$0xf] %v4098
        %4227 = vst [vmem:[%s261 + $0xbc] sm:$0xf] %v4099
        %4228 = vst [vmem:[%s261 + $0xc0] sm:$0xf] %v4100
        %4229 = vst [vmem:[%s261 + $0xc4] sm:$0xf] %v4101
        %4230 = vst [vmem:[%s261 + $0xc8] sm:$0xf] %v4102
        %4231 = vst [vmem:[%s261 + $0xcc] sm:$0xf] %v4103
        %4232 = vst [vmem:[%s261 + $0xd0] sm:$0xf] %v4104
        %4233 = vst [vmem:[%s261 + $0xd4] sm:$0xf] %v4105
        %4234 = vst [vmem:[%s261 + $0xd8] sm:$0xf] %v4106
        %4235 = vst [vmem:[%s261 + $0xdc] sm:$0xf] %v4107
        %4236 = vst [vmem:[%s261 + $0xe0] sm:$0xf] %v4108
        %4237 = vst [vmem:[%s261 + $0xe4] sm:$0xf] %v4109
        %4238 = vst [vmem:[%s261 + $0xe8] sm:$0xf] %v4110
        %4239 = vst [vmem:[%s261 + $0xec] sm:$0xf] %v4111
        %4240 = vst [vmem:[%s261 + $0xf0] sm:$0xf] %v4112
        %4241 = vst [vmem:[%s261 + $0xf4] sm:$0xf] %v4113
        %4242 = vst [vmem:[%s261 + $0xf8] sm:$0xf] %v4114
        %4243 = vst [vmem:[%s261 + $0xfc] sm:$0xf] %v4115
        %s4244 = smul.u32 64, %s20
        %p4245 = scmp.lt.s32.totalorder %s4244, 127
        %s4246 = scalar_select %p4245, %s4244, 127
        %s4247 = smul.addr %s4246, 4
        %s4248 = scalar_lea.vmem %s4, %s4247
        // Predicated region
        $region53: #{gcn_forward_prepared.2} parent=35 // pred_check
          %p4249 = pneg %p127
        $region54: #{gcn_forward_prepared.2} parent=35 // pred_check_branch
          %4251 = sbr.rel (%p4249) target = $region56
        $region55: #{gcn_forward_prepared.2} parent=35 // pred_region
          %s4252 = smul.u32 64, %s20
        $region56: #{gcn_forward_prepared.2} parent=35 // pred_fallthru
          _
      $region36: #{gcn_forward_prepared.2} parent=5 // pred_fallthru
        _
      %p4253 = scmp.le.s32.totalorder 2, %s15
      // Predicated region
      $region57: #{gcn_forward_prepared.2} parent=5 // pred_check
        %p4254 = pneg %p4253
      $region58: #{gcn_forward_prepared.2} parent=5 // pred_check_branch
        %4256 = sbr.rel (%p4254) target = $region60
      $region59: #{gcn_forward_prepared.2} parent=5 // pred_region
        %s4257 = ssub.s32 %s15, 2
        // Predicated region
        $region61: #{gcn_forward_prepared.2} parent=59 // pred_check
          %p4258 = pneg %p133
        $region62: #{gcn_forward_prepared.2} parent=59 // pred_check_branch
          %4260 = sbr.rel (%p4258) target = $region64
        $region63: #{gcn_forward_prepared.2} parent=59 // pred_region
          %s4261 = smul.u32 64, %s21
          %p4262 = scmp.lt.s32.totalorder %s4261, 127
          %s4263 = scalar_select %p4262, %s4261, 127
          %s4264 = smul.addr %s4263, 4
          %s4265 = scalar_lea.vmem %s4, %s4264
        $region64: #{gcn_forward_prepared.2} parent=59 // pred_fallthru
          _
      $region60: #{gcn_forward_prepared.2} parent=5 // pred_fallthru
        _
    $region6: #{gcn_forward_prepared.2} parent=1 // loop_footer
      %s19 = sadd.s32 1, %s15
    $region7: #{gcn_forward_prepared.2} parent=1 // loop_footer_branch
      %14 = sbr.rel target = $region3
    $region8: #{gcn_forward_prepared.2} parent=1 // loop_exit
      _
    %4266 = vsyncpa [#allocation3], 1
    %s4267 = scalar_lea.sflag [#allocation3], 1
    %4268 = vsyncpa %s4267, 1
    %4269 = vsyncpa [#allocation5], 1
    %4270 = vsyncpa [#allocation8], 1

</llo_original>
